<compile_context>
chip_gen: v7x
topology: tpu7x:2x2x1
jax: 0.10.0
libtpu: 0.0.40
codegen_flags: <defaults>
</compile_context>

<pallas_src>
import functools

import jax
import jax.numpy as jnp
from jax.experimental import pallas as pl
from jax.experimental.pallas import tpu as pltpu

EPS = 1e-5     # nn.BatchNorm2d default
W_OFF = 8      # sublane-aligned column offset of the interior inside padded scratch


def _round_up(x, m):
    return ((x + m - 1) // m) * m


# ----------------------------- in-kernel helpers -----------------------------

def _shift_h(x, oh):
    """result[:, i] = x[:, i + oh] with zeros out of range.  H is a major dim."""
    if oh == 0:
        return x
    Nb, H, W, C = x.shape
    z = jnp.zeros((Nb, 1, W, C), x.dtype)
    if oh > 0:
        return jnp.concatenate([x[:, oh:, :, :], z], axis=1)
    return jnp.concatenate([z, x[:, :H + oh, :, :]], axis=1)


def _shift_w(x, ow):
    """result[..., j, :] = x[..., j + ow, :] with zeros out of range (sublane axis)."""
    if ow == 0:
        return x
    Nb, H, W, C = x.shape
    z = jnp.zeros((Nb, H, 1, C), x.dtype)
    if ow > 0:
        return jnp.concatenate([x[:, :, ow:, :], z], axis=2)
    return jnp.concatenate([z, x[:, :, :W + ow, :]], axis=2)


def _dw3x3_s1(x, wd_ref, bd_ref):
    """Stride-1 3x3 depthwise conv (SAME, pad=1) on an in-register value.

    x: (Nb, H, W, C); wd_ref: (9, C) taps (BN scale folded); bd_ref: (1, C).
    Returns (Nb, H, W, C) f32.
    """
    acc = None
    for di in range(3):
        xh = _shift_h(x, di - 1)
        for dj in range(3):
            t = _shift_w(xh, dj - 1) * wd_ref[3 * di + dj, :]
            acc = t if acc is None else acc + t
    return acc + bd_ref[0, :]


def _fill_padded(p_ref, interior_f32, H, W, w_off):
    """Write `interior` into a zero-bordered padded scratch.

    p_ref: (Nb, Hp, Wp, C).  Interior lives at rows [1, H], cols [w_off, w_off+W).
    Only the border strips the taps can read are zeroed (rows 0 / H+1, cols
    w_off-1 / w_off+W); the interior store is sublane-aligned (offset w_off=8).
    """
    Nb = interior_f32.shape[0]
    Wp = p_ref.shape[2]
    C = p_ref.shape[-1]
    zrow = jnp.zeros((Nb, 1, Wp, C), jnp.float32)
    p_ref[:, pl.ds(0, 1), :, :] = zrow
    p_ref[:, pl.ds(H + 1, 1), :, :] = zrow
    zcol = jnp.zeros((Nb, H, 1, C), jnp.float32)
    p_ref[:, pl.ds(1, H), pl.ds(w_off - 1, 1), :] = zcol
    p_ref[:, pl.ds(1, H), pl.ds(w_off + W, 1), :] = zcol
    p_ref[:, pl.ds(1, H), pl.ds(w_off, W), :] = interior_f32


def _dw3x3_from_padded(p_ref, wd_ref, bd_ref, Nb, H, W, stride, w_off):
    """Strided 3x3 depthwise conv reading a zero-bordered padded VMEM scratch.

    Each tap is one sublane-strided read of (Nb, stride*Ho, Wo, C); the H
    subsample is a free major-dim reshape/select.  Returns (Nb, Ho, Wo, C) f32.
    """
    Ho = (H - 1) // stride + 1
    Wo = (W - 1) // stride + 1
    C = p_ref.shape[-1]
    acc = None
    for di in range(3):
        for dj in range(3):
            blk = p_ref[:, pl.ds(di, stride * Ho),
                        pl.ds(w_off - 1 + dj, Wo, stride), :]
            blk = blk.reshape(Nb, Ho, stride, Wo, C)[:, :, 0, :, :]
            t = blk * wd_ref[3 * di + dj, :]
            acc = t if acc is None else acc + t
    return acc + bd_ref[0, :]


# ------------------------------ fused kernels --------------------------------

def _bm1_kernel(x_ref, w1_ref, b1_ref, wd_ref, bd_ref, wbig_ref, bbig_ref,
                o_ref, *, Nb, H, W, Co2):
    """benchmodel=1 (stride 1): x1 passthrough, branch2 = pw1 -> dw3x3 -> pw2.

    Channel shuffle + passthrough are folded into one fused bf16 matmul:
      out = maskedReLU( [x1 | dw(relu(x2 @ w1 + b1))] @ wbig + bbig )
    even output lanes carry x1 (no ReLU), odd lanes carry branch2 (ReLU).
    """
    M = Nb * H * W
    C = 2 * Co2

    xv = x_ref[...]                              # (Nb, H, W, C) bf16
    x1 = xv[..., :Co2]                           # passthrough half
    x2 = xv[..., Co2:]                           # processed half

    # pw1 (+folded BN) + ReLU  -- MXU, bf16 in / f32 accumulate
    h = jnp.dot(x2.reshape(M, Co2), w1_ref[...],
                preferred_element_type=jnp.float32) + b1_ref[...]
    h = jnp.maximum(h, 0.0).reshape(Nb, H, W, Co2)

    # depthwise 3x3 stride 1 (+folded BN bias, no ReLU) -- in-register, no scratch
    d = _dw3x3_s1(h, wd_ref, bd_ref)             # (Nb, H, W, Co2) f32

    # fused [passthrough | pw2] matmul; shuffle folded into wbig columns
    u = jnp.concatenate([x1.reshape(M, Co2),
                         d.reshape(M, Co2).astype(jnp.bfloat16)], axis=-1)
    y = jnp.dot(u, wbig_ref[...], preferred_element_type=jnp.float32) + bbig_ref[...]

    # ReLU only on branch-2 (odd) output lanes; even lanes are the x1 passthrough.
    lane = jax.lax.broadcasted_iota(jnp.int32, y.shape, 1)
    y = jnp.where((lane & 1) == 1, jnp.maximum(y, 0.0), y)

    o_ref[...] = y.reshape(Nb, H, W, C).astype(o_ref.dtype)


def _bm2_kernel(x_ref, wd1_ref, bd1_ref, w21_ref, b21_ref, wd2_ref, bd2_ref,
                w2big_ref, b2big_ref, o_ref, *scratch,
                Nb, H, W, Cin, Co2, stride, w_off):
    """benchmodel=2: branch1 = dw3x3->pw, branch2 = pw1->dw3x3->pw2 (both strided).

    The two branch-final 1x1 convs (+BN+ReLU) and the channel shuffle are fused
    into one K=Cin+Co2 matmul (branch1 -> even lanes, branch2 -> odd lanes).
    """
    Ho = (H - 1) // stride + 1
    Wo = (W - 1) // stride + 1
    Mo = Nb * Ho * Wo
    C = 2 * Co2

    xv = x_ref[...]                              # (Nb, H, W, Cin) bf16

    # ---- branch 2 stage 1: pw1 (+folded BN) + ReLU
    h = jnp.dot(xv.reshape(Nb * H * W, Cin), w21_ref[...],
                preferred_element_type=jnp.float32) + b21_ref[...]
    h = jnp.maximum(h, 0.0).reshape(Nb, H, W, Co2)

    # ---- depthwise 3x3 (+folded BN bias) for both branches
    if stride == 1:
        d1 = _dw3x3_s1(xv.astype(jnp.float32), wd1_ref, bd1_ref)
        d2 = _dw3x3_s1(h, wd2_ref, bd2_ref)
    else:
        xp_ref, hp_ref = scratch
        _fill_padded(xp_ref, xv.astype(jnp.float32), H, W, w_off)
        _fill_padded(hp_ref, h, H, W, w_off)
        d1 = _dw3x3_from_padded(xp_ref, wd1_ref, bd1_ref, Nb, H, W, stride, w_off)
        d2 = _dw3x3_from_padded(hp_ref, wd2_ref, bd2_ref, Nb, H, W, stride, w_off)

    # ---- fused branch-final 1x1 convs + BN + ReLU + channel shuffle
    u = jnp.concatenate([d1.reshape(Mo, Cin).astype(jnp.bfloat16),
                         d2.reshape(Mo, Co2).astype(jnp.bfloat16)], axis=-1)
    y = jnp.dot(u, w2big_ref[...], preferred_element_type=jnp.float32) + b2big_ref[...]
    y = jnp.maximum(y, 0.0)

    o_ref[...] = y.reshape(Nb, Ho, Wo, C).astype(o_ref.dtype)


# ------------------------------ pallas wrappers -------------------------------

def _call_bm1(x, p, Nb):
    N, H, W, C = x.shape
    Co2 = C // 2
    assert C % 2 == 0 and Co2 % 128 == 0, "pad channels to a multiple of 256 first"
    assert N % Nb == 0
    kern = functools.partial(_bm1_kernel, Nb=Nb, H=H, W=W, Co2=Co2)
    return pl.pallas_call(
        kern,
        out_shape=jax.ShapeDtypeStruct((N, H, W, C), jnp.bfloat16),
        grid=(N // Nb,),
        in_specs=[
            pl.BlockSpec((Nb, H, W, C), lambda n: (n, 0, 0, 0)),
            pl.BlockSpec((Co2, Co2), lambda n: (0, 0)),
            pl.BlockSpec((1, Co2), lambda n: (0, 0)),
            pl.BlockSpec((9, Co2), lambda n: (0, 0)),
            pl.BlockSpec((1, Co2), lambda n: (0, 0)),
            pl.BlockSpec((C, C), lambda n: (0, 0)),
            pl.BlockSpec((1, C), lambda n: (0, 0)),
        ],
        out_specs=pl.BlockSpec((Nb, H, W, C), lambda n: (n, 0, 0, 0)),
        compiler_params=pltpu.CompilerParams(dimension_semantics=("parallel",)),
    )(x, p["w1"], p["b1"], p["wd"], p["bd"], p["wbig"], p["bbig"])


def _call_bm2(x, p, stride, Nb):
    N, H, W, Cin = x.shape
    Co2 = p["w21"].shape[1]
    C = 2 * Co2
    assert Cin % 128 == 0 and Co2 % 128 == 0, "pad channels to a multiple of 128 first"
    assert N % Nb == 0
    Ho = (H - 1) // stride + 1
    Wo = (W - 1) // stride + 1
    scratch = []
    if stride > 1:
        Hp = stride * Ho + 2
        Wp = W_OFF + _round_up(W + 2, 8)
        scratch = [pltpu.VMEM((Nb, Hp, Wp, Cin), jnp.float32),
                   pltpu.VMEM((Nb, Hp, Wp, Co2), jnp.float32)]
    kern = functools.partial(_bm2_kernel, Nb=Nb, H=H, W=W, Cin=Cin, Co2=Co2,
                             stride=stride, w_off=W_OFF)
    return pl.pallas_call(
        kern,
        out_shape=jax.ShapeDtypeStruct((N, Ho, Wo, C), jnp.bfloat16),
        grid=(N // Nb,),
        in_specs=[
            pl.BlockSpec((Nb, H, W, Cin), lambda n: (n, 0, 0, 0)),
            pl.BlockSpec((9, Cin), lambda n: (0, 0)),
            pl.BlockSpec((1, Cin), lambda n: (0, 0)),
            pl.BlockSpec((Cin, Co2), lambda n: (0, 0)),
            pl.BlockSpec((1, Co2), lambda n: (0, 0)),
            pl.BlockSpec((9, Co2), lambda n: (0, 0)),
            pl.BlockSpec((1, Co2), lambda n: (0, 0)),
            pl.BlockSpec((Cin + Co2, C), lambda n: (0, 0)),
            pl.BlockSpec((1, C), lambda n: (0, 0)),
        ],
        out_specs=pl.BlockSpec((Nb, Ho, Wo, C), lambda n: (n, 0, 0, 0)),
        scratch_shapes=scratch,
        compiler_params=pltpu.CompilerParams(dimension_semantics=("parallel",)),
    )(x, p["wd1"], p["bd1"], p["w21"], p["b21"],
      p["wd2"], p["bd2"], p["w2big"], p["b2big"])


def inverted_residual(x_nhwc, params, *, stride, benchmodel, batch_block=4):
    """Matches InvertedResidual.forward (NHWC bf16 in / NHWC bf16 out)."""
    assert stride in (1, 2) and benchmodel in (1, 2)
    if benchmodel == 1:
        assert stride == 1
        return _call_bm1(x_nhwc, params, batch_block)
    return _call_bm2(x_nhwc, params, stride, batch_block)


# ------------------------- parameters & BN/shuffle folding -------------------------

def _normal(key, shape):
    return 0.1 * jax.random.normal(key, shape, jnp.float32)


def _bn_init(key, C):
    k1, k2, k3, k4 = jax.random.split(key, 4)
    gamma = 1.0 + 0.1 * jax.random.normal(k1, (C,), jnp.float32)
    beta = 0.1 * jax.random.normal(k2, (C,), jnp.float32)
    mean = 0.1 * jax.random.normal(k3, (C,), jnp.float32)
    var = 1.0 + 0.1 * jnp.abs(jax.random.normal(k4, (C,), jnp.float32))
    return gamma, beta, mean, var


def _bn_fold(bn):
    gamma, beta, mean, var = bn
    s = gamma * jax.lax.rsqrt(var + EPS)
    return s, beta - mean * s


def init_bm1_raw(key, inp, oup):
    assert inp == oup
    Co2 = oup // 2
    ks = jax.random.split(key, 6)
    return dict(w1=_normal(ks[0], (Co2, Co2)), bn1=_bn_init(ks[1], Co2),
                wd=_normal(ks[2], (9, Co2)), bnd=_bn_init(ks[3], Co2),
                w2=_normal(ks[4], (Co2, Co2)), bn2=_bn_init(ks[5], Co2))


def init_bm2_raw(key, inp, oup):
    Co2 = oup // 2
    ks = jax.random.split(key, 10)
    return dict(wd1=_normal(ks[0], (9, inp)), bnd1=_bn_init(ks[1], inp),
                w1=_normal(ks[2], (inp, Co2)), bn1=_bn_init(ks[3], Co2),
                w21=_normal(ks[4], (inp, Co2)), bn21=_bn_init(ks[5], Co2),
                wd2=_normal(ks[6], (9, Co2)), bnd2=_bn_init(ks[7], Co2),
                w22=_normal(ks[8], (Co2, Co2)), bn22=_bn_init(ks[9], Co2))


def prep_bm1(raw):
    """Fold BN into weights; fold shuffle + passthrough into one fused matrix."""
    Co2 = raw["w1"].shape[0]
    C = 2 * Co2
    s1, b1 = _bn_fold(raw["bn1"])
    sd, bd = _bn_fold(raw["bnd"])
    s2, b2 = _bn_fold(raw["bn2"])
    w1f = (raw["w1"] * s1[None, :]).astype(jnp.bfloat16)
    wdf = raw["wd"] * sd[None, :]
    w2f = raw["w2"] * s2[None, :]
    # fused final matmul: [x1 | d] @ [[pe],[w2 scattered]]
    # shuffle(groups=2) of concat([x1, branch2]): out[2j]=x1[j], out[2j+1]=branch2[j]
    wbig = jnp.zeros((C, C), jnp.float32)
    wbig = wbig.at[:Co2, 0::2].set(jnp.eye(Co2, dtype=jnp.float32))  # passthrough -> even
    wbig = wbig.at[Co2:, 1::2].set(w2f)                              # branch2 -> odd
    bbig = jnp.zeros((C,), jnp.float32).at[1::2].set(b2)
    return dict(w1=w1f, b1=b1.reshape(1, Co2), wd=wdf, bd=bd.reshape(1, Co2),
                wbig=wbig.astype(jnp.bfloat16), bbig=bbig.reshape(1, C))


def prep_bm2(raw):
    Cin = raw["wd1"].shape[1]
    Co2 = raw["w1"].shape[1]
    C = 2 * Co2
    sd1, bd1 = _bn_fold(raw["bnd1"])
    s1, b1 = _bn_fold(raw["bn1"])
    s21, b21 = _bn_fold(raw["bn21"])
    sd2, bd2 = _bn_fold(raw["bnd2"])
    s22, b22 = _bn_fold(raw["bn22"])
    wd1f = raw["wd1"] * sd1[None, :]
    w1f = raw["w1"] * s1[None, :]                 # (Cin, Co2)
    w21f = (raw["w21"] * s21[None, :]).astype(jnp.bfloat16)
    wd2f = raw["wd2"] * sd2[None, :]
    w22f = raw["w22"] * s22[None, :]              # (Co2, Co2)
    # fused branch-final matmul: [d1 | d2] @ [[w1 scattered],[w22 scattered]]
    # shuffle(groups=2) of concat([branch1, branch2]): branch1 -> even, branch2 -> odd
    w2big = jnp.zeros((Cin + Co2, C), jnp.float32)
    w2big = w2big.at[:Cin, 0::2].set(w1f)
    w2big = w2big.at[Cin:, 1::2].set(w22f)
    b2big = jnp.zeros((C,), jnp.float32).at[0::2].set(b1).at[1::2].set(b22)
    return dict(wd1=wd1f, bd1=bd1.reshape(1, Cin),
                w21=w21f, b21=b21.reshape(1, Co2),
                wd2=wd2f, bd2=bd2.reshape(1, Co2),
                w2big=w2big.astype(jnp.bfloat16), b2big=b2big.reshape(1, C))


# ------------------------------ pure-JAX reference -----------------------------

def _conv1x1_ref(x, w):
    return jnp.einsum("nhwc,cd->nhwd", x, w)


def _dwconv_ref(x, w9c, stride):
    C = x.shape[-1]
    w = w9c.reshape(3, 3, 1, C)
    return jax.lax.conv_general_dilated(
        x, w, window_strides=(stride, stride), padding=((1, 1), (1, 1)),
        dimension_numbers=("NHWC", "HWIO", "NHWC"), feature_group_count=C)


def _shuffle_ref(x, groups=2):
    N, H, W, C = x.shape
    x = x.reshape(N, H, W, groups, C // groups)
    x = jnp.swapaxes(x, 3, 4)
    return x.reshape(N, H, W, C)


def ref_bm1(x, raw):
    C = x.shape[-1]
    Co2 = C // 2
    x1, x2 = x[..., :Co2], x[..., Co2:]
    s, b = _bn_fold(raw["bn1"])
    h = jnp.maximum(_conv1x1_ref(x2, raw["w1"]) * s + b, 0.0)
    s, b = _bn_fold(raw["bnd"])
    d = _dwconv_ref(h, raw["wd"], 1) * s + b
    s, b = _bn_fold(raw["bn2"])
    y = jnp.maximum(_conv1x1_ref(d, raw["w2"]) * s + b, 0.0)
    return _shuffle_ref(jnp.concatenate([x1, y], axis=-1))


def ref_bm2(x, raw, stride):
    s, b = _bn_fold(raw["bnd1"])
    d1 = _dwconv_ref(x, raw["wd1"], stride) * s + b
    s, b = _bn_fold(raw["bn1"])
    y1 = jnp.maximum(_conv1x1_ref(d1, raw["w1"]) * s + b, 0.0)
    s, b = _bn_fold(raw["bn21"])
    h = jnp.maximum(_conv1x1_ref(x, raw["w21"]) * s + b, 0.0)
    s, b = _bn_fold(raw["bnd2"])
    d2 = _dwconv_ref(h, raw["wd2"], stride) * s + b
    s, b = _bn_fold(raw["bn22"])
    y2 = jnp.maximum(_conv1x1_ref(d2, raw["w22"]) * s + b, 0.0)
    return _shuffle_ref(jnp.concatenate([y1, y2], axis=-1))


# ----------------------------------- main ------------------------------------

if __name__ == "__main__":
    key = jax.random.PRNGKey(0)
    kx, kp1, kp2 = jax.random.split(key, 3)

    # benchmodel=2 (downsampling) block: 128 -> 256 channels, stride 2
    # benchmodel=1 block:                256 -> 256 channels, stride 1
    N, H, W = 16, 16, 16
    INP, OUP = 128, 256
    NB = 4                      # images per grid step (raises matmul M, >=4 grid pts)

    x_nchw = jax.random.normal(kx, (N, INP, H, W), jnp.float32)   # NCHW like PyTorch

    raw2 = init_bm2_raw(kp2, INP, OUP)
    raw1 = init_bm1_raw(kp1, OUP, OUP)
    p2 = prep_bm2(raw2)
    p1 = prep_bm1(raw1)

    @jax.jit
    def forward(x):
        xh = jnp.transpose(x, (0, 2, 3, 1)).astype(jnp.bfloat16)            # NCHW -> NHWC bf16
        y = inverted_residual(xh, p2, stride=2, benchmodel=2, batch_block=NB)  # (N, 8, 8, 256)
        y = inverted_residual(y, p1, stride=1, benchmodel=1, batch_block=NB)   # (N, 8, 8, 256)
        return jnp.transpose(y.astype(jnp.float32), (0, 3, 1, 2))            # NHWC -> NCHW f32

    out = forward(x_nchw)
    jax.block_until_ready(out)
    assert out.shape == (N, OUP, H // 2, W // 2), out.shape

    @jax.jit
    def reference(x):
        xh = jnp.transpose(x, (0, 2, 3, 1))
        y = ref_bm2(xh, raw2, 2)
        y = ref_bm1(y, raw1)
        return jnp.transpose(y, (0, 3, 1, 2))

    ref = reference(x_nchw)
    jax.block_until_ready(ref)
    rel_err = jnp.sqrt(jnp.sum((out - ref) ** 2)) / jnp.sqrt(jnp.sum(ref ** 2))
    assert float(rel_err) < 5e-2, f"relative L2 error too large: {float(rel_err)}"

    print("KERNEL_OK")
</pallas_src>

<mosaic_0001>
module attributes {stable_mosaic.version = 11 : i64} {
  func.func @_bm1_kernel(%arg0: i32, %arg1: memref<4x8x8x256xbf16, #tpu.memory_space<vmem>>, %arg2: memref<128x128xbf16, #tpu.memory_space<vmem>>, %arg3: memref<1x128xf32, #tpu.memory_space<vmem>>, %arg4: memref<9x128xf32, #tpu.memory_space<vmem>>, %arg5: memref<1x128xf32, #tpu.memory_space<vmem>>, %arg6: memref<256x256xbf16, #tpu.memory_space<vmem>>, %arg7: memref<1x256xf32, #tpu.memory_space<vmem>>, %arg8: memref<4x8x8x256xbf16, #tpu.memory_space<vmem>>) attributes {dimension_semantics = [#tpu.dimension_semantics<parallel>], iteration_bounds = array<i64: 4>, scalar_prefetch = 0 : i64, scratch_operands = 0 : i64, tpu.core_type = #tpu.core_type<tc>, window_params = [{transform_indices = @transform_0, window_bounds = array<i64: 4, 8, 8, 256>}, {pipeline_mode = #tpu.pipeline_mode<synchronous>, transform_indices = @transform_1, window_bounds = array<i64: 128, 128>}, {pipeline_mode = #tpu.pipeline_mode<synchronous>, transform_indices = @transform_2, window_bounds = array<i64: 1, 128>}, {pipeline_mode = #tpu.pipeline_mode<synchronous>, transform_indices = @transform_3, window_bounds = array<i64: 9, 128>}, {pipeline_mode = #tpu.pipeline_mode<synchronous>, transform_indices = @transform_4, window_bounds = array<i64: 1, 128>}, {pipeline_mode = #tpu.pipeline_mode<synchronous>, transform_indices = @transform_5, window_bounds = array<i64: 256, 256>}, {pipeline_mode = #tpu.pipeline_mode<synchronous>, transform_indices = @transform_6, window_bounds = array<i64: 1, 256>}, {transform_indices = @transform_7, window_bounds = array<i64: 4, 8, 8, 256>}]} {
    %c0 = arith.constant 0 : index
    %c0_0 = arith.constant 0 : index
    %c0_1 = arith.constant 0 : index
    %c0_2 = arith.constant 0 : index
    %0 = vector.load %arg1[%c0, %c0_0, %c0_1, %c0_2] : memref<4x8x8x256xbf16, #tpu.memory_space<vmem>>, vector<4x8x8x256xbf16>
    %1 = vector.extract_strided_slice %0 {offsets = [0, 0, 0, 0], sizes = [4, 8, 8, 128], strides = [1, 1, 1, 1]} : vector<4x8x8x256xbf16> to vector<4x8x8x128xbf16>
    %2 = vector.extract_strided_slice %0 {offsets = [0, 0, 0, 128], sizes = [4, 8, 8, 128], strides = [1, 1, 1, 1]} : vector<4x8x8x256xbf16> to vector<4x8x8x128xbf16>
    %3 = vector.shape_cast %2 : vector<4x8x8x128xbf16> to vector<256x128xbf16>
    %c0_3 = arith.constant 0 : index
    %c0_4 = arith.constant 0 : index
    %4 = vector.load %arg2[%c0_3, %c0_4] : memref<128x128xbf16, #tpu.memory_space<vmem>>, vector<128x128xbf16>
    %cst = arith.constant dense<0.000000e+00> : vector<256x128xf32>
    %5 = tpu.matmul %3, %4, %cst {dimension_numbers = #tpu.dot_dimension_numbers<[1], [0], [0], [1], [0, 0, 1, 1], [], []>} : vector<256x128xbf16>, vector<128x128xbf16>, vector<256x128xf32> -> vector<256x128xf32>
    %c0_5 = arith.constant 0 : index
    %c0_6 = arith.constant 0 : index
    %6 = vector.load %arg3[%c0_5, %c0_6] : memref<1x128xf32, #tpu.memory_space<vmem>>, vector<1x128xf32>
    %7 = vector.broadcast %6 : vector<1x128xf32> to vector<256x128xf32>
    %8 = arith.addf %5, %7 : vector<256x128xf32>
    %cst_7 = arith.constant 0.000000e+00 : f32
    %9 = vector.broadcast %cst_7 : f32 to vector<256x128xf32>
    %10 = arith.maximumf %8, %9 : vector<256x128xf32>
    %11 = vector.shape_cast %10 : vector<256x128xf32> to vector<4x8x8x128xf32>
    %cst_8 = arith.constant 0.000000e+00 : f32
    %12 = vector.broadcast %cst_8 : f32 to vector<4x1x8x128xf32>
    %13 = vector.extract_strided_slice %11 {offsets = [0, 0, 0, 0], sizes = [4, 7, 8, 128], strides = [1, 1, 1, 1]} : vector<4x8x8x128xf32> to vector<4x7x8x128xf32>
    %14 = tpu.concatenate %12, %13 in 1 : vector<4x1x8x128xf32>, vector<4x7x8x128xf32> -> vector<4x8x8x128xf32>
    %cst_9 = arith.constant 0.000000e+00 : f32
    %15 = vector.broadcast %cst_9 : f32 to vector<4x8x1x128xf32>
    %16 = vector.extract_strided_slice %14 {offsets = [0, 0, 0, 0], sizes = [4, 8, 7, 128], strides = [1, 1, 1, 1]} : vector<4x8x8x128xf32> to vector<4x8x7x128xf32>
    %17 = tpu.concatenate %15, %16 in 2 : vector<4x8x1x128xf32>, vector<4x8x7x128xf32> -> vector<4x8x8x128xf32>
    %c0_10 = arith.constant 0 : index
    %c0_11 = arith.constant 0 : index
    %18 = vector.load %arg4[%c0_10, %c0_11] : memref<9x128xf32, #tpu.memory_space<vmem>>, vector<1x128xf32>
    %19 = vector.shape_cast %18 : vector<1x128xf32> to vector<128xf32>
    %20 = vector.shape_cast %19 : vector<128xf32> to vector<1x1x1x128xf32>
    %21 = vector.broadcast %20 : vector<1x1x1x128xf32> to vector<4x8x8x128xf32>
    %22 = arith.mulf %17, %21 : vector<4x8x8x128xf32>
    %c1 = arith.constant 1 : index
    %c0_12 = arith.constant 0 : index
    %23 = vector.load %arg4[%c1, %c0_12] : memref<9x128xf32, #tpu.memory_space<vmem>>, vector<1x128xf32>
    %24 = vector.shape_cast %23 : vector<1x128xf32> to vector<128xf32>
    %25 = vector.shape_cast %24 : vector<128xf32> to vector<1x1x1x128xf32>
    %26 = vector.broadcast %25 : vector<1x1x1x128xf32> to vector<4x8x8x128xf32>
    %27 = arith.mulf %14, %26 : vector<4x8x8x128xf32>
    %28 = arith.addf %22, %27 : vector<4x8x8x128xf32>
    %cst_13 = arith.constant 0.000000e+00 : f32
    %29 = vector.broadcast %cst_13 : f32 to vector<4x8x1x128xf32>
    %30 = vector.extract_strided_slice %14 {offsets = [0, 0, 1, 0], sizes = [4, 8, 7, 128], strides = [1, 1, 1, 1]} : vector<4x8x8x128xf32> to vector<4x8x7x128xf32>
    %31 = tpu.concatenate %30, %29 in 2 : vector<4x8x7x128xf32>, vector<4x8x1x128xf32> -> vector<4x8x8x128xf32>
    %c2 = arith.constant 2 : index
    %c0_14 = arith.constant 0 : index
    %32 = vector.load %arg4[%c2, %c0_14] : memref<9x128xf32, #tpu.memory_space<vmem>>, vector<1x128xf32>
    %33 = vector.shape_cast %32 : vector<1x128xf32> to vector<128xf32>
    %34 = vector.shape_cast %33 : vector<128xf32> to vector<1x1x1x128xf32>
    %35 = vector.broadcast %34 : vector<1x1x1x128xf32> to vector<4x8x8x128xf32>
    %36 = arith.mulf %31, %35 : vector<4x8x8x128xf32>
    %37 = arith.addf %28, %36 : vector<4x8x8x128xf32>
    %cst_15 = arith.constant 0.000000e+00 : f32
    %38 = vector.broadcast %cst_15 : f32 to vector<4x8x1x128xf32>
    %39 = vector.extract_strided_slice %11 {offsets = [0, 0, 0, 0], sizes = [4, 8, 7, 128], strides = [1, 1, 1, 1]} : vector<4x8x8x128xf32> to vector<4x8x7x128xf32>
    %40 = tpu.concatenate %38, %39 in 2 : vector<4x8x1x128xf32>, vector<4x8x7x128xf32> -> vector<4x8x8x128xf32>
    %c3 = arith.constant 3 : index
    %c0_16 = arith.constant 0 : index
    %41 = vector.load %arg4[%c3, %c0_16] : memref<9x128xf32, #tpu.memory_space<vmem>>, vector<1x128xf32>
    %42 = vector.shape_cast %41 : vector<1x128xf32> to vector<128xf32>
    %43 = vector.shape_cast %42 : vector<128xf32> to vector<1x1x1x128xf32>
    %44 = vector.broadcast %43 : vector<1x1x1x128xf32> to vector<4x8x8x128xf32>
    %45 = arith.mulf %40, %44 : vector<4x8x8x128xf32>
    %46 = arith.addf %37, %45 : vector<4x8x8x128xf32>
    %c4 = arith.constant 4 : index
    %c0_17 = arith.constant 0 : index
    %47 = vector.load %arg4[%c4, %c0_17] : memref<9x128xf32, #tpu.memory_space<vmem>>, vector<1x128xf32>
    %48 = vector.shape_cast %47 : vector<1x128xf32> to vector<128xf32>
    %49 = vector.shape_cast %48 : vector<128xf32> to vector<1x1x1x128xf32>
    %50 = vector.broadcast %49 : vector<1x1x1x128xf32> to vector<4x8x8x128xf32>
    %51 = arith.mulf %11, %50 : vector<4x8x8x128xf32>
    %52 = arith.addf %46, %51 : vector<4x8x8x128xf32>
    %cst_18 = arith.constant 0.000000e+00 : f32
    %53 = vector.broadcast %cst_18 : f32 to vector<4x8x1x128xf32>
    %54 = vector.extract_strided_slice %11 {offsets = [0, 0, 1, 0], sizes = [4, 8, 7, 128], strides = [1, 1, 1, 1]} : vector<4x8x8x128xf32> to vector<4x8x7x128xf32>
    %55 = tpu.concatenate %54, %53 in 2 : vector<4x8x7x128xf32>, vector<4x8x1x128xf32> -> vector<4x8x8x128xf32>
    %c5 = arith.constant 5 : index
    %c0_19 = arith.constant 0 : index
    %56 = vector.load %arg4[%c5, %c0_19] : memref<9x128xf32, #tpu.memory_space<vmem>>, vector<1x128xf32>
    %57 = vector.shape_cast %56 : vector<1x128xf32> to vector<128xf32>
    %58 = vector.shape_cast %57 : vector<128xf32> to vector<1x1x1x128xf32>
    %59 = vector.broadcast %58 : vector<1x1x1x128xf32> to vector<4x8x8x128xf32>
    %60 = arith.mulf %55, %59 : vector<4x8x8x128xf32>
    %61 = arith.addf %52, %60 : vector<4x8x8x128xf32>
    %cst_20 = arith.constant 0.000000e+00 : f32
    %62 = vector.broadcast %cst_20 : f32 to vector<4x1x8x128xf32>
    %63 = vector.extract_strided_slice %11 {offsets = [0, 1, 0, 0], sizes = [4, 7, 8, 128], strides = [1, 1, 1, 1]} : vector<4x8x8x128xf32> to vector<4x7x8x128xf32>
    %64 = tpu.concatenate %63, %62 in 1 : vector<4x7x8x128xf32>, vector<4x1x8x128xf32> -> vector<4x8x8x128xf32>
    %cst_21 = arith.constant 0.000000e+00 : f32
    %65 = vector.broadcast %cst_21 : f32 to vector<4x8x1x128xf32>
    %66 = vector.extract_strided_slice %64 {offsets = [0, 0, 0, 0], sizes = [4, 8, 7, 128], strides = [1, 1, 1, 1]} : vector<4x8x8x128xf32> to vector<4x8x7x128xf32>
    %67 = tpu.concatenate %65, %66 in 2 : vector<4x8x1x128xf32>, vector<4x8x7x128xf32> -> vector<4x8x8x128xf32>
    %c6 = arith.constant 6 : index
    %c0_22 = arith.constant 0 : index
    %68 = vector.load %arg4[%c6, %c0_22] : memref<9x128xf32, #tpu.memory_space<vmem>>, vector<1x128xf32>
    %69 = vector.shape_cast %68 : vector<1x128xf32> to vector<128xf32>
    %70 = vector.shape_cast %69 : vector<128xf32> to vector<1x1x1x128xf32>
    %71 = vector.broadcast %70 : vector<1x1x1x128xf32> to vector<4x8x8x128xf32>
    %72 = arith.mulf %67, %71 : vector<4x8x8x128xf32>
    %73 = arith.addf %61, %72 : vector<4x8x8x128xf32>
    %c7 = arith.constant 7 : index
    %c0_23 = arith.constant 0 : index
    %74 = vector.load %arg4[%c7, %c0_23] : memref<9x128xf32, #tpu.memory_space<vmem>>, vector<1x128xf32>
    %75 = vector.shape_cast %74 : vector<1x128xf32> to vector<128xf32>
    %76 = vector.shape_cast %75 : vector<128xf32> to vector<1x1x1x128xf32>
    %77 = vector.broadcast %76 : vector<1x1x1x128xf32> to vector<4x8x8x128xf32>
    %78 = arith.mulf %64, %77 : vector<4x8x8x128xf32>
    %79 = arith.addf %73, %78 : vector<4x8x8x128xf32>
    %cst_24 = arith.constant 0.000000e+00 : f32
    %80 = vector.broadcast %cst_24 : f32 to vector<4x8x1x128xf32>
    %81 = vector.extract_strided_slice %64 {offsets = [0, 0, 1, 0], sizes = [4, 8, 7, 128], strides = [1, 1, 1, 1]} : vector<4x8x8x128xf32> to vector<4x8x7x128xf32>
    %82 = tpu.concatenate %81, %80 in 2 : vector<4x8x7x128xf32>, vector<4x8x1x128xf32> -> vector<4x8x8x128xf32>
    %c8 = arith.constant 8 : index
    %c0_25 = arith.constant 0 : index
    %83 = vector.load %arg4[%c8, %c0_25] : memref<9x128xf32, #tpu.memory_space<vmem>>, vector<1x128xf32>
    %84 = vector.shape_cast %83 : vector<1x128xf32> to vector<128xf32>
    %85 = vector.shape_cast %84 : vector<128xf32> to vector<1x1x1x128xf32>
    %86 = vector.broadcast %85 : vector<1x1x1x128xf32> to vector<4x8x8x128xf32>
    %87 = arith.mulf %82, %86 : vector<4x8x8x128xf32>
    %88 = arith.addf %79, %87 : vector<4x8x8x128xf32>
    %c0_26 = arith.constant 0 : index
    %c0_27 = arith.constant 0 : index
    %89 = vector.load %arg5[%c0_26, %c0_27] : memref<1x128xf32, #tpu.memory_space<vmem>>, vector<1x128xf32>
    %90 = vector.shape_cast %89 : vector<1x128xf32> to vector<128xf32>
    %91 = vector.shape_cast %90 : vector<128xf32> to vector<1x1x1x128xf32>
    %92 = vector.broadcast %91 : vector<1x1x1x128xf32> to vector<4x8x8x128xf32>
    %93 = arith.addf %88, %92 : vector<4x8x8x128xf32>
    %94 = vector.shape_cast %1 : vector<4x8x8x128xbf16> to vector<256x128xbf16>
    %95 = vector.shape_cast %93 : vector<4x8x8x128xf32> to vector<256x128xf32>
    %96 = arith.truncf %95 : vector<256x128xf32> to vector<256x128xbf16>
    %97 = tpu.concatenate %94, %96 in 1 : vector<256x128xbf16>, vector<256x128xbf16> -> vector<256x256xbf16>
    %c0_28 = arith.constant 0 : index
    %c0_29 = arith.constant 0 : index
    %98 = vector.load %arg6[%c0_28, %c0_29] : memref<256x256xbf16, #tpu.memory_space<vmem>>, vector<256x256xbf16>
    %cst_30 = arith.constant dense<0.000000e+00> : vector<256x256xf32>
    %99 = tpu.matmul %97, %98, %cst_30 {dimension_numbers = #tpu.dot_dimension_numbers<[1], [0], [0], [1], [0, 0, 1, 1], [], []>} : vector<256x256xbf16>, vector<256x256xbf16>, vector<256x256xf32> -> vector<256x256xf32>
    %c0_31 = arith.constant 0 : index
    %c0_32 = arith.constant 0 : index
    %100 = vector.load %arg7[%c0_31, %c0_32] : memref<1x256xf32, #tpu.memory_space<vmem>>, vector<1x256xf32>
    %101 = vector.broadcast %100 : vector<1x256xf32> to vector<256x256xf32>
    %102 = arith.addf %99, %101 : vector<256x256xf32>
    %103 = tpu.iota {dimensions = array<i32: 1>} : vector<256x256xi32>
    %c1_i32 = arith.constant 1 : i32
    %104 = vector.broadcast %c1_i32 : i32 to vector<256x256xi32>
    %105 = arith.andi %103, %104 : vector<256x256xi32>
    %c1_i32_33 = arith.constant 1 : i32
    %106 = vector.broadcast %c1_i32_33 : i32 to vector<256x256xi32>
    %107 = arith.cmpi eq, %105, %106 : vector<256x256xi32>
    %cst_34 = arith.constant 0.000000e+00 : f32
    %108 = vector.broadcast %cst_34 : f32 to vector<256x256xf32>
    %109 = arith.maximumf %102, %108 : vector<256x256xf32>
    %110 = arith.select %107, %109, %102 : vector<256x256xi1>, vector<256x256xf32>
    %111 = vector.shape_cast %110 : vector<256x256xf32> to vector<4x8x8x256xf32>
    %112 = arith.truncf %111 : vector<4x8x8x256xf32> to vector<4x8x8x256xbf16>
    %c0_35 = arith.constant 0 : index
    %c0_36 = arith.constant 0 : index
    %c0_37 = arith.constant 0 : index
    %c0_38 = arith.constant 0 : index
    %113 = vector.load %arg8[%c0_35, %c0_36, %c0_37, %c0_38] : memref<4x8x8x256xbf16, #tpu.memory_space<vmem>>, vector<4x8x8x256xbf16>
    tpu.vector_store %arg8[%c0_35, %c0_36, %c0_37, %c0_38], %112 {strides = array<i32>} : memref<4x8x8x256xbf16, #tpu.memory_space<vmem>>, vector<4x8x8x256xbf16>,
    return
  }
  func.func @transform_0(%arg0: i32) -> (i32, i32, i32, i32) {
    %c0_i32 = arith.constant 0 : i32
    %c0_i32_0 = arith.constant 0 : i32
    %c0_i32_1 = arith.constant 0 : i32
    %c0_i32_2 = arith.constant 0 : i32
    return %arg0, %c0_i32, %c0_i32_0, %c0_i32_1 : i32, i32, i32, i32
  }
  func.func @transform_1(%arg0: i32) -> (i32, i32) {
    %c0_i32 = arith.constant 0 : i32
    %c0_i32_0 = arith.constant 0 : i32
    %c0_i32_1 = arith.constant 0 : i32
    return %c0_i32, %c0_i32_0 : i32, i32
  }
  func.func @transform_2(%arg0: i32) -> (i32, i32) {
    %c0_i32 = arith.constant 0 : i32
    %c0_i32_0 = arith.constant 0 : i32
    %c0_i32_1 = arith.constant 0 : i32
    return %c0_i32, %c0_i32_0 : i32, i32
  }
  func.func @transform_3(%arg0: i32) -> (i32, i32) {
    %c0_i32 = arith.constant 0 : i32
    %c0_i32_0 = arith.constant 0 : i32
    %c0_i32_1 = arith.constant 0 : i32
    return %c0_i32, %c0_i32_0 : i32, i32
  }
  func.func @transform_4(%arg0: i32) -> (i32, i32) {
    %c0_i32 = arith.constant 0 : i32
    %c0_i32_0 = arith.constant 0 : i32
    %c0_i32_1 = arith.constant 0 : i32
    return %c0_i32, %c0_i32_0 : i32, i32
  }
  func.func @transform_5(%arg0: i32) -> (i32, i32) {
    %c0_i32 = arith.constant 0 : i32
    %c0_i32_0 = arith.constant 0 : i32
    %c0_i32_1 = arith.constant 0 : i32
    return %c0_i32, %c0_i32_0 : i32, i32
  }
  func.func @transform_6(%arg0: i32) -> (i32, i32) {
    %c0_i32 = arith.constant 0 : i32
    %c0_i32_0 = arith.constant 0 : i32
    %c0_i32_1 = arith.constant 0 : i32
    return %c0_i32, %c0_i32_0 : i32, i32
  }
  func.func @transform_7(%arg0: i32) -> (i32, i32, i32, i32) {
    %c0_i32 = arith.constant 0 : i32
    %c0_i32_0 = arith.constant 0 : i32
    %c0_i32_1 = arith.constant 0 : i32
    %c0_i32_2 = arith.constant 0 : i32
    return %arg0, %c0_i32, %c0_i32_0, %c0_i32_1 : i32, i32, i32, i32
  }
}

module attributes {stable_mosaic.version = 11 : i64} {
  func.func @_bm2_kernel(%arg0: i32, %arg1: memref<4x16x16x128xbf16, #tpu.memory_space<vmem>>, %arg2: memref<9x128xf32, #tpu.memory_space<vmem>>, %arg3: memref<1x128xf32, #tpu.memory_space<vmem>>, %arg4: memref<128x128xbf16, #tpu.memory_space<vmem>>, %arg5: memref<1x128xf32, #tpu.memory_space<vmem>>, %arg6: memref<9x128xf32, #tpu.memory_space<vmem>>, %arg7: memref<1x128xf32, #tpu.memory_space<vmem>>, %arg8: memref<256x256xbf16, #tpu.memory_space<vmem>>, %arg9: memref<1x256xf32, #tpu.memory_space<vmem>>, %arg10: memref<4x8x8x256xbf16, #tpu.memory_space<vmem>>, %arg11: memref<4x18x32x128xf32, #tpu.memory_space<vmem>>, %arg12: memref<4x18x32x128xf32, #tpu.memory_space<vmem>>) attributes {dimension_semantics = [#tpu.dimension_semantics<parallel>], iteration_bounds = array<i64: 4>, scalar_prefetch = 0 : i64, scratch_operands = 2 : i64, tpu.core_type = #tpu.core_type<tc>, window_params = [{transform_indices = @transform_0, window_bounds = array<i64: 4, 16, 16, 128>}, {pipeline_mode = #tpu.pipeline_mode<synchronous>, transform_indices = @transform_1, window_bounds = array<i64: 9, 128>}, {pipeline_mode = #tpu.pipeline_mode<synchronous>, transform_indices = @transform_2, window_bounds = array<i64: 1, 128>}, {pipeline_mode = #tpu.pipeline_mode<synchronous>, transform_indices = @transform_3, window_bounds = array<i64: 128, 128>}, {pipeline_mode = #tpu.pipeline_mode<synchronous>, transform_indices = @transform_4, window_bounds = array<i64: 1, 128>}, {pipeline_mode = #tpu.pipeline_mode<synchronous>, transform_indices = @transform_5, window_bounds = array<i64: 9, 128>}, {pipeline_mode = #tpu.pipeline_mode<synchronous>, transform_indices = @transform_6, window_bounds = array<i64: 1, 128>}, {pipeline_mode = #tpu.pipeline_mode<synchronous>, transform_indices = @transform_7, window_bounds = array<i64: 256, 256>}, {pipeline_mode = #tpu.pipeline_mode<synchronous>, transform_indices = @transform_8, window_bounds = array<i64: 1, 256>}, {transform_indices = @transform_9, window_bounds = array<i64: 4, 8, 8, 256>}]} {
    %c0 = arith.constant 0 : index
    %c0_0 = arith.constant 0 : index
    %c0_1 = arith.constant 0 : index
    %c0_2 = arith.constant 0 : index
    %0 = vector.load %arg1[%c0, %c0_0, %c0_1, %c0_2] : memref<4x16x16x128xbf16, #tpu.memory_space<vmem>>, vector<4x16x16x128xbf16>
    %1 = vector.shape_cast %0 : vector<4x16x16x128xbf16> to vector<1024x128xbf16>
    %c0_3 = arith.constant 0 : index
    %c0_4 = arith.constant 0 : index
    %2 = vector.load %arg4[%c0_3, %c0_4] : memref<128x128xbf16, #tpu.memory_space<vmem>>, vector<128x128xbf16>
    %cst = arith.constant dense<0.000000e+00> : vector<1024x128xf32>
    %3 = tpu.matmul %1, %2, %cst {dimension_numbers = #tpu.dot_dimension_numbers<[1], [0], [0], [1], [0, 0, 1, 1], [], []>} : vector<1024x128xbf16>, vector<128x128xbf16>, vector<1024x128xf32> -> vector<1024x128xf32>
    %c0_5 = arith.constant 0 : index
    %c0_6 = arith.constant 0 : index
    %4 = vector.load %arg5[%c0_5, %c0_6] : memref<1x128xf32, #tpu.memory_space<vmem>>, vector<1x128xf32>
    %5 = vector.broadcast %4 : vector<1x128xf32> to vector<1024x128xf32>
    %6 = arith.addf %3, %5 : vector<1024x128xf32>
    %cst_7 = arith.constant 0.000000e+00 : f32
    %7 = vector.broadcast %cst_7 : f32 to vector<1024x128xf32>
    %8 = arith.maximumf %6, %7 : vector<1024x128xf32>
    %9 = vector.shape_cast %8 : vector<1024x128xf32> to vector<4x16x16x128xf32>
    %10 = arith.extf %0 : vector<4x16x16x128xbf16> to vector<4x16x16x128xf32>
    %cst_8 = arith.constant 0.000000e+00 : f32
    %11 = vector.broadcast %cst_8 : f32 to vector<4x1x32x128xf32>
    %c0_9 = arith.constant 0 : index
    %c0_10 = arith.constant 0 : index
    %c0_11 = arith.constant 0 : index
    %c0_12 = arith.constant 0 : index
    %12 = vector.load %arg11[%c0_9, %c0_10, %c0_11, %c0_12] : memref<4x18x32x128xf32, #tpu.memory_space<vmem>>, vector<4x1x32x128xf32>
    tpu.vector_store %arg11[%c0_9, %c0_10, %c0_11, %c0_12], %11 {strides = array<i32>} : memref<4x18x32x128xf32, #tpu.memory_space<vmem>>, vector<4x1x32x128xf32>,
    %c0_13 = arith.constant 0 : index
    %c17 = arith.constant 17 : index
    %c0_14 = arith.constant 0 : index
    %c0_15 = arith.constant 0 : index
    %13 = vector.load %arg11[%c0_13, %c17, %c0_14, %c0_15] : memref<4x18x32x128xf32, #tpu.memory_space<vmem>>, vector<4x1x32x128xf32>
    tpu.vector_store %arg11[%c0_13, %c17, %c0_14, %c0_15], %11 {strides = array<i32>} : memref<4x18x32x128xf32, #tpu.memory_space<vmem>>, vector<4x1x32x128xf32>,
    %cst_16 = arith.constant 0.000000e+00 : f32
    %14 = vector.broadcast %cst_16 : f32 to vector<4x16x1x128xf32>
    %c0_17 = arith.constant 0 : index
    %c1 = arith.constant 1 : index
    %c7 = arith.constant 7 : index
    %c0_18 = arith.constant 0 : index
    %15 = vector.load %arg11[%c0_17, %c1, %c7, %c0_18] : memref<4x18x32x128xf32, #tpu.memory_space<vmem>>, vector<4x16x1x128xf32>
    tpu.vector_store %arg11[%c0_17, %c1, %c7, %c0_18], %14 {strides = array<i32>} : memref<4x18x32x128xf32, #tpu.memory_space<vmem>>, vector<4x16x1x128xf32>,
    %c0_19 = arith.constant 0 : index
    %c1_20 = arith.constant 1 : index
    %c24 = arith.constant 24 : index
    %c0_21 = arith.constant 0 : index
    %16 = vector.load %arg11[%c0_19, %c1_20, %c24, %c0_21] : memref<4x18x32x128xf32, #tpu.memory_space<vmem>>, vector<4x16x1x128xf32>
    tpu.vector_store %arg11[%c0_19, %c1_20, %c24, %c0_21], %14 {strides = array<i32>} : memref<4x18x32x128xf32, #tpu.memory_space<vmem>>, vector<4x16x1x128xf32>,
    %c0_22 = arith.constant 0 : index
    %c1_23 = arith.constant 1 : index
    %c8 = arith.constant 8 : index
    %c0_24 = arith.constant 0 : index
    %17 = vector.load %arg11[%c0_22, %c1_23, %c8, %c0_24] : memref<4x18x32x128xf32, #tpu.memory_space<vmem>>, vector<4x16x16x128xf32>
    tpu.vector_store %arg11[%c0_22, %c1_23, %c8, %c0_24], %10 {strides = array<i32>} : memref<4x18x32x128xf32, #tpu.memory_space<vmem>>, vector<4x16x16x128xf32>,
    %cst_25 = arith.constant 0.000000e+00 : f32
    %18 = vector.broadcast %cst_25 : f32 to vector<4x1x32x128xf32>
    %c0_26 = arith.constant 0 : index
    %c0_27 = arith.constant 0 : index
    %c0_28 = arith.constant 0 : index
    %c0_29 = arith.constant 0 : index
    %19 = vector.load %arg12[%c0_26, %c0_27, %c0_28, %c0_29] : memref<4x18x32x128xf32, #tpu.memory_space<vmem>>, vector<4x1x32x128xf32>
    tpu.vector_store %arg12[%c0_26, %c0_27, %c0_28, %c0_29], %18 {strides = array<i32>} : memref<4x18x32x128xf32, #tpu.memory_space<vmem>>, vector<4x1x32x128xf32>,
    %c0_30 = arith.constant 0 : index
    %c17_31 = arith.constant 17 : index
    %c0_32 = arith.constant 0 : index
    %c0_33 = arith.constant 0 : index
    %20 = vector.load %arg12[%c0_30, %c17_31, %c0_32, %c0_33] : memref<4x18x32x128xf32, #tpu.memory_space<vmem>>, vector<4x1x32x128xf32>
    tpu.vector_store %arg12[%c0_30, %c17_31, %c0_32, %c0_33], %18 {strides = array<i32>} : memref<4x18x32x128xf32, #tpu.memory_space<vmem>>, vector<4x1x32x128xf32>,
    %cst_34 = arith.constant 0.000000e+00 : f32
    %21 = vector.broadcast %cst_34 : f32 to vector<4x16x1x128xf32>
    %c0_35 = arith.constant 0 : index
    %c1_36 = arith.constant 1 : index
    %c7_37 = arith.constant 7 : index
    %c0_38 = arith.constant 0 : index
    %22 = vector.load %arg12[%c0_35, %c1_36, %c7_37, %c0_38] : memref<4x18x32x128xf32, #tpu.memory_space<vmem>>, vector<4x16x1x128xf32>
    tpu.vector_store %arg12[%c0_35, %c1_36, %c7_37, %c0_38], %21 {strides = array<i32>} : memref<4x18x32x128xf32, #tpu.memory_space<vmem>>, vector<4x16x1x128xf32>,
    %c0_39 = arith.constant 0 : index
    %c1_40 = arith.constant 1 : index
    %c24_41 = arith.constant 24 : index
    %c0_42 = arith.constant 0 : index
    %23 = vector.load %arg12[%c0_39, %c1_40, %c24_41, %c0_42] : memref<4x18x32x128xf32, #tpu.memory_space<vmem>>, vector<4x16x1x128xf32>
    tpu.vector_store %arg12[%c0_39, %c1_40, %c24_41, %c0_42], %21 {strides = array<i32>} : memref<4x18x32x128xf32, #tpu.memory_space<vmem>>, vector<4x16x1x128xf32>,
    %c0_43 = arith.constant 0 : index
    %c1_44 = arith.constant 1 : index
    %c8_45 = arith.constant 8 : index
    %c0_46 = arith.constant 0 : index
    %24 = vector.load %arg12[%c0_43, %c1_44, %c8_45, %c0_46] : memref<4x18x32x128xf32, #tpu.memory_space<vmem>>, vector<4x16x16x128xf32>
    tpu.vector_store %arg12[%c0_43, %c1_44, %c8_45, %c0_46], %9 {strides = array<i32>} : memref<4x18x32x128xf32, #tpu.memory_space<vmem>>, vector<4x16x16x128xf32>,
    %c0_47 = arith.constant 0 : index
    %c0_48 = arith.constant 0 : index
    %c7_49 = arith.constant 7 : index
    %c0_50 = arith.constant 0 : index
    %25 = tpu.strided_load %arg11[%c0_47, %c0_48, %c7_49, %c0_50] {strides = array<i32: 1, 1, 2, 1>} : memref<4x18x32x128xf32, #tpu.memory_space<vmem>>, vector<4x16x8x128xf32>
    %26 = vector.shape_cast %25 : vector<4x16x8x128xf32> to vector<4x8x2x8x128xf32>
    %27 = vector.extract_strided_slice %26 {offsets = [0, 0, 0, 0, 0], sizes = [4, 8, 1, 8, 128], strides = [1, 1, 1, 1, 1]} : vector<4x8x2x8x128xf32> to vector<4x8x1x8x128xf32>
    %28 = vector.shape_cast %27 : vector<4x8x1x8x128xf32> to vector<4x8x8x128xf32>
    %c0_51 = arith.constant 0 : index
    %c0_52 = arith.constant 0 : index
    %29 = vector.load %arg2[%c0_51, %c0_52] : memref<9x128xf32, #tpu.memory_space<vmem>>, vector<1x128xf32>
    %30 = vector.shape_cast %29 : vector<1x128xf32> to vector<128xf32>
    %31 = vector.shape_cast %30 : vector<128xf32> to vector<1x1x1x128xf32>
    %32 = vector.broadcast %31 : vector<1x1x1x128xf32> to vector<4x8x8x128xf32>
    %33 = arith.mulf %28, %32 : vector<4x8x8x128xf32>
    %c0_53 = arith.constant 0 : index
    %c0_54 = arith.constant 0 : index
    %c8_55 = arith.constant 8 : index
    %c0_56 = arith.constant 0 : index
    %34 = tpu.strided_load %arg11[%c0_53, %c0_54, %c8_55, %c0_56] {strides = array<i32: 1, 1, 2, 1>} : memref<4x18x32x128xf32, #tpu.memory_space<vmem>>, vector<4x16x8x128xf32>
    %35 = vector.shape_cast %34 : vector<4x16x8x128xf32> to vector<4x8x2x8x128xf32>
    %36 = vector.extract_strided_slice %35 {offsets = [0, 0, 0, 0, 0], sizes = [4, 8, 1, 8, 128], strides = [1, 1, 1, 1, 1]} : vector<4x8x2x8x128xf32> to vector<4x8x1x8x128xf32>
    %37 = vector.shape_cast %36 : vector<4x8x1x8x128xf32> to vector<4x8x8x128xf32>
    %c1_57 = arith.constant 1 : index
    %c0_58 = arith.constant 0 : index
    %38 = vector.load %arg2[%c1_57, %c0_58] : memref<9x128xf32, #tpu.memory_space<vmem>>, vector<1x128xf32>
    %39 = vector.shape_cast %38 : vector<1x128xf32> to vector<128xf32>
    %40 = vector.shape_cast %39 : vector<128xf32> to vector<1x1x1x128xf32>
    %41 = vector.broadcast %40 : vector<1x1x1x128xf32> to vector<4x8x8x128xf32>
    %42 = arith.mulf %37, %41 : vector<4x8x8x128xf32>
    %43 = arith.addf %33, %42 : vector<4x8x8x128xf32>
    %c0_59 = arith.constant 0 : index
    %c0_60 = arith.constant 0 : index
    %c9 = arith.constant 9 : index
    %c0_61 = arith.constant 0 : index
    %44 = tpu.strided_load %arg11[%c0_59, %c0_60, %c9, %c0_61] {strides = array<i32: 1, 1, 2, 1>} : memref<4x18x32x128xf32, #tpu.memory_space<vmem>>, vector<4x16x8x128xf32>
    %45 = vector.shape_cast %44 : vector<4x16x8x128xf32> to vector<4x8x2x8x128xf32>
    %46 = vector.extract_strided_slice %45 {offsets = [0, 0, 0, 0, 0], sizes = [4, 8, 1, 8, 128], strides = [1, 1, 1, 1, 1]} : vector<4x8x2x8x128xf32> to vector<4x8x1x8x128xf32>
    %47 = vector.shape_cast %46 : vector<4x8x1x8x128xf32> to vector<4x8x8x128xf32>
    %c2 = arith.constant 2 : index
    %c0_62 = arith.constant 0 : index
    %48 = vector.load %arg2[%c2, %c0_62] : memref<9x128xf32, #tpu.memory_space<vmem>>, vector<1x128xf32>
    %49 = vector.shape_cast %48 : vector<1x128xf32> to vector<128xf32>
    %50 = vector.shape_cast %49 : vector<128xf32> to vector<1x1x1x128xf32>
    %51 = vector.broadcast %50 : vector<1x1x1x128xf32> to vector<4x8x8x128xf32>
    %52 = arith.mulf %47, %51 : vector<4x8x8x128xf32>
    %53 = arith.addf %43, %52 : vector<4x8x8x128xf32>
    %c0_63 = arith.constant 0 : index
    %c1_64 = arith.constant 1 : index
    %c7_65 = arith.constant 7 : index
    %c0_66 = arith.constant 0 : index
    %54 = tpu.strided_load %arg11[%c0_63, %c1_64, %c7_65, %c0_66] {strides = array<i32: 1, 1, 2, 1>} : memref<4x18x32x128xf32, #tpu.memory_space<vmem>>, vector<4x16x8x128xf32>
    %55 = vector.shape_cast %54 : vector<4x16x8x128xf32> to vector<4x8x2x8x128xf32>
    %56 = vector.extract_strided_slice %55 {offsets = [0, 0, 0, 0, 0], sizes = [4, 8, 1, 8, 128], strides = [1, 1, 1, 1, 1]} : vector<4x8x2x8x128xf32> to vector<4x8x1x8x128xf32>
    %57 = vector.shape_cast %56 : vector<4x8x1x8x128xf32> to vector<4x8x8x128xf32>
    %c3 = arith.constant 3 : index
    %c0_67 = arith.constant 0 : index
    %58 = vector.load %arg2[%c3, %c0_67] : memref<9x128xf32, #tpu.memory_space<vmem>>, vector<1x128xf32>
    %59 = vector.shape_cast %58 : vector<1x128xf32> to vector<128xf32>
    %60 = vector.shape_cast %59 : vector<128xf32> to vector<1x1x1x128xf32>
    %61 = vector.broadcast %60 : vector<1x1x1x128xf32> to vector<4x8x8x128xf32>
    %62 = arith.mulf %57, %61 : vector<4x8x8x128xf32>
    %63 = arith.addf %53, %62 : vector<4x8x8x128xf32>
    %c0_68 = arith.constant 0 : index
    %c1_69 = arith.constant 1 : index
    %c8_70 = arith.constant 8 : index
    %c0_71 = arith.constant 0 : index
    %64 = tpu.strided_load %arg11[%c0_68, %c1_69, %c8_70, %c0_71] {strides = array<i32: 1, 1, 2, 1>} : memref<4x18x32x128xf32, #tpu.memory_space<vmem>>, vector<4x16x8x128xf32>
    %65 = vector.shape_cast %64 : vector<4x16x8x128xf32> to vector<4x8x2x8x128xf32>
    %66 = vector.extract_strided_slice %65 {offsets = [0, 0, 0, 0, 0], sizes = [4, 8, 1, 8, 128], strides = [1, 1, 1, 1, 1]} : vector<4x8x2x8x128xf32> to vector<4x8x1x8x128xf32>
    %67 = vector.shape_cast %66 : vector<4x8x1x8x128xf32> to vector<4x8x8x128xf32>
    %c4 = arith.constant 4 : index
    %c0_72 = arith.constant 0 : index
    %68 = vector.load %arg2[%c4, %c0_72] : memref<9x128xf32, #tpu.memory_space<vmem>>, vector<1x128xf32>
    %69 = vector.shape_cast %68 : vector<1x128xf32> to vector<128xf32>
    %70 = vector.shape_cast %69 : vector<128xf32> to vector<1x1x1x128xf32>
    %71 = vector.broadcast %70 : vector<1x1x1x128xf32> to vector<4x8x8x128xf32>
    %72 = arith.mulf %67, %71 : vector<4x8x8x128xf32>
    %73 = arith.addf %63, %72 : vector<4x8x8x128xf32>
    %c0_73 = arith.constant 0 : index
    %c1_74 = arith.constant 1 : index
    %c9_75 = arith.constant 9 : index
    %c0_76 = arith.constant 0 : index
    %74 = tpu.strided_load %arg11[%c0_73, %c1_74, %c9_75, %c0_76] {strides = array<i32: 1, 1, 2, 1>} : memref<4x18x32x128xf32, #tpu.memory_space<vmem>>, vector<4x16x8x128xf32>
    %75 = vector.shape_cast %74 : vector<4x16x8x128xf32> to vector<4x8x2x8x128xf32>
    %76 = vector.extract_strided_slice %75 {offsets = [0, 0, 0, 0, 0], sizes = [4, 8, 1, 8, 128], strides = [1, 1, 1, 1, 1]} : vector<4x8x2x8x128xf32> to vector<4x8x1x8x128xf32>
    %77 = vector.shape_cast %76 : vector<4x8x1x8x128xf32> to vector<4x8x8x128xf32>
    %c5 = arith.constant 5 : index
    %c0_77 = arith.constant 0 : index
    %78 = vector.load %arg2[%c5, %c0_77] : memref<9x128xf32, #tpu.memory_space<vmem>>, vector<1x128xf32>
    %79 = vector.shape_cast %78 : vector<1x128xf32> to vector<128xf32>
    %80 = vector.shape_cast %79 : vector<128xf32> to vector<1x1x1x128xf32>
    %81 = vector.broadcast %80 : vector<1x1x1x128xf32> to vector<4x8x8x128xf32>
    %82 = arith.mulf %77, %81 : vector<4x8x8x128xf32>
    %83 = arith.addf %73, %82 : vector<4x8x8x128xf32>
    %c0_78 = arith.constant 0 : index
    %c2_79 = arith.constant 2 : index
    %c7_80 = arith.constant 7 : index
    %c0_81 = arith.constant 0 : index
    %84 = tpu.strided_load %arg11[%c0_78, %c2_79, %c7_80, %c0_81] {strides = array<i32: 1, 1, 2, 1>} : memref<4x18x32x128xf32, #tpu.memory_space<vmem>>, vector<4x16x8x128xf32>
    %85 = vector.shape_cast %84 : vector<4x16x8x128xf32> to vector<4x8x2x8x128xf32>
    %86 = vector.extract_strided_slice %85 {offsets = [0, 0, 0, 0, 0], sizes = [4, 8, 1, 8, 128], strides = [1, 1, 1, 1, 1]} : vector<4x8x2x8x128xf32> to vector<4x8x1x8x128xf32>
    %87 = vector.shape_cast %86 : vector<4x8x1x8x128xf32> to vector<4x8x8x128xf32>
    %c6 = arith.constant 6 : index
    %c0_82 = arith.constant 0 : index
    %88 = vector.load %arg2[%c6, %c0_82] : memref<9x128xf32, #tpu.memory_space<vmem>>, vector<1x128xf32>
    %89 = vector.shape_cast %88 : vector<1x128xf32> to vector<128xf32>
    %90 = vector.shape_cast %89 : vector<128xf32> to vector<1x1x1x128xf32>
    %91 = vector.broadcast %90 : vector<1x1x1x128xf32> to vector<4x8x8x128xf32>
    %92 = arith.mulf %87, %91 : vector<4x8x8x128xf32>
    %93 = arith.addf %83, %92 : vector<4x8x8x128xf32>
    %c0_83 = arith.constant 0 : index
    %c2_84 = arith.constant 2 : index
    %c8_85 = arith.constant 8 : index
    %c0_86 = arith.constant 0 : index
    %94 = tpu.strided_load %arg11[%c0_83, %c2_84, %c8_85, %c0_86] {strides = array<i32: 1, 1, 2, 1>} : memref<4x18x32x128xf32, #tpu.memory_space<vmem>>, vector<4x16x8x128xf32>
    %95 = vector.shape_cast %94 : vector<4x16x8x128xf32> to vector<4x8x2x8x128xf32>
    %96 = vector.extract_strided_slice %95 {offsets = [0, 0, 0, 0, 0], sizes = [4, 8, 1, 8, 128], strides = [1, 1, 1, 1, 1]} : vector<4x8x2x8x128xf32> to vector<4x8x1x8x128xf32>
    %97 = vector.shape_cast %96 : vector<4x8x1x8x128xf32> to vector<4x8x8x128xf32>
    %c7_87 = arith.constant 7 : index
    %c0_88 = arith.constant 0 : index
    %98 = vector.load %arg2[%c7_87, %c0_88] : memref<9x128xf32, #tpu.memory_space<vmem>>, vector<1x128xf32>
    %99 = vector.shape_cast %98 : vector<1x128xf32> to vector<128xf32>
    %100 = vector.shape_cast %99 : vector<128xf32> to vector<1x1x1x128xf32>
    %101 = vector.broadcast %100 : vector<1x1x1x128xf32> to vector<4x8x8x128xf32>
    %102 = arith.mulf %97, %101 : vector<4x8x8x128xf32>
    %103 = arith.addf %93, %102 : vector<4x8x8x128xf32>
    %c0_89 = arith.constant 0 : index
    %c2_90 = arith.constant 2 : index
    %c9_91 = arith.constant 9 : index
    %c0_92 = arith.constant 0 : index
    %104 = tpu.strided_load %arg11[%c0_89, %c2_90, %c9_91, %c0_92] {strides = array<i32: 1, 1, 2, 1>} : memref<4x18x32x128xf32, #tpu.memory_space<vmem>>, vector<4x16x8x128xf32>
    %105 = vector.shape_cast %104 : vector<4x16x8x128xf32> to vector<4x8x2x8x128xf32>
    %106 = vector.extract_strided_slice %105 {offsets = [0, 0, 0, 0, 0], sizes = [4, 8, 1, 8, 128], strides = [1, 1, 1, 1, 1]} : vector<4x8x2x8x128xf32> to vector<4x8x1x8x128xf32>
    %107 = vector.shape_cast %106 : vector<4x8x1x8x128xf32> to vector<4x8x8x128xf32>
    %c8_93 = arith.constant 8 : index
    %c0_94 = arith.constant 0 : index
    %108 = vector.load %arg2[%c8_93, %c0_94] : memref<9x128xf32, #tpu.memory_space<vmem>>, vector<1x128xf32>
    %109 = vector.shape_cast %108 : vector<1x128xf32> to vector<128xf32>
    %110 = vector.shape_cast %109 : vector<128xf32> to vector<1x1x1x128xf32>
    %111 = vector.broadcast %110 : vector<1x1x1x128xf32> to vector<4x8x8x128xf32>
    %112 = arith.mulf %107, %111 : vector<4x8x8x128xf32>
    %113 = arith.addf %103, %112 : vector<4x8x8x128xf32>
    %c0_95 = arith.constant 0 : index
    %c0_96 = arith.constant 0 : index
    %114 = vector.load %arg3[%c0_95, %c0_96] : memref<1x128xf32, #tpu.memory_space<vmem>>, vector<1x128xf32>
    %115 = vector.shape_cast %114 : vector<1x128xf32> to vector<128xf32>
    %116 = vector.shape_cast %115 : vector<128xf32> to vector<1x1x1x128xf32>
    %117 = vector.broadcast %116 : vector<1x1x1x128xf32> to vector<4x8x8x128xf32>
    %118 = arith.addf %113, %117 : vector<4x8x8x128xf32>
    %c0_97 = arith.constant 0 : index
    %c0_98 = arith.constant 0 : index
    %c7_99 = arith.constant 7 : index
    %c0_100 = arith.constant 0 : index
    %119 = tpu.strided_load %arg12[%c0_97, %c0_98, %c7_99, %c0_100] {strides = array<i32: 1, 1, 2, 1>} : memref<4x18x32x128xf32, #tpu.memory_space<vmem>>, vector<4x16x8x128xf32>
    %120 = vector.shape_cast %119 : vector<4x16x8x128xf32> to vector<4x8x2x8x128xf32>
    %121 = vector.extract_strided_slice %120 {offsets = [0, 0, 0, 0, 0], sizes = [4, 8, 1, 8, 128], strides = [1, 1, 1, 1, 1]} : vector<4x8x2x8x128xf32> to vector<4x8x1x8x128xf32>
    %122 = vector.shape_cast %121 : vector<4x8x1x8x128xf32> to vector<4x8x8x128xf32>
    %c0_101 = arith.constant 0 : index
    %c0_102 = arith.constant 0 : index
    %123 = vector.load %arg6[%c0_101, %c0_102] : memref<9x128xf32, #tpu.memory_space<vmem>>, vector<1x128xf32>
    %124 = vector.shape_cast %123 : vector<1x128xf32> to vector<128xf32>
    %125 = vector.shape_cast %124 : vector<128xf32> to vector<1x1x1x128xf32>
    %126 = vector.broadcast %125 : vector<1x1x1x128xf32> to vector<4x8x8x128xf32>
    %127 = arith.mulf %122, %126 : vector<4x8x8x128xf32>
    %c0_103 = arith.constant 0 : index
    %c0_104 = arith.constant 0 : index
    %c8_105 = arith.constant 8 : index
    %c0_106 = arith.constant 0 : index
    %128 = tpu.strided_load %arg12[%c0_103, %c0_104, %c8_105, %c0_106] {strides = array<i32: 1, 1, 2, 1>} : memref<4x18x32x128xf32, #tpu.memory_space<vmem>>, vector<4x16x8x128xf32>
    %129 = vector.shape_cast %128 : vector<4x16x8x128xf32> to vector<4x8x2x8x128xf32>
    %130 = vector.extract_strided_slice %129 {offsets = [0, 0, 0, 0, 0], sizes = [4, 8, 1, 8, 128], strides = [1, 1, 1, 1, 1]} : vector<4x8x2x8x128xf32> to vector<4x8x1x8x128xf32>
    %131 = vector.shape_cast %130 : vector<4x8x1x8x128xf32> to vector<4x8x8x128xf32>
    %c1_107 = arith.constant 1 : index
    %c0_108 = arith.constant 0 : index
    %132 = vector.load %arg6[%c1_107, %c0_108] : memref<9x128xf32, #tpu.memory_space<vmem>>, vector<1x128xf32>
    %133 = vector.shape_cast %132 : vector<1x128xf32> to vector<128xf32>
    %134 = vector.shape_cast %133 : vector<128xf32> to vector<1x1x1x128xf32>
    %135 = vector.broadcast %134 : vector<1x1x1x128xf32> to vector<4x8x8x128xf32>
    %136 = arith.mulf %131, %135 : vector<4x8x8x128xf32>
    %137 = arith.addf %127, %136 : vector<4x8x8x128xf32>
    %c0_109 = arith.constant 0 : index
    %c0_110 = arith.constant 0 : index
    %c9_111 = arith.constant 9 : index
    %c0_112 = arith.constant 0 : index
    %138 = tpu.strided_load %arg12[%c0_109, %c0_110, %c9_111, %c0_112] {strides = array<i32: 1, 1, 2, 1>} : memref<4x18x32x128xf32, #tpu.memory_space<vmem>>, vector<4x16x8x128xf32>
    %139 = vector.shape_cast %138 : vector<4x16x8x128xf32> to vector<4x8x2x8x128xf32>
    %140 = vector.extract_strided_slice %139 {offsets = [0, 0, 0, 0, 0], sizes = [4, 8, 1, 8, 128], strides = [1, 1, 1, 1, 1]} : vector<4x8x2x8x128xf32> to vector<4x8x1x8x128xf32>
    %141 = vector.shape_cast %140 : vector<4x8x1x8x128xf32> to vector<4x8x8x128xf32>
    %c2_113 = arith.constant 2 : index
    %c0_114 = arith.constant 0 : index
    %142 = vector.load %arg6[%c2_113, %c0_114] : memref<9x128xf32, #tpu.memory_space<vmem>>, vector<1x128xf32>
    %143 = vector.shape_cast %142 : vector<1x128xf32> to vector<128xf32>
    %144 = vector.shape_cast %143 : vector<128xf32> to vector<1x1x1x128xf32>
    %145 = vector.broadcast %144 : vector<1x1x1x128xf32> to vector<4x8x8x128xf32>
    %146 = arith.mulf %141, %145 : vector<4x8x8x128xf32>
    %147 = arith.addf %137, %146 : vector<4x8x8x128xf32>
    %c0_115 = arith.constant 0 : index
    %c1_116 = arith.constant 1 : index
    %c7_117 = arith.constant 7 : index
    %c0_118 = arith.constant 0 : index
    %148 = tpu.strided_load %arg12[%c0_115, %c1_116, %c7_117, %c0_118] {strides = array<i32: 1, 1, 2, 1>} : memref<4x18x32x128xf32, #tpu.memory_space<vmem>>, vector<4x16x8x128xf32>
    %149 = vector.shape_cast %148 : vector<4x16x8x128xf32> to vector<4x8x2x8x128xf32>
    %150 = vector.extract_strided_slice %149 {offsets = [0, 0, 0, 0, 0], sizes = [4, 8, 1, 8, 128], strides = [1, 1, 1, 1, 1]} : vector<4x8x2x8x128xf32> to vector<4x8x1x8x128xf32>
    %151 = vector.shape_cast %150 : vector<4x8x1x8x128xf32> to vector<4x8x8x128xf32>
    %c3_119 = arith.constant 3 : index
    %c0_120 = arith.constant 0 : index
    %152 = vector.load %arg6[%c3_119, %c0_120] : memref<9x128xf32, #tpu.memory_space<vmem>>, vector<1x128xf32>
    %153 = vector.shape_cast %152 : vector<1x128xf32> to vector<128xf32>
    %154 = vector.shape_cast %153 : vector<128xf32> to vector<1x1x1x128xf32>
    %155 = vector.broadcast %154 : vector<1x1x1x128xf32> to vector<4x8x8x128xf32>
    %156 = arith.mulf %151, %155 : vector<4x8x8x128xf32>
    %157 = arith.addf %147, %156 : vector<4x8x8x128xf32>
    %c0_121 = arith.constant 0 : index
    %c1_122 = arith.constant 1 : index
    %c8_123 = arith.constant 8 : index
    %c0_124 = arith.constant 0 : index
    %158 = tpu.strided_load %arg12[%c0_121, %c1_122, %c8_123, %c0_124] {strides = array<i32: 1, 1, 2, 1>} : memref<4x18x32x128xf32, #tpu.memory_space<vmem>>, vector<4x16x8x128xf32>
    %159 = vector.shape_cast %158 : vector<4x16x8x128xf32> to vector<4x8x2x8x128xf32>
    %160 = vector.extract_strided_slice %159 {offsets = [0, 0, 0, 0, 0], sizes = [4, 8, 1, 8, 128], strides = [1, 1, 1, 1, 1]} : vector<4x8x2x8x128xf32> to vector<4x8x1x8x128xf32>
    %161 = vector.shape_cast %160 : vector<4x8x1x8x128xf32> to vector<4x8x8x128xf32>
    %c4_125 = arith.constant 4 : index
    %c0_126 = arith.constant 0 : index
    %162 = vector.load %arg6[%c4_125, %c0_126] : memref<9x128xf32, #tpu.memory_space<vmem>>, vector<1x128xf32>
    %163 = vector.shape_cast %162 : vector<1x128xf32> to vector<128xf32>
    %164 = vector.shape_cast %163 : vector<128xf32> to vector<1x1x1x128xf32>
    %165 = vector.broadcast %164 : vector<1x1x1x128xf32> to vector<4x8x8x128xf32>
    %166 = arith.mulf %161, %165 : vector<4x8x8x128xf32>
    %167 = arith.addf %157, %166 : vector<4x8x8x128xf32>
    %c0_127 = arith.constant 0 : index
    %c1_128 = arith.constant 1 : index
    %c9_129 = arith.constant 9 : index
    %c0_130 = arith.constant 0 : index
    %168 = tpu.strided_load %arg12[%c0_127, %c1_128, %c9_129, %c0_130] {strides = array<i32: 1, 1, 2, 1>} : memref<4x18x32x128xf32, #tpu.memory_space<vmem>>, vector<4x16x8x128xf32>
    %169 = vector.shape_cast %168 : vector<4x16x8x128xf32> to vector<4x8x2x8x128xf32>
    %170 = vector.extract_strided_slice %169 {offsets = [0, 0, 0, 0, 0], sizes = [4, 8, 1, 8, 128], strides = [1, 1, 1, 1, 1]} : vector<4x8x2x8x128xf32> to vector<4x8x1x8x128xf32>
    %171 = vector.shape_cast %170 : vector<4x8x1x8x128xf32> to vector<4x8x8x128xf32>
    %c5_131 = arith.constant 5 : index
    %c0_132 = arith.constant 0 : index
    %172 = vector.load %arg6[%c5_131, %c0_132] : memref<9x128xf32, #tpu.memory_space<vmem>>, vector<1x128xf32>
    %173 = vector.shape_cast %172 : vector<1x128xf32> to vector<128xf32>
    %174 = vector.shape_cast %173 : vector<128xf32> to vector<1x1x1x128xf32>
    %175 = vector.broadcast %174 : vector<1x1x1x128xf32> to vector<4x8x8x128xf32>
    %176 = arith.mulf %171, %175 : vector<4x8x8x128xf32>
    %177 = arith.addf %167, %176 : vector<4x8x8x128xf32>
    %c0_133 = arith.constant 0 : index
    %c2_134 = arith.constant 2 : index
    %c7_135 = arith.constant 7 : index
    %c0_136 = arith.constant 0 : index
    %178 = tpu.strided_load %arg12[%c0_133, %c2_134, %c7_135, %c0_136] {strides = array<i32: 1, 1, 2, 1>} : memref<4x18x32x128xf32, #tpu.memory_space<vmem>>, vector<4x16x8x128xf32>
    %179 = vector.shape_cast %178 : vector<4x16x8x128xf32> to vector<4x8x2x8x128xf32>
    %180 = vector.extract_strided_slice %179 {offsets = [0, 0, 0, 0, 0], sizes = [4, 8, 1, 8, 128], strides = [1, 1, 1, 1, 1]} : vector<4x8x2x8x128xf32> to vector<4x8x1x8x128xf32>
    %181 = vector.shape_cast %180 : vector<4x8x1x8x128xf32> to vector<4x8x8x128xf32>
    %c6_137 = arith.constant 6 : index
    %c0_138 = arith.constant 0 : index
    %182 = vector.load %arg6[%c6_137, %c0_138] : memref<9x128xf32, #tpu.memory_space<vmem>>, vector<1x128xf32>
    %183 = vector.shape_cast %182 : vector<1x128xf32> to vector<128xf32>
    %184 = vector.shape_cast %183 : vector<128xf32> to vector<1x1x1x128xf32>
    %185 = vector.broadcast %184 : vector<1x1x1x128xf32> to vector<4x8x8x128xf32>
    %186 = arith.mulf %181, %185 : vector<4x8x8x128xf32>
    %187 = arith.addf %177, %186 : vector<4x8x8x128xf32>
    %c0_139 = arith.constant 0 : index
    %c2_140 = arith.constant 2 : index
    %c8_141 = arith.constant 8 : index
    %c0_142 = arith.constant 0 : index
    %188 = tpu.strided_load %arg12[%c0_139, %c2_140, %c8_141, %c0_142] {strides = array<i32: 1, 1, 2, 1>} : memref<4x18x32x128xf32, #tpu.memory_space<vmem>>, vector<4x16x8x128xf32>
    %189 = vector.shape_cast %188 : vector<4x16x8x128xf32> to vector<4x8x2x8x128xf32>
    %190 = vector.extract_strided_slice %189 {offsets = [0, 0, 0, 0, 0], sizes = [4, 8, 1, 8, 128], strides = [1, 1, 1, 1, 1]} : vector<4x8x2x8x128xf32> to vector<4x8x1x8x128xf32>
    %191 = vector.shape_cast %190 : vector<4x8x1x8x128xf32> to vector<4x8x8x128xf32>
    %c7_143 = arith.constant 7 : index
    %c0_144 = arith.constant 0 : index
    %192 = vector.load %arg6[%c7_143, %c0_144] : memref<9x128xf32, #tpu.memory_space<vmem>>, vector<1x128xf32>
    %193 = vector.shape_cast %192 : vector<1x128xf32> to vector<128xf32>
    %194 = vector.shape_cast %193 : vector<128xf32> to vector<1x1x1x128xf32>
    %195 = vector.broadcast %194 : vector<1x1x1x128xf32> to vector<4x8x8x128xf32>
    %196 = arith.mulf %191, %195 : vector<4x8x8x128xf32>
    %197 = arith.addf %187, %196 : vector<4x8x8x128xf32>
    %c0_145 = arith.constant 0 : index
    %c2_146 = arith.constant 2 : index
    %c9_147 = arith.constant 9 : index
    %c0_148 = arith.constant 0 : index
    %198 = tpu.strided_load %arg12[%c0_145, %c2_146, %c9_147, %c0_148] {strides = array<i32: 1, 1, 2, 1>} : memref<4x18x32x128xf32, #tpu.memory_space<vmem>>, vector<4x16x8x128xf32>
    %199 = vector.shape_cast %198 : vector<4x16x8x128xf32> to vector<4x8x2x8x128xf32>
    %200 = vector.extract_strided_slice %199 {offsets = [0, 0, 0, 0, 0], sizes = [4, 8, 1, 8, 128], strides = [1, 1, 1, 1, 1]} : vector<4x8x2x8x128xf32> to vector<4x8x1x8x128xf32>
    %201 = vector.shape_cast %200 : vector<4x8x1x8x128xf32> to vector<4x8x8x128xf32>
    %c8_149 = arith.constant 8 : index
    %c0_150 = arith.constant 0 : index
    %202 = vector.load %arg6[%c8_149, %c0_150] : memref<9x128xf32, #tpu.memory_space<vmem>>, vector<1x128xf32>
    %203 = vector.shape_cast %202 : vector<1x128xf32> to vector<128xf32>
    %204 = vector.shape_cast %203 : vector<128xf32> to vector<1x1x1x128xf32>
    %205 = vector.broadcast %204 : vector<1x1x1x128xf32> to vector<4x8x8x128xf32>
    %206 = arith.mulf %201, %205 : vector<4x8x8x128xf32>
    %207 = arith.addf %197, %206 : vector<4x8x8x128xf32>
    %c0_151 = arith.constant 0 : index
    %c0_152 = arith.constant 0 : index
    %208 = vector.load %arg7[%c0_151, %c0_152] : memref<1x128xf32, #tpu.memory_space<vmem>>, vector<1x128xf32>
    %209 = vector.shape_cast %208 : vector<1x128xf32> to vector<128xf32>
    %210 = vector.shape_cast %209 : vector<128xf32> to vector<1x1x1x128xf32>
    %211 = vector.broadcast %210 : vector<1x1x1x128xf32> to vector<4x8x8x128xf32>
    %212 = arith.addf %207, %211 : vector<4x8x8x128xf32>
    %213 = vector.shape_cast %118 : vector<4x8x8x128xf32> to vector<256x128xf32>
    %214 = arith.truncf %213 : vector<256x128xf32> to vector<256x128xbf16>
    %215 = vector.shape_cast %212 : vector<4x8x8x128xf32> to vector<256x128xf32>
    %216 = arith.truncf %215 : vector<256x128xf32> to vector<256x128xbf16>
    %217 = tpu.concatenate %214, %216 in 1 : vector<256x128xbf16>, vector<256x128xbf16> -> vector<256x256xbf16>
    %c0_153 = arith.constant 0 : index
    %c0_154 = arith.constant 0 : index
    %218 = vector.load %arg8[%c0_153, %c0_154] : memref<256x256xbf16, #tpu.memory_space<vmem>>, vector<256x256xbf16>
    %cst_155 = arith.constant dense<0.000000e+00> : vector<256x256xf32>
    %219 = tpu.matmul %217, %218, %cst_155 {dimension_numbers = #tpu.dot_dimension_numbers<[1], [0], [0], [1], [0, 0, 1, 1], [], []>} : vector<256x256xbf16>, vector<256x256xbf16>, vector<256x256xf32> -> vector<256x256xf32>
    %c0_156 = arith.constant 0 : index
    %c0_157 = arith.constant 0 : index
    %220 = vector.load %arg9[%c0_156, %c0_157] : memref<1x256xf32, #tpu.memory_space<vmem>>, vector<1x256xf32>
    %221 = vector.broadcast %220 : vector<1x256xf32> to vector<256x256xf32>
    %222 = arith.addf %219, %221 : vector<256x256xf32>
    %cst_158 = arith.constant 0.000000e+00 : f32
    %223 = vector.broadcast %cst_158 : f32 to vector<256x256xf32>
    %224 = arith.maximumf %222, %223 : vector<256x256xf32>
    %225 = vector.shape_cast %224 : vector<256x256xf32> to vector<4x8x8x256xf32>
    %226 = arith.truncf %225 : vector<4x8x8x256xf32> to vector<4x8x8x256xbf16>
    %c0_159 = arith.constant 0 : index
    %c0_160 = arith.constant 0 : index
    %c0_161 = arith.constant 0 : index
    %c0_162 = arith.constant 0 : index
    %227 = vector.load %arg10[%c0_159, %c0_160, %c0_161, %c0_162] : memref<4x8x8x256xbf16, #tpu.memory_space<vmem>>, vector<4x8x8x256xbf16>
    tpu.vector_store %arg10[%c0_159, %c0_160, %c0_161, %c0_162], %226 {strides = array<i32>} : memref<4x8x8x256xbf16, #tpu.memory_space<vmem>>, vector<4x8x8x256xbf16>,
    return
  }
  func.func @transform_0(%arg0: i32) -> (i32, i32, i32, i32) {
    %c0_i32 = arith.constant 0 : i32
    %c0_i32_0 = arith.constant 0 : i32
    %c0_i32_1 = arith.constant 0 : i32
    %c0_i32_2 = arith.constant 0 : i32
    return %arg0, %c0_i32, %c0_i32_0, %c0_i32_1 : i32, i32, i32, i32
  }
  func.func @transform_1(%arg0: i32) -> (i32, i32) {
    %c0_i32 = arith.constant 0 : i32
    %c0_i32_0 = arith.constant 0 : i32
    %c0_i32_1 = arith.constant 0 : i32
    return %c0_i32, %c0_i32_0 : i32, i32
  }
  func.func @transform_2(%arg0: i32) -> (i32, i32) {
    %c0_i32 = arith.constant 0 : i32
    %c0_i32_0 = arith.constant 0 : i32
    %c0_i32_1 = arith.constant 0 : i32
    return %c0_i32, %c0_i32_0 : i32, i32
  }
  func.func @transform_3(%arg0: i32) -> (i32, i32) {
    %c0_i32 = arith.constant 0 : i32
    %c0_i32_0 = arith.constant 0 : i32
    %c0_i32_1 = arith.constant 0 : i32
    return %c0_i32, %c0_i32_0 : i32, i32
  }
  func.func @transform_4(%arg0: i32) -> (i32, i32) {
    %c0_i32 = arith.constant 0 : i32
    %c0_i32_0 = arith.constant 0 : i32
    %c0_i32_1 = arith.constant 0 : i32
    return %c0_i32, %c0_i32_0 : i32, i32
  }
  func.func @transform_5(%arg0: i32) -> (i32, i32) {
    %c0_i32 = arith.constant 0 : i32
    %c0_i32_0 = arith.constant 0 : i32
    %c0_i32_1 = arith.constant 0 : i32
    return %c0_i32, %c0_i32_0 : i32, i32
  }
  func.func @transform_6(%arg0: i32) -> (i32, i32) {
    %c0_i32 = arith.constant 0 : i32
    %c0_i32_0 = arith.constant 0 : i32
    %c0_i32_1 = arith.constant 0 : i32
    return %c0_i32, %c0_i32_0 : i32, i32
  }
  func.func @transform_7(%arg0: i32) -> (i32, i32) {
    %c0_i32 = arith.constant 0 : i32
    %c0_i32_0 = arith.constant 0 : i32
    %c0_i32_1 = arith.constant 0 : i32
    return %c0_i32, %c0_i32_0 : i32, i32
  }
  func.func @transform_8(%arg0: i32) -> (i32, i32) {
    %c0_i32 = arith.constant 0 : i32
    %c0_i32_0 = arith.constant 0 : i32
    %c0_i32_1 = arith.constant 0 : i32
    return %c0_i32, %c0_i32_0 : i32, i32
  }
  func.func @transform_9(%arg0: i32) -> (i32, i32, i32, i32) {
    %c0_i32 = arith.constant 0 : i32
    %c0_i32_0 = arith.constant 0 : i32
    %c0_i32_1 = arith.constant 0 : i32
    %c0_i32_2 = arith.constant 0 : i32
    return %arg0, %c0_i32, %c0_i32_0, %c0_i32_1 : i32, i32, i32, i32
  }
}

</mosaic_0001>

<llo_original>
// kernel: forward.3
$region0: #{forward.3}
  #allocation0 [shape = 'u32[]', space=smem, size = 0x4, offset = 0x4, fixed_abs, tag = 'smem constant byte address 0x4 - core index']
  #allocation1 [shape = 'u32[144,128]{1,0:T(1,128)}', space=vmem, size = 0x12000, scoped, tag = 'internal scratch']
  %s0 = inlined_call_operand.vmem [shape: bf16[16,8,8,256], index: 0, kind: input, shape index: {}]
  %s1 = inlined_call_operand.vmem [shape: bf16[128,128], index: 1, kind: input, shape index: {}]
  %s2 = inlined_call_operand.vmem [shape: f32[1,128], index: 2, kind: input, shape index: {}]
  %s3 = inlined_call_operand.vmem [shape: f32[9,128], index: 3, kind: input, shape index: {}]
  %s4 = inlined_call_operand.vmem [shape: f32[1,128], index: 4, kind: input, shape index: {}]
  %s5 = inlined_call_operand.vmem [shape: bf16[256,256], index: 5, kind: input, shape index: {}]
  %s6 = inlined_call_operand.vmem [shape: f32[1,256], index: 6, kind: input, shape index: {}]
  %s7 = inlined_call_operand.vmem [shape: bf16[16,8,8,256], index: 7, kind: output, shape index: {}]
  %s8 = sld [smem:[#allocation0]]
  $region61: #{forward.3} parent=0
    _
  %s10 = ssub.s32 1, %s8
  %s11 = scalar_select 0, %s10, %s8
  loop: start=0, step=1, limit=6
  $region2: #{forward.3} parent=0 // loop_pre_header
    _
  $region3: #{forward.3} parent=0 // loop_header
    %s13 = sphi 0, %s17
    %p14 = scmp.ge.s32.totalorder %s13, 6
    %s23 = sphi 0, %s25
    %s26 = sphi 0, %s23
    %s27 = sphi 0, %s26
    %s43 = sphi 0, %s27
    %s47 = sphi 0, %s47
    %s49 = sphi 0, %s47
    %s50 = sphi 0, %s49
    %s64 = sphi 0, %s50
    %s68 = sphi 0, %s68
    %s70 = sphi 0, %s68
    %s71 = sphi 0, %s70
    %s85 = sphi 0, %s71
    %s89 = sphi 0, %s89
    %s91 = sphi 0, %s89
    %s92 = sphi 0, %s91
    %s106 = sphi 0, %s92
    %s110 = sphi 0, %s110
    %s112 = sphi 0, %s110
    %s113 = sphi 0, %s112
    %s127 = sphi 0, %s113
    %s131 = sphi 0, %s131
    %s133 = sphi 0, %s131
    %s134 = sphi 0, %s133
    %s148 = sphi 0, %s134
    %s152 = sphi 0, %s152
    %s154 = sphi 0, %s152
    %s155 = sphi 0, %s154
    %s169 = sphi 0, %s155
    %s175 = sphi 0, %s177
    %s178 = sphi 0, %s175
    %s179 = sphi 0, %s178
    %s195 = sphi 0, %s179
  $region4: #{forward.3} parent=0 // loop_header_branch
    %16 = sbr.rel (%p14) target = $region8
  $region5: #{forward.3} parent=0 // loop_body
    %s18 = ssub.s32 %s13, 1
    %s19 = ssub.s32 %s13, 2
    %s20 = sadd.s32 %s13, 1
    %s21 = ssub.s32 %s13, %s20
    %p22 = scmp.eq.s32.totalorder %s21, 0
    %s24 = sadd.s32 %s23, 1
    %s25 = scalar_select %p22, %s23, %s24
    %p28 = pneg %p22
    %p29 = scmp.eq.s32.totalorder %s13, 3
    %p30 = por %p28, %p29
    %p31 = scmp.ne.s32.totalorder %s23, %s26
    %p32 = scmp.eq.s32.totalorder %s13, 0
    %p33 = por %p31, %p32
    %p34 = scmp.ne.s32.totalorder %s23, %s26
    %p35 = scmp.eq.s32.totalorder %s18, 3
    %p36 = por %p34, %p35
    %p37 = scmp.ne.s32.totalorder %s26, %s27
    %p38 = scmp.eq.s32.totalorder %s18, 0
    %p39 = por %p37, %p38
    %p40 = scmp.ne.s32.totalorder %s26, %s27
    %p41 = scmp.eq.s32.totalorder %s19, 3
    %p42 = por %p40, %p41
    %p44 = scmp.ne.s32.totalorder %s27, %s43
    %p45 = scmp.eq.s32.totalorder %s19, 0
    %p46 = por %p44, %p45
    %s48 = sadd.s32 %s47, 1
    %p51 = scmp.eq.s32.totalorder %s13, 3
    %p52 = scmp.ne.s32.totalorder %s47, %s49
    %p53 = scmp.eq.s32.totalorder %s13, 0
    %p54 = por %p52, %p53
    %p55 = scmp.ne.s32.totalorder %s47, %s49
    %p56 = scmp.eq.s32.totalorder %s18, 3
    %p57 = por %p55, %p56
    %p58 = scmp.ne.s32.totalorder %s49, %s50
    %p59 = scmp.eq.s32.totalorder %s18, 0
    %p60 = por %p58, %p59
    %p61 = scmp.ne.s32.totalorder %s49, %s50
    %p62 = scmp.eq.s32.totalorder %s19, 3
    %p63 = por %p61, %p62
    %p65 = scmp.ne.s32.totalorder %s50, %s64
    %p66 = scmp.eq.s32.totalorder %s19, 0
    %p67 = por %p65, %p66
    %s69 = sadd.s32 %s68, 1
    %p72 = scmp.eq.s32.totalorder %s13, 3
    %p73 = scmp.ne.s32.totalorder %s68, %s70
    %p74 = scmp.eq.s32.totalorder %s13, 0
    %p75 = por %p73, %p74
    %p76 = scmp.ne.s32.totalorder %s68, %s70
    %p77 = scmp.eq.s32.totalorder %s18, 3
    %p78 = por %p76, %p77
    %p79 = scmp.ne.s32.totalorder %s70, %s71
    %p80 = scmp.eq.s32.totalorder %s18, 0
    %p81 = por %p79, %p80
    %p82 = scmp.ne.s32.totalorder %s70, %s71
    %p83 = scmp.eq.s32.totalorder %s19, 3
    %p84 = por %p82, %p83
    %p86 = scmp.ne.s32.totalorder %s71, %s85
    %p87 = scmp.eq.s32.totalorder %s19, 0
    %p88 = por %p86, %p87
    %s90 = sadd.s32 %s89, 1
    %p93 = scmp.eq.s32.totalorder %s13, 3
    %p94 = scmp.ne.s32.totalorder %s89, %s91
    %p95 = scmp.eq.s32.totalorder %s13, 0
    %p96 = por %p94, %p95
    %p97 = scmp.ne.s32.totalorder %s89, %s91
    %p98 = scmp.eq.s32.totalorder %s18, 3
    %p99 = por %p97, %p98
    %p100 = scmp.ne.s32.totalorder %s91, %s92
    %p101 = scmp.eq.s32.totalorder %s18, 0
    %p102 = por %p100, %p101
    %p103 = scmp.ne.s32.totalorder %s91, %s92
    %p104 = scmp.eq.s32.totalorder %s19, 3
    %p105 = por %p103, %p104
    %p107 = scmp.ne.s32.totalorder %s92, %s106
    %p108 = scmp.eq.s32.totalorder %s19, 0
    %p109 = por %p107, %p108
    %s111 = sadd.s32 %s110, 1
    %p114 = scmp.eq.s32.totalorder %s13, 3
    %p115 = scmp.ne.s32.totalorder %s110, %s112
    %p116 = scmp.eq.s32.totalorder %s13, 0
    %p117 = por %p115, %p116
    %p118 = scmp.ne.s32.totalorder %s110, %s112
    %p119 = scmp.eq.s32.totalorder %s18, 3
    %p120 = por %p118, %p119
    %p121 = scmp.ne.s32.totalorder %s112, %s113
    %p122 = scmp.eq.s32.totalorder %s18, 0
    %p123 = por %p121, %p122
    %p124 = scmp.ne.s32.totalorder %s112, %s113
    %p125 = scmp.eq.s32.totalorder %s19, 3
    %p126 = por %p124, %p125
    %p128 = scmp.ne.s32.totalorder %s113, %s127
    %p129 = scmp.eq.s32.totalorder %s19, 0
    %p130 = por %p128, %p129
    %s132 = sadd.s32 %s131, 1
    %p135 = scmp.eq.s32.totalorder %s13, 3
    %p136 = scmp.ne.s32.totalorder %s131, %s133
    %p137 = scmp.eq.s32.totalorder %s13, 0
    %p138 = por %p136, %p137
    %p139 = scmp.ne.s32.totalorder %s131, %s133
    %p140 = scmp.eq.s32.totalorder %s18, 3
    %p141 = por %p139, %p140
    %p142 = scmp.ne.s32.totalorder %s133, %s134
    %p143 = scmp.eq.s32.totalorder %s18, 0
    %p144 = por %p142, %p143
    %p145 = scmp.ne.s32.totalorder %s133, %s134
    %p146 = scmp.eq.s32.totalorder %s19, 3
    %p147 = por %p145, %p146
    %p149 = scmp.ne.s32.totalorder %s134, %s148
    %p150 = scmp.eq.s32.totalorder %s19, 0
    %p151 = por %p149, %p150
    %s153 = sadd.s32 %s152, 1
    %p156 = scmp.eq.s32.totalorder %s13, 3
    %p157 = scmp.ne.s32.totalorder %s152, %s154
    %p158 = scmp.eq.s32.totalorder %s13, 0
    %p159 = por %p157, %p158
    %p160 = scmp.ne.s32.totalorder %s152, %s154
    %p161 = scmp.eq.s32.totalorder %s18, 3
    %p162 = por %p160, %p161
    %p163 = scmp.ne.s32.totalorder %s154, %s155
    %p164 = scmp.eq.s32.totalorder %s18, 0
    %p165 = por %p163, %p164
    %p166 = scmp.ne.s32.totalorder %s154, %s155
    %p167 = scmp.eq.s32.totalorder %s19, 3
    %p168 = por %p166, %p167
    %p170 = scmp.ne.s32.totalorder %s155, %s169
    %p171 = scmp.eq.s32.totalorder %s19, 0
    %p172 = por %p170, %p171
    %s173 = ssub.s32 %s13, %s20
    %p174 = scmp.eq.s32.totalorder %s173, 0
    %s176 = sadd.s32 %s175, 1
    %s177 = scalar_select %p174, %s175, %s176
    %p180 = pneg %p174
    %p181 = scmp.eq.s32.totalorder %s13, 3
    %p182 = por %p180, %p181
    %p183 = scmp.ne.s32.totalorder %s175, %s178
    %p184 = scmp.eq.s32.totalorder %s13, 0
    %p185 = por %p183, %p184
    %p186 = scmp.ne.s32.totalorder %s175, %s178
    %p187 = scmp.eq.s32.totalorder %s18, 3
    %p188 = por %p186, %p187
    %p189 = scmp.ne.s32.totalorder %s178, %s179
    %p190 = scmp.eq.s32.totalorder %s18, 0
    %p191 = por %p189, %p190
    %p192 = scmp.ne.s32.totalorder %s178, %s179
    %p193 = scmp.eq.s32.totalorder %s19, 3
    %p194 = por %p192, %p193
    %p196 = scmp.ne.s32.totalorder %s179, %s195
    %p197 = scmp.eq.s32.totalorder %s19, 0
    %p198 = por %p196, %p197
    %p199 = scmp.le.s32.totalorder 1, %s13
    %p200 = scmp.lt.s32.totalorder %s13, 5
    %p201 = pnand %p199, %p200
    %p202 = pneg %p201
    // Predicated region
    $region9: #{forward.3} parent=5 // pred_check
      _
    $region10: #{forward.3} parent=5 // pred_check_branch
      %204 = sbr.rel (%p201) target = $region12
    $region11: #{forward.3} parent=5 // pred_region
      %s205 = ssub.s32 %s13, 1
      // Predicated region
      $region13: #{forward.3} parent=11 // pred_check
        %p206 = pneg %p60
      $region14: #{forward.3} parent=11 // pred_check_branch
        %208 = sbr.rel (%p206) target = $region16
      $region15: #{forward.3} parent=11 // pred_region
        _
      $region16: #{forward.3} parent=11 // pred_fallthru
        _
      // Predicated region
      $region17: #{forward.3} parent=11 // pred_check
        %p209 = pneg %p81
      $region18: #{forward.3} parent=11 // pred_check_branch
        %211 = sbr.rel (%p209) target = $region20
      $region19: #{forward.3} parent=11 // pred_region
        _
      $region20: #{forward.3} parent=11 // pred_fallthru
        _
      // Predicated region
      $region21: #{forward.3} parent=11 // pred_check
        %p212 = pneg %p102
      $region22: #{forward.3} parent=11 // pred_check_branch
        %214 = sbr.rel (%p212) target = $region24
      $region23: #{forward.3} parent=11 // pred_region
        _
      $region24: #{forward.3} parent=11 // pred_fallthru
        _
      // Predicated region
      $region25: #{forward.3} parent=11 // pred_check
        %p215 = pneg %p123
      $region26: #{forward.3} parent=11 // pred_check_branch
        %217 = sbr.rel (%p215) target = $region28
      $region27: #{forward.3} parent=11 // pred_region
        _
      $region28: #{forward.3} parent=11 // pred_fallthru
        _
      // Predicated region
      $region29: #{forward.3} parent=11 // pred_check
        %p218 = pneg %p144
      $region30: #{forward.3} parent=11 // pred_check_branch
        %220 = sbr.rel (%p218) target = $region32
      $region31: #{forward.3} parent=11 // pred_region
        _
      $region32: #{forward.3} parent=11 // pred_fallthru
        _
      // Predicated region
      $region33: #{forward.3} parent=11 // pred_check
        %p221 = pneg %p165
      $region34: #{forward.3} parent=11 // pred_check_branch
        %223 = sbr.rel (%p221) target = $region36
      $region35: #{forward.3} parent=11 // pred_region
        _
      $region36: #{forward.3} parent=11 // pred_fallthru
        _
    $region12: #{forward.3} parent=5 // pred_fallthru
      _
    %p224 = scmp.lt.s32.totalorder %s13, 4
    // Predicated region
    $region37: #{forward.3} parent=5 // pred_check
      %p225 = pneg %p224
    $region38: #{forward.3} parent=5 // pred_check_branch
      %227 = sbr.rel (%p225) target = $region40
    $region39: #{forward.3} parent=5 // pred_region
      // Predicated region
      $region41: #{forward.3} parent=39 // pred_check
        %p228 = pneg %p33
      $region42: #{forward.3} parent=39 // pred_check_branch
        %230 = sbr.rel (%p228) target = $region44
      $region43: #{forward.3} parent=39 // pred_region
        %s231 = smul.u32 4, %s13
        %p232 = scmp.lt.s32.totalorder %s231, 15
        %s233 = scalar_select %p232, %s231, 15
        %s234 = smul.addr %s233, 16
        %s235 = smul.addr %s234, 4
        %s236 = scalar_lea.vmem %s0, %s235
        %s237 = smul.u32 4, %s13
      $region44: #{forward.3} parent=39 // pred_fallthru
        _
    $region40: #{forward.3} parent=5 // pred_fallthru
      _
    %p238 = scmp.le.s32.totalorder 1, %s13
    %p239 = scmp.lt.s32.totalorder %s13, 5
    %p240 = pnand %p238, %p239
    %p241 = pneg %p240
    // Predicated region
    $region45: #{forward.3} parent=5 // pred_check
      _
    $region46: #{forward.3} parent=5 // pred_check_branch
      %243 = sbr.rel (%p240) target = $region48
    $region47: #{forward.3} parent=5 // pred_region
      %s244 = ssub.s32 %s13, 1
      %s245 = smul.u32 4, %s18
      %p246 = scmp.lt.s32.totalorder %s245, 15
      %s247 = scalar_select %p246, %s245, 15
      %s248 = smul.addr %s247, 16
      %s249 = smul.addr %s248, 4
      %s250 = scalar_lea.vmem %s0, %s249
      %p251 = pneg %p39
      %p252 = pneg %p36
      %p253 = pneg %p60
      %p254 = pneg %p57
      %p255 = pneg %p81
      %p256 = pneg %p78
      %p257 = pneg %p102
      %p258 = pneg %p99
      %p259 = pneg %p123
      %p260 = pneg %p120
      %p261 = pneg %p144
      %p262 = pneg %p141
      %p263 = pneg %p165
      %p264 = pneg %p162
      %p265 = pneg %p191
      %p266 = pneg %p188
      %s267 = smul.u32 4, %s18
      %p268 = scmp.lt.s32.totalorder %s267, 15
      %s269 = scalar_select %p268, %s267, 15
      %s270 = smul.addr %s269, 16
      %s271 = smul.addr %s270, 4
      %s272 = scalar_lea.vmem %s7, %s271
      %s273 = smul.u32 4, %s18
      %p274 = scmp.lt.s32.totalorder %s273, 15
      %s275 = scalar_select %p274, %s273, 15
      %s276 = smul.addr %s275, 16
      %s277 = smul.addr %s276, 4
      %s278 = scalar_lea.vmem %s0, %s277
      %s279 = smul.u32 4, %s18
      %s280 = smul.u32 4, %s18
      %p281 = scmp.lt.s32.totalorder %s280, 15
      %s282 = scalar_select %p281, %s280, 15
      %s283 = smul.addr %s282, 16
      %s284 = smul.addr %s283, 4
      %s285 = scalar_lea.vmem %s7, %s284
      %s286 = smul.u32 4, %s18
      %v288 = vld [vmem:[%s278] sm:$0xff]
      %v289 = vld [vmem:[%s278 + $0x8] sm:$0xff]
      %v290 = vld [vmem:[%s278 + $0x10] sm:$0xff]
      %v291 = vld [vmem:[%s278 + $0x18] sm:$0xff]
      %v292 = vld [vmem:[%s278 + $0x20] sm:$0xff]
      %v293 = vld [vmem:[%s278 + $0x28] sm:$0xff]
      %v294 = vld [vmem:[%s278 + $0x30] sm:$0xff]
      %v295 = vld [vmem:[%s278 + $0x38] sm:$0xff]
      %v296 = vld [vmem:[%s278 + $0x40] sm:$0xff]
      %v297 = vld [vmem:[%s278 + $0x48] sm:$0xff]
      %v298 = vld [vmem:[%s278 + $0x50] sm:$0xff]
      %v299 = vld [vmem:[%s278 + $0x58] sm:$0xff]
      %v300 = vld [vmem:[%s278 + $0x60] sm:$0xff]
      %v301 = vld [vmem:[%s278 + $0x68] sm:$0xff]
      %v302 = vld [vmem:[%s278 + $0x70] sm:$0xff]
      %v303 = vld [vmem:[%s278 + $0x78] sm:$0xff]
      %v304 = vld [vmem:[%s278 + $0x80] sm:$0xff]
      %v305 = vld [vmem:[%s278 + $0x88] sm:$0xff]
      %v306 = vld [vmem:[%s278 + $0x90] sm:$0xff]
      %v307 = vld [vmem:[%s278 + $0x98] sm:$0xff]
      %v308 = vld [vmem:[%s278 + $0xa0] sm:$0xff]
      %v309 = vld [vmem:[%s278 + $0xa8] sm:$0xff]
      %v310 = vld [vmem:[%s278 + $0xb0] sm:$0xff]
      %v311 = vld [vmem:[%s278 + $0xb8] sm:$0xff]
      %v312 = vld [vmem:[%s278 + $0xc0] sm:$0xff]
      %v313 = vld [vmem:[%s278 + $0xc8] sm:$0xff]
      %v314 = vld [vmem:[%s278 + $0xd0] sm:$0xff]
      %v315 = vld [vmem:[%s278 + $0xd8] sm:$0xff]
      %v316 = vld [vmem:[%s278 + $0xe0] sm:$0xff]
      %v317 = vld [vmem:[%s278 + $0xe8] sm:$0xff]
      %v318 = vld [vmem:[%s278 + $0xf0] sm:$0xff]
      %v319 = vld [vmem:[%s278 + $0xf8] sm:$0xff]
      %v352 = vrot.slane %v288, 4
      %v353 = vrot.slane %v289, 4
      %v354 = vrot.slane %v290, 4
      %v355 = vrot.slane %v291, 4
      %v356 = vrot.slane %v292, 4
      %v357 = vrot.slane %v293, 4
      %v358 = vrot.slane %v294, 4
      %v359 = vrot.slane %v295, 4
      %v360 = vrot.slane %v296, 4
      %v361 = vrot.slane %v297, 4
      %v362 = vrot.slane %v298, 4
      %v363 = vrot.slane %v299, 4
      %v364 = vrot.slane %v300, 4
      %v365 = vrot.slane %v301, 4
      %v366 = vrot.slane %v302, 4
      %v367 = vrot.slane %v303, 4
      %v368 = vrot.slane %v304, 4
      %v369 = vrot.slane %v305, 4
      %v370 = vrot.slane %v306, 4
      %v371 = vrot.slane %v307, 4
      %v372 = vrot.slane %v308, 4
      %v373 = vrot.slane %v309, 4
      %v374 = vrot.slane %v310, 4
      %v375 = vrot.slane %v311, 4
      %v376 = vrot.slane %v312, 4
      %v377 = vrot.slane %v313, 4
      %v378 = vrot.slane %v314, 4
      %v379 = vrot.slane %v315, 4
      %v380 = vrot.slane %v316, 4
      %v381 = vrot.slane %v317, 4
      %v382 = vrot.slane %v318, 4
      %v383 = vrot.slane %v319, 4
      %v384 = vld [vmem:[%s1] sm:$0xf]
      %v385 = vld [vmem:[%s1 + $0x4] sm:$0xf]
      %v386 = vld [vmem:[%s1 + $0x8] sm:$0xf]
      %v387 = vld [vmem:[%s1 + $0xc] sm:$0xf]
      %v388 = vld [vmem:[%s1 + $0x10] sm:$0xf]
      %v389 = vld [vmem:[%s1 + $0x14] sm:$0xf]
      %v390 = vld [vmem:[%s1 + $0x18] sm:$0xf]
      %v391 = vld [vmem:[%s1 + $0x1c] sm:$0xf]
      %v392 = vld [vmem:[%s1 + $0x20] sm:$0xf]
      %v393 = vld [vmem:[%s1 + $0x24] sm:$0xf]
      %v394 = vld [vmem:[%s1 + $0x28] sm:$0xf]
      %v395 = vld [vmem:[%s1 + $0x2c] sm:$0xf]
      %v396 = vld [vmem:[%s1 + $0x30] sm:$0xf]
      %v397 = vld [vmem:[%s1 + $0x34] sm:$0xf]
      %v398 = vld [vmem:[%s1 + $0x38] sm:$0xf]
      %v399 = vld [vmem:[%s1 + $0x3c] sm:$0xf]
      %v400 = vld [vmem:[%s2] sm:$0x1]
      %v402 = vlaneseq
      %v403 = vshrl.u32 %v402, 7
      %v404 = vsub.s32 0, %v403
      %v405 = vrot.slane %v400, %v404
      %v407 = vunpack.c.l.b16 %v352
      %v408 = vunpack.c.l.b16 %v353
      %v409 = vunpack.c.l.b16 %v354
      %v410 = vunpack.c.l.b16 %v355
      %v411 = vunpack.c.l.b16 %v356
      %v412 = vunpack.c.l.b16 %v357
      %v413 = vunpack.c.l.b16 %v358
      %v414 = vunpack.c.l.b16 %v359
      %v415 = vunpack.c.l.b16 %v360
      %v416 = vunpack.c.l.b16 %v361
      %v417 = vunpack.c.l.b16 %v362
      %v418 = vunpack.c.l.b16 %v363
      %v419 = vunpack.c.l.b16 %v364
      %v420 = vunpack.c.l.b16 %v365
      %v421 = vunpack.c.l.b16 %v366
      %v422 = vunpack.c.l.b16 %v367
      %v423 = vunpack.c.l.b16 %v368
      %v424 = vunpack.c.l.b16 %v369
      %v425 = vunpack.c.l.b16 %v370
      %v426 = vunpack.c.l.b16 %v371
      %v427 = vunpack.c.l.b16 %v372
      %v428 = vunpack.c.l.b16 %v373
      %v429 = vunpack.c.l.b16 %v374
      %v430 = vunpack.c.l.b16 %v375
      %v431 = vunpack.c.l.b16 %v376
      %v432 = vunpack.c.l.b16 %v377
      %v433 = vunpack.c.l.b16 %v378
      %v434 = vunpack.c.l.b16 %v379
      %v435 = vunpack.c.l.b16 %v380
      %v436 = vunpack.c.l.b16 %v381
      %v437 = vunpack.c.l.b16 %v382
      %v438 = vunpack.c.l.b16 %v383
      %v439 = vpack.c.b16 %v408, %v407
      %v440 = vpack.c.b16 %v410, %v409
      %v441 = vpack.c.b16 %v412, %v411
      %v442 = vpack.c.b16 %v414, %v413
      %v443 = vpack.c.b16 %v416, %v415
      %v444 = vpack.c.b16 %v418, %v417
      %v445 = vpack.c.b16 %v420, %v419
      %v446 = vpack.c.b16 %v422, %v421
      %v447 = vpack.c.b16 %v424, %v423
      %v448 = vpack.c.b16 %v426, %v425
      %v449 = vpack.c.b16 %v428, %v427
      %v450 = vpack.c.b16 %v430, %v429
      %v451 = vpack.c.b16 %v432, %v431
      %v452 = vpack.c.b16 %v434, %v433
      %v453 = vpack.c.b16 %v436, %v435
      %v454 = vpack.c.b16 %v438, %v437
      %v487 = vunpack.c.l.b16 %v384
      %v488 = vunpack.c.l.b16 %v385
      %v489 = vunpack.c.l.b16 %v386
      %v490 = vunpack.c.l.b16 %v387
      %v491 = vunpack.c.l.b16 %v388
      %v492 = vunpack.c.l.b16 %v389
      %v493 = vunpack.c.l.b16 %v390
      %v494 = vunpack.c.l.b16 %v391
      %v495 = vunpack.c.l.b16 %v392
      %v496 = vunpack.c.l.b16 %v393
      %v497 = vunpack.c.l.b16 %v394
      %v498 = vunpack.c.l.b16 %v395
      %v499 = vunpack.c.l.b16 %v396
      %v500 = vunpack.c.l.b16 %v397
      %v501 = vunpack.c.l.b16 %v398
      %v502 = vunpack.c.l.b16 %v399
      %v503 = vpack.c.b16 %v488, %v487
      %v504 = vpack.c.b16 %v490, %v489
      %v505 = vpack.c.b16 %v492, %v491
      %v506 = vpack.c.b16 %v494, %v493
      %v507 = vpack.c.b16 %v496, %v495
      %v508 = vpack.c.b16 %v498, %v497
      %v509 = vpack.c.b16 %v500, %v499
      %v510 = vpack.c.b16 %v502, %v501
      %519 = vmatprep.subr.bf16.mxu0 0
      %520 = vmatpush1.bf16.msra.mxu0 %v503
      %521 = vmatprep.subr.bf16.mxu0 0
      %522 = vmatpush1.bf16.msra.mxu0 %v504
      %523 = vmatprep.subr.bf16.mxu0 0
      %524 = vmatpush1.bf16.msra.mxu0 %v505
      %525 = vmatprep.subr.bf16.mxu0 0
      %526 = vmatpush1.bf16.msra.mxu0 %v506
      %527 = vmatprep.subr.bf16.mxu0 0
      %528 = vmatpush1.bf16.msra.mxu0 %v507
      %529 = vmatprep.subr.bf16.mxu0 0
      %530 = vmatpush1.bf16.msra.mxu0 %v508
      %531 = vmatprep.subr.bf16.mxu0 0
      %532 = vmatpush1.bf16.msra.mxu0 %v509
      %533 = vmatprep.subr.bf16.mxu0 0
      %534 = vmatpush1.bf16.msra.mxu0 %v510
      %535 = vmatprep.subr.bf16.mxu0 0
      %536 = vmatpush1.bf16.msra.mxu0 0
      %537 = vmatprep.subr.bf16.mxu0 0
      %538 = vmatpush1.bf16.msra.mxu0 0
      %539 = vmatprep.subr.bf16.mxu0 0
      %540 = vmatpush1.bf16.msra.mxu0 0
      %541 = vmatprep.subr.bf16.mxu0 0
      %542 = vmatpush1.bf16.msra.mxu0 0
      %543 = vmatprep.subr.bf16.mxu0 0
      %544 = vmatpush1.bf16.msra.mxu0 0
      %545 = vmatprep.subr.bf16.mxu0 0
      %546 = vmatpush1.bf16.msra.mxu0 0
      %547 = vmatprep.subr.bf16.mxu0 0
      %548 = vmatpush1.bf16.msra.mxu0 0
      %549 = vmatprep.subr.bf16.mxu0 0
      %550 = vmatpush1.bf16.msra.mxu0 0
      %551 = vmatprep.mubr.bf16.mxu0 0
      %552 = vmatmul.mubr.bf16.gmra.mrb[0].mxu0 %v439
      %v553 = vpop.f32.mrb[0].mxu0
      %v554 = vadd.f32 %v405, %v553
      %v555 = vpop.f32.mrb[0].mxu0
      %v556 = vpop.f32.mrb[0].mxu0
      %v557 = vadd.f32 %v405, %v556
      %v558 = vpop.f32.mrb[0].mxu0
      %559 = vmatprep.mubr.bf16.mxu0 0
      %560 = vmatmul.mubr.bf16.gmra.mrb[0].mxu0 %v440
      %v561 = vpop.f32.mrb[0].mxu0
      %v562 = vadd.f32 %v405, %v561
      %v563 = vpop.f32.mrb[0].mxu0
      %v564 = vpop.f32.mrb[0].mxu0
      %v565 = vadd.f32 %v405, %v564
      %v566 = vpop.f32.mrb[0].mxu0
      %567 = vmatprep.mubr.bf16.mxu0 0
      %568 = vmatmul.mubr.bf16.gmra.mrb[0].mxu0 %v441
      %v569 = vpop.f32.mrb[0].mxu0
      %v570 = vadd.f32 %v405, %v569
      %v571 = vpop.f32.mrb[0].mxu0
      %v572 = vpop.f32.mrb[0].mxu0
      %v573 = vadd.f32 %v405, %v572
      %v574 = vpop.f32.mrb[0].mxu0
      %575 = vmatprep.mubr.bf16.mxu0 0
      %576 = vmatmul.mubr.bf16.gmra.mrb[0].mxu0 %v442
      %v577 = vpop.f32.mrb[0].mxu0
      %v578 = vadd.f32 %v405, %v577
      %v579 = vpop.f32.mrb[0].mxu0
      %v580 = vpop.f32.mrb[0].mxu0
      %v581 = vadd.f32 %v405, %v580
      %v582 = vpop.f32.mrb[0].mxu0
      %583 = vmatprep.mubr.bf16.mxu0 0
      %584 = vmatmul.mubr.bf16.gmra.mrb[0].mxu0 %v443
      %v585 = vpop.f32.mrb[0].mxu0
      %v586 = vadd.f32 %v405, %v585
      %v587 = vpop.f32.mrb[0].mxu0
      %v588 = vpop.f32.mrb[0].mxu0
      %v589 = vadd.f32 %v405, %v588
      %v590 = vpop.f32.mrb[0].mxu0
      %591 = vmatprep.mubr.bf16.mxu0 0
      %592 = vmatmul.mubr.bf16.gmra.mrb[0].mxu0 %v444
      %v593 = vpop.f32.mrb[0].mxu0
      %v594 = vadd.f32 %v405, %v593
      %v595 = vpop.f32.mrb[0].mxu0
      %v596 = vpop.f32.mrb[0].mxu0
      %v597 = vadd.f32 %v405, %v596
      %v598 = vpop.f32.mrb[0].mxu0
      %599 = vmatprep.mubr.bf16.mxu0 0
      %600 = vmatmul.mubr.bf16.gmra.mrb[0].mxu0 %v445
      %v601 = vpop.f32.mrb[0].mxu0
      %v602 = vadd.f32 %v405, %v601
      %v603 = vpop.f32.mrb[0].mxu0
      %v604 = vpop.f32.mrb[0].mxu0
      %v605 = vadd.f32 %v405, %v604
      %v606 = vpop.f32.mrb[0].mxu0
      %607 = vmatprep.mubr.bf16.mxu0 0
      %608 = vmatmul.mubr.bf16.gmra.mrb[0].mxu0 %v446
      %v609 = vpop.f32.mrb[0].mxu0
      %v610 = vadd.f32 %v405, %v609
      %v611 = vpop.f32.mrb[0].mxu0
      %v612 = vpop.f32.mrb[0].mxu0
      %v613 = vadd.f32 %v405, %v612
      %v614 = vpop.f32.mrb[0].mxu0
      %615 = vmatprep.mubr.bf16.mxu0 0
      %616 = vmatmul.mubr.bf16.gmra.mrb[0].mxu0 %v447
      %v617 = vpop.f32.mrb[0].mxu0
      %v618 = vadd.f32 %v405, %v617
      %v619 = vpop.f32.mrb[0].mxu0
      %v620 = vpop.f32.mrb[0].mxu0
      %v621 = vadd.f32 %v405, %v620
      %v622 = vpop.f32.mrb[0].mxu0
      %623 = vmatprep.mubr.bf16.mxu0 0
      %624 = vmatmul.mubr.bf16.gmra.mrb[0].mxu0 %v448
      %v625 = vpop.f32.mrb[0].mxu0
      %v626 = vadd.f32 %v405, %v625
      %v627 = vpop.f32.mrb[0].mxu0
      %v628 = vpop.f32.mrb[0].mxu0
      %v629 = vadd.f32 %v405, %v628
      %v630 = vpop.f32.mrb[0].mxu0
      %631 = vmatprep.mubr.bf16.mxu0 0
      %632 = vmatmul.mubr.bf16.gmra.mrb[0].mxu0 %v449
      %v633 = vpop.f32.mrb[0].mxu0
      %v634 = vadd.f32 %v405, %v633
      %v635 = vpop.f32.mrb[0].mxu0
      %v636 = vpop.f32.mrb[0].mxu0
      %v637 = vadd.f32 %v405, %v636
      %v638 = vpop.f32.mrb[0].mxu0
      %639 = vmatprep.mubr.bf16.mxu0 0
      %640 = vmatmul.mubr.bf16.gmra.mrb[0].mxu0 %v450
      %v641 = vpop.f32.mrb[0].mxu0
      %v642 = vadd.f32 %v405, %v641
      %v643 = vpop.f32.mrb[0].mxu0
      %v644 = vpop.f32.mrb[0].mxu0
      %v645 = vadd.f32 %v405, %v644
      %v646 = vpop.f32.mrb[0].mxu0
      %647 = vmatprep.mubr.bf16.mxu0 0
      %648 = vmatmul.mubr.bf16.gmra.mrb[0].mxu0 %v451
      %v649 = vpop.f32.mrb[0].mxu0
      %v650 = vadd.f32 %v405, %v649
      %v651 = vpop.f32.mrb[0].mxu0
      %v652 = vpop.f32.mrb[0].mxu0
      %v653 = vadd.f32 %v405, %v652
      %v654 = vpop.f32.mrb[0].mxu0
      %655 = vmatprep.mubr.bf16.mxu0 0
      %656 = vmatmul.mubr.bf16.gmra.mrb[0].mxu0 %v452
      %v657 = vpop.f32.mrb[0].mxu0
      %v658 = vadd.f32 %v405, %v657
      %v659 = vpop.f32.mrb[0].mxu0
      %v660 = vpop.f32.mrb[0].mxu0
      %v661 = vadd.f32 %v405, %v660
      %v662 = vpop.f32.mrb[0].mxu0
      %663 = vmatprep.mubr.bf16.mxu0 0
      %664 = vmatmul.mubr.bf16.gmra.mrb[0].mxu0 %v453
      %v665 = vpop.f32.mrb[0].mxu0
      %v666 = vadd.f32 %v405, %v665
      %v667 = vpop.f32.mrb[0].mxu0
      %v668 = vpop.f32.mrb[0].mxu0
      %v669 = vadd.f32 %v405, %v668
      %v670 = vpop.f32.mrb[0].mxu0
      %671 = vmatprep.mubr.bf16.mxu0 0
      %672 = vmatmul.mubr.bf16.gmra.mrb[0].mxu0 %v454
      %v673 = vpop.f32.mrb[0].mxu0
      %v674 = vadd.f32 %v405, %v673
      %v675 = vpop.f32.mrb[0].mxu0
      %v676 = vpop.f32.mrb[0].mxu0
      %v677 = vadd.f32 %v405, %v676
      %v678 = vpop.f32.mrb[0].mxu0
      %679 = vdwg.mxu0
      %v680 = vmax.f32 %v554, 0.0
      %v681 = vmax.f32 %v557, 0.0
      %v682 = vmax.f32 %v562, 0.0
      %v683 = vmax.f32 %v565, 0.0
      %v684 = vmax.f32 %v570, 0.0
      %v685 = vmax.f32 %v573, 0.0
      %v686 = vmax.f32 %v578, 0.0
      %v687 = vmax.f32 %v581, 0.0
      %v688 = vmax.f32 %v586, 0.0
      %v689 = vmax.f32 %v589, 0.0
      %v690 = vmax.f32 %v594, 0.0
      %v691 = vmax.f32 %v597, 0.0
      %v692 = vmax.f32 %v602, 0.0
      %v693 = vmax.f32 %v605, 0.0
      %v694 = vmax.f32 %v610, 0.0
      %v695 = vmax.f32 %v613, 0.0
      %v696 = vmax.f32 %v618, 0.0
      %v697 = vmax.f32 %v621, 0.0
      %v698 = vmax.f32 %v626, 0.0
      %v699 = vmax.f32 %v629, 0.0
      %v700 = vmax.f32 %v634, 0.0
      %v701 = vmax.f32 %v637, 0.0
      %v702 = vmax.f32 %v642, 0.0
      %v703 = vmax.f32 %v645, 0.0
      %v704 = vmax.f32 %v650, 0.0
      %v705 = vmax.f32 %v653, 0.0
      %v706 = vmax.f32 %v658, 0.0
      %v707 = vmax.f32 %v661, 0.0
      %v708 = vmax.f32 %v666, 0.0
      %v709 = vmax.f32 %v669, 0.0
      %v710 = vmax.f32 %v674, 0.0
      %v711 = vmax.f32 %v677, 0.0
      %v741 = vrot.slane 0.0, 7
      %v742 = vrot.slane %v680, 7
      %v743 = vrot.slane %v681, 7
      %v744 = vrot.slane %v682, 7
      %v745 = vrot.slane %v683, 7
      %v746 = vrot.slane %v684, 7
      %v747 = vrot.slane %v685, 7
      %v748 = vrot.slane %v686, 7
      %v749 = vrot.slane %v688, 7
      %v750 = vrot.slane %v689, 7
      %v751 = vrot.slane %v690, 7
      %v752 = vrot.slane %v691, 7
      %v753 = vrot.slane %v692, 7
      %v754 = vrot.slane %v693, 7
      %v755 = vrot.slane %v694, 7
      %v756 = vrot.slane %v696, 7
      %v757 = vrot.slane %v697, 7
      %v758 = vrot.slane %v698, 7
      %v759 = vrot.slane %v699, 7
      %v760 = vrot.slane %v700, 7
      %v761 = vrot.slane %v701, 7
      %v762 = vrot.slane %v702, 7
      %v763 = vrot.slane %v704, 7
      %v764 = vrot.slane %v705, 7
      %v765 = vrot.slane %v706, 7
      %v766 = vrot.slane %v707, 7
      %v767 = vrot.slane %v708, 7
      %v768 = vrot.slane %v709, 7
      %v769 = vrot.slane %v710, 7
      %vm799 = vcmask 1040384
      %v800 = vsel %vm799, 0.0, %v741
      %v801 = vsel %vm799, 0.0, %v742
      %v802 = vsel %vm799, 0.0, %v743
      %v803 = vsel %vm799, 0.0, %v744
      %v804 = vsel %vm799, 0.0, %v745
      %v805 = vsel %vm799, 0.0, %v746
      %v806 = vsel %vm799, 0.0, %v747
      %v807 = vsel %vm799, 0.0, %v748
      %v808 = vsel %vm799, 0.0, %v749
      %v809 = vsel %vm799, 0.0, %v750
      %v810 = vsel %vm799, 0.0, %v751
      %v811 = vsel %vm799, 0.0, %v752
      %v812 = vsel %vm799, 0.0, %v753
      %v813 = vsel %vm799, 0.0, %v754
      %v814 = vsel %vm799, 0.0, %v755
      %v815 = vsel %vm799, 0.0, %v756
      %v816 = vsel %vm799, 0.0, %v757
      %v817 = vsel %vm799, 0.0, %v758
      %v818 = vsel %vm799, 0.0, %v759
      %v819 = vsel %vm799, 0.0, %v760
      %v820 = vsel %vm799, 0.0, %v761
      %v821 = vsel %vm799, 0.0, %v762
      %v822 = vsel %vm799, 0.0, %v763
      %v823 = vsel %vm799, 0.0, %v764
      %v824 = vsel %vm799, 0.0, %v765
      %v825 = vsel %vm799, 0.0, %v766
      %v826 = vsel %vm799, 0.0, %v767
      %v827 = vsel %vm799, 0.0, %v768
      %v828 = vsel %vm799, 0.0, %v769
      %v829 = vld [vmem:[%s3] sm:$0x1]
      %v830 = vlaneseq
      %v831 = vshrl.u32 %v830, 7
      %v832 = vsub.s32 0, %v831
      %v833 = vrot.slane %v829, %v832
      %v834 = vmul.f32 %v800, %v833
      %v835 = vmul.f32 %v801, %v833
      %v836 = vmul.f32 %v802, %v833
      %v837 = vmul.f32 %v803, %v833
      %v838 = vmul.f32 %v804, %v833
      %v839 = vmul.f32 %v805, %v833
      %v840 = vmul.f32 %v806, %v833
      %v841 = vmul.f32 %v807, %v833
      %v842 = vmul.f32 %v808, %v833
      %v843 = vmul.f32 %v809, %v833
      %v844 = vmul.f32 %v810, %v833
      %v845 = vmul.f32 %v811, %v833
      %v846 = vmul.f32 %v812, %v833
      %v847 = vmul.f32 %v813, %v833
      %v848 = vmul.f32 %v814, %v833
      %v849 = vmul.f32 %v815, %v833
      %v850 = vmul.f32 %v816, %v833
      %v851 = vmul.f32 %v817, %v833
      %v852 = vmul.f32 %v818, %v833
      %v853 = vmul.f32 %v819, %v833
      %v854 = vmul.f32 %v820, %v833
      %v855 = vmul.f32 %v821, %v833
      %v856 = vmul.f32 %v822, %v833
      %v857 = vmul.f32 %v823, %v833
      %v858 = vmul.f32 %v824, %v833
      %v859 = vmul.f32 %v825, %v833
      %v860 = vmul.f32 %v826, %v833
      %v861 = vmul.f32 %v827, %v833
      %v862 = vmul.f32 %v828, %v833
      %v863 = vld [vmem:[%s3 + $0x1] sm:$0x1]
      %v864 = vlaneseq
      %v865 = vshrl.u32 %v864, 7
      %v866 = vsub.s32 0, %v865
      %v867 = vrot.slane %v863, %v866
      %v868 = vmul.f32 %v867, 0.0
      %v869 = vmul.f32 %v680, %v867
      %v870 = vmul.f32 %v681, %v867
      %v871 = vmul.f32 %v682, %v867
      %v872 = vmul.f32 %v683, %v867
      %v873 = vmul.f32 %v684, %v867
      %v874 = vmul.f32 %v685, %v867
      %v875 = vmul.f32 %v686, %v867
      %v876 = vmul.f32 %v688, %v867
      %v877 = vmul.f32 %v689, %v867
      %v878 = vmul.f32 %v690, %v867
      %v879 = vmul.f32 %v691, %v867
      %v880 = vmul.f32 %v692, %v867
      %v881 = vmul.f32 %v693, %v867
      %v882 = vmul.f32 %v694, %v867
      %v883 = vmul.f32 %v696, %v867
      %v884 = vmul.f32 %v697, %v867
      %v885 = vmul.f32 %v698, %v867
      %v886 = vmul.f32 %v699, %v867
      %v887 = vmul.f32 %v700, %v867
      %v888 = vmul.f32 %v701, %v867
      %v889 = vmul.f32 %v702, %v867
      %v890 = vmul.f32 %v704, %v867
      %v891 = vmul.f32 %v705, %v867
      %v892 = vmul.f32 %v706, %v867
      %v893 = vmul.f32 %v707, %v867
      %v894 = vmul.f32 %v708, %v867
      %v895 = vmul.f32 %v709, %v867
      %v896 = vmul.f32 %v710, %v867
      %v897 = vadd.f32 %v834, %v868
      %v898 = vadd.f32 %v835, %v869
      %v899 = vadd.f32 %v836, %v870
      %v900 = vadd.f32 %v837, %v871
      %v901 = vadd.f32 %v838, %v872
      %v902 = vadd.f32 %v839, %v873
      %v903 = vadd.f32 %v840, %v874
      %v904 = vadd.f32 %v841, %v875
      %v905 = vadd.f32 %v842, %v876
      %v906 = vadd.f32 %v843, %v877
      %v907 = vadd.f32 %v844, %v878
      %v908 = vadd.f32 %v845, %v879
      %v909 = vadd.f32 %v846, %v880
      %v910 = vadd.f32 %v847, %v881
      %v911 = vadd.f32 %v848, %v882
      %v912 = vadd.f32 %v849, %v883
      %v913 = vadd.f32 %v850, %v884
      %v914 = vadd.f32 %v851, %v885
      %v915 = vadd.f32 %v852, %v886
      %v916 = vadd.f32 %v853, %v887
      %v917 = vadd.f32 %v854, %v888
      %v918 = vadd.f32 %v855, %v889
      %v919 = vadd.f32 %v856, %v890
      %v920 = vadd.f32 %v857, %v891
      %v921 = vadd.f32 %v858, %v892
      %v922 = vadd.f32 %v859, %v893
      %v923 = vadd.f32 %v860, %v894
      %v924 = vadd.f32 %v861, %v895
      %v925 = vadd.f32 %v862, %v896
      %v926 = vrot.slane 0.0, 1
      %v927 = vrot.slane %v680, 1
      %v928 = vrot.slane %v681, 1
      %v929 = vrot.slane %v682, 1
      %v930 = vrot.slane %v683, 1
      %v931 = vrot.slane %v684, 1
      %v932 = vrot.slane %v685, 1
      %v933 = vrot.slane %v686, 1
      %v934 = vrot.slane %v688, 1
      %v935 = vrot.slane %v689, 1
      %v936 = vrot.slane %v690, 1
      %v937 = vrot.slane %v691, 1
      %v938 = vrot.slane %v692, 1
      %v939 = vrot.slane %v693, 1
      %v940 = vrot.slane %v694, 1
      %v941 = vrot.slane %v696, 1
      %v942 = vrot.slane %v697, 1
      %v943 = vrot.slane %v698, 1
      %v944 = vrot.slane %v699, 1
      %v945 = vrot.slane %v700, 1
      %v946 = vrot.slane %v701, 1
      %v947 = vrot.slane %v702, 1
      %v948 = vrot.slane %v704, 1
      %v949 = vrot.slane %v705, 1
      %v950 = vrot.slane %v706, 1
      %v951 = vrot.slane %v707, 1
      %v952 = vrot.slane %v708, 1
      %v953 = vrot.slane %v709, 1
      %v954 = vrot.slane %v710, 1
      %vm984 = vcmask 1046528
      %v985 = vsel %vm984, %v926, 0.0
      %v986 = vsel %vm984, %v927, 0.0
      %v987 = vsel %vm984, %v928, 0.0
      %v988 = vsel %vm984, %v929, 0.0
      %v989 = vsel %vm984, %v930, 0.0
      %v990 = vsel %vm984, %v931, 0.0
      %v991 = vsel %vm984, %v932, 0.0
      %v992 = vsel %vm984, %v933, 0.0
      %v993 = vsel %vm984, %v934, 0.0
      %v994 = vsel %vm984, %v935, 0.0
      %v995 = vsel %vm984, %v936, 0.0
      %v996 = vsel %vm984, %v937, 0.0
      %v997 = vsel %vm984, %v938, 0.0
      %v998 = vsel %vm984, %v939, 0.0
      %v999 = vsel %vm984, %v940, 0.0
      %v1000 = vsel %vm984, %v941, 0.0
      %v1001 = vsel %vm984, %v942, 0.0
      %v1002 = vsel %vm984, %v943, 0.0
      %v1003 = vsel %vm984, %v944, 0.0
      %v1004 = vsel %vm984, %v945, 0.0
      %v1005 = vsel %vm984, %v946, 0.0
      %v1006 = vsel %vm984, %v947, 0.0
      %v1007 = vsel %vm984, %v948, 0.0
      %v1008 = vsel %vm984, %v949, 0.0
      %v1009 = vsel %vm984, %v950, 0.0
      %v1010 = vsel %vm984, %v951, 0.0
      %v1011 = vsel %vm984, %v952, 0.0
      %v1012 = vsel %vm984, %v953, 0.0
      %v1013 = vsel %vm984, %v954, 0.0
      %v1014 = vld [vmem:[%s3 + $0x2] sm:$0x1]
      %v1015 = vlaneseq
      %v1016 = vshrl.u32 %v1015, 7
      %v1017 = vsub.s32 0, %v1016
      %v1018 = vrot.slane %v1014, %v1017
      %v1019 = vmul.f32 %v985, %v1018
      %v1020 = vmul.f32 %v986, %v1018
      %v1021 = vmul.f32 %v987, %v1018
      %v1022 = vmul.f32 %v988, %v1018
      %v1023 = vmul.f32 %v989, %v1018
      %v1024 = vmul.f32 %v990, %v1018
      %v1025 = vmul.f32 %v991, %v1018
      %v1026 = vmul.f32 %v992, %v1018
      %v1027 = vmul.f32 %v993, %v1018
      %v1028 = vmul.f32 %v994, %v1018
      %v1029 = vmul.f32 %v995, %v1018
      %v1030 = vmul.f32 %v996, %v1018
      %v1031 = vmul.f32 %v997, %v1018
      %v1032 = vmul.f32 %v998, %v1018
      %v1033 = vmul.f32 %v999, %v1018
      %v1034 = vmul.f32 %v1000, %v1018
      %v1035 = vmul.f32 %v1001, %v1018
      %v1036 = vmul.f32 %v1002, %v1018
      %v1037 = vmul.f32 %v1003, %v1018
      %v1038 = vmul.f32 %v1004, %v1018
      %v1039 = vmul.f32 %v1005, %v1018
      %v1040 = vmul.f32 %v1006, %v1018
      %v1041 = vmul.f32 %v1007, %v1018
      %v1042 = vmul.f32 %v1008, %v1018
      %v1043 = vmul.f32 %v1009, %v1018
      %v1044 = vmul.f32 %v1010, %v1018
      %v1045 = vmul.f32 %v1011, %v1018
      %v1046 = vmul.f32 %v1012, %v1018
      %v1047 = vmul.f32 %v1013, %v1018
      %v1048 = vadd.f32 %v897, %v1019
      %v1049 = vadd.f32 %v898, %v1020
      %v1050 = vadd.f32 %v899, %v1021
      %v1051 = vadd.f32 %v900, %v1022
      %v1052 = vadd.f32 %v901, %v1023
      %v1053 = vadd.f32 %v902, %v1024
      %v1054 = vadd.f32 %v903, %v1025
      %v1055 = vadd.f32 %v904, %v1026
      %v1056 = vadd.f32 %v905, %v1027
      %v1057 = vadd.f32 %v906, %v1028
      %v1058 = vadd.f32 %v907, %v1029
      %v1059 = vadd.f32 %v908, %v1030
      %v1060 = vadd.f32 %v909, %v1031
      %v1061 = vadd.f32 %v910, %v1032
      %v1062 = vadd.f32 %v911, %v1033
      %v1063 = vadd.f32 %v912, %v1034
      %v1064 = vadd.f32 %v913, %v1035
      %v1065 = vadd.f32 %v914, %v1036
      %v1066 = vadd.f32 %v915, %v1037
      %v1067 = vadd.f32 %v916, %v1038
      %v1068 = vadd.f32 %v917, %v1039
      %v1069 = vadd.f32 %v918, %v1040
      %v1070 = vadd.f32 %v919, %v1041
      %v1071 = vadd.f32 %v920, %v1042
      %v1072 = vadd.f32 %v921, %v1043
      %v1073 = vadd.f32 %v922, %v1044
      %v1074 = vadd.f32 %v923, %v1045
      %v1075 = vadd.f32 %v924, %v1046
      %v1076 = vadd.f32 %v925, %v1047
      %v1081 = vrot.slane %v687, 7
      %v1082 = vrot.slane %v695, 7
      %v1083 = vrot.slane %v703, 7
      %v1084 = vrot.slane %v711, 7
      %v1089 = vsel %vm799, 0.0, %v1081
      %v1090 = vsel %vm799, 0.0, %v1082
      %v1091 = vsel %vm799, 0.0, %v1083
      %v1092 = vsel %vm799, 0.0, %v1084
      %v1093 = vld [vmem:[%s3 + $0x3] sm:$0x1]
      %v1094 = vlaneseq
      %v1095 = vshrl.u32 %v1094, 7
      %v1096 = vsub.s32 0, %v1095
      %v1097 = vrot.slane %v1093, %v1096
      %v1098 = vmul.f32 %v801, %v1097
      %v1099 = vmul.f32 %v802, %v1097
      %v1100 = vmul.f32 %v803, %v1097
      %v1101 = vmul.f32 %v804, %v1097
      %v1102 = vmul.f32 %v805, %v1097
      %v1103 = vmul.f32 %v806, %v1097
      %v1104 = vmul.f32 %v807, %v1097
      %v1105 = vmul.f32 %v1089, %v1097
      %v1106 = vmul.f32 %v808, %v1097
      %v1107 = vmul.f32 %v809, %v1097
      %v1108 = vmul.f32 %v810, %v1097
      %v1109 = vmul.f32 %v811, %v1097
      %v1110 = vmul.f32 %v812, %v1097
      %v1111 = vmul.f32 %v813, %v1097
      %v1112 = vmul.f32 %v814, %v1097
      %v1113 = vmul.f32 %v1090, %v1097
      %v1114 = vmul.f32 %v815, %v1097
      %v1115 = vmul.f32 %v816, %v1097
      %v1116 = vmul.f32 %v817, %v1097
      %v1117 = vmul.f32 %v818, %v1097
      %v1118 = vmul.f32 %v819, %v1097
      %v1119 = vmul.f32 %v820, %v1097
      %v1120 = vmul.f32 %v821, %v1097
      %v1121 = vmul.f32 %v1091, %v1097
      %v1122 = vmul.f32 %v822, %v1097
      %v1123 = vmul.f32 %v823, %v1097
      %v1124 = vmul.f32 %v824, %v1097
      %v1125 = vmul.f32 %v825, %v1097
      %v1126 = vmul.f32 %v826, %v1097
      %v1127 = vmul.f32 %v827, %v1097
      %v1128 = vmul.f32 %v828, %v1097
      %v1129 = vmul.f32 %v1092, %v1097
      %v1130 = vadd.f32 %v1048, %v1098
      %v1131 = vadd.f32 %v1049, %v1099
      %v1132 = vadd.f32 %v1050, %v1100
      %v1133 = vadd.f32 %v1051, %v1101
      %v1134 = vadd.f32 %v1052, %v1102
      %v1135 = vadd.f32 %v1053, %v1103
      %v1136 = vadd.f32 %v1054, %v1104
      %v1137 = vadd.f32 %v1055, %v1105
      %v1138 = vadd.f32 %v1048, %v1106
      %v1139 = vadd.f32 %v1056, %v1107
      %v1140 = vadd.f32 %v1057, %v1108
      %v1141 = vadd.f32 %v1058, %v1109
      %v1142 = vadd.f32 %v1059, %v1110
      %v1143 = vadd.f32 %v1060, %v1111
      %v1144 = vadd.f32 %v1061, %v1112
      %v1145 = vadd.f32 %v1062, %v1113
      %v1146 = vadd.f32 %v1048, %v1114
      %v1147 = vadd.f32 %v1063, %v1115
      %v1148 = vadd.f32 %v1064, %v1116
      %v1149 = vadd.f32 %v1065, %v1117
      %v1150 = vadd.f32 %v1066, %v1118
      %v1151 = vadd.f32 %v1067, %v1119
      %v1152 = vadd.f32 %v1068, %v1120
      %v1153 = vadd.f32 %v1069, %v1121
      %v1154 = vadd.f32 %v1048, %v1122
      %v1155 = vadd.f32 %v1070, %v1123
      %v1156 = vadd.f32 %v1071, %v1124
      %v1157 = vadd.f32 %v1072, %v1125
      %v1158 = vadd.f32 %v1073, %v1126
      %v1159 = vadd.f32 %v1074, %v1127
      %v1160 = vadd.f32 %v1075, %v1128
      %v1161 = vadd.f32 %v1076, %v1129
      %v1162 = vld [vmem:[%s3 + $0x4] sm:$0x1]
      %v1163 = vlaneseq
      %v1164 = vshrl.u32 %v1163, 7
      %v1165 = vsub.s32 0, %v1164
      %v1166 = vrot.slane %v1162, %v1165
      %v1167 = vmul.f32 %v680, %v1166
      %v1168 = vmul.f32 %v681, %v1166
      %v1169 = vmul.f32 %v682, %v1166
      %v1170 = vmul.f32 %v683, %v1166
      %v1171 = vmul.f32 %v684, %v1166
      %v1172 = vmul.f32 %v685, %v1166
      %v1173 = vmul.f32 %v686, %v1166
      %v1174 = vmul.f32 %v687, %v1166
      %v1175 = vmul.f32 %v688, %v1166
      %v1176 = vmul.f32 %v689, %v1166
      %v1177 = vmul.f32 %v690, %v1166
      %v1178 = vmul.f32 %v691, %v1166
      %v1179 = vmul.f32 %v692, %v1166
      %v1180 = vmul.f32 %v693, %v1166
      %v1181 = vmul.f32 %v694, %v1166
      %v1182 = vmul.f32 %v695, %v1166
      %v1183 = vmul.f32 %v696, %v1166
      %v1184 = vmul.f32 %v697, %v1166
      %v1185 = vmul.f32 %v698, %v1166
      %v1186 = vmul.f32 %v699, %v1166
      %v1187 = vmul.f32 %v700, %v1166
      %v1188 = vmul.f32 %v701, %v1166
      %v1189 = vmul.f32 %v702, %v1166
      %v1190 = vmul.f32 %v703, %v1166
      %v1191 = vmul.f32 %v704, %v1166
      %v1192 = vmul.f32 %v705, %v1166
      %v1193 = vmul.f32 %v706, %v1166
      %v1194 = vmul.f32 %v707, %v1166
      %v1195 = vmul.f32 %v708, %v1166
      %v1196 = vmul.f32 %v709, %v1166
      %v1197 = vmul.f32 %v710, %v1166
      %v1198 = vmul.f32 %v711, %v1166
      %v1199 = vadd.f32 %v1130, %v1167
      %v1200 = vadd.f32 %v1131, %v1168
      %v1201 = vadd.f32 %v1132, %v1169
      %v1202 = vadd.f32 %v1133, %v1170
      %v1203 = vadd.f32 %v1134, %v1171
      %v1204 = vadd.f32 %v1135, %v1172
      %v1205 = vadd.f32 %v1136, %v1173
      %v1206 = vadd.f32 %v1137, %v1174
      %v1207 = vadd.f32 %v1138, %v1175
      %v1208 = vadd.f32 %v1139, %v1176
      %v1209 = vadd.f32 %v1140, %v1177
      %v1210 = vadd.f32 %v1141, %v1178
      %v1211 = vadd.f32 %v1142, %v1179
      %v1212 = vadd.f32 %v1143, %v1180
      %v1213 = vadd.f32 %v1144, %v1181
      %v1214 = vadd.f32 %v1145, %v1182
      %v1215 = vadd.f32 %v1146, %v1183
      %v1216 = vadd.f32 %v1147, %v1184
      %v1217 = vadd.f32 %v1148, %v1185
      %v1218 = vadd.f32 %v1149, %v1186
      %v1219 = vadd.f32 %v1150, %v1187
      %v1220 = vadd.f32 %v1151, %v1188
      %v1221 = vadd.f32 %v1152, %v1189
      %v1222 = vadd.f32 %v1153, %v1190
      %v1223 = vadd.f32 %v1154, %v1191
      %v1224 = vadd.f32 %v1155, %v1192
      %v1225 = vadd.f32 %v1156, %v1193
      %v1226 = vadd.f32 %v1157, %v1194
      %v1227 = vadd.f32 %v1158, %v1195
      %v1228 = vadd.f32 %v1159, %v1196
      %v1229 = vadd.f32 %v1160, %v1197
      %v1230 = vadd.f32 %v1161, %v1198
      %v1231 = vrot.slane %v687, 1
      %v1232 = vrot.slane %v695, 1
      %v1233 = vrot.slane %v703, 1
      %v1234 = vrot.slane %v711, 1
      %v1239 = vsel %vm984, %v1231, 0.0
      %v1240 = vsel %vm984, %v1232, 0.0
      %v1241 = vsel %vm984, %v1233, 0.0
      %v1242 = vsel %vm984, %v1234, 0.0
      %v1243 = vld [vmem:[%s3 + $0x5] sm:$0x1]
      %v1244 = vlaneseq
      %v1245 = vshrl.u32 %v1244, 7
      %v1246 = vsub.s32 0, %v1245
      %v1247 = vrot.slane %v1243, %v1246
      %v1248 = vmul.f32 %v986, %v1247
      %v1249 = vmul.f32 %v987, %v1247
      %v1250 = vmul.f32 %v988, %v1247
      %v1251 = vmul.f32 %v989, %v1247
      %v1252 = vmul.f32 %v990, %v1247
      %v1253 = vmul.f32 %v991, %v1247
      %v1254 = vmul.f32 %v992, %v1247
      %v1255 = vmul.f32 %v1239, %v1247
      %v1256 = vmul.f32 %v993, %v1247
      %v1257 = vmul.f32 %v994, %v1247
      %v1258 = vmul.f32 %v995, %v1247
      %v1259 = vmul.f32 %v996, %v1247
      %v1260 = vmul.f32 %v997, %v1247
      %v1261 = vmul.f32 %v998, %v1247
      %v1262 = vmul.f32 %v999, %v1247
      %v1263 = vmul.f32 %v1240, %v1247
      %v1264 = vmul.f32 %v1000, %v1247
      %v1265 = vmul.f32 %v1001, %v1247
      %v1266 = vmul.f32 %v1002, %v1247
      %v1267 = vmul.f32 %v1003, %v1247
      %v1268 = vmul.f32 %v1004, %v1247
      %v1269 = vmul.f32 %v1005, %v1247
      %v1270 = vmul.f32 %v1006, %v1247
      %v1271 = vmul.f32 %v1241, %v1247
      %v1272 = vmul.f32 %v1007, %v1247
      %v1273 = vmul.f32 %v1008, %v1247
      %v1274 = vmul.f32 %v1009, %v1247
      %v1275 = vmul.f32 %v1010, %v1247
      %v1276 = vmul.f32 %v1011, %v1247
      %v1277 = vmul.f32 %v1012, %v1247
      %v1278 = vmul.f32 %v1013, %v1247
      %v1279 = vmul.f32 %v1242, %v1247
      %v1280 = vadd.f32 %v1199, %v1248
      %v1281 = vadd.f32 %v1200, %v1249
      %v1282 = vadd.f32 %v1201, %v1250
      %v1283 = vadd.f32 %v1202, %v1251
      %v1284 = vadd.f32 %v1203, %v1252
      %v1285 = vadd.f32 %v1204, %v1253
      %v1286 = vadd.f32 %v1205, %v1254
      %v1287 = vadd.f32 %v1206, %v1255
      %v1288 = vadd.f32 %v1207, %v1256
      %v1289 = vadd.f32 %v1208, %v1257
      %v1290 = vadd.f32 %v1209, %v1258
      %v1291 = vadd.f32 %v1210, %v1259
      %v1292 = vadd.f32 %v1211, %v1260
      %v1293 = vadd.f32 %v1212, %v1261
      %v1294 = vadd.f32 %v1213, %v1262
      %v1295 = vadd.f32 %v1214, %v1263
      %v1296 = vadd.f32 %v1215, %v1264
      %v1297 = vadd.f32 %v1216, %v1265
      %v1298 = vadd.f32 %v1217, %v1266
      %v1299 = vadd.f32 %v1218, %v1267
      %v1300 = vadd.f32 %v1219, %v1268
      %v1301 = vadd.f32 %v1220, %v1269
      %v1302 = vadd.f32 %v1221, %v1270
      %v1303 = vadd.f32 %v1222, %v1271
      %v1304 = vadd.f32 %v1223, %v1272
      %v1305 = vadd.f32 %v1224, %v1273
      %v1306 = vadd.f32 %v1225, %v1274
      %v1307 = vadd.f32 %v1226, %v1275
      %v1308 = vadd.f32 %v1227, %v1276
      %v1309 = vadd.f32 %v1228, %v1277
      %v1310 = vadd.f32 %v1229, %v1278
      %v1311 = vadd.f32 %v1230, %v1279
      %v1312 = vld [vmem:[%s3 + $0x6] sm:$0x1]
      %v1313 = vlaneseq
      %v1314 = vshrl.u32 %v1313, 7
      %v1315 = vsub.s32 0, %v1314
      %v1316 = vrot.slane %v1312, %v1315
      %v1317 = vmul.f32 %v802, %v1316
      %v1318 = vmul.f32 %v803, %v1316
      %v1319 = vmul.f32 %v804, %v1316
      %v1320 = vmul.f32 %v805, %v1316
      %v1321 = vmul.f32 %v806, %v1316
      %v1322 = vmul.f32 %v807, %v1316
      %v1323 = vmul.f32 %v1089, %v1316
      %v1324 = vmul.f32 %v800, %v1316
      %v1325 = vmul.f32 %v809, %v1316
      %v1326 = vmul.f32 %v810, %v1316
      %v1327 = vmul.f32 %v811, %v1316
      %v1328 = vmul.f32 %v812, %v1316
      %v1329 = vmul.f32 %v813, %v1316
      %v1330 = vmul.f32 %v814, %v1316
      %v1331 = vmul.f32 %v1090, %v1316
      %v1332 = vmul.f32 %v816, %v1316
      %v1333 = vmul.f32 %v817, %v1316
      %v1334 = vmul.f32 %v818, %v1316
      %v1335 = vmul.f32 %v819, %v1316
      %v1336 = vmul.f32 %v820, %v1316
      %v1337 = vmul.f32 %v821, %v1316
      %v1338 = vmul.f32 %v1091, %v1316
      %v1339 = vmul.f32 %v823, %v1316
      %v1340 = vmul.f32 %v824, %v1316
      %v1341 = vmul.f32 %v825, %v1316
      %v1342 = vmul.f32 %v826, %v1316
      %v1343 = vmul.f32 %v827, %v1316
      %v1344 = vmul.f32 %v828, %v1316
      %v1345 = vmul.f32 %v1092, %v1316
      %v1346 = vadd.f32 %v1280, %v1317
      %v1347 = vadd.f32 %v1281, %v1318
      %v1348 = vadd.f32 %v1282, %v1319
      %v1349 = vadd.f32 %v1283, %v1320
      %v1350 = vadd.f32 %v1284, %v1321
      %v1351 = vadd.f32 %v1285, %v1322
      %v1352 = vadd.f32 %v1286, %v1323
      %v1353 = vadd.f32 %v1287, %v1324
      %v1354 = vadd.f32 %v1288, %v1325
      %v1355 = vadd.f32 %v1289, %v1326
      %v1356 = vadd.f32 %v1290, %v1327
      %v1357 = vadd.f32 %v1291, %v1328
      %v1358 = vadd.f32 %v1292, %v1329
      %v1359 = vadd.f32 %v1293, %v1330
      %v1360 = vadd.f32 %v1294, %v1331
      %v1361 = vadd.f32 %v1295, %v1324
      %v1362 = vadd.f32 %v1296, %v1332
      %v1363 = vadd.f32 %v1297, %v1333
      %v1364 = vadd.f32 %v1298, %v1334
      %v1365 = vadd.f32 %v1299, %v1335
      %v1366 = vadd.f32 %v1300, %v1336
      %v1367 = vadd.f32 %v1301, %v1337
      %v1368 = vadd.f32 %v1302, %v1338
      %v1369 = vadd.f32 %v1303, %v1324
      %v1370 = vadd.f32 %v1304, %v1339
      %v1371 = vadd.f32 %v1305, %v1340
      %v1372 = vadd.f32 %v1306, %v1341
      %v1373 = vadd.f32 %v1307, %v1342
      %v1374 = vadd.f32 %v1308, %v1343
      %v1375 = vadd.f32 %v1309, %v1344
      %v1376 = vadd.f32 %v1310, %v1345
      %v1377 = vadd.f32 %v1311, %v1324
      %v1378 = vld [vmem:[%s3 + $0x7] sm:$0x1]
      %v1379 = vlaneseq
      %v1380 = vshrl.u32 %v1379, 7
      %v1381 = vsub.s32 0, %v1380
      %v1382 = vrot.slane %v1378, %v1381
      %v1383 = vmul.f32 %v681, %v1382
      %v1384 = vmul.f32 %v682, %v1382
      %v1385 = vmul.f32 %v683, %v1382
      %v1386 = vmul.f32 %v684, %v1382
      %v1387 = vmul.f32 %v685, %v1382
      %v1388 = vmul.f32 %v686, %v1382
      %v1389 = vmul.f32 %v687, %v1382
      %v1390 = vmul.f32 %v1382, 0.0
      %v1391 = vmul.f32 %v689, %v1382
      %v1392 = vmul.f32 %v690, %v1382
      %v1393 = vmul.f32 %v691, %v1382
      %v1394 = vmul.f32 %v692, %v1382
      %v1395 = vmul.f32 %v693, %v1382
      %v1396 = vmul.f32 %v694, %v1382
      %v1397 = vmul.f32 %v695, %v1382
      %v1398 = vmul.f32 %v697, %v1382
      %v1399 = vmul.f32 %v698, %v1382
      %v1400 = vmul.f32 %v699, %v1382
      %v1401 = vmul.f32 %v700, %v1382
      %v1402 = vmul.f32 %v701, %v1382
      %v1403 = vmul.f32 %v702, %v1382
      %v1404 = vmul.f32 %v703, %v1382
      %v1405 = vmul.f32 %v705, %v1382
      %v1406 = vmul.f32 %v706, %v1382
      %v1407 = vmul.f32 %v707, %v1382
      %v1408 = vmul.f32 %v708, %v1382
      %v1409 = vmul.f32 %v709, %v1382
      %v1410 = vmul.f32 %v710, %v1382
      %v1411 = vmul.f32 %v711, %v1382
      %v1412 = vadd.f32 %v1346, %v1383
      %v1413 = vadd.f32 %v1347, %v1384
      %v1414 = vadd.f32 %v1348, %v1385
      %v1415 = vadd.f32 %v1349, %v1386
      %v1416 = vadd.f32 %v1350, %v1387
      %v1417 = vadd.f32 %v1351, %v1388
      %v1418 = vadd.f32 %v1352, %v1389
      %v1419 = vadd.f32 %v1353, %v1390
      %v1420 = vadd.f32 %v1354, %v1391
      %v1421 = vadd.f32 %v1355, %v1392
      %v1422 = vadd.f32 %v1356, %v1393
      %v1423 = vadd.f32 %v1357, %v1394
      %v1424 = vadd.f32 %v1358, %v1395
      %v1425 = vadd.f32 %v1359, %v1396
      %v1426 = vadd.f32 %v1360, %v1397
      %v1427 = vadd.f32 %v1361, %v1390
      %v1428 = vadd.f32 %v1362, %v1398
      %v1429 = vadd.f32 %v1363, %v1399
      %v1430 = vadd.f32 %v1364, %v1400
      %v1431 = vadd.f32 %v1365, %v1401
      %v1432 = vadd.f32 %v1366, %v1402
      %v1433 = vadd.f32 %v1367, %v1403
      %v1434 = vadd.f32 %v1368, %v1404
      %v1435 = vadd.f32 %v1369, %v1390
      %v1436 = vadd.f32 %v1370, %v1405
      %v1437 = vadd.f32 %v1371, %v1406
      %v1438 = vadd.f32 %v1372, %v1407
      %v1439 = vadd.f32 %v1373, %v1408
      %v1440 = vadd.f32 %v1374, %v1409
      %v1441 = vadd.f32 %v1375, %v1410
      %v1442 = vadd.f32 %v1376, %v1411
      %v1443 = vadd.f32 %v1377, %v1390
      %v1444 = vld [vmem:[%s3 + $0x8] sm:$0x1]
      %v1445 = vlaneseq
      %v1446 = vshrl.u32 %v1445, 7
      %v1447 = vsub.s32 0, %v1446
      %v1448 = vrot.slane %v1444, %v1447
      %v1449 = vmul.f32 %v987, %v1448
      %v1450 = vmul.f32 %v988, %v1448
      %v1451 = vmul.f32 %v989, %v1448
      %v1452 = vmul.f32 %v990, %v1448
      %v1453 = vmul.f32 %v991, %v1448
      %v1454 = vmul.f32 %v992, %v1448
      %v1455 = vmul.f32 %v1239, %v1448
      %v1456 = vmul.f32 %v985, %v1448
      %v1457 = vmul.f32 %v994, %v1448
      %v1458 = vmul.f32 %v995, %v1448
      %v1459 = vmul.f32 %v996, %v1448
      %v1460 = vmul.f32 %v997, %v1448
      %v1461 = vmul.f32 %v998, %v1448
      %v1462 = vmul.f32 %v999, %v1448
      %v1463 = vmul.f32 %v1240, %v1448
      %v1464 = vmul.f32 %v1001, %v1448
      %v1465 = vmul.f32 %v1002, %v1448
      %v1466 = vmul.f32 %v1003, %v1448
      %v1467 = vmul.f32 %v1004, %v1448
      %v1468 = vmul.f32 %v1005, %v1448
      %v1469 = vmul.f32 %v1006, %v1448
      %v1470 = vmul.f32 %v1241, %v1448
      %v1471 = vmul.f32 %v1008, %v1448
      %v1472 = vmul.f32 %v1009, %v1448
      %v1473 = vmul.f32 %v1010, %v1448
      %v1474 = vmul.f32 %v1011, %v1448
      %v1475 = vmul.f32 %v1012, %v1448
      %v1476 = vmul.f32 %v1013, %v1448
      %v1477 = vmul.f32 %v1242, %v1448
      %v1478 = vadd.f32 %v1412, %v1449
      %v1479 = vadd.f32 %v1413, %v1450
      %v1480 = vadd.f32 %v1414, %v1451
      %v1481 = vadd.f32 %v1415, %v1452
      %v1482 = vadd.f32 %v1416, %v1453
      %v1483 = vadd.f32 %v1417, %v1454
      %v1484 = vadd.f32 %v1418, %v1455
      %v1485 = vadd.f32 %v1419, %v1456
      %v1486 = vadd.f32 %v1420, %v1457
      %v1487 = vadd.f32 %v1421, %v1458
      %v1488 = vadd.f32 %v1422, %v1459
      %v1489 = vadd.f32 %v1423, %v1460
      %v1490 = vadd.f32 %v1424, %v1461
      %v1491 = vadd.f32 %v1425, %v1462
      %v1492 = vadd.f32 %v1426, %v1463
      %v1493 = vadd.f32 %v1427, %v1456
      %v1494 = vadd.f32 %v1428, %v1464
      %v1495 = vadd.f32 %v1429, %v1465
      %v1496 = vadd.f32 %v1430, %v1466
      %v1497 = vadd.f32 %v1431, %v1467
      %v1498 = vadd.f32 %v1432, %v1468
      %v1499 = vadd.f32 %v1433, %v1469
      %v1500 = vadd.f32 %v1434, %v1470
      %v1501 = vadd.f32 %v1435, %v1456
      %v1502 = vadd.f32 %v1436, %v1471
      %v1503 = vadd.f32 %v1437, %v1472
      %v1504 = vadd.f32 %v1438, %v1473
      %v1505 = vadd.f32 %v1439, %v1474
      %v1506 = vadd.f32 %v1440, %v1475
      %v1507 = vadd.f32 %v1441, %v1476
      %v1508 = vadd.f32 %v1442, %v1477
      %v1509 = vadd.f32 %v1443, %v1456
      %v1510 = vld [vmem:[%s4] sm:$0x1]
      %v1512 = vlaneseq
      %v1513 = vshrl.u32 %v1512, 7
      %v1514 = vsub.s32 0, %v1513
      %v1515 = vrot.slane %v1510, %v1514
      %v1517 = vadd.f32 %v1478, %v1515
      %v1518 = vadd.f32 %v1479, %v1515
      %v1519 = vadd.f32 %v1480, %v1515
      %v1520 = vadd.f32 %v1481, %v1515
      %v1521 = vadd.f32 %v1482, %v1515
      %v1522 = vadd.f32 %v1483, %v1515
      %v1523 = vadd.f32 %v1484, %v1515
      %v1524 = vadd.f32 %v1485, %v1515
      %v1525 = vadd.f32 %v1486, %v1515
      %v1526 = vadd.f32 %v1487, %v1515
      %v1527 = vadd.f32 %v1488, %v1515
      %v1528 = vadd.f32 %v1489, %v1515
      %v1529 = vadd.f32 %v1490, %v1515
      %v1530 = vadd.f32 %v1491, %v1515
      %v1531 = vadd.f32 %v1492, %v1515
      %v1532 = vadd.f32 %v1493, %v1515
      %v1533 = vadd.f32 %v1494, %v1515
      %v1534 = vadd.f32 %v1495, %v1515
      %v1535 = vadd.f32 %v1496, %v1515
      %v1536 = vadd.f32 %v1497, %v1515
      %v1537 = vadd.f32 %v1498, %v1515
      %v1538 = vadd.f32 %v1499, %v1515
      %v1539 = vadd.f32 %v1500, %v1515
      %v1540 = vadd.f32 %v1501, %v1515
      %v1541 = vadd.f32 %v1502, %v1515
      %v1542 = vadd.f32 %v1503, %v1515
      %v1543 = vadd.f32 %v1504, %v1515
      %v1544 = vadd.f32 %v1505, %v1515
      %v1545 = vadd.f32 %v1506, %v1515
      %v1546 = vadd.f32 %v1507, %v1515
      %v1547 = vadd.f32 %v1508, %v1515
      %v1548 = vadd.f32 %v1509, %v1515
      %v1549 = vpack.c.bf16 %v1518, %v1517
      %v1550 = vpack.c.bf16 %v1520, %v1519
      %v1551 = vpack.c.bf16 %v1522, %v1521
      %v1552 = vpack.c.bf16 %v1524, %v1523
      %v1553 = vpack.c.bf16 %v1526, %v1525
      %v1554 = vpack.c.bf16 %v1528, %v1527
      %v1555 = vpack.c.bf16 %v1530, %v1529
      %v1556 = vpack.c.bf16 %v1532, %v1531
      %v1557 = vpack.c.bf16 %v1534, %v1533
      %v1558 = vpack.c.bf16 %v1536, %v1535
      %v1559 = vpack.c.bf16 %v1538, %v1537
      %v1560 = vpack.c.bf16 %v1540, %v1539
      %v1561 = vpack.c.bf16 %v1542, %v1541
      %v1562 = vpack.c.bf16 %v1544, %v1543
      %v1563 = vpack.c.bf16 %v1546, %v1545
      %v1564 = vpack.c.bf16 %v1548, %v1547
      %v1565 = vunpack.c.l.b16 %v288
      %v1566 = vunpack.c.l.b16 %v289
      %v1567 = vunpack.c.l.b16 %v290
      %v1568 = vunpack.c.l.b16 %v291
      %v1569 = vunpack.c.l.b16 %v292
      %v1570 = vunpack.c.l.b16 %v293
      %v1571 = vunpack.c.l.b16 %v294
      %v1572 = vunpack.c.l.b16 %v295
      %v1573 = vunpack.c.l.b16 %v296
      %v1574 = vunpack.c.l.b16 %v297
      %v1575 = vunpack.c.l.b16 %v298
      %v1576 = vunpack.c.l.b16 %v299
      %v1577 = vunpack.c.l.b16 %v300
      %v1578 = vunpack.c.l.b16 %v301
      %v1579 = vunpack.c.l.b16 %v302
      %v1580 = vunpack.c.l.b16 %v303
      %v1581 = vunpack.c.l.b16 %v304
      %v1582 = vunpack.c.l.b16 %v305
      %v1583 = vunpack.c.l.b16 %v306
      %v1584 = vunpack.c.l.b16 %v307
      %v1585 = vunpack.c.l.b16 %v308
      %v1586 = vunpack.c.l.b16 %v309
      %v1587 = vunpack.c.l.b16 %v310
      %v1588 = vunpack.c.l.b16 %v311
      %v1589 = vunpack.c.l.b16 %v312
      %v1590 = vunpack.c.l.b16 %v313
      %v1591 = vunpack.c.l.b16 %v314
      %v1592 = vunpack.c.l.b16 %v315
      %v1593 = vunpack.c.l.b16 %v316
      %v1594 = vunpack.c.l.b16 %v317
      %v1595 = vunpack.c.l.b16 %v318
      %v1596 = vunpack.c.l.b16 %v319
      %v1597 = vpack.c.b16 %v1566, %v1565
      %v1598 = vpack.c.b16 %v1568, %v1567
      %v1599 = vpack.c.b16 %v1570, %v1569
      %v1600 = vpack.c.b16 %v1572, %v1571
      %v1601 = vpack.c.b16 %v1574, %v1573
      %v1602 = vpack.c.b16 %v1576, %v1575
      %v1603 = vpack.c.b16 %v1578, %v1577
      %v1604 = vpack.c.b16 %v1580, %v1579
      %v1605 = vpack.c.b16 %v1582, %v1581
      %v1606 = vpack.c.b16 %v1584, %v1583
      %v1607 = vpack.c.b16 %v1586, %v1585
      %v1608 = vpack.c.b16 %v1588, %v1587
      %v1609 = vpack.c.b16 %v1590, %v1589
      %v1610 = vpack.c.b16 %v1592, %v1591
      %v1611 = vpack.c.b16 %v1594, %v1593
      %v1612 = vpack.c.b16 %v1596, %v1595
      %v1629 = vld [vmem:[%s5] sm:$0xff]
      %v1630 = vld [vmem:[%s5 + $0x8] sm:$0xff]
      %v1631 = vld [vmem:[%s5 + $0x10] sm:$0xff]
      %v1632 = vld [vmem:[%s5 + $0x18] sm:$0xff]
      %v1633 = vld [vmem:[%s5 + $0x20] sm:$0xff]
      %v1634 = vld [vmem:[%s5 + $0x28] sm:$0xff]
      %v1635 = vld [vmem:[%s5 + $0x30] sm:$0xff]
      %v1636 = vld [vmem:[%s5 + $0x38] sm:$0xff]
      %v1637 = vld [vmem:[%s5 + $0x40] sm:$0xff]
      %v1638 = vld [vmem:[%s5 + $0x48] sm:$0xff]
      %v1639 = vld [vmem:[%s5 + $0x50] sm:$0xff]
      %v1640 = vld [vmem:[%s5 + $0x58] sm:$0xff]
      %v1641 = vld [vmem:[%s5 + $0x60] sm:$0xff]
      %v1642 = vld [vmem:[%s5 + $0x68] sm:$0xff]
      %v1643 = vld [vmem:[%s5 + $0x70] sm:$0xff]
      %v1644 = vld [vmem:[%s5 + $0x78] sm:$0xff]
      %v1645 = vld [vmem:[%s5 + $0x80] sm:$0xff]
      %v1646 = vld [vmem:[%s5 + $0x88] sm:$0xff]
      %v1647 = vld [vmem:[%s5 + $0x90] sm:$0xff]
      %v1648 = vld [vmem:[%s5 + $0x98] sm:$0xff]
      %v1649 = vld [vmem:[%s5 + $0xa0] sm:$0xff]
      %v1650 = vld [vmem:[%s5 + $0xa8] sm:$0xff]
      %v1651 = vld [vmem:[%s5 + $0xb0] sm:$0xff]
      %v1652 = vld [vmem:[%s5 + $0xb8] sm:$0xff]
      %v1653 = vld [vmem:[%s5 + $0xc0] sm:$0xff]
      %v1654 = vld [vmem:[%s5 + $0xc8] sm:$0xff]
      %v1655 = vld [vmem:[%s5 + $0xd0] sm:$0xff]
      %v1656 = vld [vmem:[%s5 + $0xd8] sm:$0xff]
      %v1657 = vld [vmem:[%s5 + $0xe0] sm:$0xff]
      %v1658 = vld [vmem:[%s5 + $0xe8] sm:$0xff]
      %v1659 = vld [vmem:[%s5 + $0xf0] sm:$0xff]
      %v1660 = vld [vmem:[%s5 + $0xf8] sm:$0xff]
      %v1661 = vld [vmem:[%s6] sm:$0x3]
      %v1663 = vlaneseq
      %v1664 = vshrl.u32 %v1663, 7
      %v1665 = vsub.s32 0, %v1664
      %v1666 = vrot.slane %v1661, %v1665
      %v1667 = vlaneseq
      %v1668 = vshrl.u32 %v1667, 7
      %v1669 = vsub.s32 1, %v1668
      %v1670 = vrot.slane %v1661, %v1669
      %v1705 = vunpack.c.l.b16 %v1629
      %v1706 = vunpack.c.h.b16 %v1629
      %v1707 = vunpack.c.l.b16 %v1630
      %v1708 = vunpack.c.h.b16 %v1630
      %v1709 = vunpack.c.l.b16 %v1631
      %v1710 = vunpack.c.h.b16 %v1631
      %v1711 = vunpack.c.l.b16 %v1632
      %v1712 = vunpack.c.h.b16 %v1632
      %v1713 = vunpack.c.l.b16 %v1633
      %v1714 = vunpack.c.h.b16 %v1633
      %v1715 = vunpack.c.l.b16 %v1634
      %v1716 = vunpack.c.h.b16 %v1634
      %v1717 = vunpack.c.l.b16 %v1635
      %v1718 = vunpack.c.h.b16 %v1635
      %v1719 = vunpack.c.l.b16 %v1636
      %v1720 = vunpack.c.h.b16 %v1636
      %v1721 = vunpack.c.l.b16 %v1637
      %v1722 = vunpack.c.h.b16 %v1637
      %v1723 = vunpack.c.l.b16 %v1638
      %v1724 = vunpack.c.h.b16 %v1638
      %v1725 = vunpack.c.l.b16 %v1639
      %v1726 = vunpack.c.h.b16 %v1639
      %v1727 = vunpack.c.l.b16 %v1640
      %v1728 = vunpack.c.h.b16 %v1640
      %v1729 = vunpack.c.l.b16 %v1641
      %v1730 = vunpack.c.h.b16 %v1641
      %v1731 = vunpack.c.l.b16 %v1642
      %v1732 = vunpack.c.h.b16 %v1642
      %v1733 = vunpack.c.l.b16 %v1643
      %v1734 = vunpack.c.h.b16 %v1643
      %v1735 = vunpack.c.l.b16 %v1644
      %v1736 = vunpack.c.h.b16 %v1644
      %v1737 = vunpack.c.l.b16 %v1645
      %v1738 = vunpack.c.h.b16 %v1645
      %v1739 = vunpack.c.l.b16 %v1646
      %v1740 = vunpack.c.h.b16 %v1646
      %v1741 = vunpack.c.l.b16 %v1647
      %v1742 = vunpack.c.h.b16 %v1647
      %v1743 = vunpack.c.l.b16 %v1648
      %v1744 = vunpack.c.h.b16 %v1648
      %v1745 = vunpack.c.l.b16 %v1649
      %v1746 = vunpack.c.h.b16 %v1649
      %v1747 = vunpack.c.l.b16 %v1650
      %v1748 = vunpack.c.h.b16 %v1650
      %v1749 = vunpack.c.l.b16 %v1651
      %v1750 = vunpack.c.h.b16 %v1651
      %v1751 = vunpack.c.l.b16 %v1652
      %v1752 = vunpack.c.h.b16 %v1652
      %v1753 = vunpack.c.l.b16 %v1653
      %v1754 = vunpack.c.h.b16 %v1653
      %v1755 = vunpack.c.l.b16 %v1654
      %v1756 = vunpack.c.h.b16 %v1654
      %v1757 = vunpack.c.l.b16 %v1655
      %v1758 = vunpack.c.h.b16 %v1655
      %v1759 = vunpack.c.l.b16 %v1656
      %v1760 = vunpack.c.h.b16 %v1656
      %v1761 = vunpack.c.l.b16 %v1657
      %v1762 = vunpack.c.h.b16 %v1657
      %v1763 = vunpack.c.l.b16 %v1658
      %v1764 = vunpack.c.h.b16 %v1658
      %v1765 = vunpack.c.l.b16 %v1659
      %v1766 = vunpack.c.h.b16 %v1659
      %v1767 = vunpack.c.l.b16 %v1660
      %v1768 = vunpack.c.h.b16 %v1660
      %v1769 = vpack.c.b16 %v1707, %v1705
      %v1770 = vpack.c.b16 %v1708, %v1706
      %v1771 = vpack.c.b16 %v1711, %v1709
      %v1772 = vpack.c.b16 %v1712, %v1710
      %v1773 = vpack.c.b16 %v1715, %v1713
      %v1774 = vpack.c.b16 %v1716, %v1714
      %v1775 = vpack.c.b16 %v1719, %v1717
      %v1776 = vpack.c.b16 %v1720, %v1718
      %v1777 = vpack.c.b16 %v1723, %v1721
      %v1778 = vpack.c.b16 %v1724, %v1722
      %v1779 = vpack.c.b16 %v1727, %v1725
      %v1780 = vpack.c.b16 %v1728, %v1726
      %v1781 = vpack.c.b16 %v1731, %v1729
      %v1782 = vpack.c.b16 %v1732, %v1730
      %v1783 = vpack.c.b16 %v1735, %v1733
      %v1784 = vpack.c.b16 %v1736, %v1734
      %v1785 = vpack.c.b16 %v1739, %v1737
      %v1786 = vpack.c.b16 %v1740, %v1738
      %v1787 = vpack.c.b16 %v1743, %v1741
      %v1788 = vpack.c.b16 %v1744, %v1742
      %v1789 = vpack.c.b16 %v1747, %v1745
      %v1790 = vpack.c.b16 %v1748, %v1746
      %v1791 = vpack.c.b16 %v1751, %v1749
      %v1792 = vpack.c.b16 %v1752, %v1750
      %v1793 = vpack.c.b16 %v1755, %v1753
      %v1794 = vpack.c.b16 %v1756, %v1754
      %v1795 = vpack.c.b16 %v1759, %v1757
      %v1796 = vpack.c.b16 %v1760, %v1758
      %v1797 = vpack.c.b16 %v1763, %v1761
      %v1798 = vpack.c.b16 %v1764, %v1762
      %v1799 = vpack.c.b16 %v1767, %v1765
      %v1800 = vpack.c.b16 %v1768, %v1766
      %1833 = vmatprep.subr.bf16.mxu0 %v1770
      %1834 = vmatpush1.bf16.msra.mxu0 %v1769
      %1835 = vmatprep.subr.bf16.mxu0 %v1772
      %1836 = vmatpush1.bf16.msra.mxu0 %v1771
      %1837 = vmatprep.subr.bf16.mxu0 %v1774
      %1838 = vmatpush1.bf16.msra.mxu0 %v1773
      %1839 = vmatprep.subr.bf16.mxu0 %v1776
      %1840 = vmatpush1.bf16.msra.mxu0 %v1775
      %1841 = vmatprep.subr.bf16.mxu0 %v1778
      %1842 = vmatpush1.bf16.msra.mxu0 %v1777
      %1843 = vmatprep.subr.bf16.mxu0 %v1780
      %1844 = vmatpush1.bf16.msra.mxu0 %v1779
      %1845 = vmatprep.subr.bf16.mxu0 %v1782
      %1846 = vmatpush1.bf16.msra.mxu0 %v1781
      %1847 = vmatprep.subr.bf16.mxu0 %v1784
      %1848 = vmatpush1.bf16.msra.mxu0 %v1783
      %1849 = vmatprep.subr.bf16.mxu0 %v1786
      %1850 = vmatpush1.bf16.msra.mxu0 %v1785
      %1851 = vmatprep.subr.bf16.mxu0 %v1788
      %1852 = vmatpush1.bf16.msra.mxu0 %v1787
      %1853 = vmatprep.subr.bf16.mxu0 %v1790
      %1854 = vmatpush1.bf16.msra.mxu0 %v1789
      %1855 = vmatprep.subr.bf16.mxu0 %v1792
      %1856 = vmatpush1.bf16.msra.mxu0 %v1791
      %1857 = vmatprep.subr.bf16.mxu0 %v1794
      %1858 = vmatpush1.bf16.msra.mxu0 %v1793
      %1859 = vmatprep.subr.bf16.mxu0 %v1796
      %1860 = vmatpush1.bf16.msra.mxu0 %v1795
      %1861 = vmatprep.subr.bf16.mxu0 %v1798
      %1862 = vmatpush1.bf16.msra.mxu0 %v1797
      %1863 = vmatprep.subr.bf16.mxu0 %v1800
      %1864 = vmatpush1.bf16.msra.mxu0 %v1799
      %1865 = vmatprep.mubr.bf16.mxu0 %v1549
      %1866 = vmatmul.mubr.bf16.gmra.mrb[0].mxu0 %v1597
      %v1867 = vpop.f32.mrb[0].mxu0
      %v1868 = vadd.f32 %v1666, %v1867
      %v1869 = vpop.f32.mrb[0].mxu0
      %v1870 = vadd.f32 %v1670, %v1869
      %v1871 = vpop.f32.mrb[0].mxu0
      %v1872 = vadd.f32 %v1666, %v1871
      %v1873 = vpop.f32.mrb[0].mxu0
      %v1874 = vadd.f32 %v1670, %v1873
      %1875 = vmatprep.mubr.bf16.mxu0 %v1550
      %1876 = vmatmul.mubr.bf16.gmra.mrb[0].mxu0 %v1598
      %v1877 = vpop.f32.mrb[0].mxu0
      %v1878 = vadd.f32 %v1666, %v1877
      %v1879 = vpop.f32.mrb[0].mxu0
      %v1880 = vadd.f32 %v1670, %v1879
      %v1881 = vpop.f32.mrb[0].mxu0
      %v1882 = vadd.f32 %v1666, %v1881
      %v1883 = vpop.f32.mrb[0].mxu0
      %v1884 = vadd.f32 %v1670, %v1883
      %1885 = vmatprep.mubr.bf16.mxu0 %v1551
      %1886 = vmatmul.mubr.bf16.gmra.mrb[0].mxu0 %v1599
      %v1887 = vpop.f32.mrb[0].mxu0
      %v1888 = vadd.f32 %v1666, %v1887
      %v1889 = vpop.f32.mrb[0].mxu0
      %v1890 = vadd.f32 %v1670, %v1889
      %v1891 = vpop.f32.mrb[0].mxu0
      %v1892 = vadd.f32 %v1666, %v1891
      %v1893 = vpop.f32.mrb[0].mxu0
      %v1894 = vadd.f32 %v1670, %v1893
      %1895 = vmatprep.mubr.bf16.mxu0 %v1552
      %1896 = vmatmul.mubr.bf16.gmra.mrb[0].mxu0 %v1600
      %v1897 = vpop.f32.mrb[0].mxu0
      %v1898 = vadd.f32 %v1666, %v1897
      %v1899 = vpop.f32.mrb[0].mxu0
      %v1900 = vadd.f32 %v1670, %v1899
      %v1901 = vpop.f32.mrb[0].mxu0
      %v1902 = vadd.f32 %v1666, %v1901
      %v1903 = vpop.f32.mrb[0].mxu0
      %v1904 = vadd.f32 %v1670, %v1903
      %1905 = vmatprep.mubr.bf16.mxu0 %v1553
      %1906 = vmatmul.mubr.bf16.gmra.mrb[0].mxu0 %v1601
      %v1907 = vpop.f32.mrb[0].mxu0
      %v1908 = vadd.f32 %v1666, %v1907
      %v1909 = vpop.f32.mrb[0].mxu0
      %v1910 = vadd.f32 %v1670, %v1909
      %v1911 = vpop.f32.mrb[0].mxu0
      %v1912 = vadd.f32 %v1666, %v1911
      %v1913 = vpop.f32.mrb[0].mxu0
      %v1914 = vadd.f32 %v1670, %v1913
      %1915 = vmatprep.mubr.bf16.mxu0 %v1554
      %1916 = vmatmul.mubr.bf16.gmra.mrb[0].mxu0 %v1602
      %v1917 = vpop.f32.mrb[0].mxu0
      %v1918 = vadd.f32 %v1666, %v1917
      %v1919 = vpop.f32.mrb[0].mxu0
      %v1920 = vadd.f32 %v1670, %v1919
      %v1921 = vpop.f32.mrb[0].mxu0
      %v1922 = vadd.f32 %v1666, %v1921
      %v1923 = vpop.f32.mrb[0].mxu0
      %v1924 = vadd.f32 %v1670, %v1923
      %1925 = vmatprep.mubr.bf16.mxu0 %v1555
      %1926 = vmatmul.mubr.bf16.gmra.mrb[0].mxu0 %v1603
      %v1927 = vpop.f32.mrb[0].mxu0
      %v1928 = vadd.f32 %v1666, %v1927
      %v1929 = vpop.f32.mrb[0].mxu0
      %v1930 = vadd.f32 %v1670, %v1929
      %v1931 = vpop.f32.mrb[0].mxu0
      %v1932 = vadd.f32 %v1666, %v1931
      %v1933 = vpop.f32.mrb[0].mxu0
      %v1934 = vadd.f32 %v1670, %v1933
      %1935 = vmatprep.mubr.bf16.mxu0 %v1556
      %1936 = vmatmul.mubr.bf16.gmra.mrb[0].mxu0 %v1604
      %v1937 = vpop.f32.mrb[0].mxu0
      %v1938 = vadd.f32 %v1666, %v1937
      %v1939 = vpop.f32.mrb[0].mxu0
      %v1940 = vadd.f32 %v1670, %v1939
      %v1941 = vpop.f32.mrb[0].mxu0
      %v1942 = vadd.f32 %v1666, %v1941
      %v1943 = vpop.f32.mrb[0].mxu0
      %v1944 = vadd.f32 %v1670, %v1943
      %1945 = vmatprep.mubr.bf16.mxu0 %v1557
      %1946 = vmatmul.mubr.bf16.gmra.mrb[0].mxu0 %v1605
      %v1947 = vpop.f32.mrb[0].mxu0
      %v1948 = vadd.f32 %v1666, %v1947
      %v1949 = vpop.f32.mrb[0].mxu0
      %v1950 = vadd.f32 %v1670, %v1949
      %v1951 = vpop.f32.mrb[0].mxu0
      %v1952 = vadd.f32 %v1666, %v1951
      %v1953 = vpop.f32.mrb[0].mxu0
      %v1954 = vadd.f32 %v1670, %v1953
      %1955 = vmatprep.mubr.bf16.mxu0 %v1558
      %1956 = vmatmul.mubr.bf16.gmra.mrb[0].mxu0 %v1606
      %v1957 = vpop.f32.mrb[0].mxu0
      %v1958 = vadd.f32 %v1666, %v1957
      %v1959 = vpop.f32.mrb[0].mxu0
      %v1960 = vadd.f32 %v1670, %v1959
      %v1961 = vpop.f32.mrb[0].mxu0
      %v1962 = vadd.f32 %v1666, %v1961
      %v1963 = vpop.f32.mrb[0].mxu0
      %v1964 = vadd.f32 %v1670, %v1963
      %1965 = vmatprep.mubr.bf16.mxu0 %v1559
      %1966 = vmatmul.mubr.bf16.gmra.mrb[0].mxu0 %v1607
      %v1967 = vpop.f32.mrb[0].mxu0
      %v1968 = vadd.f32 %v1666, %v1967
      %v1969 = vpop.f32.mrb[0].mxu0
      %v1970 = vadd.f32 %v1670, %v1969
      %v1971 = vpop.f32.mrb[0].mxu0
      %v1972 = vadd.f32 %v1666, %v1971
      %v1973 = vpop.f32.mrb[0].mxu0
      %v1974 = vadd.f32 %v1670, %v1973
      %1975 = vmatprep.mubr.bf16.mxu0 %v1560
      %1976 = vmatmul.mubr.bf16.gmra.mrb[0].mxu0 %v1608
      %v1977 = vpop.f32.mrb[0].mxu0
      %v1978 = vadd.f32 %v1666, %v1977
      %v1979 = vpop.f32.mrb[0].mxu0
      %v1980 = vadd.f32 %v1670, %v1979
      %v1981 = vpop.f32.mrb[0].mxu0
      %v1982 = vadd.f32 %v1666, %v1981
      %v1983 = vpop.f32.mrb[0].mxu0
      %v1984 = vadd.f32 %v1670, %v1983
      %1985 = vmatprep.mubr.bf16.mxu0 %v1561
      %1986 = vmatmul.mubr.bf16.gmra.mrb[0].mxu0 %v1609
      %v1987 = vpop.f32.mrb[0].mxu0
      %v1988 = vadd.f32 %v1666, %v1987
      %v1989 = vpop.f32.mrb[0].mxu0
      %v1990 = vadd.f32 %v1670, %v1989
      %v1991 = vpop.f32.mrb[0].mxu0
      %v1992 = vadd.f32 %v1666, %v1991
      %v1993 = vpop.f32.mrb[0].mxu0
      %v1994 = vadd.f32 %v1670, %v1993
      %1995 = vmatprep.mubr.bf16.mxu0 %v1562
      %1996 = vmatmul.mubr.bf16.gmra.mrb[0].mxu0 %v1610
      %v1997 = vpop.f32.mrb[0].mxu0
      %v1998 = vadd.f32 %v1666, %v1997
      %v1999 = vpop.f32.mrb[0].mxu0
      %v2000 = vadd.f32 %v1670, %v1999
      %v2001 = vpop.f32.mrb[0].mxu0
      %v2002 = vadd.f32 %v1666, %v2001
      %v2003 = vpop.f32.mrb[0].mxu0
      %v2004 = vadd.f32 %v1670, %v2003
      %2005 = vmatprep.mubr.bf16.mxu0 %v1563
      %2006 = vmatmul.mubr.bf16.gmra.mrb[0].mxu0 %v1611
      %v2007 = vpop.f32.mrb[0].mxu0
      %v2008 = vadd.f32 %v1666, %v2007
      %v2009 = vpop.f32.mrb[0].mxu0
      %v2010 = vadd.f32 %v1670, %v2009
      %v2011 = vpop.f32.mrb[0].mxu0
      %v2012 = vadd.f32 %v1666, %v2011
      %v2013 = vpop.f32.mrb[0].mxu0
      %v2014 = vadd.f32 %v1670, %v2013
      %2015 = vmatprep.mubr.bf16.mxu0 %v1564
      %2016 = vmatmul.mubr.bf16.gmra.mrb[0].mxu0 %v1612
      %v2017 = vpop.f32.mrb[0].mxu0
      %v2018 = vadd.f32 %v1666, %v2017
      %v2019 = vpop.f32.mrb[0].mxu0
      %v2020 = vadd.f32 %v1670, %v2019
      %v2021 = vpop.f32.mrb[0].mxu0
      %v2022 = vadd.f32 %v1666, %v2021
      %v2023 = vpop.f32.mrb[0].mxu0
      %v2024 = vadd.f32 %v1670, %v2023
      %2025 = vdwg.mxu0
      %v2026 = vlaneseq
      %v2027 = vand.u32 %v2026, 127
      %v2028 = vadd.s32 %v2027, 128
      %v2029 = vand.u32 %v2027, 1
      %v2030 = vand.u32 %v2028, 1
      %vm2031 = vcmp.eq.s32.totalorder %v2029, 1
      %vm2032 = vcmp.eq.s32.totalorder %v2030, 1
      %v2033 = vmax.f32 %v1868, 0.0
      %v2034 = vmax.f32 %v1870, 0.0
      %v2035 = vmax.f32 %v1872, 0.0
      %v2036 = vmax.f32 %v1874, 0.0
      %v2037 = vmax.f32 %v1878, 0.0
      %v2038 = vmax.f32 %v1880, 0.0
      %v2039 = vmax.f32 %v1882, 0.0
      %v2040 = vmax.f32 %v1884, 0.0
      %v2041 = vmax.f32 %v1888, 0.0
      %v2042 = vmax.f32 %v1890, 0.0
      %v2043 = vmax.f32 %v1892, 0.0
      %v2044 = vmax.f32 %v1894, 0.0
      %v2045 = vmax.f32 %v1898, 0.0
      %v2046 = vmax.f32 %v1900, 0.0
      %v2047 = vmax.f32 %v1902, 0.0
      %v2048 = vmax.f32 %v1904, 0.0
      %v2049 = vmax.f32 %v1908, 0.0
      %v2050 = vmax.f32 %v1910, 0.0
      %v2051 = vmax.f32 %v1912, 0.0
      %v2052 = vmax.f32 %v1914, 0.0
      %v2053 = vmax.f32 %v1918, 0.0
      %v2054 = vmax.f32 %v1920, 0.0
      %v2055 = vmax.f32 %v1922, 0.0
      %v2056 = vmax.f32 %v1924, 0.0
      %v2057 = vmax.f32 %v1928, 0.0
      %v2058 = vmax.f32 %v1930, 0.0
      %v2059 = vmax.f32 %v1932, 0.0
      %v2060 = vmax.f32 %v1934, 0.0
      %v2061 = vmax.f32 %v1938, 0.0
      %v2062 = vmax.f32 %v1940, 0.0
      %v2063 = vmax.f32 %v1942, 0.0
      %v2064 = vmax.f32 %v1944, 0.0
      %v2065 = vmax.f32 %v1948, 0.0
      %v2066 = vmax.f32 %v1950, 0.0
      %v2067 = vmax.f32 %v1952, 0.0
      %v2068 = vmax.f32 %v1954, 0.0
      %v2069 = vmax.f32 %v1958, 0.0
      %v2070 = vmax.f32 %v1960, 0.0
      %v2071 = vmax.f32 %v1962, 0.0
      %v2072 = vmax.f32 %v1964, 0.0
      %v2073 = vmax.f32 %v1968, 0.0
      %v2074 = vmax.f32 %v1970, 0.0
      %v2075 = vmax.f32 %v1972, 0.0
      %v2076 = vmax.f32 %v1974, 0.0
      %v2077 = vmax.f32 %v1978, 0.0
      %v2078 = vmax.f32 %v1980, 0.0
      %v2079 = vmax.f32 %v1982, 0.0
      %v2080 = vmax.f32 %v1984, 0.0
      %v2081 = vmax.f32 %v1988, 0.0
      %v2082 = vmax.f32 %v1990, 0.0
      %v2083 = vmax.f32 %v1992, 0.0
      %v2084 = vmax.f32 %v1994, 0.0
      %v2085 = vmax.f32 %v1998, 0.0
      %v2086 = vmax.f32 %v2000, 0.0
      %v2087 = vmax.f32 %v2002, 0.0
      %v2088 = vmax.f32 %v2004, 0.0
      %v2089 = vmax.f32 %v2008, 0.0
      %v2090 = vmax.f32 %v2010, 0.0
      %v2091 = vmax.f32 %v2012, 0.0
      %v2092 = vmax.f32 %v2014, 0.0
      %v2093 = vmax.f32 %v2018, 0.0
      %v2094 = vmax.f32 %v2020, 0.0
      %v2095 = vmax.f32 %v2022, 0.0
      %v2096 = vmax.f32 %v2024, 0.0
      %v2097 = vsel %vm2031, %v2033, %v1868
      %v2098 = vsel %vm2032, %v2034, %v1870
      %v2099 = vsel %vm2031, %v2035, %v1872
      %v2100 = vsel %vm2032, %v2036, %v1874
      %v2101 = vsel %vm2031, %v2037, %v1878
      %v2102 = vsel %vm2032, %v2038, %v1880
      %v2103 = vsel %vm2031, %v2039, %v1882
      %v2104 = vsel %vm2032, %v2040, %v1884
      %v2105 = vsel %vm2031, %v2041, %v1888
      %v2106 = vsel %vm2032, %v2042, %v1890
      %v2107 = vsel %vm2031, %v2043, %v1892
      %v2108 = vsel %vm2032, %v2044, %v1894
      %v2109 = vsel %vm2031, %v2045, %v1898
      %v2110 = vsel %vm2032, %v2046, %v1900
      %v2111 = vsel %vm2031, %v2047, %v1902
      %v2112 = vsel %vm2032, %v2048, %v1904
      %v2113 = vsel %vm2031, %v2049, %v1908
      %v2114 = vsel %vm2032, %v2050, %v1910
      %v2115 = vsel %vm2031, %v2051, %v1912
      %v2116 = vsel %vm2032, %v2052, %v1914
      %v2117 = vsel %vm2031, %v2053, %v1918
      %v2118 = vsel %vm2032, %v2054, %v1920
      %v2119 = vsel %vm2031, %v2055, %v1922
      %v2120 = vsel %vm2032, %v2056, %v1924
      %v2121 = vsel %vm2031, %v2057, %v1928
      %v2122 = vsel %vm2032, %v2058, %v1930
      %v2123 = vsel %vm2031, %v2059, %v1932
      %v2124 = vsel %vm2032, %v2060, %v1934
      %v2125 = vsel %vm2031, %v2061, %v1938
      %v2126 = vsel %vm2032, %v2062, %v1940
      %v2127 = vsel %vm2031, %v2063, %v1942
      %v2128 = vsel %vm2032, %v2064, %v1944
      %v2129 = vsel %vm2031, %v2065, %v1948
      %v2130 = vsel %vm2032, %v2066, %v1950
      %v2131 = vsel %vm2031, %v2067, %v1952
      %v2132 = vsel %vm2032, %v2068, %v1954
      %v2133 = vsel %vm2031, %v2069, %v1958
      %v2134 = vsel %vm2032, %v2070, %v1960
      %v2135 = vsel %vm2031, %v2071, %v1962
      %v2136 = vsel %vm2032, %v2072, %v1964
      %v2137 = vsel %vm2031, %v2073, %v1968
      %v2138 = vsel %vm2032, %v2074, %v1970
      %v2139 = vsel %vm2031, %v2075, %v1972
      %v2140 = vsel %vm2032, %v2076, %v1974
      %v2141 = vsel %vm2031, %v2077, %v1978
      %v2142 = vsel %vm2032, %v2078, %v1980
      %v2143 = vsel %vm2031, %v2079, %v1982
      %v2144 = vsel %vm2032, %v2080, %v1984
      %v2145 = vsel %vm2031, %v2081, %v1988
      %v2146 = vsel %vm2032, %v2082, %v1990
      %v2147 = vsel %vm2031, %v2083, %v1992
      %v2148 = vsel %vm2032, %v2084, %v1994
      %v2149 = vsel %vm2031, %v2085, %v1998
      %v2150 = vsel %vm2032, %v2086, %v2000
      %v2151 = vsel %vm2031, %v2087, %v2002
      %v2152 = vsel %vm2032, %v2088, %v2004
      %v2153 = vsel %vm2031, %v2089, %v2008
      %v2154 = vsel %vm2032, %v2090, %v2010
      %v2155 = vsel %vm2031, %v2091, %v2012
      %v2156 = vsel %vm2032, %v2092, %v2014
      %v2157 = vsel %vm2031, %v2093, %v2018
      %v2158 = vsel %vm2032, %v2094, %v2020
      %v2159 = vsel %vm2031, %v2095, %v2022
      %v2160 = vsel %vm2032, %v2096, %v2024
      %v2161 = vpack.c.bf16 %v2097, %v2097
      %v2162 = vpack.c.bf16 %v2098, %v2098
      %v2163 = vpack.c.bf16 %v2099, %v2099
      %v2164 = vpack.c.bf16 %v2100, %v2100
      %v2165 = vpack.c.bf16 %v2101, %v2101
      %v2166 = vpack.c.bf16 %v2102, %v2102
      %v2167 = vpack.c.bf16 %v2103, %v2103
      %v2168 = vpack.c.bf16 %v2104, %v2104
      %v2169 = vpack.c.bf16 %v2105, %v2105
      %v2170 = vpack.c.bf16 %v2106, %v2106
      %v2171 = vpack.c.bf16 %v2107, %v2107
      %v2172 = vpack.c.bf16 %v2108, %v2108
      %v2173 = vpack.c.bf16 %v2109, %v2109
      %v2174 = vpack.c.bf16 %v2110, %v2110
      %v2175 = vpack.c.bf16 %v2111, %v2111
      %v2176 = vpack.c.bf16 %v2112, %v2112
      %v2177 = vpack.c.bf16 %v2113, %v2113
      %v2178 = vpack.c.bf16 %v2114, %v2114
      %v2179 = vpack.c.bf16 %v2115, %v2115
      %v2180 = vpack.c.bf16 %v2116, %v2116
      %v2181 = vpack.c.bf16 %v2117, %v2117
      %v2182 = vpack.c.bf16 %v2118, %v2118
      %v2183 = vpack.c.bf16 %v2119, %v2119
      %v2184 = vpack.c.bf16 %v2120, %v2120
      %v2185 = vpack.c.bf16 %v2121, %v2121
      %v2186 = vpack.c.bf16 %v2122, %v2122
      %v2187 = vpack.c.bf16 %v2123, %v2123
      %v2188 = vpack.c.bf16 %v2124, %v2124
      %v2189 = vpack.c.bf16 %v2125, %v2125
      %v2190 = vpack.c.bf16 %v2126, %v2126
      %v2191 = vpack.c.bf16 %v2127, %v2127
      %v2192 = vpack.c.bf16 %v2128, %v2128
      %v2193 = vpack.c.bf16 %v2129, %v2129
      %v2194 = vpack.c.bf16 %v2130, %v2130
      %v2195 = vpack.c.bf16 %v2131, %v2131
      %v2196 = vpack.c.bf16 %v2132, %v2132
      %v2197 = vpack.c.bf16 %v2133, %v2133
      %v2198 = vpack.c.bf16 %v2134, %v2134
      %v2199 = vpack.c.bf16 %v2135, %v2135
      %v2200 = vpack.c.bf16 %v2136, %v2136
      %v2201 = vpack.c.bf16 %v2137, %v2137
      %v2202 = vpack.c.bf16 %v2138, %v2138
      %v2203 = vpack.c.bf16 %v2139, %v2139
      %v2204 = vpack.c.bf16 %v2140, %v2140
      %v2205 = vpack.c.bf16 %v2141, %v2141
      %v2206 = vpack.c.bf16 %v2142, %v2142
      %v2207 = vpack.c.bf16 %v2143, %v2143
      %v2208 = vpack.c.bf16 %v2144, %v2144
      %v2209 = vpack.c.bf16 %v2145, %v2145
      %v2210 = vpack.c.bf16 %v2146, %v2146
      %v2211 = vpack.c.bf16 %v2147, %v2147
      %v2212 = vpack.c.bf16 %v2148, %v2148
      %v2213 = vpack.c.bf16 %v2149, %v2149
      %v2214 = vpack.c.bf16 %v2150, %v2150
      %v2215 = vpack.c.bf16 %v2151, %v2151
      %v2216 = vpack.c.bf16 %v2152, %v2152
      %v2217 = vpack.c.bf16 %v2153, %v2153
      %v2218 = vpack.c.bf16 %v2154, %v2154
      %v2219 = vpack.c.bf16 %v2155, %v2155
      %v2220 = vpack.c.bf16 %v2156, %v2156
      %v2221 = vpack.c.bf16 %v2157, %v2157
      %v2222 = vpack.c.bf16 %v2158, %v2158
      %v2223 = vpack.c.bf16 %v2159, %v2159
      %v2224 = vpack.c.bf16 %v2160, %v2160
      %v2289 = vunpack.c.l.b16 %v2161
      %v2290 = vunpack.c.l.b16 %v2162
      %v2291 = vunpack.c.l.b16 %v2163
      %v2292 = vunpack.c.l.b16 %v2164
      %v2293 = vunpack.c.l.b16 %v2165
      %v2294 = vunpack.c.l.b16 %v2166
      %v2295 = vunpack.c.l.b16 %v2167
      %v2296 = vunpack.c.l.b16 %v2168
      %v2297 = vunpack.c.l.b16 %v2169
      %v2298 = vunpack.c.l.b16 %v2170
      %v2299 = vunpack.c.l.b16 %v2171
      %v2300 = vunpack.c.l.b16 %v2172
      %v2301 = vunpack.c.l.b16 %v2173
      %v2302 = vunpack.c.l.b16 %v2174
      %v2303 = vunpack.c.l.b16 %v2175
      %v2304 = vunpack.c.l.b16 %v2176
      %v2305 = vunpack.c.l.b16 %v2177
      %v2306 = vunpack.c.l.b16 %v2178
      %v2307 = vunpack.c.l.b16 %v2179
      %v2308 = vunpack.c.l.b16 %v2180
      %v2309 = vunpack.c.l.b16 %v2181
      %v2310 = vunpack.c.l.b16 %v2182
      %v2311 = vunpack.c.l.b16 %v2183
      %v2312 = vunpack.c.l.b16 %v2184
      %v2313 = vunpack.c.l.b16 %v2185
      %v2314 = vunpack.c.l.b16 %v2186
      %v2315 = vunpack.c.l.b16 %v2187
      %v2316 = vunpack.c.l.b16 %v2188
      %v2317 = vunpack.c.l.b16 %v2189
      %v2318 = vunpack.c.l.b16 %v2190
      %v2319 = vunpack.c.l.b16 %v2191
      %v2320 = vunpack.c.l.b16 %v2192
      %v2321 = vunpack.c.l.b16 %v2193
      %v2322 = vunpack.c.l.b16 %v2194
      %v2323 = vunpack.c.l.b16 %v2195
      %v2324 = vunpack.c.l.b16 %v2196
      %v2325 = vunpack.c.l.b16 %v2197
      %v2326 = vunpack.c.l.b16 %v2198
      %v2327 = vunpack.c.l.b16 %v2199
      %v2328 = vunpack.c.l.b16 %v2200
      %v2329 = vunpack.c.l.b16 %v2201
      %v2330 = vunpack.c.l.b16 %v2202
      %v2331 = vunpack.c.l.b16 %v2203
      %v2332 = vunpack.c.l.b16 %v2204
      %v2333 = vunpack.c.l.b16 %v2205
      %v2334 = vunpack.c.l.b16 %v2206
      %v2335 = vunpack.c.l.b16 %v2207
      %v2336 = vunpack.c.l.b16 %v2208
      %v2337 = vunpack.c.l.b16 %v2209
      %v2338 = vunpack.c.l.b16 %v2210
      %v2339 = vunpack.c.l.b16 %v2211
      %v2340 = vunpack.c.l.b16 %v2212
      %v2341 = vunpack.c.l.b16 %v2213
      %v2342 = vunpack.c.l.b16 %v2214
      %v2343 = vunpack.c.l.b16 %v2215
      %v2344 = vunpack.c.l.b16 %v2216
      %v2345 = vunpack.c.l.b16 %v2217
      %v2346 = vunpack.c.l.b16 %v2218
      %v2347 = vunpack.c.l.b16 %v2219
      %v2348 = vunpack.c.l.b16 %v2220
      %v2349 = vunpack.c.l.b16 %v2221
      %v2350 = vunpack.c.l.b16 %v2222
      %v2351 = vunpack.c.l.b16 %v2223
      %v2352 = vunpack.c.l.b16 %v2224
      %v2353 = vpack.c.b16 %v2290, %v2289
      %v2354 = vpack.c.b16 %v2292, %v2291
      %v2355 = vpack.c.b16 %v2294, %v2293
      %v2356 = vpack.c.b16 %v2296, %v2295
      %v2357 = vpack.c.b16 %v2298, %v2297
      %v2358 = vpack.c.b16 %v2300, %v2299
      %v2359 = vpack.c.b16 %v2302, %v2301
      %v2360 = vpack.c.b16 %v2304, %v2303
      %v2361 = vpack.c.b16 %v2306, %v2305
      %v2362 = vpack.c.b16 %v2308, %v2307
      %v2363 = vpack.c.b16 %v2310, %v2309
      %v2364 = vpack.c.b16 %v2312, %v2311
      %v2365 = vpack.c.b16 %v2314, %v2313
      %v2366 = vpack.c.b16 %v2316, %v2315
      %v2367 = vpack.c.b16 %v2318, %v2317
      %v2368 = vpack.c.b16 %v2320, %v2319
      %v2369 = vpack.c.b16 %v2322, %v2321
      %v2370 = vpack.c.b16 %v2324, %v2323
      %v2371 = vpack.c.b16 %v2326, %v2325
      %v2372 = vpack.c.b16 %v2328, %v2327
      %v2373 = vpack.c.b16 %v2330, %v2329
      %v2374 = vpack.c.b16 %v2332, %v2331
      %v2375 = vpack.c.b16 %v2334, %v2333
      %v2376 = vpack.c.b16 %v2336, %v2335
      %v2377 = vpack.c.b16 %v2338, %v2337
      %v2378 = vpack.c.b16 %v2340, %v2339
      %v2379 = vpack.c.b16 %v2342, %v2341
      %v2380 = vpack.c.b16 %v2344, %v2343
      %v2381 = vpack.c.b16 %v2346, %v2345
      %v2382 = vpack.c.b16 %v2348, %v2347
      %v2383 = vpack.c.b16 %v2350, %v2349
      %v2384 = vpack.c.b16 %v2352, %v2351
      %2417 = vst [vmem:[%s285] sm:$0xff] %v2353
      %2418 = vst [vmem:[%s285 + $0x8] sm:$0xff] %v2354
      %2419 = vst [vmem:[%s285 + $0x10] sm:$0xff] %v2355
      %2420 = vst [vmem:[%s285 + $0x18] sm:$0xff] %v2356
      %2421 = vst [vmem:[%s285 + $0x20] sm:$0xff] %v2357
      %2422 = vst [vmem:[%s285 + $0x28] sm:$0xff] %v2358
      %2423 = vst [vmem:[%s285 + $0x30] sm:$0xff] %v2359
      %2424 = vst [vmem:[%s285 + $0x38] sm:$0xff] %v2360
      %2425 = vst [vmem:[%s285 + $0x40] sm:$0xff] %v2361
      %2426 = vst [vmem:[%s285 + $0x48] sm:$0xff] %v2362
      %2427 = vst [vmem:[%s285 + $0x50] sm:$0xff] %v2363
      %2428 = vst [vmem:[%s285 + $0x58] sm:$0xff] %v2364
      %2429 = vst [vmem:[%s285 + $0x60] sm:$0xff] %v2365
      %2430 = vst [vmem:[%s285 + $0x68] sm:$0xff] %v2366
      %2431 = vst [vmem:[%s285 + $0x70] sm:$0xff] %v2367
      %2432 = vst [vmem:[%s285 + $0x78] sm:$0xff] %v2368
      %2433 = vst [vmem:[%s285 + $0x80] sm:$0xff] %v2369
      %2434 = vst [vmem:[%s285 + $0x88] sm:$0xff] %v2370
      %2435 = vst [vmem:[%s285 + $0x90] sm:$0xff] %v2371
      %2436 = vst [vmem:[%s285 + $0x98] sm:$0xff] %v2372
      %2437 = vst [vmem:[%s285 + $0xa0] sm:$0xff] %v2373
      %2438 = vst [vmem:[%s285 + $0xa8] sm:$0xff] %v2374
      %2439 = vst [vmem:[%s285 + $0xb0] sm:$0xff] %v2375
      %2440 = vst [vmem:[%s285 + $0xb8] sm:$0xff] %v2376
      %2441 = vst [vmem:[%s285 + $0xc0] sm:$0xff] %v2377
      %2442 = vst [vmem:[%s285 + $0xc8] sm:$0xff] %v2378
      %2443 = vst [vmem:[%s285 + $0xd0] sm:$0xff] %v2379
      %2444 = vst [vmem:[%s285 + $0xd8] sm:$0xff] %v2380
      %2445 = vst [vmem:[%s285 + $0xe0] sm:$0xff] %v2381
      %2446 = vst [vmem:[%s285 + $0xe8] sm:$0xff] %v2382
      %2447 = vst [vmem:[%s285 + $0xf0] sm:$0xff] %v2383
      %2448 = vst [vmem:[%s285 + $0xf8] sm:$0xff] %v2384
      %s2449 = smul.u32 4, %s18
      %p2450 = scmp.lt.s32.totalorder %s2449, 15
      %s2451 = scalar_select %p2450, %s2449, 15
      %s2452 = smul.addr %s2451, 16
      %s2453 = smul.addr %s2452, 4
      %s2454 = scalar_lea.vmem %s7, %s2453
      // Predicated region
      $region49: #{forward.3} parent=47 // pred_check
        %p2455 = pneg %p188
      $region50: #{forward.3} parent=47 // pred_check_branch
        %2457 = sbr.rel (%p2455) target = $region52
      $region51: #{forward.3} parent=47 // pred_region
        %s2458 = smul.u32 4, %s18
      $region52: #{forward.3} parent=47 // pred_fallthru
        _
    $region48: #{forward.3} parent=5 // pred_fallthru
      _
    %p2459 = scmp.le.s32.totalorder 2, %s13
    // Predicated region
    $region53: #{forward.3} parent=5 // pred_check
      %p2460 = pneg %p2459
    $region54: #{forward.3} parent=5 // pred_check_branch
      %2462 = sbr.rel (%p2460) target = $region56
    $region55: #{forward.3} parent=5 // pred_region
      %s2463 = ssub.s32 %s13, 2
      // Predicated region
      $region57: #{forward.3} parent=55 // pred_check
        %p2464 = pneg %p194
      $region58: #{forward.3} parent=55 // pred_check_branch
        %2466 = sbr.rel (%p2464) target = $region60
      $region59: #{forward.3} parent=55 // pred_region
        %s2467 = smul.u32 4, %s19
        %p2468 = scmp.lt.s32.totalorder %s2467, 15
        %s2469 = scalar_select %p2468, %s2467, 15
        %s2470 = smul.addr %s2469, 16
        %s2471 = smul.addr %s2470, 4
        %s2472 = scalar_lea.vmem %s7, %s2471
      $region60: #{forward.3} parent=55 // pred_fallthru
        _
    $region56: #{forward.3} parent=5 // pred_fallthru
      _
  $region6: #{forward.3} parent=0 // loop_footer
    %s17 = sadd.s32 1, %s13
  $region7: #{forward.3} parent=0 // loop_footer_branch
    %12 = sbr.rel target = $region3
  $region8: #{forward.3} parent=0 // loop_exit
    _

// kernel: forward.2
$region0: #{forward.2}
  #allocation0 [shape = 'u32[]', space=smem, size = 0x4, offset = 0x4, fixed_abs, tag = 'smem constant byte address 0x4 - core index']
  #allocation1 [shape = 'u32[144,128]{1,0:T(1,128)}', space=vmem, size = 0x12000, scoped, tag = 'internal scratch']
  #allocation2 [shape = 'f32[4,18,32,128]{3,2,1,0:T(8,128)}', space=vmem, size = 0x120000, scoped, tag = 'scratch operand']
  #allocation3 [shape = 'f32[4,18,32,128]{3,2,1,0:T(8,128)}', space=vmem, size = 0x120000, scoped, tag = 'scratch operand']
  %s0 = inlined_call_operand.vmem [shape: bf16[16,16,16,128], index: 0, kind: input, shape index: {}]
  %s1 = inlined_call_operand.vmem [shape: f32[9,128], index: 1, kind: input, shape index: {}]
  %s2 = inlined_call_operand.vmem [shape: f32[1,128], index: 2, kind: input, shape index: {}]
  %s3 = inlined_call_operand.vmem [shape: bf16[128,128], index: 3, kind: input, shape index: {}]
  %s4 = inlined_call_operand.vmem [shape: f32[1,128], index: 4, kind: input, shape index: {}]
  %s5 = inlined_call_operand.vmem [shape: f32[9,128], index: 5, kind: input, shape index: {}]
  %s6 = inlined_call_operand.vmem [shape: f32[1,128], index: 6, kind: input, shape index: {}]
  %s7 = inlined_call_operand.vmem [shape: bf16[256,256], index: 7, kind: input, shape index: {}]
  %s8 = inlined_call_operand.vmem [shape: f32[1,256], index: 8, kind: input, shape index: {}]
  %s9 = inlined_call_operand.vmem [shape: bf16[16,8,8,256], index: 9, kind: output, shape index: {}]
  %s10 = sld [smem:[#allocation0]]
  $region69: #{forward.2} parent=0
    _
  %s12 = ssub.s32 1, %s10
  %s13 = scalar_select 0, %s12, %s10
  loop: start=0, step=1, limit=6
  $region2: #{forward.2} parent=0 // loop_pre_header
    _
  $region3: #{forward.2} parent=0 // loop_header
    %s15 = sphi 0, %s19
    %p16 = scmp.ge.s32.totalorder %s15, 6
    %s25 = sphi 0, %s27
    %s28 = sphi 0, %s25
    %s29 = sphi 0, %s28
    %s45 = sphi 0, %s29
    %s49 = sphi 0, %s49
    %s51 = sphi 0, %s49
    %s52 = sphi 0, %s51
    %s66 = sphi 0, %s52
    %s70 = sphi 0, %s70
    %s72 = sphi 0, %s70
    %s73 = sphi 0, %s72
    %s87 = sphi 0, %s73
    %s91 = sphi 0, %s91
    %s93 = sphi 0, %s91
    %s94 = sphi 0, %s93
    %s108 = sphi 0, %s94
    %s112 = sphi 0, %s112
    %s114 = sphi 0, %s112
    %s115 = sphi 0, %s114
    %s129 = sphi 0, %s115
    %s133 = sphi 0, %s133
    %s135 = sphi 0, %s133
    %s136 = sphi 0, %s135
    %s150 = sphi 0, %s136
    %s154 = sphi 0, %s154
    %s156 = sphi 0, %s154
    %s157 = sphi 0, %s156
    %s171 = sphi 0, %s157
    %s175 = sphi 0, %s175
    %s177 = sphi 0, %s175
    %s178 = sphi 0, %s177
    %s192 = sphi 0, %s178
    %s196 = sphi 0, %s196
    %s198 = sphi 0, %s196
    %s199 = sphi 0, %s198
    %s213 = sphi 0, %s199
    %s219 = sphi 0, %s221
    %s222 = sphi 0, %s219
    %s223 = sphi 0, %s222
    %s239 = sphi 0, %s223
  $region4: #{forward.2} parent=0 // loop_header_branch
    %18 = sbr.rel (%p16) target = $region8
  $region5: #{forward.2} parent=0 // loop_body
    %s20 = ssub.s32 %s15, 1
    %s21 = ssub.s32 %s15, 2
    %s22 = sadd.s32 %s15, 1
    %s23 = ssub.s32 %s15, %s22
    %p24 = scmp.eq.s32.totalorder %s23, 0
    %s26 = sadd.s32 %s25, 1
    %s27 = scalar_select %p24, %s25, %s26
    %p30 = pneg %p24
    %p31 = scmp.eq.s32.totalorder %s15, 3
    %p32 = por %p30, %p31
    %p33 = scmp.ne.s32.totalorder %s25, %s28
    %p34 = scmp.eq.s32.totalorder %s15, 0
    %p35 = por %p33, %p34
    %p36 = scmp.ne.s32.totalorder %s25, %s28
    %p37 = scmp.eq.s32.totalorder %s20, 3
    %p38 = por %p36, %p37
    %p39 = scmp.ne.s32.totalorder %s28, %s29
    %p40 = scmp.eq.s32.totalorder %s20, 0
    %p41 = por %p39, %p40
    %p42 = scmp.ne.s32.totalorder %s28, %s29
    %p43 = scmp.eq.s32.totalorder %s21, 3
    %p44 = por %p42, %p43
    %p46 = scmp.ne.s32.totalorder %s29, %s45
    %p47 = scmp.eq.s32.totalorder %s21, 0
    %p48 = por %p46, %p47
    %s50 = sadd.s32 %s49, 1
    %p53 = scmp.eq.s32.totalorder %s15, 3
    %p54 = scmp.ne.s32.totalorder %s49, %s51
    %p55 = scmp.eq.s32.totalorder %s15, 0
    %p56 = por %p54, %p55
    %p57 = scmp.ne.s32.totalorder %s49, %s51
    %p58 = scmp.eq.s32.totalorder %s20, 3
    %p59 = por %p57, %p58
    %p60 = scmp.ne.s32.totalorder %s51, %s52
    %p61 = scmp.eq.s32.totalorder %s20, 0
    %p62 = por %p60, %p61
    %p63 = scmp.ne.s32.totalorder %s51, %s52
    %p64 = scmp.eq.s32.totalorder %s21, 3
    %p65 = por %p63, %p64
    %p67 = scmp.ne.s32.totalorder %s52, %s66
    %p68 = scmp.eq.s32.totalorder %s21, 0
    %p69 = por %p67, %p68
    %s71 = sadd.s32 %s70, 1
    %p74 = scmp.eq.s32.totalorder %s15, 3
    %p75 = scmp.ne.s32.totalorder %s70, %s72
    %p76 = scmp.eq.s32.totalorder %s15, 0
    %p77 = por %p75, %p76
    %p78 = scmp.ne.s32.totalorder %s70, %s72
    %p79 = scmp.eq.s32.totalorder %s20, 3
    %p80 = por %p78, %p79
    %p81 = scmp.ne.s32.totalorder %s72, %s73
    %p82 = scmp.eq.s32.totalorder %s20, 0
    %p83 = por %p81, %p82
    %p84 = scmp.ne.s32.totalorder %s72, %s73
    %p85 = scmp.eq.s32.totalorder %s21, 3
    %p86 = por %p84, %p85
    %p88 = scmp.ne.s32.totalorder %s73, %s87
    %p89 = scmp.eq.s32.totalorder %s21, 0
    %p90 = por %p88, %p89
    %s92 = sadd.s32 %s91, 1
    %p95 = scmp.eq.s32.totalorder %s15, 3
    %p96 = scmp.ne.s32.totalorder %s91, %s93
    %p97 = scmp.eq.s32.totalorder %s15, 0
    %p98 = por %p96, %p97
    %p99 = scmp.ne.s32.totalorder %s91, %s93
    %p100 = scmp.eq.s32.totalorder %s20, 3
    %p101 = por %p99, %p100
    %p102 = scmp.ne.s32.totalorder %s93, %s94
    %p103 = scmp.eq.s32.totalorder %s20, 0
    %p104 = por %p102, %p103
    %p105 = scmp.ne.s32.totalorder %s93, %s94
    %p106 = scmp.eq.s32.totalorder %s21, 3
    %p107 = por %p105, %p106
    %p109 = scmp.ne.s32.totalorder %s94, %s108
    %p110 = scmp.eq.s32.totalorder %s21, 0
    %p111 = por %p109, %p110
    %s113 = sadd.s32 %s112, 1
    %p116 = scmp.eq.s32.totalorder %s15, 3
    %p117 = scmp.ne.s32.totalorder %s112, %s114
    %p118 = scmp.eq.s32.totalorder %s15, 0
    %p119 = por %p117, %p118
    %p120 = scmp.ne.s32.totalorder %s112, %s114
    %p121 = scmp.eq.s32.totalorder %s20, 3
    %p122 = por %p120, %p121
    %p123 = scmp.ne.s32.totalorder %s114, %s115
    %p124 = scmp.eq.s32.totalorder %s20, 0
    %p125 = por %p123, %p124
    %p126 = scmp.ne.s32.totalorder %s114, %s115
    %p127 = scmp.eq.s32.totalorder %s21, 3
    %p128 = por %p126, %p127
    %p130 = scmp.ne.s32.totalorder %s115, %s129
    %p131 = scmp.eq.s32.totalorder %s21, 0
    %p132 = por %p130, %p131
    %s134 = sadd.s32 %s133, 1
    %p137 = scmp.eq.s32.totalorder %s15, 3
    %p138 = scmp.ne.s32.totalorder %s133, %s135
    %p139 = scmp.eq.s32.totalorder %s15, 0
    %p140 = por %p138, %p139
    %p141 = scmp.ne.s32.totalorder %s133, %s135
    %p142 = scmp.eq.s32.totalorder %s20, 3
    %p143 = por %p141, %p142
    %p144 = scmp.ne.s32.totalorder %s135, %s136
    %p145 = scmp.eq.s32.totalorder %s20, 0
    %p146 = por %p144, %p145
    %p147 = scmp.ne.s32.totalorder %s135, %s136
    %p148 = scmp.eq.s32.totalorder %s21, 3
    %p149 = por %p147, %p148
    %p151 = scmp.ne.s32.totalorder %s136, %s150
    %p152 = scmp.eq.s32.totalorder %s21, 0
    %p153 = por %p151, %p152
    %s155 = sadd.s32 %s154, 1
    %p158 = scmp.eq.s32.totalorder %s15, 3
    %p159 = scmp.ne.s32.totalorder %s154, %s156
    %p160 = scmp.eq.s32.totalorder %s15, 0
    %p161 = por %p159, %p160
    %p162 = scmp.ne.s32.totalorder %s154, %s156
    %p163 = scmp.eq.s32.totalorder %s20, 3
    %p164 = por %p162, %p163
    %p165 = scmp.ne.s32.totalorder %s156, %s157
    %p166 = scmp.eq.s32.totalorder %s20, 0
    %p167 = por %p165, %p166
    %p168 = scmp.ne.s32.totalorder %s156, %s157
    %p169 = scmp.eq.s32.totalorder %s21, 3
    %p170 = por %p168, %p169
    %p172 = scmp.ne.s32.totalorder %s157, %s171
    %p173 = scmp.eq.s32.totalorder %s21, 0
    %p174 = por %p172, %p173
    %s176 = sadd.s32 %s175, 1
    %p179 = scmp.eq.s32.totalorder %s15, 3
    %p180 = scmp.ne.s32.totalorder %s175, %s177
    %p181 = scmp.eq.s32.totalorder %s15, 0
    %p182 = por %p180, %p181
    %p183 = scmp.ne.s32.totalorder %s175, %s177
    %p184 = scmp.eq.s32.totalorder %s20, 3
    %p185 = por %p183, %p184
    %p186 = scmp.ne.s32.totalorder %s177, %s178
    %p187 = scmp.eq.s32.totalorder %s20, 0
    %p188 = por %p186, %p187
    %p189 = scmp.ne.s32.totalorder %s177, %s178
    %p190 = scmp.eq.s32.totalorder %s21, 3
    %p191 = por %p189, %p190
    %p193 = scmp.ne.s32.totalorder %s178, %s192
    %p194 = scmp.eq.s32.totalorder %s21, 0
    %p195 = por %p193, %p194
    %s197 = sadd.s32 %s196, 1
    %p200 = scmp.eq.s32.totalorder %s15, 3
    %p201 = scmp.ne.s32.totalorder %s196, %s198
    %p202 = scmp.eq.s32.totalorder %s15, 0
    %p203 = por %p201, %p202
    %p204 = scmp.ne.s32.totalorder %s196, %s198
    %p205 = scmp.eq.s32.totalorder %s20, 3
    %p206 = por %p204, %p205
    %p207 = scmp.ne.s32.totalorder %s198, %s199
    %p208 = scmp.eq.s32.totalorder %s20, 0
    %p209 = por %p207, %p208
    %p210 = scmp.ne.s32.totalorder %s198, %s199
    %p211 = scmp.eq.s32.totalorder %s21, 3
    %p212 = por %p210, %p211
    %p214 = scmp.ne.s32.totalorder %s199, %s213
    %p215 = scmp.eq.s32.totalorder %s21, 0
    %p216 = por %p214, %p215
    %s217 = ssub.s32 %s15, %s22
    %p218 = scmp.eq.s32.totalorder %s217, 0
    %s220 = sadd.s32 %s219, 1
    %s221 = scalar_select %p218, %s219, %s220
    %p224 = pneg %p218
    %p225 = scmp.eq.s32.totalorder %s15, 3
    %p226 = por %p224, %p225
    %p227 = scmp.ne.s32.totalorder %s219, %s222
    %p228 = scmp.eq.s32.totalorder %s15, 0
    %p229 = por %p227, %p228
    %p230 = scmp.ne.s32.totalorder %s219, %s222
    %p231 = scmp.eq.s32.totalorder %s20, 3
    %p232 = por %p230, %p231
    %p233 = scmp.ne.s32.totalorder %s222, %s223
    %p234 = scmp.eq.s32.totalorder %s20, 0
    %p235 = por %p233, %p234
    %p236 = scmp.ne.s32.totalorder %s222, %s223
    %p237 = scmp.eq.s32.totalorder %s21, 3
    %p238 = por %p236, %p237
    %p240 = scmp.ne.s32.totalorder %s223, %s239
    %p241 = scmp.eq.s32.totalorder %s21, 0
    %p242 = por %p240, %p241
    %p243 = scmp.le.s32.totalorder 1, %s15
    %p244 = scmp.lt.s32.totalorder %s15, 5
    %p245 = pnand %p243, %p244
    %p246 = pneg %p245
    // Predicated region
    $region9: #{forward.2} parent=5 // pred_check
      _
    $region10: #{forward.2} parent=5 // pred_check_branch
      %248 = sbr.rel (%p245) target = $region12
    $region11: #{forward.2} parent=5 // pred_region
      %s249 = ssub.s32 %s15, 1
      // Predicated region
      $region13: #{forward.2} parent=11 // pred_check
        %p250 = pneg %p62
      $region14: #{forward.2} parent=11 // pred_check_branch
        %252 = sbr.rel (%p250) target = $region16
      $region15: #{forward.2} parent=11 // pred_region
        _
      $region16: #{forward.2} parent=11 // pred_fallthru
        _
      // Predicated region
      $region17: #{forward.2} parent=11 // pred_check
        %p253 = pneg %p83
      $region18: #{forward.2} parent=11 // pred_check_branch
        %255 = sbr.rel (%p253) target = $region20
      $region19: #{forward.2} parent=11 // pred_region
        _
      $region20: #{forward.2} parent=11 // pred_fallthru
        _
      // Predicated region
      $region21: #{forward.2} parent=11 // pred_check
        %p256 = pneg %p104
      $region22: #{forward.2} parent=11 // pred_check_branch
        %258 = sbr.rel (%p256) target = $region24
      $region23: #{forward.2} parent=11 // pred_region
        _
      $region24: #{forward.2} parent=11 // pred_fallthru
        _
      // Predicated region
      $region25: #{forward.2} parent=11 // pred_check
        %p259 = pneg %p125
      $region26: #{forward.2} parent=11 // pred_check_branch
        %261 = sbr.rel (%p259) target = $region28
      $region27: #{forward.2} parent=11 // pred_region
        _
      $region28: #{forward.2} parent=11 // pred_fallthru
        _
      // Predicated region
      $region29: #{forward.2} parent=11 // pred_check
        %p262 = pneg %p146
      $region30: #{forward.2} parent=11 // pred_check_branch
        %264 = sbr.rel (%p262) target = $region32
      $region31: #{forward.2} parent=11 // pred_region
        _
      $region32: #{forward.2} parent=11 // pred_fallthru
        _
      // Predicated region
      $region33: #{forward.2} parent=11 // pred_check
        %p265 = pneg %p167
      $region34: #{forward.2} parent=11 // pred_check_branch
        %267 = sbr.rel (%p265) target = $region36
      $region35: #{forward.2} parent=11 // pred_region
        _
      $region36: #{forward.2} parent=11 // pred_fallthru
        _
      // Predicated region
      $region37: #{forward.2} parent=11 // pred_check
        %p268 = pneg %p188
      $region38: #{forward.2} parent=11 // pred_check_branch
        %270 = sbr.rel (%p268) target = $region40
      $region39: #{forward.2} parent=11 // pred_region
        _
      $region40: #{forward.2} parent=11 // pred_fallthru
        _
      // Predicated region
      $region41: #{forward.2} parent=11 // pred_check
        %p271 = pneg %p209
      $region42: #{forward.2} parent=11 // pred_check_branch
        %273 = sbr.rel (%p271) target = $region44
      $region43: #{forward.2} parent=11 // pred_region
        _
      $region44: #{forward.2} parent=11 // pred_fallthru
        _
    $region12: #{forward.2} parent=5 // pred_fallthru
      _
    %p274 = scmp.lt.s32.totalorder %s15, 4
    // Predicated region
    $region45: #{forward.2} parent=5 // pred_check
      %p275 = pneg %p274
    $region46: #{forward.2} parent=5 // pred_check_branch
      %277 = sbr.rel (%p275) target = $region48
    $region47: #{forward.2} parent=5 // pred_region
      // Predicated region
      $region49: #{forward.2} parent=47 // pred_check
        %p278 = pneg %p35
      $region50: #{forward.2} parent=47 // pred_check_branch
        %280 = sbr.rel (%p278) target = $region52
      $region51: #{forward.2} parent=47 // pred_region
        %s281 = smul.u32 4, %s15
        %p282 = scmp.lt.s32.totalorder %s281, 15
        %s283 = scalar_select %p282, %s281, 15
        %s284 = smul.addr %s283, 32
        %s285 = smul.addr %s284, 4
        %s286 = scalar_lea.vmem %s0, %s285
        %s287 = smul.u32 4, %s15
      $region52: #{forward.2} parent=47 // pred_fallthru
        _
    $region48: #{forward.2} parent=5 // pred_fallthru
      _
    %p288 = scmp.le.s32.totalorder 1, %s15
    %p289 = scmp.lt.s32.totalorder %s15, 5
    %p290 = pnand %p288, %p289
    %p291 = pneg %p290
    // Predicated region
    $region53: #{forward.2} parent=5 // pred_check
      _
    $region54: #{forward.2} parent=5 // pred_check_branch
      %293 = sbr.rel (%p290) target = $region56
    $region55: #{forward.2} parent=5 // pred_region
      %s294 = ssub.s32 %s15, 1
      %s295 = smul.u32 4, %s20
      %p296 = scmp.lt.s32.totalorder %s295, 15
      %s297 = scalar_select %p296, %s295, 15
      %s298 = smul.addr %s297, 32
      %s299 = smul.addr %s298, 4
      %s300 = scalar_lea.vmem %s0, %s299
      %p301 = pneg %p41
      %p302 = pneg %p38
      %p303 = pneg %p62
      %p304 = pneg %p59
      %p305 = pneg %p83
      %p306 = pneg %p80
      %p307 = pneg %p104
      %p308 = pneg %p101
      %p309 = pneg %p125
      %p310 = pneg %p122
      %p311 = pneg %p146
      %p312 = pneg %p143
      %p313 = pneg %p167
      %p314 = pneg %p164
      %p315 = pneg %p188
      %p316 = pneg %p185
      %p317 = pneg %p209
      %p318 = pneg %p206
      %p319 = pneg %p235
      %p320 = pneg %p232
      %s321 = smul.u32 4, %s20
      %p322 = scmp.lt.s32.totalorder %s321, 15
      %s323 = scalar_select %p322, %s321, 15
      %s324 = smul.addr %s323, 16
      %s325 = smul.addr %s324, 4
      %s326 = scalar_lea.vmem %s9, %s325
      %s327 = smul.u32 4, %s20
      %p328 = scmp.lt.s32.totalorder %s327, 15
      %s329 = scalar_select %p328, %s327, 15
      %s330 = smul.addr %s329, 32
      %s331 = smul.addr %s330, 4
      %s332 = scalar_lea.vmem %s0, %s331
      %s333 = smul.u32 4, %s20
      %s334 = smul.u32 4, %s20
      %p335 = scmp.lt.s32.totalorder %s334, 15
      %s336 = scalar_select %p335, %s334, 15
      %s337 = smul.addr %s336, 16
      %s338 = smul.addr %s337, 4
      %s339 = scalar_lea.vmem %s9, %s338
      %s340 = smul.u32 4, %s20
      %v342 = vld [vmem:[%s332] sm:$0xf]
      %v343 = vld [vmem:[%s332 + $0x4] sm:$0xf]
      %v344 = vld [vmem:[%s332 + $0x8] sm:$0xf]
      %v345 = vld [vmem:[%s332 + $0xc] sm:$0xf]
      %v346 = vld [vmem:[%s332 + $0x10] sm:$0xf]
      %v347 = vld [vmem:[%s332 + $0x14] sm:$0xf]
      %v348 = vld [vmem:[%s332 + $0x18] sm:$0xf]
      %v349 = vld [vmem:[%s332 + $0x1c] sm:$0xf]
      %v350 = vld [vmem:[%s332 + $0x20] sm:$0xf]
      %v351 = vld [vmem:[%s332 + $0x24] sm:$0xf]
      %v352 = vld [vmem:[%s332 + $0x28] sm:$0xf]
      %v353 = vld [vmem:[%s332 + $0x2c] sm:$0xf]
      %v354 = vld [vmem:[%s332 + $0x30] sm:$0xf]
      %v355 = vld [vmem:[%s332 + $0x34] sm:$0xf]
      %v356 = vld [vmem:[%s332 + $0x38] sm:$0xf]
      %v357 = vld [vmem:[%s332 + $0x3c] sm:$0xf]
      %v358 = vld [vmem:[%s332 + $0x40] sm:$0xf]
      %v359 = vld [vmem:[%s332 + $0x44] sm:$0xf]
      %v360 = vld [vmem:[%s332 + $0x48] sm:$0xf]
      %v361 = vld [vmem:[%s332 + $0x4c] sm:$0xf]
      %v362 = vld [vmem:[%s332 + $0x50] sm:$0xf]
      %v363 = vld [vmem:[%s332 + $0x54] sm:$0xf]
      %v364 = vld [vmem:[%s332 + $0x58] sm:$0xf]
      %v365 = vld [vmem:[%s332 + $0x5c] sm:$0xf]
      %v366 = vld [vmem:[%s332 + $0x60] sm:$0xf]
      %v367 = vld [vmem:[%s332 + $0x64] sm:$0xf]
      %v368 = vld [vmem:[%s332 + $0x68] sm:$0xf]
      %v369 = vld [vmem:[%s332 + $0x6c] sm:$0xf]
      %v370 = vld [vmem:[%s332 + $0x70] sm:$0xf]
      %v371 = vld [vmem:[%s332 + $0x74] sm:$0xf]
      %v372 = vld [vmem:[%s332 + $0x78] sm:$0xf]
      %v373 = vld [vmem:[%s332 + $0x7c] sm:$0xf]
      %v374 = vld [vmem:[%s332 + $0x80] sm:$0xf]
      %v375 = vld [vmem:[%s332 + $0x84] sm:$0xf]
      %v376 = vld [vmem:[%s332 + $0x88] sm:$0xf]
      %v377 = vld [vmem:[%s332 + $0x8c] sm:$0xf]
      %v378 = vld [vmem:[%s332 + $0x90] sm:$0xf]
      %v379 = vld [vmem:[%s332 + $0x94] sm:$0xf]
      %v380 = vld [vmem:[%s332 + $0x98] sm:$0xf]
      %v381 = vld [vmem:[%s332 + $0x9c] sm:$0xf]
      %v382 = vld [vmem:[%s332 + $0xa0] sm:$0xf]
      %v383 = vld [vmem:[%s332 + $0xa4] sm:$0xf]
      %v384 = vld [vmem:[%s332 + $0xa8] sm:$0xf]
      %v385 = vld [vmem:[%s332 + $0xac] sm:$0xf]
      %v386 = vld [vmem:[%s332 + $0xb0] sm:$0xf]
      %v387 = vld [vmem:[%s332 + $0xb4] sm:$0xf]
      %v388 = vld [vmem:[%s332 + $0xb8] sm:$0xf]
      %v389 = vld [vmem:[%s332 + $0xbc] sm:$0xf]
      %v390 = vld [vmem:[%s332 + $0xc0] sm:$0xf]
      %v391 = vld [vmem:[%s332 + $0xc4] sm:$0xf]
      %v392 = vld [vmem:[%s332 + $0xc8] sm:$0xf]
      %v393 = vld [vmem:[%s332 + $0xcc] sm:$0xf]
      %v394 = vld [vmem:[%s332 + $0xd0] sm:$0xf]
      %v395 = vld [vmem:[%s332 + $0xd4] sm:$0xf]
      %v396 = vld [vmem:[%s332 + $0xd8] sm:$0xf]
      %v397 = vld [vmem:[%s332 + $0xdc] sm:$0xf]
      %v398 = vld [vmem:[%s332 + $0xe0] sm:$0xf]
      %v399 = vld [vmem:[%s332 + $0xe4] sm:$0xf]
      %v400 = vld [vmem:[%s332 + $0xe8] sm:$0xf]
      %v401 = vld [vmem:[%s332 + $0xec] sm:$0xf]
      %v402 = vld [vmem:[%s332 + $0xf0] sm:$0xf]
      %v403 = vld [vmem:[%s332 + $0xf4] sm:$0xf]
      %v404 = vld [vmem:[%s332 + $0xf8] sm:$0xf]
      %v405 = vld [vmem:[%s332 + $0xfc] sm:$0xf]
      %v406 = vld [vmem:[%s332 + $0x100] sm:$0xf]
      %v407 = vld [vmem:[%s332 + $0x104] sm:$0xf]
      %v408 = vld [vmem:[%s332 + $0x108] sm:$0xf]
      %v409 = vld [vmem:[%s332 + $0x10c] sm:$0xf]
      %v410 = vld [vmem:[%s332 + $0x110] sm:$0xf]
      %v411 = vld [vmem:[%s332 + $0x114] sm:$0xf]
      %v412 = vld [vmem:[%s332 + $0x118] sm:$0xf]
      %v413 = vld [vmem:[%s332 + $0x11c] sm:$0xf]
      %v414 = vld [vmem:[%s332 + $0x120] sm:$0xf]
      %v415 = vld [vmem:[%s332 + $0x124] sm:$0xf]
      %v416 = vld [vmem:[%s332 + $0x128] sm:$0xf]
      %v417 = vld [vmem:[%s332 + $0x12c] sm:$0xf]
      %v418 = vld [vmem:[%s332 + $0x130] sm:$0xf]
      %v419 = vld [vmem:[%s332 + $0x134] sm:$0xf]
      %v420 = vld [vmem:[%s332 + $0x138] sm:$0xf]
      %v421 = vld [vmem:[%s332 + $0x13c] sm:$0xf]
      %v422 = vld [vmem:[%s332 + $0x140] sm:$0xf]
      %v423 = vld [vmem:[%s332 + $0x144] sm:$0xf]
      %v424 = vld [vmem:[%s332 + $0x148] sm:$0xf]
      %v425 = vld [vmem:[%s332 + $0x14c] sm:$0xf]
      %v426 = vld [vmem:[%s332 + $0x150] sm:$0xf]
      %v427 = vld [vmem:[%s332 + $0x154] sm:$0xf]
      %v428 = vld [vmem:[%s332 + $0x158] sm:$0xf]
      %v429 = vld [vmem:[%s332 + $0x15c] sm:$0xf]
      %v430 = vld [vmem:[%s332 + $0x160] sm:$0xf]
      %v431 = vld [vmem:[%s332 + $0x164] sm:$0xf]
      %v432 = vld [vmem:[%s332 + $0x168] sm:$0xf]
      %v433 = vld [vmem:[%s332 + $0x16c] sm:$0xf]
      %v434 = vld [vmem:[%s332 + $0x170] sm:$0xf]
      %v435 = vld [vmem:[%s332 + $0x174] sm:$0xf]
      %v436 = vld [vmem:[%s332 + $0x178] sm:$0xf]
      %v437 = vld [vmem:[%s332 + $0x17c] sm:$0xf]
      %v438 = vld [vmem:[%s332 + $0x180] sm:$0xf]
      %v439 = vld [vmem:[%s332 + $0x184] sm:$0xf]
      %v440 = vld [vmem:[%s332 + $0x188] sm:$0xf]
      %v441 = vld [vmem:[%s332 + $0x18c] sm:$0xf]
      %v442 = vld [vmem:[%s332 + $0x190] sm:$0xf]
      %v443 = vld [vmem:[%s332 + $0x194] sm:$0xf]
      %v444 = vld [vmem:[%s332 + $0x198] sm:$0xf]
      %v445 = vld [vmem:[%s332 + $0x19c] sm:$0xf]
      %v446 = vld [vmem:[%s332 + $0x1a0] sm:$0xf]
      %v447 = vld [vmem:[%s332 + $0x1a4] sm:$0xf]
      %v448 = vld [vmem:[%s332 + $0x1a8] sm:$0xf]
      %v449 = vld [vmem:[%s332 + $0x1ac] sm:$0xf]
      %v450 = vld [vmem:[%s332 + $0x1b0] sm:$0xf]
      %v451 = vld [vmem:[%s332 + $0x1b4] sm:$0xf]
      %v452 = vld [vmem:[%s332 + $0x1b8] sm:$0xf]
      %v453 = vld [vmem:[%s332 + $0x1bc] sm:$0xf]
      %v454 = vld [vmem:[%s332 + $0x1c0] sm:$0xf]
      %v455 = vld [vmem:[%s332 + $0x1c4] sm:$0xf]
      %v456 = vld [vmem:[%s332 + $0x1c8] sm:$0xf]
      %v457 = vld [vmem:[%s332 + $0x1cc] sm:$0xf]
      %v458 = vld [vmem:[%s332 + $0x1d0] sm:$0xf]
      %v459 = vld [vmem:[%s332 + $0x1d4] sm:$0xf]
      %v460 = vld [vmem:[%s332 + $0x1d8] sm:$0xf]
      %v461 = vld [vmem:[%s332 + $0x1dc] sm:$0xf]
      %v462 = vld [vmem:[%s332 + $0x1e0] sm:$0xf]
      %v463 = vld [vmem:[%s332 + $0x1e4] sm:$0xf]
      %v464 = vld [vmem:[%s332 + $0x1e8] sm:$0xf]
      %v465 = vld [vmem:[%s332 + $0x1ec] sm:$0xf]
      %v466 = vld [vmem:[%s332 + $0x1f0] sm:$0xf]
      %v467 = vld [vmem:[%s332 + $0x1f4] sm:$0xf]
      %v468 = vld [vmem:[%s332 + $0x1f8] sm:$0xf]
      %v469 = vld [vmem:[%s332 + $0x1fc] sm:$0xf]
      %v470 = vld [vmem:[%s3] sm:$0xf]
      %v471 = vld [vmem:[%s3 + $0x4] sm:$0xf]
      %v472 = vld [vmem:[%s3 + $0x8] sm:$0xf]
      %v473 = vld [vmem:[%s3 + $0xc] sm:$0xf]
      %v474 = vld [vmem:[%s3 + $0x10] sm:$0xf]
      %v475 = vld [vmem:[%s3 + $0x14] sm:$0xf]
      %v476 = vld [vmem:[%s3 + $0x18] sm:$0xf]
      %v477 = vld [vmem:[%s3 + $0x1c] sm:$0xf]
      %v478 = vld [vmem:[%s3 + $0x20] sm:$0xf]
      %v479 = vld [vmem:[%s3 + $0x24] sm:$0xf]
      %v480 = vld [vmem:[%s3 + $0x28] sm:$0xf]
      %v481 = vld [vmem:[%s3 + $0x2c] sm:$0xf]
      %v482 = vld [vmem:[%s3 + $0x30] sm:$0xf]
      %v483 = vld [vmem:[%s3 + $0x34] sm:$0xf]
      %v484 = vld [vmem:[%s3 + $0x38] sm:$0xf]
      %v485 = vld [vmem:[%s3 + $0x3c] sm:$0xf]
      %v486 = vld [vmem:[%s4] sm:$0x1]
      %v488 = vlaneseq
      %v489 = vshrl.u32 %v488, 7
      %v490 = vsub.s32 0, %v489
      %v491 = vrot.slane %v486, %v490
      %v621 = vunpack.c.l.b16 %v342
      %v622 = vunpack.c.l.b16 %v343
      %v623 = vunpack.c.l.b16 %v344
      %v624 = vunpack.c.l.b16 %v345
      %v625 = vunpack.c.l.b16 %v346
      %v626 = vunpack.c.l.b16 %v347
      %v627 = vunpack.c.l.b16 %v348
      %v628 = vunpack.c.l.b16 %v349
      %v629 = vunpack.c.l.b16 %v350
      %v630 = vunpack.c.l.b16 %v351
      %v631 = vunpack.c.l.b16 %v352
      %v632 = vunpack.c.l.b16 %v353
      %v633 = vunpack.c.l.b16 %v354
      %v634 = vunpack.c.l.b16 %v355
      %v635 = vunpack.c.l.b16 %v356
      %v636 = vunpack.c.l.b16 %v357
      %v637 = vunpack.c.l.b16 %v358
      %v638 = vunpack.c.l.b16 %v359
      %v639 = vunpack.c.l.b16 %v360
      %v640 = vunpack.c.l.b16 %v361
      %v641 = vunpack.c.l.b16 %v362
      %v642 = vunpack.c.l.b16 %v363
      %v643 = vunpack.c.l.b16 %v364
      %v644 = vunpack.c.l.b16 %v365
      %v645 = vunpack.c.l.b16 %v366
      %v646 = vunpack.c.l.b16 %v367
      %v647 = vunpack.c.l.b16 %v368
      %v648 = vunpack.c.l.b16 %v369
      %v649 = vunpack.c.l.b16 %v370
      %v650 = vunpack.c.l.b16 %v371
      %v651 = vunpack.c.l.b16 %v372
      %v652 = vunpack.c.l.b16 %v373
      %v653 = vunpack.c.l.b16 %v374
      %v654 = vunpack.c.l.b16 %v375
      %v655 = vunpack.c.l.b16 %v376
      %v656 = vunpack.c.l.b16 %v377
      %v657 = vunpack.c.l.b16 %v378
      %v658 = vunpack.c.l.b16 %v379
      %v659 = vunpack.c.l.b16 %v380
      %v660 = vunpack.c.l.b16 %v381
      %v661 = vunpack.c.l.b16 %v382
      %v662 = vunpack.c.l.b16 %v383
      %v663 = vunpack.c.l.b16 %v384
      %v664 = vunpack.c.l.b16 %v385
      %v665 = vunpack.c.l.b16 %v386
      %v666 = vunpack.c.l.b16 %v387
      %v667 = vunpack.c.l.b16 %v388
      %v668 = vunpack.c.l.b16 %v389
      %v669 = vunpack.c.l.b16 %v390
      %v670 = vunpack.c.l.b16 %v391
      %v671 = vunpack.c.l.b16 %v392
      %v672 = vunpack.c.l.b16 %v393
      %v673 = vunpack.c.l.b16 %v394
      %v674 = vunpack.c.l.b16 %v395
      %v675 = vunpack.c.l.b16 %v396
      %v676 = vunpack.c.l.b16 %v397
      %v677 = vunpack.c.l.b16 %v398
      %v678 = vunpack.c.l.b16 %v399
      %v679 = vunpack.c.l.b16 %v400
      %v680 = vunpack.c.l.b16 %v401
      %v681 = vunpack.c.l.b16 %v402
      %v682 = vunpack.c.l.b16 %v403
      %v683 = vunpack.c.l.b16 %v404
      %v684 = vunpack.c.l.b16 %v405
      %v685 = vunpack.c.l.b16 %v406
      %v686 = vunpack.c.l.b16 %v407
      %v687 = vunpack.c.l.b16 %v408
      %v688 = vunpack.c.l.b16 %v409
      %v689 = vunpack.c.l.b16 %v410
      %v690 = vunpack.c.l.b16 %v411
      %v691 = vunpack.c.l.b16 %v412
      %v692 = vunpack.c.l.b16 %v413
      %v693 = vunpack.c.l.b16 %v414
      %v694 = vunpack.c.l.b16 %v415
      %v695 = vunpack.c.l.b16 %v416
      %v696 = vunpack.c.l.b16 %v417
      %v697 = vunpack.c.l.b16 %v418
      %v698 = vunpack.c.l.b16 %v419
      %v699 = vunpack.c.l.b16 %v420
      %v700 = vunpack.c.l.b16 %v421
      %v701 = vunpack.c.l.b16 %v422
      %v702 = vunpack.c.l.b16 %v423
      %v703 = vunpack.c.l.b16 %v424
      %v704 = vunpack.c.l.b16 %v425
      %v705 = vunpack.c.l.b16 %v426
      %v706 = vunpack.c.l.b16 %v427
      %v707 = vunpack.c.l.b16 %v428
      %v708 = vunpack.c.l.b16 %v429
      %v709 = vunpack.c.l.b16 %v430
      %v710 = vunpack.c.l.b16 %v431
      %v711 = vunpack.c.l.b16 %v432
      %v712 = vunpack.c.l.b16 %v433
      %v713 = vunpack.c.l.b16 %v434
      %v714 = vunpack.c.l.b16 %v435
      %v715 = vunpack.c.l.b16 %v436
      %v716 = vunpack.c.l.b16 %v437
      %v717 = vunpack.c.l.b16 %v438
      %v718 = vunpack.c.l.b16 %v439
      %v719 = vunpack.c.l.b16 %v440
      %v720 = vunpack.c.l.b16 %v441
      %v721 = vunpack.c.l.b16 %v442
      %v722 = vunpack.c.l.b16 %v443
      %v723 = vunpack.c.l.b16 %v444
      %v724 = vunpack.c.l.b16 %v445
      %v725 = vunpack.c.l.b16 %v446
      %v726 = vunpack.c.l.b16 %v447
      %v727 = vunpack.c.l.b16 %v448
      %v728 = vunpack.c.l.b16 %v449
      %v729 = vunpack.c.l.b16 %v450
      %v730 = vunpack.c.l.b16 %v451
      %v731 = vunpack.c.l.b16 %v452
      %v732 = vunpack.c.l.b16 %v453
      %v733 = vunpack.c.l.b16 %v454
      %v734 = vunpack.c.l.b16 %v455
      %v735 = vunpack.c.l.b16 %v456
      %v736 = vunpack.c.l.b16 %v457
      %v737 = vunpack.c.l.b16 %v458
      %v738 = vunpack.c.l.b16 %v459
      %v739 = vunpack.c.l.b16 %v460
      %v740 = vunpack.c.l.b16 %v461
      %v741 = vunpack.c.l.b16 %v462
      %v742 = vunpack.c.l.b16 %v463
      %v743 = vunpack.c.l.b16 %v464
      %v744 = vunpack.c.l.b16 %v465
      %v745 = vunpack.c.l.b16 %v466
      %v746 = vunpack.c.l.b16 %v467
      %v747 = vunpack.c.l.b16 %v468
      %v748 = vunpack.c.l.b16 %v469
      %v749 = vpack.c.b16 %v622, %v621
      %v750 = vpack.c.b16 %v624, %v623
      %v751 = vpack.c.b16 %v626, %v625
      %v752 = vpack.c.b16 %v628, %v627
      %v753 = vpack.c.b16 %v630, %v629
      %v754 = vpack.c.b16 %v632, %v631
      %v755 = vpack.c.b16 %v634, %v633
      %v756 = vpack.c.b16 %v636, %v635
      %v757 = vpack.c.b16 %v638, %v637
      %v758 = vpack.c.b16 %v640, %v639
      %v759 = vpack.c.b16 %v642, %v641
      %v760 = vpack.c.b16 %v644, %v643
      %v761 = vpack.c.b16 %v646, %v645
      %v762 = vpack.c.b16 %v648, %v647
      %v763 = vpack.c.b16 %v650, %v649
      %v764 = vpack.c.b16 %v652, %v651
      %v765 = vpack.c.b16 %v654, %v653
      %v766 = vpack.c.b16 %v656, %v655
      %v767 = vpack.c.b16 %v658, %v657
      %v768 = vpack.c.b16 %v660, %v659
      %v769 = vpack.c.b16 %v662, %v661
      %v770 = vpack.c.b16 %v664, %v663
      %v771 = vpack.c.b16 %v666, %v665
      %v772 = vpack.c.b16 %v668, %v667
      %v773 = vpack.c.b16 %v670, %v669
      %v774 = vpack.c.b16 %v672, %v671
      %v775 = vpack.c.b16 %v674, %v673
      %v776 = vpack.c.b16 %v676, %v675
      %v777 = vpack.c.b16 %v678, %v677
      %v778 = vpack.c.b16 %v680, %v679
      %v779 = vpack.c.b16 %v682, %v681
      %v780 = vpack.c.b16 %v684, %v683
      %v781 = vpack.c.b16 %v686, %v685
      %v782 = vpack.c.b16 %v688, %v687
      %v783 = vpack.c.b16 %v690, %v689
      %v784 = vpack.c.b16 %v692, %v691
      %v785 = vpack.c.b16 %v694, %v693
      %v786 = vpack.c.b16 %v696, %v695
      %v787 = vpack.c.b16 %v698, %v697
      %v788 = vpack.c.b16 %v700, %v699
      %v789 = vpack.c.b16 %v702, %v701
      %v790 = vpack.c.b16 %v704, %v703
      %v791 = vpack.c.b16 %v706, %v705
      %v792 = vpack.c.b16 %v708, %v707
      %v793 = vpack.c.b16 %v710, %v709
      %v794 = vpack.c.b16 %v712, %v711
      %v795 = vpack.c.b16 %v714, %v713
      %v796 = vpack.c.b16 %v716, %v715
      %v797 = vpack.c.b16 %v718, %v717
      %v798 = vpack.c.b16 %v720, %v719
      %v799 = vpack.c.b16 %v722, %v721
      %v800 = vpack.c.b16 %v724, %v723
      %v801 = vpack.c.b16 %v726, %v725
      %v802 = vpack.c.b16 %v728, %v727
      %v803 = vpack.c.b16 %v730, %v729
      %v804 = vpack.c.b16 %v732, %v731
      %v805 = vpack.c.b16 %v734, %v733
      %v806 = vpack.c.b16 %v736, %v735
      %v807 = vpack.c.b16 %v738, %v737
      %v808 = vpack.c.b16 %v740, %v739
      %v809 = vpack.c.b16 %v742, %v741
      %v810 = vpack.c.b16 %v744, %v743
      %v811 = vpack.c.b16 %v746, %v745
      %v812 = vpack.c.b16 %v748, %v747
      %v893 = vunpack.c.l.b16 %v470
      %v894 = vunpack.c.l.b16 %v471
      %v895 = vunpack.c.l.b16 %v472
      %v896 = vunpack.c.l.b16 %v473
      %v897 = vunpack.c.l.b16 %v474
      %v898 = vunpack.c.l.b16 %v475
      %v899 = vunpack.c.l.b16 %v476
      %v900 = vunpack.c.l.b16 %v477
      %v901 = vunpack.c.l.b16 %v478
      %v902 = vunpack.c.l.b16 %v479
      %v903 = vunpack.c.l.b16 %v480
      %v904 = vunpack.c.l.b16 %v481
      %v905 = vunpack.c.l.b16 %v482
      %v906 = vunpack.c.l.b16 %v483
      %v907 = vunpack.c.l.b16 %v484
      %v908 = vunpack.c.l.b16 %v485
      %v909 = vpack.c.b16 %v894, %v893
      %v910 = vpack.c.b16 %v896, %v895
      %v911 = vpack.c.b16 %v898, %v897
      %v912 = vpack.c.b16 %v900, %v899
      %v913 = vpack.c.b16 %v902, %v901
      %v914 = vpack.c.b16 %v904, %v903
      %v915 = vpack.c.b16 %v906, %v905
      %v916 = vpack.c.b16 %v908, %v907
      %925 = vmatprep.subr.bf16.mxu0 0
      %926 = vmatpush1.bf16.msra.mxu0 %v909
      %927 = vmatprep.subr.bf16.mxu0 0
      %928 = vmatpush1.bf16.msra.mxu0 %v910
      %929 = vmatprep.subr.bf16.mxu0 0
      %930 = vmatpush1.bf16.msra.mxu0 %v911
      %931 = vmatprep.subr.bf16.mxu0 0
      %932 = vmatpush1.bf16.msra.mxu0 %v912
      %933 = vmatprep.subr.bf16.mxu0 0
      %934 = vmatpush1.bf16.msra.mxu0 %v913
      %935 = vmatprep.subr.bf16.mxu0 0
      %936 = vmatpush1.bf16.msra.mxu0 %v914
      %937 = vmatprep.subr.bf16.mxu0 0
      %938 = vmatpush1.bf16.msra.mxu0 %v915
      %939 = vmatprep.subr.bf16.mxu0 0
      %940 = vmatpush1.bf16.msra.mxu0 %v916
      %941 = vmatprep.subr.bf16.mxu0 0
      %942 = vmatpush1.bf16.msra.mxu0 0
      %943 = vmatprep.subr.bf16.mxu0 0
      %944 = vmatpush1.bf16.msra.mxu0 0
      %945 = vmatprep.subr.bf16.mxu0 0
      %946 = vmatpush1.bf16.msra.mxu0 0
      %947 = vmatprep.subr.bf16.mxu0 0
      %948 = vmatpush1.bf16.msra.mxu0 0
      %949 = vmatprep.subr.bf16.mxu0 0
      %950 = vmatpush1.bf16.msra.mxu0 0
      %951 = vmatprep.subr.bf16.mxu0 0
      %952 = vmatpush1.bf16.msra.mxu0 0
      %953 = vmatprep.subr.bf16.mxu0 0
      %954 = vmatpush1.bf16.msra.mxu0 0
      %955 = vmatprep.subr.bf16.mxu0 0
      %956 = vmatpush1.bf16.msra.mxu0 0
      %957 = vmatprep.mubr.bf16.mxu0 0
      %958 = vmatmul.mubr.bf16.gmra.mrb[0].mxu0 %v749
      %v959 = vpop.f32.mrb[0].mxu0
      %v960 = vadd.f32 %v491, %v959
      %v961 = vpop.f32.mrb[0].mxu0
      %v962 = vpop.f32.mrb[0].mxu0
      %v963 = vadd.f32 %v491, %v962
      %v964 = vpop.f32.mrb[0].mxu0
      %965 = vmatprep.mubr.bf16.mxu0 0
      %966 = vmatmul.mubr.bf16.gmra.mrb[0].mxu0 %v750
      %v967 = vpop.f32.mrb[0].mxu0
      %v968 = vadd.f32 %v491, %v967
      %v969 = vpop.f32.mrb[0].mxu0
      %v970 = vpop.f32.mrb[0].mxu0
      %v971 = vadd.f32 %v491, %v970
      %v972 = vpop.f32.mrb[0].mxu0
      %973 = vmatprep.mubr.bf16.mxu0 0
      %974 = vmatmul.mubr.bf16.gmra.mrb[0].mxu0 %v751
      %v975 = vpop.f32.mrb[0].mxu0
      %v976 = vadd.f32 %v491, %v975
      %v977 = vpop.f32.mrb[0].mxu0
      %v978 = vpop.f32.mrb[0].mxu0
      %v979 = vadd.f32 %v491, %v978
      %v980 = vpop.f32.mrb[0].mxu0
      %981 = vmatprep.mubr.bf16.mxu0 0
      %982 = vmatmul.mubr.bf16.gmra.mrb[0].mxu0 %v752
      %v983 = vpop.f32.mrb[0].mxu0
      %v984 = vadd.f32 %v491, %v983
      %v985 = vpop.f32.mrb[0].mxu0
      %v986 = vpop.f32.mrb[0].mxu0
      %v987 = vadd.f32 %v491, %v986
      %v988 = vpop.f32.mrb[0].mxu0
      %989 = vmatprep.mubr.bf16.mxu0 0
      %990 = vmatmul.mubr.bf16.gmra.mrb[0].mxu0 %v753
      %v991 = vpop.f32.mrb[0].mxu0
      %v992 = vadd.f32 %v491, %v991
      %v993 = vpop.f32.mrb[0].mxu0
      %v994 = vpop.f32.mrb[0].mxu0
      %v995 = vadd.f32 %v491, %v994
      %v996 = vpop.f32.mrb[0].mxu0
      %997 = vmatprep.mubr.bf16.mxu0 0
      %998 = vmatmul.mubr.bf16.gmra.mrb[0].mxu0 %v754
      %v999 = vpop.f32.mrb[0].mxu0
      %v1000 = vadd.f32 %v491, %v999
      %v1001 = vpop.f32.mrb[0].mxu0
      %v1002 = vpop.f32.mrb[0].mxu0
      %v1003 = vadd.f32 %v491, %v1002
      %v1004 = vpop.f32.mrb[0].mxu0
      %1005 = vmatprep.mubr.bf16.mxu0 0
      %1006 = vmatmul.mubr.bf16.gmra.mrb[0].mxu0 %v755
      %v1007 = vpop.f32.mrb[0].mxu0
      %v1008 = vadd.f32 %v491, %v1007
      %v1009 = vpop.f32.mrb[0].mxu0
      %v1010 = vpop.f32.mrb[0].mxu0
      %v1011 = vadd.f32 %v491, %v1010
      %v1012 = vpop.f32.mrb[0].mxu0
      %1013 = vmatprep.mubr.bf16.mxu0 0
      %1014 = vmatmul.mubr.bf16.gmra.mrb[0].mxu0 %v756
      %v1015 = vpop.f32.mrb[0].mxu0
      %v1016 = vadd.f32 %v491, %v1015
      %v1017 = vpop.f32.mrb[0].mxu0
      %v1018 = vpop.f32.mrb[0].mxu0
      %v1019 = vadd.f32 %v491, %v1018
      %v1020 = vpop.f32.mrb[0].mxu0
      %1021 = vmatprep.mubr.bf16.mxu0 0
      %1022 = vmatmul.mubr.bf16.gmra.mrb[0].mxu0 %v757
      %v1023 = vpop.f32.mrb[0].mxu0
      %v1024 = vadd.f32 %v491, %v1023
      %v1025 = vpop.f32.mrb[0].mxu0
      %v1026 = vpop.f32.mrb[0].mxu0
      %v1027 = vadd.f32 %v491, %v1026
      %v1028 = vpop.f32.mrb[0].mxu0
      %1029 = vmatprep.mubr.bf16.mxu0 0
      %1030 = vmatmul.mubr.bf16.gmra.mrb[0].mxu0 %v758
      %v1031 = vpop.f32.mrb[0].mxu0
      %v1032 = vadd.f32 %v491, %v1031
      %v1033 = vpop.f32.mrb[0].mxu0
      %v1034 = vpop.f32.mrb[0].mxu0
      %v1035 = vadd.f32 %v491, %v1034
      %v1036 = vpop.f32.mrb[0].mxu0
      %1037 = vmatprep.mubr.bf16.mxu0 0
      %1038 = vmatmul.mubr.bf16.gmra.mrb[0].mxu0 %v759
      %v1039 = vpop.f32.mrb[0].mxu0
      %v1040 = vadd.f32 %v491, %v1039
      %v1041 = vpop.f32.mrb[0].mxu0
      %v1042 = vpop.f32.mrb[0].mxu0
      %v1043 = vadd.f32 %v491, %v1042
      %v1044 = vpop.f32.mrb[0].mxu0
      %1045 = vmatprep.mubr.bf16.mxu0 0
      %1046 = vmatmul.mubr.bf16.gmra.mrb[0].mxu0 %v760
      %v1047 = vpop.f32.mrb[0].mxu0
      %v1048 = vadd.f32 %v491, %v1047
      %v1049 = vpop.f32.mrb[0].mxu0
      %v1050 = vpop.f32.mrb[0].mxu0
      %v1051 = vadd.f32 %v491, %v1050
      %v1052 = vpop.f32.mrb[0].mxu0
      %1053 = vmatprep.mubr.bf16.mxu0 0
      %1054 = vmatmul.mubr.bf16.gmra.mrb[0].mxu0 %v761
      %v1055 = vpop.f32.mrb[0].mxu0
      %v1056 = vadd.f32 %v491, %v1055
      %v1057 = vpop.f32.mrb[0].mxu0
      %v1058 = vpop.f32.mrb[0].mxu0
      %v1059 = vadd.f32 %v491, %v1058
      %v1060 = vpop.f32.mrb[0].mxu0
      %1061 = vmatprep.mubr.bf16.mxu0 0
      %1062 = vmatmul.mubr.bf16.gmra.mrb[0].mxu0 %v762
      %v1063 = vpop.f32.mrb[0].mxu0
      %v1064 = vadd.f32 %v491, %v1063
      %v1065 = vpop.f32.mrb[0].mxu0
      %v1066 = vpop.f32.mrb[0].mxu0
      %v1067 = vadd.f32 %v491, %v1066
      %v1068 = vpop.f32.mrb[0].mxu0
      %1069 = vmatprep.mubr.bf16.mxu0 0
      %1070 = vmatmul.mubr.bf16.gmra.mrb[0].mxu0 %v763
      %v1071 = vpop.f32.mrb[0].mxu0
      %v1072 = vadd.f32 %v491, %v1071
      %v1073 = vpop.f32.mrb[0].mxu0
      %v1074 = vpop.f32.mrb[0].mxu0
      %v1075 = vadd.f32 %v491, %v1074
      %v1076 = vpop.f32.mrb[0].mxu0
      %1077 = vmatprep.mubr.bf16.mxu0 0
      %1078 = vmatmul.mubr.bf16.gmra.mrb[0].mxu0 %v764
      %v1079 = vpop.f32.mrb[0].mxu0
      %v1080 = vadd.f32 %v491, %v1079
      %v1081 = vpop.f32.mrb[0].mxu0
      %v1082 = vpop.f32.mrb[0].mxu0
      %v1083 = vadd.f32 %v491, %v1082
      %v1084 = vpop.f32.mrb[0].mxu0
      %1085 = vmatprep.mubr.bf16.mxu0 0
      %1086 = vmatmul.mubr.bf16.gmra.mrb[0].mxu0 %v765
      %v1087 = vpop.f32.mrb[0].mxu0
      %v1088 = vadd.f32 %v491, %v1087
      %v1089 = vpop.f32.mrb[0].mxu0
      %v1090 = vpop.f32.mrb[0].mxu0
      %v1091 = vadd.f32 %v491, %v1090
      %v1092 = vpop.f32.mrb[0].mxu0
      %1093 = vmatprep.mubr.bf16.mxu0 0
      %1094 = vmatmul.mubr.bf16.gmra.mrb[0].mxu0 %v766
      %v1095 = vpop.f32.mrb[0].mxu0
      %v1096 = vadd.f32 %v491, %v1095
      %v1097 = vpop.f32.mrb[0].mxu0
      %v1098 = vpop.f32.mrb[0].mxu0
      %v1099 = vadd.f32 %v491, %v1098
      %v1100 = vpop.f32.mrb[0].mxu0
      %1101 = vmatprep.mubr.bf16.mxu0 0
      %1102 = vmatmul.mubr.bf16.gmra.mrb[0].mxu0 %v767
      %v1103 = vpop.f32.mrb[0].mxu0
      %v1104 = vadd.f32 %v491, %v1103
      %v1105 = vpop.f32.mrb[0].mxu0
      %v1106 = vpop.f32.mrb[0].mxu0
      %v1107 = vadd.f32 %v491, %v1106
      %v1108 = vpop.f32.mrb[0].mxu0
      %1109 = vmatprep.mubr.bf16.mxu0 0
      %1110 = vmatmul.mubr.bf16.gmra.mrb[0].mxu0 %v768
      %v1111 = vpop.f32.mrb[0].mxu0
      %v1112 = vadd.f32 %v491, %v1111
      %v1113 = vpop.f32.mrb[0].mxu0
      %v1114 = vpop.f32.mrb[0].mxu0
      %v1115 = vadd.f32 %v491, %v1114
      %v1116 = vpop.f32.mrb[0].mxu0
      %1117 = vmatprep.mubr.bf16.mxu0 0
      %1118 = vmatmul.mubr.bf16.gmra.mrb[0].mxu0 %v769
      %v1119 = vpop.f32.mrb[0].mxu0
      %v1120 = vadd.f32 %v491, %v1119
      %v1121 = vpop.f32.mrb[0].mxu0
      %v1122 = vpop.f32.mrb[0].mxu0
      %v1123 = vadd.f32 %v491, %v1122
      %v1124 = vpop.f32.mrb[0].mxu0
      %1125 = vmatprep.mubr.bf16.mxu0 0
      %1126 = vmatmul.mubr.bf16.gmra.mrb[0].mxu0 %v770
      %v1127 = vpop.f32.mrb[0].mxu0
      %v1128 = vadd.f32 %v491, %v1127
      %v1129 = vpop.f32.mrb[0].mxu0
      %v1130 = vpop.f32.mrb[0].mxu0
      %v1131 = vadd.f32 %v491, %v1130
      %v1132 = vpop.f32.mrb[0].mxu0
      %1133 = vmatprep.mubr.bf16.mxu0 0
      %1134 = vmatmul.mubr.bf16.gmra.mrb[0].mxu0 %v771
      %v1135 = vpop.f32.mrb[0].mxu0
      %v1136 = vadd.f32 %v491, %v1135
      %v1137 = vpop.f32.mrb[0].mxu0
      %v1138 = vpop.f32.mrb[0].mxu0
      %v1139 = vadd.f32 %v491, %v1138
      %v1140 = vpop.f32.mrb[0].mxu0
      %1141 = vmatprep.mubr.bf16.mxu0 0
      %1142 = vmatmul.mubr.bf16.gmra.mrb[0].mxu0 %v772
      %v1143 = vpop.f32.mrb[0].mxu0
      %v1144 = vadd.f32 %v491, %v1143
      %v1145 = vpop.f32.mrb[0].mxu0
      %v1146 = vpop.f32.mrb[0].mxu0
      %v1147 = vadd.f32 %v491, %v1146
      %v1148 = vpop.f32.mrb[0].mxu0
      %1149 = vmatprep.mubr.bf16.mxu0 0
      %1150 = vmatmul.mubr.bf16.gmra.mrb[0].mxu0 %v773
      %v1151 = vpop.f32.mrb[0].mxu0
      %v1152 = vadd.f32 %v491, %v1151
      %v1153 = vpop.f32.mrb[0].mxu0
      %v1154 = vpop.f32.mrb[0].mxu0
      %v1155 = vadd.f32 %v491, %v1154
      %v1156 = vpop.f32.mrb[0].mxu0
      %1157 = vmatprep.mubr.bf16.mxu0 0
      %1158 = vmatmul.mubr.bf16.gmra.mrb[0].mxu0 %v774
      %v1159 = vpop.f32.mrb[0].mxu0
      %v1160 = vadd.f32 %v491, %v1159
      %v1161 = vpop.f32.mrb[0].mxu0
      %v1162 = vpop.f32.mrb[0].mxu0
      %v1163 = vadd.f32 %v491, %v1162
      %v1164 = vpop.f32.mrb[0].mxu0
      %1165 = vmatprep.mubr.bf16.mxu0 0
      %1166 = vmatmul.mubr.bf16.gmra.mrb[0].mxu0 %v775
      %v1167 = vpop.f32.mrb[0].mxu0
      %v1168 = vadd.f32 %v491, %v1167
      %v1169 = vpop.f32.mrb[0].mxu0
      %v1170 = vpop.f32.mrb[0].mxu0
      %v1171 = vadd.f32 %v491, %v1170
      %v1172 = vpop.f32.mrb[0].mxu0
      %1173 = vmatprep.mubr.bf16.mxu0 0
      %1174 = vmatmul.mubr.bf16.gmra.mrb[0].mxu0 %v776
      %v1175 = vpop.f32.mrb[0].mxu0
      %v1176 = vadd.f32 %v491, %v1175
      %v1177 = vpop.f32.mrb[0].mxu0
      %v1178 = vpop.f32.mrb[0].mxu0
      %v1179 = vadd.f32 %v491, %v1178
      %v1180 = vpop.f32.mrb[0].mxu0
      %1181 = vmatprep.mubr.bf16.mxu0 0
      %1182 = vmatmul.mubr.bf16.gmra.mrb[0].mxu0 %v777
      %v1183 = vpop.f32.mrb[0].mxu0
      %v1184 = vadd.f32 %v491, %v1183
      %v1185 = vpop.f32.mrb[0].mxu0
      %v1186 = vpop.f32.mrb[0].mxu0
      %v1187 = vadd.f32 %v491, %v1186
      %v1188 = vpop.f32.mrb[0].mxu0
      %1189 = vmatprep.mubr.bf16.mxu0 0
      %1190 = vmatmul.mubr.bf16.gmra.mrb[0].mxu0 %v778
      %v1191 = vpop.f32.mrb[0].mxu0
      %v1192 = vadd.f32 %v491, %v1191
      %v1193 = vpop.f32.mrb[0].mxu0
      %v1194 = vpop.f32.mrb[0].mxu0
      %v1195 = vadd.f32 %v491, %v1194
      %v1196 = vpop.f32.mrb[0].mxu0
      %1197 = vmatprep.mubr.bf16.mxu0 0
      %1198 = vmatmul.mubr.bf16.gmra.mrb[0].mxu0 %v779
      %v1199 = vpop.f32.mrb[0].mxu0
      %v1200 = vadd.f32 %v491, %v1199
      %v1201 = vpop.f32.mrb[0].mxu0
      %v1202 = vpop.f32.mrb[0].mxu0
      %v1203 = vadd.f32 %v491, %v1202
      %v1204 = vpop.f32.mrb[0].mxu0
      %1205 = vmatprep.mubr.bf16.mxu0 0
      %1206 = vmatmul.mubr.bf16.gmra.mrb[0].mxu0 %v780
      %v1207 = vpop.f32.mrb[0].mxu0
      %v1208 = vadd.f32 %v491, %v1207
      %v1209 = vpop.f32.mrb[0].mxu0
      %v1210 = vpop.f32.mrb[0].mxu0
      %v1211 = vadd.f32 %v491, %v1210
      %v1212 = vpop.f32.mrb[0].mxu0
      %1213 = vmatprep.mubr.bf16.mxu0 0
      %1214 = vmatmul.mubr.bf16.gmra.mrb[0].mxu0 %v781
      %v1215 = vpop.f32.mrb[0].mxu0
      %v1216 = vadd.f32 %v491, %v1215
      %v1217 = vpop.f32.mrb[0].mxu0
      %v1218 = vpop.f32.mrb[0].mxu0
      %v1219 = vadd.f32 %v491, %v1218
      %v1220 = vpop.f32.mrb[0].mxu0
      %1221 = vmatprep.mubr.bf16.mxu0 0
      %1222 = vmatmul.mubr.bf16.gmra.mrb[0].mxu0 %v782
      %v1223 = vpop.f32.mrb[0].mxu0
      %v1224 = vadd.f32 %v491, %v1223
      %v1225 = vpop.f32.mrb[0].mxu0
      %v1226 = vpop.f32.mrb[0].mxu0
      %v1227 = vadd.f32 %v491, %v1226
      %v1228 = vpop.f32.mrb[0].mxu0
      %1229 = vmatprep.mubr.bf16.mxu0 0
      %1230 = vmatmul.mubr.bf16.gmra.mrb[0].mxu0 %v783
      %v1231 = vpop.f32.mrb[0].mxu0
      %v1232 = vadd.f32 %v491, %v1231
      %v1233 = vpop.f32.mrb[0].mxu0
      %v1234 = vpop.f32.mrb[0].mxu0
      %v1235 = vadd.f32 %v491, %v1234
      %v1236 = vpop.f32.mrb[0].mxu0
      %1237 = vmatprep.mubr.bf16.mxu0 0
      %1238 = vmatmul.mubr.bf16.gmra.mrb[0].mxu0 %v784
      %v1239 = vpop.f32.mrb[0].mxu0
      %v1240 = vadd.f32 %v491, %v1239
      %v1241 = vpop.f32.mrb[0].mxu0
      %v1242 = vpop.f32.mrb[0].mxu0
      %v1243 = vadd.f32 %v491, %v1242
      %v1244 = vpop.f32.mrb[0].mxu0
      %1245 = vmatprep.mubr.bf16.mxu0 0
      %1246 = vmatmul.mubr.bf16.gmra.mrb[0].mxu0 %v785
      %v1247 = vpop.f32.mrb[0].mxu0
      %v1248 = vadd.f32 %v491, %v1247
      %v1249 = vpop.f32.mrb[0].mxu0
      %v1250 = vpop.f32.mrb[0].mxu0
      %v1251 = vadd.f32 %v491, %v1250
      %v1252 = vpop.f32.mrb[0].mxu0
      %1253 = vmatprep.mubr.bf16.mxu0 0
      %1254 = vmatmul.mubr.bf16.gmra.mrb[0].mxu0 %v786
      %v1255 = vpop.f32.mrb[0].mxu0
      %v1256 = vadd.f32 %v491, %v1255
      %v1257 = vpop.f32.mrb[0].mxu0
      %v1258 = vpop.f32.mrb[0].mxu0
      %v1259 = vadd.f32 %v491, %v1258
      %v1260 = vpop.f32.mrb[0].mxu0
      %1261 = vmatprep.mubr.bf16.mxu0 0
      %1262 = vmatmul.mubr.bf16.gmra.mrb[0].mxu0 %v787
      %v1263 = vpop.f32.mrb[0].mxu0
      %v1264 = vadd.f32 %v491, %v1263
      %v1265 = vpop.f32.mrb[0].mxu0
      %v1266 = vpop.f32.mrb[0].mxu0
      %v1267 = vadd.f32 %v491, %v1266
      %v1268 = vpop.f32.mrb[0].mxu0
      %1269 = vmatprep.mubr.bf16.mxu0 0
      %1270 = vmatmul.mubr.bf16.gmra.mrb[0].mxu0 %v788
      %v1271 = vpop.f32.mrb[0].mxu0
      %v1272 = vadd.f32 %v491, %v1271
      %v1273 = vpop.f32.mrb[0].mxu0
      %v1274 = vpop.f32.mrb[0].mxu0
      %v1275 = vadd.f32 %v491, %v1274
      %v1276 = vpop.f32.mrb[0].mxu0
      %1277 = vmatprep.mubr.bf16.mxu0 0
      %1278 = vmatmul.mubr.bf16.gmra.mrb[0].mxu0 %v789
      %v1279 = vpop.f32.mrb[0].mxu0
      %v1280 = vadd.f32 %v491, %v1279
      %v1281 = vpop.f32.mrb[0].mxu0
      %v1282 = vpop.f32.mrb[0].mxu0
      %v1283 = vadd.f32 %v491, %v1282
      %v1284 = vpop.f32.mrb[0].mxu0
      %1285 = vmatprep.mubr.bf16.mxu0 0
      %1286 = vmatmul.mubr.bf16.gmra.mrb[0].mxu0 %v790
      %v1287 = vpop.f32.mrb[0].mxu0
      %v1288 = vadd.f32 %v491, %v1287
      %v1289 = vpop.f32.mrb[0].mxu0
      %v1290 = vpop.f32.mrb[0].mxu0
      %v1291 = vadd.f32 %v491, %v1290
      %v1292 = vpop.f32.mrb[0].mxu0
      %1293 = vmatprep.mubr.bf16.mxu0 0
      %1294 = vmatmul.mubr.bf16.gmra.mrb[0].mxu0 %v791
      %v1295 = vpop.f32.mrb[0].mxu0
      %v1296 = vadd.f32 %v491, %v1295
      %v1297 = vpop.f32.mrb[0].mxu0
      %v1298 = vpop.f32.mrb[0].mxu0
      %v1299 = vadd.f32 %v491, %v1298
      %v1300 = vpop.f32.mrb[0].mxu0
      %1301 = vmatprep.mubr.bf16.mxu0 0
      %1302 = vmatmul.mubr.bf16.gmra.mrb[0].mxu0 %v792
      %v1303 = vpop.f32.mrb[0].mxu0
      %v1304 = vadd.f32 %v491, %v1303
      %v1305 = vpop.f32.mrb[0].mxu0
      %v1306 = vpop.f32.mrb[0].mxu0
      %v1307 = vadd.f32 %v491, %v1306
      %v1308 = vpop.f32.mrb[0].mxu0
      %1309 = vmatprep.mubr.bf16.mxu0 0
      %1310 = vmatmul.mubr.bf16.gmra.mrb[0].mxu0 %v793
      %v1311 = vpop.f32.mrb[0].mxu0
      %v1312 = vadd.f32 %v491, %v1311
      %v1313 = vpop.f32.mrb[0].mxu0
      %v1314 = vpop.f32.mrb[0].mxu0
      %v1315 = vadd.f32 %v491, %v1314
      %v1316 = vpop.f32.mrb[0].mxu0
      %1317 = vmatprep.mubr.bf16.mxu0 0
      %1318 = vmatmul.mubr.bf16.gmra.mrb[0].mxu0 %v794
      %v1319 = vpop.f32.mrb[0].mxu0
      %v1320 = vadd.f32 %v491, %v1319
      %v1321 = vpop.f32.mrb[0].mxu0
      %v1322 = vpop.f32.mrb[0].mxu0
      %v1323 = vadd.f32 %v491, %v1322
      %v1324 = vpop.f32.mrb[0].mxu0
      %1325 = vmatprep.mubr.bf16.mxu0 0
      %1326 = vmatmul.mubr.bf16.gmra.mrb[0].mxu0 %v795
      %v1327 = vpop.f32.mrb[0].mxu0
      %v1328 = vadd.f32 %v491, %v1327
      %v1329 = vpop.f32.mrb[0].mxu0
      %v1330 = vpop.f32.mrb[0].mxu0
      %v1331 = vadd.f32 %v491, %v1330
      %v1332 = vpop.f32.mrb[0].mxu0
      %1333 = vmatprep.mubr.bf16.mxu0 0
      %1334 = vmatmul.mubr.bf16.gmra.mrb[0].mxu0 %v796
      %v1335 = vpop.f32.mrb[0].mxu0
      %v1336 = vadd.f32 %v491, %v1335
      %v1337 = vpop.f32.mrb[0].mxu0
      %v1338 = vpop.f32.mrb[0].mxu0
      %v1339 = vadd.f32 %v491, %v1338
      %v1340 = vpop.f32.mrb[0].mxu0
      %1341 = vmatprep.mubr.bf16.mxu0 0
      %1342 = vmatmul.mubr.bf16.gmra.mrb[0].mxu0 %v797
      %v1343 = vpop.f32.mrb[0].mxu0
      %v1344 = vadd.f32 %v491, %v1343
      %v1345 = vpop.f32.mrb[0].mxu0
      %v1346 = vpop.f32.mrb[0].mxu0
      %v1347 = vadd.f32 %v491, %v1346
      %v1348 = vpop.f32.mrb[0].mxu0
      %1349 = vmatprep.mubr.bf16.mxu0 0
      %1350 = vmatmul.mubr.bf16.gmra.mrb[0].mxu0 %v798
      %v1351 = vpop.f32.mrb[0].mxu0
      %v1352 = vadd.f32 %v491, %v1351
      %v1353 = vpop.f32.mrb[0].mxu0
      %v1354 = vpop.f32.mrb[0].mxu0
      %v1355 = vadd.f32 %v491, %v1354
      %v1356 = vpop.f32.mrb[0].mxu0
      %1357 = vmatprep.mubr.bf16.mxu0 0
      %1358 = vmatmul.mubr.bf16.gmra.mrb[0].mxu0 %v799
      %v1359 = vpop.f32.mrb[0].mxu0
      %v1360 = vadd.f32 %v491, %v1359
      %v1361 = vpop.f32.mrb[0].mxu0
      %v1362 = vpop.f32.mrb[0].mxu0
      %v1363 = vadd.f32 %v491, %v1362
      %v1364 = vpop.f32.mrb[0].mxu0
      %1365 = vmatprep.mubr.bf16.mxu0 0
      %1366 = vmatmul.mubr.bf16.gmra.mrb[0].mxu0 %v800
      %v1367 = vpop.f32.mrb[0].mxu0
      %v1368 = vadd.f32 %v491, %v1367
      %v1369 = vpop.f32.mrb[0].mxu0
      %v1370 = vpop.f32.mrb[0].mxu0
      %v1371 = vadd.f32 %v491, %v1370
      %v1372 = vpop.f32.mrb[0].mxu0
      %1373 = vmatprep.mubr.bf16.mxu0 0
      %1374 = vmatmul.mubr.bf16.gmra.mrb[0].mxu0 %v801
      %v1375 = vpop.f32.mrb[0].mxu0
      %v1376 = vadd.f32 %v491, %v1375
      %v1377 = vpop.f32.mrb[0].mxu0
      %v1378 = vpop.f32.mrb[0].mxu0
      %v1379 = vadd.f32 %v491, %v1378
      %v1380 = vpop.f32.mrb[0].mxu0
      %1381 = vmatprep.mubr.bf16.mxu0 0
      %1382 = vmatmul.mubr.bf16.gmra.mrb[0].mxu0 %v802
      %v1383 = vpop.f32.mrb[0].mxu0
      %v1384 = vadd.f32 %v491, %v1383
      %v1385 = vpop.f32.mrb[0].mxu0
      %v1386 = vpop.f32.mrb[0].mxu0
      %v1387 = vadd.f32 %v491, %v1386
      %v1388 = vpop.f32.mrb[0].mxu0
      %1389 = vmatprep.mubr.bf16.mxu0 0
      %1390 = vmatmul.mubr.bf16.gmra.mrb[0].mxu0 %v803
      %v1391 = vpop.f32.mrb[0].mxu0
      %v1392 = vadd.f32 %v491, %v1391
      %v1393 = vpop.f32.mrb[0].mxu0
      %v1394 = vpop.f32.mrb[0].mxu0
      %v1395 = vadd.f32 %v491, %v1394
      %v1396 = vpop.f32.mrb[0].mxu0
      %1397 = vmatprep.mubr.bf16.mxu0 0
      %1398 = vmatmul.mubr.bf16.gmra.mrb[0].mxu0 %v804
      %v1399 = vpop.f32.mrb[0].mxu0
      %v1400 = vadd.f32 %v491, %v1399
      %v1401 = vpop.f32.mrb[0].mxu0
      %v1402 = vpop.f32.mrb[0].mxu0
      %v1403 = vadd.f32 %v491, %v1402
      %v1404 = vpop.f32.mrb[0].mxu0
      %1405 = vmatprep.mubr.bf16.mxu0 0
      %1406 = vmatmul.mubr.bf16.gmra.mrb[0].mxu0 %v805
      %v1407 = vpop.f32.mrb[0].mxu0
      %v1408 = vadd.f32 %v491, %v1407
      %v1409 = vpop.f32.mrb[0].mxu0
      %v1410 = vpop.f32.mrb[0].mxu0
      %v1411 = vadd.f32 %v491, %v1410
      %v1412 = vpop.f32.mrb[0].mxu0
      %1413 = vmatprep.mubr.bf16.mxu0 0
      %1414 = vmatmul.mubr.bf16.gmra.mrb[0].mxu0 %v806
      %v1415 = vpop.f32.mrb[0].mxu0
      %v1416 = vadd.f32 %v491, %v1415
      %v1417 = vpop.f32.mrb[0].mxu0
      %v1418 = vpop.f32.mrb[0].mxu0
      %v1419 = vadd.f32 %v491, %v1418
      %v1420 = vpop.f32.mrb[0].mxu0
      %1421 = vmatprep.mubr.bf16.mxu0 0
      %1422 = vmatmul.mubr.bf16.gmra.mrb[0].mxu0 %v807
      %v1423 = vpop.f32.mrb[0].mxu0
      %v1424 = vadd.f32 %v491, %v1423
      %v1425 = vpop.f32.mrb[0].mxu0
      %v1426 = vpop.f32.mrb[0].mxu0
      %v1427 = vadd.f32 %v491, %v1426
      %v1428 = vpop.f32.mrb[0].mxu0
      %1429 = vmatprep.mubr.bf16.mxu0 0
      %1430 = vmatmul.mubr.bf16.gmra.mrb[0].mxu0 %v808
      %v1431 = vpop.f32.mrb[0].mxu0
      %v1432 = vadd.f32 %v491, %v1431
      %v1433 = vpop.f32.mrb[0].mxu0
      %v1434 = vpop.f32.mrb[0].mxu0
      %v1435 = vadd.f32 %v491, %v1434
      %v1436 = vpop.f32.mrb[0].mxu0
      %1437 = vmatprep.mubr.bf16.mxu0 0
      %1438 = vmatmul.mubr.bf16.gmra.mrb[0].mxu0 %v809
      %v1439 = vpop.f32.mrb[0].mxu0
      %v1440 = vadd.f32 %v491, %v1439
      %v1441 = vpop.f32.mrb[0].mxu0
      %v1442 = vpop.f32.mrb[0].mxu0
      %v1443 = vadd.f32 %v491, %v1442
      %v1444 = vpop.f32.mrb[0].mxu0
      %1445 = vmatprep.mubr.bf16.mxu0 0
      %1446 = vmatmul.mubr.bf16.gmra.mrb[0].mxu0 %v810
      %v1447 = vpop.f32.mrb[0].mxu0
      %v1448 = vadd.f32 %v491, %v1447
      %v1449 = vpop.f32.mrb[0].mxu0
      %v1450 = vpop.f32.mrb[0].mxu0
      %v1451 = vadd.f32 %v491, %v1450
      %v1452 = vpop.f32.mrb[0].mxu0
      %1453 = vmatprep.mubr.bf16.mxu0 0
      %1454 = vmatmul.mubr.bf16.gmra.mrb[0].mxu0 %v811
      %v1455 = vpop.f32.mrb[0].mxu0
      %v1456 = vadd.f32 %v491, %v1455
      %v1457 = vpop.f32.mrb[0].mxu0
      %v1458 = vpop.f32.mrb[0].mxu0
      %v1459 = vadd.f32 %v491, %v1458
      %v1460 = vpop.f32.mrb[0].mxu0
      %1461 = vmatprep.mubr.bf16.mxu0 0
      %1462 = vmatmul.mubr.bf16.gmra.mrb[0].mxu0 %v812
      %v1463 = vpop.f32.mrb[0].mxu0
      %v1464 = vadd.f32 %v491, %v1463
      %v1465 = vpop.f32.mrb[0].mxu0
      %v1466 = vpop.f32.mrb[0].mxu0
      %v1467 = vadd.f32 %v491, %v1466
      %v1468 = vpop.f32.mrb[0].mxu0
      %1469 = vdwg.mxu0
      %v1470 = vmax.f32 %v960, 0.0
      %v1471 = vmax.f32 %v963, 0.0
      %v1472 = vmax.f32 %v968, 0.0
      %v1473 = vmax.f32 %v971, 0.0
      %v1474 = vmax.f32 %v976, 0.0
      %v1475 = vmax.f32 %v979, 0.0
      %v1476 = vmax.f32 %v984, 0.0
      %v1477 = vmax.f32 %v987, 0.0
      %v1478 = vmax.f32 %v992, 0.0
      %v1479 = vmax.f32 %v995, 0.0
      %v1480 = vmax.f32 %v1000, 0.0
      %v1481 = vmax.f32 %v1003, 0.0
      %v1482 = vmax.f32 %v1008, 0.0
      %v1483 = vmax.f32 %v1011, 0.0
      %v1484 = vmax.f32 %v1016, 0.0
      %v1485 = vmax.f32 %v1019, 0.0
      %v1486 = vmax.f32 %v1024, 0.0
      %v1487 = vmax.f32 %v1027, 0.0
      %v1488 = vmax.f32 %v1032, 0.0
      %v1489 = vmax.f32 %v1035, 0.0
      %v1490 = vmax.f32 %v1040, 0.0
      %v1491 = vmax.f32 %v1043, 0.0
      %v1492 = vmax.f32 %v1048, 0.0
      %v1493 = vmax.f32 %v1051, 0.0
      %v1494 = vmax.f32 %v1056, 0.0
      %v1495 = vmax.f32 %v1059, 0.0
      %v1496 = vmax.f32 %v1064, 0.0
      %v1497 = vmax.f32 %v1067, 0.0
      %v1498 = vmax.f32 %v1072, 0.0
      %v1499 = vmax.f32 %v1075, 0.0
      %v1500 = vmax.f32 %v1080, 0.0
      %v1501 = vmax.f32 %v1083, 0.0
      %v1502 = vmax.f32 %v1088, 0.0
      %v1503 = vmax.f32 %v1091, 0.0
      %v1504 = vmax.f32 %v1096, 0.0
      %v1505 = vmax.f32 %v1099, 0.0
      %v1506 = vmax.f32 %v1104, 0.0
      %v1507 = vmax.f32 %v1107, 0.0
      %v1508 = vmax.f32 %v1112, 0.0
      %v1509 = vmax.f32 %v1115, 0.0
      %v1510 = vmax.f32 %v1120, 0.0
      %v1511 = vmax.f32 %v1123, 0.0
      %v1512 = vmax.f32 %v1128, 0.0
      %v1513 = vmax.f32 %v1131, 0.0
      %v1514 = vmax.f32 %v1136, 0.0
      %v1515 = vmax.f32 %v1139, 0.0
      %v1516 = vmax.f32 %v1144, 0.0
      %v1517 = vmax.f32 %v1147, 0.0
      %v1518 = vmax.f32 %v1152, 0.0
      %v1519 = vmax.f32 %v1155, 0.0
      %v1520 = vmax.f32 %v1160, 0.0
      %v1521 = vmax.f32 %v1163, 0.0
      %v1522 = vmax.f32 %v1168, 0.0
      %v1523 = vmax.f32 %v1171, 0.0
      %v1524 = vmax.f32 %v1176, 0.0
      %v1525 = vmax.f32 %v1179, 0.0
      %v1526 = vmax.f32 %v1184, 0.0
      %v1527 = vmax.f32 %v1187, 0.0
      %v1528 = vmax.f32 %v1192, 0.0
      %v1529 = vmax.f32 %v1195, 0.0
      %v1530 = vmax.f32 %v1200, 0.0
      %v1531 = vmax.f32 %v1203, 0.0
      %v1532 = vmax.f32 %v1208, 0.0
      %v1533 = vmax.f32 %v1211, 0.0
      %v1534 = vmax.f32 %v1216, 0.0
      %v1535 = vmax.f32 %v1219, 0.0
      %v1536 = vmax.f32 %v1224, 0.0
      %v1537 = vmax.f32 %v1227, 0.0
      %v1538 = vmax.f32 %v1232, 0.0
      %v1539 = vmax.f32 %v1235, 0.0
      %v1540 = vmax.f32 %v1240, 0.0
      %v1541 = vmax.f32 %v1243, 0.0
      %v1542 = vmax.f32 %v1248, 0.0
      %v1543 = vmax.f32 %v1251, 0.0
      %v1544 = vmax.f32 %v1256, 0.0
      %v1545 = vmax.f32 %v1259, 0.0
      %v1546 = vmax.f32 %v1264, 0.0
      %v1547 = vmax.f32 %v1267, 0.0
      %v1548 = vmax.f32 %v1272, 0.0
      %v1549 = vmax.f32 %v1275, 0.0
      %v1550 = vmax.f32 %v1280, 0.0
      %v1551 = vmax.f32 %v1283, 0.0
      %v1552 = vmax.f32 %v1288, 0.0
      %v1553 = vmax.f32 %v1291, 0.0
      %v1554 = vmax.f32 %v1296, 0.0
      %v1555 = vmax.f32 %v1299, 0.0
      %v1556 = vmax.f32 %v1304, 0.0
      %v1557 = vmax.f32 %v1307, 0.0
      %v1558 = vmax.f32 %v1312, 0.0
      %v1559 = vmax.f32 %v1315, 0.0
      %v1560 = vmax.f32 %v1320, 0.0
      %v1561 = vmax.f32 %v1323, 0.0
      %v1562 = vmax.f32 %v1328, 0.0
      %v1563 = vmax.f32 %v1331, 0.0
      %v1564 = vmax.f32 %v1336, 0.0
      %v1565 = vmax.f32 %v1339, 0.0
      %v1566 = vmax.f32 %v1344, 0.0
      %v1567 = vmax.f32 %v1347, 0.0
      %v1568 = vmax.f32 %v1352, 0.0
      %v1569 = vmax.f32 %v1355, 0.0
      %v1570 = vmax.f32 %v1360, 0.0
      %v1571 = vmax.f32 %v1363, 0.0
      %v1572 = vmax.f32 %v1368, 0.0
      %v1573 = vmax.f32 %v1371, 0.0
      %v1574 = vmax.f32 %v1376, 0.0
      %v1575 = vmax.f32 %v1379, 0.0
      %v1576 = vmax.f32 %v1384, 0.0
      %v1577 = vmax.f32 %v1387, 0.0
      %v1578 = vmax.f32 %v1392, 0.0
      %v1579 = vmax.f32 %v1395, 0.0
      %v1580 = vmax.f32 %v1400, 0.0
      %v1581 = vmax.f32 %v1403, 0.0
      %v1582 = vmax.f32 %v1408, 0.0
      %v1583 = vmax.f32 %v1411, 0.0
      %v1584 = vmax.f32 %v1416, 0.0
      %v1585 = vmax.f32 %v1419, 0.0
      %v1586 = vmax.f32 %v1424, 0.0
      %v1587 = vmax.f32 %v1427, 0.0
      %v1588 = vmax.f32 %v1432, 0.0
      %v1589 = vmax.f32 %v1435, 0.0
      %v1590 = vmax.f32 %v1440, 0.0
      %v1591 = vmax.f32 %v1443, 0.0
      %v1592 = vmax.f32 %v1448, 0.0
      %v1593 = vmax.f32 %v1451, 0.0
      %v1594 = vmax.f32 %v1456, 0.0
      %v1595 = vmax.f32 %v1459, 0.0
      %v1596 = vmax.f32 %v1464, 0.0
      %v1597 = vmax.f32 %v1467, 0.0
      %v1598 = vunpack.c.l.bf16 %v342
      %v1599 = vunpack.c.l.bf16 %v343
      %v1600 = vunpack.c.l.bf16 %v344
      %v1601 = vunpack.c.l.bf16 %v345
      %v1602 = vunpack.c.l.bf16 %v346
      %v1603 = vunpack.c.l.bf16 %v347
      %v1604 = vunpack.c.l.bf16 %v348
      %v1605 = vunpack.c.l.bf16 %v349
      %v1606 = vunpack.c.l.bf16 %v350
      %v1607 = vunpack.c.l.bf16 %v351
      %v1608 = vunpack.c.l.bf16 %v352
      %v1609 = vunpack.c.l.bf16 %v353
      %v1610 = vunpack.c.l.bf16 %v354
      %v1611 = vunpack.c.l.bf16 %v355
      %v1612 = vunpack.c.l.bf16 %v356
      %v1613 = vunpack.c.l.bf16 %v357
      %v1614 = vunpack.c.l.bf16 %v358
      %v1615 = vunpack.c.l.bf16 %v359
      %v1616 = vunpack.c.l.bf16 %v360
      %v1617 = vunpack.c.l.bf16 %v361
      %v1618 = vunpack.c.l.bf16 %v362
      %v1619 = vunpack.c.l.bf16 %v363
      %v1620 = vunpack.c.l.bf16 %v364
      %v1621 = vunpack.c.l.bf16 %v365
      %v1622 = vunpack.c.l.bf16 %v366
      %v1623 = vunpack.c.l.bf16 %v367
      %v1624 = vunpack.c.l.bf16 %v368
      %v1625 = vunpack.c.l.bf16 %v369
      %v1626 = vunpack.c.l.bf16 %v370
      %v1627 = vunpack.c.l.bf16 %v371
      %v1628 = vunpack.c.l.bf16 %v372
      %v1629 = vunpack.c.l.bf16 %v373
      %v1630 = vunpack.c.l.bf16 %v374
      %v1631 = vunpack.c.l.bf16 %v375
      %v1632 = vunpack.c.l.bf16 %v376
      %v1633 = vunpack.c.l.bf16 %v377
      %v1634 = vunpack.c.l.bf16 %v378
      %v1635 = vunpack.c.l.bf16 %v379
      %v1636 = vunpack.c.l.bf16 %v380
      %v1637 = vunpack.c.l.bf16 %v381
      %v1638 = vunpack.c.l.bf16 %v382
      %v1639 = vunpack.c.l.bf16 %v383
      %v1640 = vunpack.c.l.bf16 %v384
      %v1641 = vunpack.c.l.bf16 %v385
      %v1642 = vunpack.c.l.bf16 %v386
      %v1643 = vunpack.c.l.bf16 %v387
      %v1644 = vunpack.c.l.bf16 %v388
      %v1645 = vunpack.c.l.bf16 %v389
      %v1646 = vunpack.c.l.bf16 %v390
      %v1647 = vunpack.c.l.bf16 %v391
      %v1648 = vunpack.c.l.bf16 %v392
      %v1649 = vunpack.c.l.bf16 %v393
      %v1650 = vunpack.c.l.bf16 %v394
      %v1651 = vunpack.c.l.bf16 %v395
      %v1652 = vunpack.c.l.bf16 %v396
      %v1653 = vunpack.c.l.bf16 %v397
      %v1654 = vunpack.c.l.bf16 %v398
      %v1655 = vunpack.c.l.bf16 %v399
      %v1656 = vunpack.c.l.bf16 %v400
      %v1657 = vunpack.c.l.bf16 %v401
      %v1658 = vunpack.c.l.bf16 %v402
      %v1659 = vunpack.c.l.bf16 %v403
      %v1660 = vunpack.c.l.bf16 %v404
      %v1661 = vunpack.c.l.bf16 %v405
      %v1662 = vunpack.c.l.bf16 %v406
      %v1663 = vunpack.c.l.bf16 %v407
      %v1664 = vunpack.c.l.bf16 %v408
      %v1665 = vunpack.c.l.bf16 %v409
      %v1666 = vunpack.c.l.bf16 %v410
      %v1667 = vunpack.c.l.bf16 %v411
      %v1668 = vunpack.c.l.bf16 %v412
      %v1669 = vunpack.c.l.bf16 %v413
      %v1670 = vunpack.c.l.bf16 %v414
      %v1671 = vunpack.c.l.bf16 %v415
      %v1672 = vunpack.c.l.bf16 %v416
      %v1673 = vunpack.c.l.bf16 %v417
      %v1674 = vunpack.c.l.bf16 %v418
      %v1675 = vunpack.c.l.bf16 %v419
      %v1676 = vunpack.c.l.bf16 %v420
      %v1677 = vunpack.c.l.bf16 %v421
      %v1678 = vunpack.c.l.bf16 %v422
      %v1679 = vunpack.c.l.bf16 %v423
      %v1680 = vunpack.c.l.bf16 %v424
      %v1681 = vunpack.c.l.bf16 %v425
      %v1682 = vunpack.c.l.bf16 %v426
      %v1683 = vunpack.c.l.bf16 %v427
      %v1684 = vunpack.c.l.bf16 %v428
      %v1685 = vunpack.c.l.bf16 %v429
      %v1686 = vunpack.c.l.bf16 %v430
      %v1687 = vunpack.c.l.bf16 %v431
      %v1688 = vunpack.c.l.bf16 %v432
      %v1689 = vunpack.c.l.bf16 %v433
      %v1690 = vunpack.c.l.bf16 %v434
      %v1691 = vunpack.c.l.bf16 %v435
      %v1692 = vunpack.c.l.bf16 %v436
      %v1693 = vunpack.c.l.bf16 %v437
      %v1694 = vunpack.c.l.bf16 %v438
      %v1695 = vunpack.c.l.bf16 %v439
      %v1696 = vunpack.c.l.bf16 %v440
      %v1697 = vunpack.c.l.bf16 %v441
      %v1698 = vunpack.c.l.bf16 %v442
      %v1699 = vunpack.c.l.bf16 %v443
      %v1700 = vunpack.c.l.bf16 %v444
      %v1701 = vunpack.c.l.bf16 %v445
      %v1702 = vunpack.c.l.bf16 %v446
      %v1703 = vunpack.c.l.bf16 %v447
      %v1704 = vunpack.c.l.bf16 %v448
      %v1705 = vunpack.c.l.bf16 %v449
      %v1706 = vunpack.c.l.bf16 %v450
      %v1707 = vunpack.c.l.bf16 %v451
      %v1708 = vunpack.c.l.bf16 %v452
      %v1709 = vunpack.c.l.bf16 %v453
      %v1710 = vunpack.c.l.bf16 %v454
      %v1711 = vunpack.c.l.bf16 %v455
      %v1712 = vunpack.c.l.bf16 %v456
      %v1713 = vunpack.c.l.bf16 %v457
      %v1714 = vunpack.c.l.bf16 %v458
      %v1715 = vunpack.c.l.bf16 %v459
      %v1716 = vunpack.c.l.bf16 %v460
      %v1717 = vunpack.c.l.bf16 %v461
      %v1718 = vunpack.c.l.bf16 %v462
      %v1719 = vunpack.c.l.bf16 %v463
      %v1720 = vunpack.c.l.bf16 %v464
      %v1721 = vunpack.c.l.bf16 %v465
      %v1722 = vunpack.c.l.bf16 %v466
      %v1723 = vunpack.c.l.bf16 %v467
      %v1724 = vunpack.c.l.bf16 %v468
      %v1725 = vunpack.c.l.bf16 %v469
      %1726 = vst [vmem:[#allocation2] sm:$0xff] 0.0
      %1727 = vst [vmem:[#allocation2 + $0x8] sm:$0xff] 0.0
      %1728 = vst [vmem:[#allocation2 + $0x10] sm:$0xff] 0.0
      %1729 = vst [vmem:[#allocation2 + $0x18] sm:$0xff] 0.0
      %1730 = vst [vmem:[#allocation2 + $0x240] sm:$0xff] 0.0
      %1731 = vst [vmem:[#allocation2 + $0x248] sm:$0xff] 0.0
      %1732 = vst [vmem:[#allocation2 + $0x250] sm:$0xff] 0.0
      %1733 = vst [vmem:[#allocation2 + $0x258] sm:$0xff] 0.0
      %1734 = vst [vmem:[#allocation2 + $0x480] sm:$0xff] 0.0
      %1735 = vst [vmem:[#allocation2 + $0x488] sm:$0xff] 0.0
      %1736 = vst [vmem:[#allocation2 + $0x490] sm:$0xff] 0.0
      %1737 = vst [vmem:[#allocation2 + $0x498] sm:$0xff] 0.0
      %1738 = vst [vmem:[#allocation2 + $0x6c0] sm:$0xff] 0.0
      %1739 = vst [vmem:[#allocation2 + $0x6c8] sm:$0xff] 0.0
      %1740 = vst [vmem:[#allocation2 + $0x6d0] sm:$0xff] 0.0
      %1741 = vst [vmem:[#allocation2 + $0x6d8] sm:$0xff] 0.0
      %s1742 = scalar_lea.vmem [#allocation2], 544
      %1743 = vst [vmem:[%s1742] sm:$0xff] 0.0
      %1744 = vst [vmem:[%s1742 + $0x8] sm:$0xff] 0.0
      %1745 = vst [vmem:[%s1742 + $0x10] sm:$0xff] 0.0
      %1746 = vst [vmem:[%s1742 + $0x18] sm:$0xff] 0.0
      %1747 = vst [vmem:[%s1742 + $0x240] sm:$0xff] 0.0
      %1748 = vst [vmem:[%s1742 + $0x248] sm:$0xff] 0.0
      %1749 = vst [vmem:[%s1742 + $0x250] sm:$0xff] 0.0
      %1750 = vst [vmem:[%s1742 + $0x258] sm:$0xff] 0.0
      %1751 = vst [vmem:[%s1742 + $0x480] sm:$0xff] 0.0
      %1752 = vst [vmem:[%s1742 + $0x488] sm:$0xff] 0.0
      %1753 = vst [vmem:[%s1742 + $0x490] sm:$0xff] 0.0
      %1754 = vst [vmem:[%s1742 + $0x498] sm:$0xff] 0.0
      %1755 = vst [vmem:[%s1742 + $0x6c0] sm:$0xff] 0.0
      %1756 = vst [vmem:[%s1742 + $0x6c8] sm:$0xff] 0.0
      %1757 = vst [vmem:[%s1742 + $0x6d0] sm:$0xff] 0.0
      %1758 = vst [vmem:[%s1742 + $0x6d8] sm:$0xff] 0.0
      %s1759 = scalar_lea.vmem [#allocation2], 32
      %1760 = vst [vmem:[%s1759 + $0x7] sm:$0x1] 0.0
      %1761 = vst [vmem:[%s1759 + $0x27] sm:$0x1] 0.0
      %1762 = vst [vmem:[%s1759 + $0x47] sm:$0x1] 0.0
      %1763 = vst [vmem:[%s1759 + $0x67] sm:$0x1] 0.0
      %1764 = vst [vmem:[%s1759 + $0x87] sm:$0x1] 0.0
      %1765 = vst [vmem:[%s1759 + $0xa7] sm:$0x1] 0.0
      %1766 = vst [vmem:[%s1759 + $0xc7] sm:$0x1] 0.0
      %1767 = vst [vmem:[%s1759 + $0xe7] sm:$0x1] 0.0
      %1768 = vst [vmem:[%s1759 + $0x107] sm:$0x1] 0.0
      %1769 = vst [vmem:[%s1759 + $0x127] sm:$0x1] 0.0
      %1770 = vst [vmem:[%s1759 + $0x147] sm:$0x1] 0.0
      %1771 = vst [vmem:[%s1759 + $0x167] sm:$0x1] 0.0
      %1772 = vst [vmem:[%s1759 + $0x187] sm:$0x1] 0.0
      %1773 = vst [vmem:[%s1759 + $0x1a7] sm:$0x1] 0.0
      %1774 = vst [vmem:[%s1759 + $0x1c7] sm:$0x1] 0.0
      %1775 = vst [vmem:[%s1759 + $0x1e7] sm:$0x1] 0.0
      %1776 = vst [vmem:[%s1759 + $0x247] sm:$0x1] 0.0
      %1777 = vst [vmem:[%s1759 + $0x267] sm:$0x1] 0.0
      %1778 = vst [vmem:[%s1759 + $0x287] sm:$0x1] 0.0
      %1779 = vst [vmem:[%s1759 + $0x2a7] sm:$0x1] 0.0
      %1780 = vst [vmem:[%s1759 + $0x2c7] sm:$0x1] 0.0
      %1781 = vst [vmem:[%s1759 + $0x2e7] sm:$0x1] 0.0
      %1782 = vst [vmem:[%s1759 + $0x307] sm:$0x1] 0.0
      %1783 = vst [vmem:[%s1759 + $0x327] sm:$0x1] 0.0
      %1784 = vst [vmem:[%s1759 + $0x347] sm:$0x1] 0.0
      %1785 = vst [vmem:[%s1759 + $0x367] sm:$0x1] 0.0
      %1786 = vst [vmem:[%s1759 + $0x387] sm:$0x1] 0.0
      %1787 = vst [vmem:[%s1759 + $0x3a7] sm:$0x1] 0.0
      %1788 = vst [vmem:[%s1759 + $0x3c7] sm:$0x1] 0.0
      %1789 = vst [vmem:[%s1759 + $0x3e7] sm:$0x1] 0.0
      %1790 = vst [vmem:[%s1759 + $0x407] sm:$0x1] 0.0
      %1791 = vst [vmem:[%s1759 + $0x427] sm:$0x1] 0.0
      %1792 = vst [vmem:[%s1759 + $0x487] sm:$0x1] 0.0
      %1793 = vst [vmem:[%s1759 + $0x4a7] sm:$0x1] 0.0
      %1794 = vst [vmem:[%s1759 + $0x4c7] sm:$0x1] 0.0
      %1795 = vst [vmem:[%s1759 + $0x4e7] sm:$0x1] 0.0
      %1796 = vst [vmem:[%s1759 + $0x507] sm:$0x1] 0.0
      %1797 = vst [vmem:[%s1759 + $0x527] sm:$0x1] 0.0
      %1798 = vst [vmem:[%s1759 + $0x547] sm:$0x1] 0.0
      %1799 = vst [vmem:[%s1759 + $0x567] sm:$0x1] 0.0
      %1800 = vst [vmem:[%s1759 + $0x587] sm:$0x1] 0.0
      %1801 = vst [vmem:[%s1759 + $0x5a7] sm:$0x1] 0.0
      %1802 = vst [vmem:[%s1759 + $0x5c7] sm:$0x1] 0.0
      %1803 = vst [vmem:[%s1759 + $0x5e7] sm:$0x1] 0.0
      %1804 = vst [vmem:[%s1759 + $0x607] sm:$0x1] 0.0
      %1805 = vst [vmem:[%s1759 + $0x627] sm:$0x1] 0.0
      %1806 = vst [vmem:[%s1759 + $0x647] sm:$0x1] 0.0
      %1807 = vst [vmem:[%s1759 + $0x667] sm:$0x1] 0.0
      %1808 = vst [vmem:[%s1759 + $0x6c7] sm:$0x1] 0.0
      %1809 = vst [vmem:[%s1759 + $0x6e7] sm:$0x1] 0.0
      %1810 = vst [vmem:[%s1759 + $0x707] sm:$0x1] 0.0
      %1811 = vst [vmem:[%s1759 + $0x727] sm:$0x1] 0.0
      %1812 = vst [vmem:[%s1759 + $0x747] sm:$0x1] 0.0
      %1813 = vst [vmem:[%s1759 + $0x767] sm:$0x1] 0.0
      %1814 = vst [vmem:[%s1759 + $0x787] sm:$0x1] 0.0
      %1815 = vst [vmem:[%s1759 + $0x7a7] sm:$0x1] 0.0
      %1816 = vst [vmem:[%s1759 + $0x7c7] sm:$0x1] 0.0
      %1817 = vst [vmem:[%s1759 + $0x7e7] sm:$0x1] 0.0
      %1818 = vst [vmem:[%s1759 + $0x807] sm:$0x1] 0.0
      %1819 = vst [vmem:[%s1759 + $0x827] sm:$0x1] 0.0
      %1820 = vst [vmem:[%s1759 + $0x847] sm:$0x1] 0.0
      %1821 = vst [vmem:[%s1759 + $0x867] sm:$0x1] 0.0
      %1822 = vst [vmem:[%s1759 + $0x887] sm:$0x1] 0.0
      %1823 = vst [vmem:[%s1759 + $0x8a7] sm:$0x1] 0.0
      %1824 = vst [vmem:[%s1759 + $0x18] sm:$0x1] 0.0
      %1825 = vst [vmem:[%s1759 + $0x38] sm:$0x1] 0.0
      %1826 = vst [vmem:[%s1759 + $0x58] sm:$0x1] 0.0
      %1827 = vst [vmem:[%s1759 + $0x78] sm:$0x1] 0.0
      %1828 = vst [vmem:[%s1759 + $0x98] sm:$0x1] 0.0
      %1829 = vst [vmem:[%s1759 + $0xb8] sm:$0x1] 0.0
      %1830 = vst [vmem:[%s1759 + $0xd8] sm:$0x1] 0.0
      %1831 = vst [vmem:[%s1759 + $0xf8] sm:$0x1] 0.0
      %1832 = vst [vmem:[%s1759 + $0x118] sm:$0x1] 0.0
      %1833 = vst [vmem:[%s1759 + $0x138] sm:$0x1] 0.0
      %1834 = vst [vmem:[%s1759 + $0x158] sm:$0x1] 0.0
      %1835 = vst [vmem:[%s1759 + $0x178] sm:$0x1] 0.0
      %1836 = vst [vmem:[%s1759 + $0x198] sm:$0x1] 0.0
      %1837 = vst [vmem:[%s1759 + $0x1b8] sm:$0x1] 0.0
      %1838 = vst [vmem:[%s1759 + $0x1d8] sm:$0x1] 0.0
      %1839 = vst [vmem:[%s1759 + $0x1f8] sm:$0x1] 0.0
      %1840 = vst [vmem:[%s1759 + $0x258] sm:$0x1] 0.0
      %1841 = vst [vmem:[%s1759 + $0x278] sm:$0x1] 0.0
      %1842 = vst [vmem:[%s1759 + $0x298] sm:$0x1] 0.0
      %1843 = vst [vmem:[%s1759 + $0x2b8] sm:$0x1] 0.0
      %1844 = vst [vmem:[%s1759 + $0x2d8] sm:$0x1] 0.0
      %1845 = vst [vmem:[%s1759 + $0x2f8] sm:$0x1] 0.0
      %1846 = vst [vmem:[%s1759 + $0x318] sm:$0x1] 0.0
      %1847 = vst [vmem:[%s1759 + $0x338] sm:$0x1] 0.0
      %1848 = vst [vmem:[%s1759 + $0x358] sm:$0x1] 0.0
      %1849 = vst [vmem:[%s1759 + $0x378] sm:$0x1] 0.0
      %1850 = vst [vmem:[%s1759 + $0x398] sm:$0x1] 0.0
      %1851 = vst [vmem:[%s1759 + $0x3b8] sm:$0x1] 0.0
      %1852 = vst [vmem:[%s1759 + $0x3d8] sm:$0x1] 0.0
      %1853 = vst [vmem:[%s1759 + $0x3f8] sm:$0x1] 0.0
      %1854 = vst [vmem:[%s1759 + $0x418] sm:$0x1] 0.0
      %1855 = vst [vmem:[%s1759 + $0x438] sm:$0x1] 0.0
      %1856 = vst [vmem:[%s1759 + $0x498] sm:$0x1] 0.0
      %1857 = vst [vmem:[%s1759 + $0x4b8] sm:$0x1] 0.0
      %1858 = vst [vmem:[%s1759 + $0x4d8] sm:$0x1] 0.0
      %1859 = vst [vmem:[%s1759 + $0x4f8] sm:$0x1] 0.0
      %1860 = vst [vmem:[%s1759 + $0x518] sm:$0x1] 0.0
      %1861 = vst [vmem:[%s1759 + $0x538] sm:$0x1] 0.0
      %1862 = vst [vmem:[%s1759 + $0x558] sm:$0x1] 0.0
      %1863 = vst [vmem:[%s1759 + $0x578] sm:$0x1] 0.0
      %1864 = vst [vmem:[%s1759 + $0x598] sm:$0x1] 0.0
      %1865 = vst [vmem:[%s1759 + $0x5b8] sm:$0x1] 0.0
      %1866 = vst [vmem:[%s1759 + $0x5d8] sm:$0x1] 0.0
      %1867 = vst [vmem:[%s1759 + $0x5f8] sm:$0x1] 0.0
      %1868 = vst [vmem:[%s1759 + $0x618] sm:$0x1] 0.0
      %1869 = vst [vmem:[%s1759 + $0x638] sm:$0x1] 0.0
      %1870 = vst [vmem:[%s1759 + $0x658] sm:$0x1] 0.0
      %1871 = vst [vmem:[%s1759 + $0x678] sm:$0x1] 0.0
      %1872 = vst [vmem:[%s1759 + $0x6d8] sm:$0x1] 0.0
      %1873 = vst [vmem:[%s1759 + $0x6f8] sm:$0x1] 0.0
      %1874 = vst [vmem:[%s1759 + $0x718] sm:$0x1] 0.0
      %1875 = vst [vmem:[%s1759 + $0x738] sm:$0x1] 0.0
      %1876 = vst [vmem:[%s1759 + $0x758] sm:$0x1] 0.0
      %1877 = vst [vmem:[%s1759 + $0x778] sm:$0x1] 0.0
      %1878 = vst [vmem:[%s1759 + $0x798] sm:$0x1] 0.0
      %1879 = vst [vmem:[%s1759 + $0x7b8] sm:$0x1] 0.0
      %1880 = vst [vmem:[%s1759 + $0x7d8] sm:$0x1] 0.0
      %1881 = vst [vmem:[%s1759 + $0x7f8] sm:$0x1] 0.0
      %1882 = vst [vmem:[%s1759 + $0x818] sm:$0x1] 0.0
      %1883 = vst [vmem:[%s1759 + $0x838] sm:$0x1] 0.0
      %1884 = vst [vmem:[%s1759 + $0x858] sm:$0x1] 0.0
      %1885 = vst [vmem:[%s1759 + $0x878] sm:$0x1] 0.0
      %1886 = vst [vmem:[%s1759 + $0x898] sm:$0x1] 0.0
      %1887 = vst [vmem:[%s1759 + $0x8b8] sm:$0x1] 0.0
      %1888 = vst [vmem:[%s1759 + $0x8] sm:$0xff] %v1598
      %1889 = vst [vmem:[%s1759 + $0x10] sm:$0xff] %v1599
      %1890 = vst [vmem:[%s1759 + $0x28] sm:$0xff] %v1600
      %1891 = vst [vmem:[%s1759 + $0x30] sm:$0xff] %v1601
      %1892 = vst [vmem:[%s1759 + $0x48] sm:$0xff] %v1602
      %1893 = vst [vmem:[%s1759 + $0x50] sm:$0xff] %v1603
      %1894 = vst [vmem:[%s1759 + $0x68] sm:$0xff] %v1604
      %1895 = vst [vmem:[%s1759 + $0x70] sm:$0xff] %v1605
      %1896 = vst [vmem:[%s1759 + $0x88] sm:$0xff] %v1606
      %1897 = vst [vmem:[%s1759 + $0x90] sm:$0xff] %v1607
      %1898 = vst [vmem:[%s1759 + $0xa8] sm:$0xff] %v1608
      %1899 = vst [vmem:[%s1759 + $0xb0] sm:$0xff] %v1609
      %1900 = vst [vmem:[%s1759 + $0xc8] sm:$0xff] %v1610
      %1901 = vst [vmem:[%s1759 + $0xd0] sm:$0xff] %v1611
      %1902 = vst [vmem:[%s1759 + $0xe8] sm:$0xff] %v1612
      %1903 = vst [vmem:[%s1759 + $0xf0] sm:$0xff] %v1613
      %1904 = vst [vmem:[%s1759 + $0x108] sm:$0xff] %v1614
      %1905 = vst [vmem:[%s1759 + $0x110] sm:$0xff] %v1615
      %1906 = vst [vmem:[%s1759 + $0x128] sm:$0xff] %v1616
      %1907 = vst [vmem:[%s1759 + $0x130] sm:$0xff] %v1617
      %1908 = vst [vmem:[%s1759 + $0x148] sm:$0xff] %v1618
      %1909 = vst [vmem:[%s1759 + $0x150] sm:$0xff] %v1619
      %1910 = vst [vmem:[%s1759 + $0x168] sm:$0xff] %v1620
      %1911 = vst [vmem:[%s1759 + $0x170] sm:$0xff] %v1621
      %1912 = vst [vmem:[%s1759 + $0x188] sm:$0xff] %v1622
      %1913 = vst [vmem:[%s1759 + $0x190] sm:$0xff] %v1623
      %1914 = vst [vmem:[%s1759 + $0x1a8] sm:$0xff] %v1624
      %1915 = vst [vmem:[%s1759 + $0x1b0] sm:$0xff] %v1625
      %1916 = vst [vmem:[%s1759 + $0x1c8] sm:$0xff] %v1626
      %1917 = vst [vmem:[%s1759 + $0x1d0] sm:$0xff] %v1627
      %1918 = vst [vmem:[%s1759 + $0x1e8] sm:$0xff] %v1628
      %1919 = vst [vmem:[%s1759 + $0x1f0] sm:$0xff] %v1629
      %1920 = vst [vmem:[%s1759 + $0x248] sm:$0xff] %v1630
      %1921 = vst [vmem:[%s1759 + $0x250] sm:$0xff] %v1631
      %1922 = vst [vmem:[%s1759 + $0x268] sm:$0xff] %v1632
      %1923 = vst [vmem:[%s1759 + $0x270] sm:$0xff] %v1633
      %1924 = vst [vmem:[%s1759 + $0x288] sm:$0xff] %v1634
      %1925 = vst [vmem:[%s1759 + $0x290] sm:$0xff] %v1635
      %1926 = vst [vmem:[%s1759 + $0x2a8] sm:$0xff] %v1636
      %1927 = vst [vmem:[%s1759 + $0x2b0] sm:$0xff] %v1637
      %1928 = vst [vmem:[%s1759 + $0x2c8] sm:$0xff] %v1638
      %1929 = vst [vmem:[%s1759 + $0x2d0] sm:$0xff] %v1639
      %1930 = vst [vmem:[%s1759 + $0x2e8] sm:$0xff] %v1640
      %1931 = vst [vmem:[%s1759 + $0x2f0] sm:$0xff] %v1641
      %1932 = vst [vmem:[%s1759 + $0x308] sm:$0xff] %v1642
      %1933 = vst [vmem:[%s1759 + $0x310] sm:$0xff] %v1643
      %1934 = vst [vmem:[%s1759 + $0x328] sm:$0xff] %v1644
      %1935 = vst [vmem:[%s1759 + $0x330] sm:$0xff] %v1645
      %1936 = vst [vmem:[%s1759 + $0x348] sm:$0xff] %v1646
      %1937 = vst [vmem:[%s1759 + $0x350] sm:$0xff] %v1647
      %1938 = vst [vmem:[%s1759 + $0x368] sm:$0xff] %v1648
      %1939 = vst [vmem:[%s1759 + $0x370] sm:$0xff] %v1649
      %1940 = vst [vmem:[%s1759 + $0x388] sm:$0xff] %v1650
      %1941 = vst [vmem:[%s1759 + $0x390] sm:$0xff] %v1651
      %1942 = vst [vmem:[%s1759 + $0x3a8] sm:$0xff] %v1652
      %1943 = vst [vmem:[%s1759 + $0x3b0] sm:$0xff] %v1653
      %1944 = vst [vmem:[%s1759 + $0x3c8] sm:$0xff] %v1654
      %1945 = vst [vmem:[%s1759 + $0x3d0] sm:$0xff] %v1655
      %1946 = vst [vmem:[%s1759 + $0x3e8] sm:$0xff] %v1656
      %1947 = vst [vmem:[%s1759 + $0x3f0] sm:$0xff] %v1657
      %1948 = vst [vmem:[%s1759 + $0x408] sm:$0xff] %v1658
      %1949 = vst [vmem:[%s1759 + $0x410] sm:$0xff] %v1659
      %1950 = vst [vmem:[%s1759 + $0x428] sm:$0xff] %v1660
      %1951 = vst [vmem:[%s1759 + $0x430] sm:$0xff] %v1661
      %1952 = vst [vmem:[%s1759 + $0x488] sm:$0xff] %v1662
      %1953 = vst [vmem:[%s1759 + $0x490] sm:$0xff] %v1663
      %1954 = vst [vmem:[%s1759 + $0x4a8] sm:$0xff] %v1664
      %1955 = vst [vmem:[%s1759 + $0x4b0] sm:$0xff] %v1665
      %1956 = vst [vmem:[%s1759 + $0x4c8] sm:$0xff] %v1666
      %1957 = vst [vmem:[%s1759 + $0x4d0] sm:$0xff] %v1667
      %1958 = vst [vmem:[%s1759 + $0x4e8] sm:$0xff] %v1668
      %1959 = vst [vmem:[%s1759 + $0x4f0] sm:$0xff] %v1669
      %1960 = vst [vmem:[%s1759 + $0x508] sm:$0xff] %v1670
      %1961 = vst [vmem:[%s1759 + $0x510] sm:$0xff] %v1671
      %1962 = vst [vmem:[%s1759 + $0x528] sm:$0xff] %v1672
      %1963 = vst [vmem:[%s1759 + $0x530] sm:$0xff] %v1673
      %1964 = vst [vmem:[%s1759 + $0x548] sm:$0xff] %v1674
      %1965 = vst [vmem:[%s1759 + $0x550] sm:$0xff] %v1675
      %1966 = vst [vmem:[%s1759 + $0x568] sm:$0xff] %v1676
      %1967 = vst [vmem:[%s1759 + $0x570] sm:$0xff] %v1677
      %1968 = vst [vmem:[%s1759 + $0x588] sm:$0xff] %v1678
      %1969 = vst [vmem:[%s1759 + $0x590] sm:$0xff] %v1679
      %1970 = vst [vmem:[%s1759 + $0x5a8] sm:$0xff] %v1680
      %1971 = vst [vmem:[%s1759 + $0x5b0] sm:$0xff] %v1681
      %1972 = vst [vmem:[%s1759 + $0x5c8] sm:$0xff] %v1682
      %1973 = vst [vmem:[%s1759 + $0x5d0] sm:$0xff] %v1683
      %1974 = vst [vmem:[%s1759 + $0x5e8] sm:$0xff] %v1684
      %1975 = vst [vmem:[%s1759 + $0x5f0] sm:$0xff] %v1685
      %1976 = vst [vmem:[%s1759 + $0x608] sm:$0xff] %v1686
      %1977 = vst [vmem:[%s1759 + $0x610] sm:$0xff] %v1687
      %1978 = vst [vmem:[%s1759 + $0x628] sm:$0xff] %v1688
      %1979 = vst [vmem:[%s1759 + $0x630] sm:$0xff] %v1689
      %1980 = vst [vmem:[%s1759 + $0x648] sm:$0xff] %v1690
      %1981 = vst [vmem:[%s1759 + $0x650] sm:$0xff] %v1691
      %1982 = vst [vmem:[%s1759 + $0x668] sm:$0xff] %v1692
      %1983 = vst [vmem:[%s1759 + $0x670] sm:$0xff] %v1693
      %1984 = vst [vmem:[%s1759 + $0x6c8] sm:$0xff] %v1694
      %1985 = vst [vmem:[%s1759 + $0x6d0] sm:$0xff] %v1695
      %1986 = vst [vmem:[%s1759 + $0x6e8] sm:$0xff] %v1696
      %1987 = vst [vmem:[%s1759 + $0x6f0] sm:$0xff] %v1697
      %1988 = vst [vmem:[%s1759 + $0x708] sm:$0xff] %v1698
      %1989 = vst [vmem:[%s1759 + $0x710] sm:$0xff] %v1699
      %1990 = vst [vmem:[%s1759 + $0x728] sm:$0xff] %v1700
      %1991 = vst [vmem:[%s1759 + $0x730] sm:$0xff] %v1701
      %1992 = vst [vmem:[%s1759 + $0x748] sm:$0xff] %v1702
      %1993 = vst [vmem:[%s1759 + $0x750] sm:$0xff] %v1703
      %1994 = vst [vmem:[%s1759 + $0x768] sm:$0xff] %v1704
      %1995 = vst [vmem:[%s1759 + $0x770] sm:$0xff] %v1705
      %1996 = vst [vmem:[%s1759 + $0x788] sm:$0xff] %v1706
      %1997 = vst [vmem:[%s1759 + $0x790] sm:$0xff] %v1707
      %1998 = vst [vmem:[%s1759 + $0x7a8] sm:$0xff] %v1708
      %1999 = vst [vmem:[%s1759 + $0x7b0] sm:$0xff] %v1709
      %2000 = vst [vmem:[%s1759 + $0x7c8] sm:$0xff] %v1710
      %2001 = vst [vmem:[%s1759 + $0x7d0] sm:$0xff] %v1711
      %2002 = vst [vmem:[%s1759 + $0x7e8] sm:$0xff] %v1712
      %2003 = vst [vmem:[%s1759 + $0x7f0] sm:$0xff] %v1713
      %2004 = vst [vmem:[%s1759 + $0x808] sm:$0xff] %v1714
      %2005 = vst [vmem:[%s1759 + $0x810] sm:$0xff] %v1715
      %2006 = vst [vmem:[%s1759 + $0x828] sm:$0xff] %v1716
      %2007 = vst [vmem:[%s1759 + $0x830] sm:$0xff] %v1717
      %2008 = vst [vmem:[%s1759 + $0x848] sm:$0xff] %v1718
      %2009 = vst [vmem:[%s1759 + $0x850] sm:$0xff] %v1719
      %2010 = vst [vmem:[%s1759 + $0x868] sm:$0xff] %v1720
      %2011 = vst [vmem:[%s1759 + $0x870] sm:$0xff] %v1721
      %2012 = vst [vmem:[%s1759 + $0x888] sm:$0xff] %v1722
      %2013 = vst [vmem:[%s1759 + $0x890] sm:$0xff] %v1723
      %2014 = vst [vmem:[%s1759 + $0x8a8] sm:$0xff] %v1724
      %2015 = vst [vmem:[%s1759 + $0x8b0] sm:$0xff] %v1725
      %2016 = vst [vmem:[#allocation3] sm:$0xff] 0.0
      %2017 = vst [vmem:[#allocation3 + $0x8] sm:$0xff] 0.0
      %2018 = vst [vmem:[#allocation3 + $0x10] sm:$0xff] 0.0
      %2019 = vst [vmem:[#allocation3 + $0x18] sm:$0xff] 0.0
      %2020 = vst [vmem:[#allocation3 + $0x240] sm:$0xff] 0.0
      %2021 = vst [vmem:[#allocation3 + $0x248] sm:$0xff] 0.0
      %2022 = vst [vmem:[#allocation3 + $0x250] sm:$0xff] 0.0
      %2023 = vst [vmem:[#allocation3 + $0x258] sm:$0xff] 0.0
      %2024 = vst [vmem:[#allocation3 + $0x480] sm:$0xff] 0.0
      %2025 = vst [vmem:[#allocation3 + $0x488] sm:$0xff] 0.0
      %2026 = vst [vmem:[#allocation3 + $0x490] sm:$0xff] 0.0
      %2027 = vst [vmem:[#allocation3 + $0x498] sm:$0xff] 0.0
      %2028 = vst [vmem:[#allocation3 + $0x6c0] sm:$0xff] 0.0
      %2029 = vst [vmem:[#allocation3 + $0x6c8] sm:$0xff] 0.0
      %2030 = vst [vmem:[#allocation3 + $0x6d0] sm:$0xff] 0.0
      %2031 = vst [vmem:[#allocation3 + $0x6d8] sm:$0xff] 0.0
      %s2032 = scalar_lea.vmem [#allocation3], 544
      %2033 = vst [vmem:[%s2032] sm:$0xff] 0.0
      %2034 = vst [vmem:[%s2032 + $0x8] sm:$0xff] 0.0
      %2035 = vst [vmem:[%s2032 + $0x10] sm:$0xff] 0.0
      %2036 = vst [vmem:[%s2032 + $0x18] sm:$0xff] 0.0
      %2037 = vst [vmem:[%s2032 + $0x240] sm:$0xff] 0.0
      %2038 = vst [vmem:[%s2032 + $0x248] sm:$0xff] 0.0
      %2039 = vst [vmem:[%s2032 + $0x250] sm:$0xff] 0.0
      %2040 = vst [vmem:[%s2032 + $0x258] sm:$0xff] 0.0
      %2041 = vst [vmem:[%s2032 + $0x480] sm:$0xff] 0.0
      %2042 = vst [vmem:[%s2032 + $0x488] sm:$0xff] 0.0
      %2043 = vst [vmem:[%s2032 + $0x490] sm:$0xff] 0.0
      %2044 = vst [vmem:[%s2032 + $0x498] sm:$0xff] 0.0
      %2045 = vst [vmem:[%s2032 + $0x6c0] sm:$0xff] 0.0
      %2046 = vst [vmem:[%s2032 + $0x6c8] sm:$0xff] 0.0
      %2047 = vst [vmem:[%s2032 + $0x6d0] sm:$0xff] 0.0
      %2048 = vst [vmem:[%s2032 + $0x6d8] sm:$0xff] 0.0
      %s2049 = scalar_lea.vmem [#allocation3], 32
      %2050 = vst [vmem:[%s2049 + $0x7] sm:$0x1] 0.0
      %2051 = vst [vmem:[%s2049 + $0x27] sm:$0x1] 0.0
      %2052 = vst [vmem:[%s2049 + $0x47] sm:$0x1] 0.0
      %2053 = vst [vmem:[%s2049 + $0x67] sm:$0x1] 0.0
      %2054 = vst [vmem:[%s2049 + $0x87] sm:$0x1] 0.0
      %2055 = vst [vmem:[%s2049 + $0xa7] sm:$0x1] 0.0
      %2056 = vst [vmem:[%s2049 + $0xc7] sm:$0x1] 0.0
      %2057 = vst [vmem:[%s2049 + $0xe7] sm:$0x1] 0.0
      %2058 = vst [vmem:[%s2049 + $0x107] sm:$0x1] 0.0
      %2059 = vst [vmem:[%s2049 + $0x127] sm:$0x1] 0.0
      %2060 = vst [vmem:[%s2049 + $0x147] sm:$0x1] 0.0
      %2061 = vst [vmem:[%s2049 + $0x167] sm:$0x1] 0.0
      %2062 = vst [vmem:[%s2049 + $0x187] sm:$0x1] 0.0
      %2063 = vst [vmem:[%s2049 + $0x1a7] sm:$0x1] 0.0
      %2064 = vst [vmem:[%s2049 + $0x1c7] sm:$0x1] 0.0
      %2065 = vst [vmem:[%s2049 + $0x1e7] sm:$0x1] 0.0
      %2066 = vst [vmem:[%s2049 + $0x247] sm:$0x1] 0.0
      %2067 = vst [vmem:[%s2049 + $0x267] sm:$0x1] 0.0
      %2068 = vst [vmem:[%s2049 + $0x287] sm:$0x1] 0.0
      %2069 = vst [vmem:[%s2049 + $0x2a7] sm:$0x1] 0.0
      %2070 = vst [vmem:[%s2049 + $0x2c7] sm:$0x1] 0.0
      %2071 = vst [vmem:[%s2049 + $0x2e7] sm:$0x1] 0.0
      %2072 = vst [vmem:[%s2049 + $0x307] sm:$0x1] 0.0
      %2073 = vst [vmem:[%s2049 + $0x327] sm:$0x1] 0.0
      %2074 = vst [vmem:[%s2049 + $0x347] sm:$0x1] 0.0
      %2075 = vst [vmem:[%s2049 + $0x367] sm:$0x1] 0.0
      %2076 = vst [vmem:[%s2049 + $0x387] sm:$0x1] 0.0
      %2077 = vst [vmem:[%s2049 + $0x3a7] sm:$0x1] 0.0
      %2078 = vst [vmem:[%s2049 + $0x3c7] sm:$0x1] 0.0
      %2079 = vst [vmem:[%s2049 + $0x3e7] sm:$0x1] 0.0
      %2080 = vst [vmem:[%s2049 + $0x407] sm:$0x1] 0.0
      %2081 = vst [vmem:[%s2049 + $0x427] sm:$0x1] 0.0
      %2082 = vst [vmem:[%s2049 + $0x487] sm:$0x1] 0.0
      %2083 = vst [vmem:[%s2049 + $0x4a7] sm:$0x1] 0.0
      %2084 = vst [vmem:[%s2049 + $0x4c7] sm:$0x1] 0.0
      %2085 = vst [vmem:[%s2049 + $0x4e7] sm:$0x1] 0.0
      %2086 = vst [vmem:[%s2049 + $0x507] sm:$0x1] 0.0
      %2087 = vst [vmem:[%s2049 + $0x527] sm:$0x1] 0.0
      %2088 = vst [vmem:[%s2049 + $0x547] sm:$0x1] 0.0
      %2089 = vst [vmem:[%s2049 + $0x567] sm:$0x1] 0.0
      %2090 = vst [vmem:[%s2049 + $0x587] sm:$0x1] 0.0
      %2091 = vst [vmem:[%s2049 + $0x5a7] sm:$0x1] 0.0
      %2092 = vst [vmem:[%s2049 + $0x5c7] sm:$0x1] 0.0
      %2093 = vst [vmem:[%s2049 + $0x5e7] sm:$0x1] 0.0
      %2094 = vst [vmem:[%s2049 + $0x607] sm:$0x1] 0.0
      %2095 = vst [vmem:[%s2049 + $0x627] sm:$0x1] 0.0
      %2096 = vst [vmem:[%s2049 + $0x647] sm:$0x1] 0.0
      %2097 = vst [vmem:[%s2049 + $0x667] sm:$0x1] 0.0
      %2098 = vst [vmem:[%s2049 + $0x6c7] sm:$0x1] 0.0
      %2099 = vst [vmem:[%s2049 + $0x6e7] sm:$0x1] 0.0
      %2100 = vst [vmem:[%s2049 + $0x707] sm:$0x1] 0.0
      %2101 = vst [vmem:[%s2049 + $0x727] sm:$0x1] 0.0
      %2102 = vst [vmem:[%s2049 + $0x747] sm:$0x1] 0.0
      %2103 = vst [vmem:[%s2049 + $0x767] sm:$0x1] 0.0
      %2104 = vst [vmem:[%s2049 + $0x787] sm:$0x1] 0.0
      %2105 = vst [vmem:[%s2049 + $0x7a7] sm:$0x1] 0.0
      %2106 = vst [vmem:[%s2049 + $0x7c7] sm:$0x1] 0.0
      %2107 = vst [vmem:[%s2049 + $0x7e7] sm:$0x1] 0.0
      %2108 = vst [vmem:[%s2049 + $0x807] sm:$0x1] 0.0
      %2109 = vst [vmem:[%s2049 + $0x827] sm:$0x1] 0.0
      %2110 = vst [vmem:[%s2049 + $0x847] sm:$0x1] 0.0
      %2111 = vst [vmem:[%s2049 + $0x867] sm:$0x1] 0.0
      %2112 = vst [vmem:[%s2049 + $0x887] sm:$0x1] 0.0
      %2113 = vst [vmem:[%s2049 + $0x8a7] sm:$0x1] 0.0
      %2114 = vst [vmem:[%s2049 + $0x18] sm:$0x1] 0.0
      %2115 = vst [vmem:[%s2049 + $0x38] sm:$0x1] 0.0
      %2116 = vst [vmem:[%s2049 + $0x58] sm:$0x1] 0.0
      %2117 = vst [vmem:[%s2049 + $0x78] sm:$0x1] 0.0
      %2118 = vst [vmem:[%s2049 + $0x98] sm:$0x1] 0.0
      %2119 = vst [vmem:[%s2049 + $0xb8] sm:$0x1] 0.0
      %2120 = vst [vmem:[%s2049 + $0xd8] sm:$0x1] 0.0
      %2121 = vst [vmem:[%s2049 + $0xf8] sm:$0x1] 0.0
      %2122 = vst [vmem:[%s2049 + $0x118] sm:$0x1] 0.0
      %2123 = vst [vmem:[%s2049 + $0x138] sm:$0x1] 0.0
      %2124 = vst [vmem:[%s2049 + $0x158] sm:$0x1] 0.0
      %2125 = vst [vmem:[%s2049 + $0x178] sm:$0x1] 0.0
      %2126 = vst [vmem:[%s2049 + $0x198] sm:$0x1] 0.0
      %2127 = vst [vmem:[%s2049 + $0x1b8] sm:$0x1] 0.0
      %2128 = vst [vmem:[%s2049 + $0x1d8] sm:$0x1] 0.0
      %2129 = vst [vmem:[%s2049 + $0x1f8] sm:$0x1] 0.0
      %2130 = vst [vmem:[%s2049 + $0x258] sm:$0x1] 0.0
      %2131 = vst [vmem:[%s2049 + $0x278] sm:$0x1] 0.0
      %2132 = vst [vmem:[%s2049 + $0x298] sm:$0x1] 0.0
      %2133 = vst [vmem:[%s2049 + $0x2b8] sm:$0x1] 0.0
      %2134 = vst [vmem:[%s2049 + $0x2d8] sm:$0x1] 0.0
      %2135 = vst [vmem:[%s2049 + $0x2f8] sm:$0x1] 0.0
      %2136 = vst [vmem:[%s2049 + $0x318] sm:$0x1] 0.0
      %2137 = vst [vmem:[%s2049 + $0x338] sm:$0x1] 0.0
      %2138 = vst [vmem:[%s2049 + $0x358] sm:$0x1] 0.0
      %2139 = vst [vmem:[%s2049 + $0x378] sm:$0x1] 0.0
      %2140 = vst [vmem:[%s2049 + $0x398] sm:$0x1] 0.0
      %2141 = vst [vmem:[%s2049 + $0x3b8] sm:$0x1] 0.0
      %2142 = vst [vmem:[%s2049 + $0x3d8] sm:$0x1] 0.0
      %2143 = vst [vmem:[%s2049 + $0x3f8] sm:$0x1] 0.0
      %2144 = vst [vmem:[%s2049 + $0x418] sm:$0x1] 0.0
      %2145 = vst [vmem:[%s2049 + $0x438] sm:$0x1] 0.0
      %2146 = vst [vmem:[%s2049 + $0x498] sm:$0x1] 0.0
      %2147 = vst [vmem:[%s2049 + $0x4b8] sm:$0x1] 0.0
      %2148 = vst [vmem:[%s2049 + $0x4d8] sm:$0x1] 0.0
      %2149 = vst [vmem:[%s2049 + $0x4f8] sm:$0x1] 0.0
      %2150 = vst [vmem:[%s2049 + $0x518] sm:$0x1] 0.0
      %2151 = vst [vmem:[%s2049 + $0x538] sm:$0x1] 0.0
      %2152 = vst [vmem:[%s2049 + $0x558] sm:$0x1] 0.0
      %2153 = vst [vmem:[%s2049 + $0x578] sm:$0x1] 0.0
      %2154 = vst [vmem:[%s2049 + $0x598] sm:$0x1] 0.0
      %2155 = vst [vmem:[%s2049 + $0x5b8] sm:$0x1] 0.0
      %2156 = vst [vmem:[%s2049 + $0x5d8] sm:$0x1] 0.0
      %2157 = vst [vmem:[%s2049 + $0x5f8] sm:$0x1] 0.0
      %2158 = vst [vmem:[%s2049 + $0x618] sm:$0x1] 0.0
      %2159 = vst [vmem:[%s2049 + $0x638] sm:$0x1] 0.0
      %2160 = vst [vmem:[%s2049 + $0x658] sm:$0x1] 0.0
      %2161 = vst [vmem:[%s2049 + $0x678] sm:$0x1] 0.0
      %2162 = vst [vmem:[%s2049 + $0x6d8] sm:$0x1] 0.0
      %2163 = vst [vmem:[%s2049 + $0x6f8] sm:$0x1] 0.0
      %2164 = vst [vmem:[%s2049 + $0x718] sm:$0x1] 0.0
      %2165 = vst [vmem:[%s2049 + $0x738] sm:$0x1] 0.0
      %2166 = vst [vmem:[%s2049 + $0x758] sm:$0x1] 0.0
      %2167 = vst [vmem:[%s2049 + $0x778] sm:$0x1] 0.0
      %2168 = vst [vmem:[%s2049 + $0x798] sm:$0x1] 0.0
      %2169 = vst [vmem:[%s2049 + $0x7b8] sm:$0x1] 0.0
      %2170 = vst [vmem:[%s2049 + $0x7d8] sm:$0x1] 0.0
      %2171 = vst [vmem:[%s2049 + $0x7f8] sm:$0x1] 0.0
      %2172 = vst [vmem:[%s2049 + $0x818] sm:$0x1] 0.0
      %2173 = vst [vmem:[%s2049 + $0x838] sm:$0x1] 0.0
      %2174 = vst [vmem:[%s2049 + $0x858] sm:$0x1] 0.0
      %2175 = vst [vmem:[%s2049 + $0x878] sm:$0x1] 0.0
      %2176 = vst [vmem:[%s2049 + $0x898] sm:$0x1] 0.0
      %2177 = vst [vmem:[%s2049 + $0x8b8] sm:$0x1] 0.0
      %2178 = vst [vmem:[%s2049 + $0x8] sm:$0xff] %v1470
      %2179 = vst [vmem:[%s2049 + $0x10] sm:$0xff] %v1471
      %2180 = vst [vmem:[%s2049 + $0x28] sm:$0xff] %v1472
      %2181 = vst [vmem:[%s2049 + $0x30] sm:$0xff] %v1473
      %2182 = vst [vmem:[%s2049 + $0x48] sm:$0xff] %v1474
      %2183 = vst [vmem:[%s2049 + $0x50] sm:$0xff] %v1475
      %2184 = vst [vmem:[%s2049 + $0x68] sm:$0xff] %v1476
      %2185 = vst [vmem:[%s2049 + $0x70] sm:$0xff] %v1477
      %2186 = vst [vmem:[%s2049 + $0x88] sm:$0xff] %v1478
      %2187 = vst [vmem:[%s2049 + $0x90] sm:$0xff] %v1479
      %2188 = vst [vmem:[%s2049 + $0xa8] sm:$0xff] %v1480
      %2189 = vst [vmem:[%s2049 + $0xb0] sm:$0xff] %v1481
      %2190 = vst [vmem:[%s2049 + $0xc8] sm:$0xff] %v1482
      %2191 = vst [vmem:[%s2049 + $0xd0] sm:$0xff] %v1483
      %2192 = vst [vmem:[%s2049 + $0xe8] sm:$0xff] %v1484
      %2193 = vst [vmem:[%s2049 + $0xf0] sm:$0xff] %v1485
      %2194 = vst [vmem:[%s2049 + $0x108] sm:$0xff] %v1486
      %2195 = vst [vmem:[%s2049 + $0x110] sm:$0xff] %v1487
      %2196 = vst [vmem:[%s2049 + $0x128] sm:$0xff] %v1488
      %2197 = vst [vmem:[%s2049 + $0x130] sm:$0xff] %v1489
      %2198 = vst [vmem:[%s2049 + $0x148] sm:$0xff] %v1490
      %2199 = vst [vmem:[%s2049 + $0x150] sm:$0xff] %v1491
      %2200 = vst [vmem:[%s2049 + $0x168] sm:$0xff] %v1492
      %2201 = vst [vmem:[%s2049 + $0x170] sm:$0xff] %v1493
      %2202 = vst [vmem:[%s2049 + $0x188] sm:$0xff] %v1494
      %2203 = vst [vmem:[%s2049 + $0x190] sm:$0xff] %v1495
      %2204 = vst [vmem:[%s2049 + $0x1a8] sm:$0xff] %v1496
      %2205 = vst [vmem:[%s2049 + $0x1b0] sm:$0xff] %v1497
      %2206 = vst [vmem:[%s2049 + $0x1c8] sm:$0xff] %v1498
      %2207 = vst [vmem:[%s2049 + $0x1d0] sm:$0xff] %v1499
      %2208 = vst [vmem:[%s2049 + $0x1e8] sm:$0xff] %v1500
      %2209 = vst [vmem:[%s2049 + $0x1f0] sm:$0xff] %v1501
      %2210 = vst [vmem:[%s2049 + $0x248] sm:$0xff] %v1502
      %2211 = vst [vmem:[%s2049 + $0x250] sm:$0xff] %v1503
      %2212 = vst [vmem:[%s2049 + $0x268] sm:$0xff] %v1504
      %2213 = vst [vmem:[%s2049 + $0x270] sm:$0xff] %v1505
      %2214 = vst [vmem:[%s2049 + $0x288] sm:$0xff] %v1506
      %2215 = vst [vmem:[%s2049 + $0x290] sm:$0xff] %v1507
      %2216 = vst [vmem:[%s2049 + $0x2a8] sm:$0xff] %v1508
      %2217 = vst [vmem:[%s2049 + $0x2b0] sm:$0xff] %v1509
      %2218 = vst [vmem:[%s2049 + $0x2c8] sm:$0xff] %v1510
      %2219 = vst [vmem:[%s2049 + $0x2d0] sm:$0xff] %v1511
      %2220 = vst [vmem:[%s2049 + $0x2e8] sm:$0xff] %v1512
      %2221 = vst [vmem:[%s2049 + $0x2f0] sm:$0xff] %v1513
      %2222 = vst [vmem:[%s2049 + $0x308] sm:$0xff] %v1514
      %2223 = vst [vmem:[%s2049 + $0x310] sm:$0xff] %v1515
      %2224 = vst [vmem:[%s2049 + $0x328] sm:$0xff] %v1516
      %2225 = vst [vmem:[%s2049 + $0x330] sm:$0xff] %v1517
      %2226 = vst [vmem:[%s2049 + $0x348] sm:$0xff] %v1518
      %2227 = vst [vmem:[%s2049 + $0x350] sm:$0xff] %v1519
      %2228 = vst [vmem:[%s2049 + $0x368] sm:$0xff] %v1520
      %2229 = vst [vmem:[%s2049 + $0x370] sm:$0xff] %v1521
      %2230 = vst [vmem:[%s2049 + $0x388] sm:$0xff] %v1522
      %2231 = vst [vmem:[%s2049 + $0x390] sm:$0xff] %v1523
      %2232 = vst [vmem:[%s2049 + $0x3a8] sm:$0xff] %v1524
      %2233 = vst [vmem:[%s2049 + $0x3b0] sm:$0xff] %v1525
      %2234 = vst [vmem:[%s2049 + $0x3c8] sm:$0xff] %v1526
      %2235 = vst [vmem:[%s2049 + $0x3d0] sm:$0xff] %v1527
      %2236 = vst [vmem:[%s2049 + $0x3e8] sm:$0xff] %v1528
      %2237 = vst [vmem:[%s2049 + $0x3f0] sm:$0xff] %v1529
      %2238 = vst [vmem:[%s2049 + $0x408] sm:$0xff] %v1530
      %2239 = vst [vmem:[%s2049 + $0x410] sm:$0xff] %v1531
      %2240 = vst [vmem:[%s2049 + $0x428] sm:$0xff] %v1532
      %2241 = vst [vmem:[%s2049 + $0x430] sm:$0xff] %v1533
      %2242 = vst [vmem:[%s2049 + $0x488] sm:$0xff] %v1534
      %2243 = vst [vmem:[%s2049 + $0x490] sm:$0xff] %v1535
      %2244 = vst [vmem:[%s2049 + $0x4a8] sm:$0xff] %v1536
      %2245 = vst [vmem:[%s2049 + $0x4b0] sm:$0xff] %v1537
      %2246 = vst [vmem:[%s2049 + $0x4c8] sm:$0xff] %v1538
      %2247 = vst [vmem:[%s2049 + $0x4d0] sm:$0xff] %v1539
      %2248 = vst [vmem:[%s2049 + $0x4e8] sm:$0xff] %v1540
      %2249 = vst [vmem:[%s2049 + $0x4f0] sm:$0xff] %v1541
      %2250 = vst [vmem:[%s2049 + $0x508] sm:$0xff] %v1542
      %2251 = vst [vmem:[%s2049 + $0x510] sm:$0xff] %v1543
      %2252 = vst [vmem:[%s2049 + $0x528] sm:$0xff] %v1544
      %2253 = vst [vmem:[%s2049 + $0x530] sm:$0xff] %v1545
      %2254 = vst [vmem:[%s2049 + $0x548] sm:$0xff] %v1546
      %2255 = vst [vmem:[%s2049 + $0x550] sm:$0xff] %v1547
      %2256 = vst [vmem:[%s2049 + $0x568] sm:$0xff] %v1548
      %2257 = vst [vmem:[%s2049 + $0x570] sm:$0xff] %v1549
      %2258 = vst [vmem:[%s2049 + $0x588] sm:$0xff] %v1550
      %2259 = vst [vmem:[%s2049 + $0x590] sm:$0xff] %v1551
      %2260 = vst [vmem:[%s2049 + $0x5a8] sm:$0xff] %v1552
      %2261 = vst [vmem:[%s2049 + $0x5b0] sm:$0xff] %v1553
      %2262 = vst [vmem:[%s2049 + $0x5c8] sm:$0xff] %v1554
      %2263 = vst [vmem:[%s2049 + $0x5d0] sm:$0xff] %v1555
      %2264 = vst [vmem:[%s2049 + $0x5e8] sm:$0xff] %v1556
      %2265 = vst [vmem:[%s2049 + $0x5f0] sm:$0xff] %v1557
      %2266 = vst [vmem:[%s2049 + $0x608] sm:$0xff] %v1558
      %2267 = vst [vmem:[%s2049 + $0x610] sm:$0xff] %v1559
      %2268 = vst [vmem:[%s2049 + $0x628] sm:$0xff] %v1560
      %2269 = vst [vmem:[%s2049 + $0x630] sm:$0xff] %v1561
      %2270 = vst [vmem:[%s2049 + $0x648] sm:$0xff] %v1562
      %2271 = vst [vmem:[%s2049 + $0x650] sm:$0xff] %v1563
      %2272 = vst [vmem:[%s2049 + $0x668] sm:$0xff] %v1564
      %2273 = vst [vmem:[%s2049 + $0x670] sm:$0xff] %v1565
      %2274 = vst [vmem:[%s2049 + $0x6c8] sm:$0xff] %v1566
      %2275 = vst [vmem:[%s2049 + $0x6d0] sm:$0xff] %v1567
      %2276 = vst [vmem:[%s2049 + $0x6e8] sm:$0xff] %v1568
      %2277 = vst [vmem:[%s2049 + $0x6f0] sm:$0xff] %v1569
      %2278 = vst [vmem:[%s2049 + $0x708] sm:$0xff] %v1570
      %2279 = vst [vmem:[%s2049 + $0x710] sm:$0xff] %v1571
      %2280 = vst [vmem:[%s2049 + $0x728] sm:$0xff] %v1572
      %2281 = vst [vmem:[%s2049 + $0x730] sm:$0xff] %v1573
      %2282 = vst [vmem:[%s2049 + $0x748] sm:$0xff] %v1574
      %2283 = vst [vmem:[%s2049 + $0x750] sm:$0xff] %v1575
      %2284 = vst [vmem:[%s2049 + $0x768] sm:$0xff] %v1576
      %2285 = vst [vmem:[%s2049 + $0x770] sm:$0xff] %v1577
      %2286 = vst [vmem:[%s2049 + $0x788] sm:$0xff] %v1578
      %2287 = vst [vmem:[%s2049 + $0x790] sm:$0xff] %v1579
      %2288 = vst [vmem:[%s2049 + $0x7a8] sm:$0xff] %v1580
      %2289 = vst [vmem:[%s2049 + $0x7b0] sm:$0xff] %v1581
      %2290 = vst [vmem:[%s2049 + $0x7c8] sm:$0xff] %v1582
      %2291 = vst [vmem:[%s2049 + $0x7d0] sm:$0xff] %v1583
      %2292 = vst [vmem:[%s2049 + $0x7e8] sm:$0xff] %v1584
      %2293 = vst [vmem:[%s2049 + $0x7f0] sm:$0xff] %v1585
      %2294 = vst [vmem:[%s2049 + $0x808] sm:$0xff] %v1586
      %2295 = vst [vmem:[%s2049 + $0x810] sm:$0xff] %v1587
      %2296 = vst [vmem:[%s2049 + $0x828] sm:$0xff] %v1588
      %2297 = vst [vmem:[%s2049 + $0x830] sm:$0xff] %v1589
      %2298 = vst [vmem:[%s2049 + $0x848] sm:$0xff] %v1590
      %2299 = vst [vmem:[%s2049 + $0x850] sm:$0xff] %v1591
      %2300 = vst [vmem:[%s2049 + $0x868] sm:$0xff] %v1592
      %2301 = vst [vmem:[%s2049 + $0x870] sm:$0xff] %v1593
      %2302 = vst [vmem:[%s2049 + $0x888] sm:$0xff] %v1594
      %2303 = vst [vmem:[%s2049 + $0x890] sm:$0xff] %v1595
      %2304 = vst [vmem:[%s2049 + $0x8a8] sm:$0xff] %v1596
      %2305 = vst [vmem:[%s2049 + $0x8b0] sm:$0xff] %v1597
      %s2306 = scalar_lea.vmem [#allocation2], 7
      %v2307 = vld [vmem:[%s2306] ss:$2 sm:$0xff]
      %s2308 = scalar_lea.vmem [#allocation2], 71
      %v2309 = vld [vmem:[%s2308] ss:$2 sm:$0xff]
      %s2310 = scalar_lea.vmem [#allocation2], 135
      %v2311 = vld [vmem:[%s2310] ss:$2 sm:$0xff]
      %s2312 = scalar_lea.vmem [#allocation2], 199
      %v2313 = vld [vmem:[%s2312] ss:$2 sm:$0xff]
      %s2314 = scalar_lea.vmem [#allocation2], 263
      %v2315 = vld [vmem:[%s2314] ss:$2 sm:$0xff]
      %s2316 = scalar_lea.vmem [#allocation2], 327
      %v2317 = vld [vmem:[%s2316] ss:$2 sm:$0xff]
      %s2318 = scalar_lea.vmem [#allocation2], 391
      %v2319 = vld [vmem:[%s2318] ss:$2 sm:$0xff]
      %s2320 = scalar_lea.vmem [#allocation2], 455
      %v2321 = vld [vmem:[%s2320] ss:$2 sm:$0xff]
      %s2322 = scalar_lea.vmem [#allocation2], 583
      %v2323 = vld [vmem:[%s2322] ss:$2 sm:$0xff]
      %s2324 = scalar_lea.vmem [#allocation2], 647
      %v2325 = vld [vmem:[%s2324] ss:$2 sm:$0xff]
      %s2326 = scalar_lea.vmem [#allocation2], 711
      %v2327 = vld [vmem:[%s2326] ss:$2 sm:$0xff]
      %s2328 = scalar_lea.vmem [#allocation2], 775
      %v2329 = vld [vmem:[%s2328] ss:$2 sm:$0xff]
      %s2330 = scalar_lea.vmem [#allocation2], 839
      %v2331 = vld [vmem:[%s2330] ss:$2 sm:$0xff]
      %s2332 = scalar_lea.vmem [#allocation2], 903
      %v2333 = vld [vmem:[%s2332] ss:$2 sm:$0xff]
      %s2334 = scalar_lea.vmem [#allocation2], 967
      %v2335 = vld [vmem:[%s2334] ss:$2 sm:$0xff]
      %s2336 = scalar_lea.vmem [#allocation2], 1031
      %v2337 = vld [vmem:[%s2336] ss:$2 sm:$0xff]
      %s2338 = scalar_lea.vmem [#allocation2], 1159
      %v2339 = vld [vmem:[%s2338] ss:$2 sm:$0xff]
      %s2340 = scalar_lea.vmem [#allocation2], 1223
      %v2341 = vld [vmem:[%s2340] ss:$2 sm:$0xff]
      %s2342 = scalar_lea.vmem [#allocation2], 1287
      %v2343 = vld [vmem:[%s2342] ss:$2 sm:$0xff]
      %s2344 = scalar_lea.vmem [#allocation2], 1351
      %v2345 = vld [vmem:[%s2344] ss:$2 sm:$0xff]
      %s2346 = scalar_lea.vmem [#allocation2], 1415
      %v2347 = vld [vmem:[%s2346] ss:$2 sm:$0xff]
      %s2348 = scalar_lea.vmem [#allocation2], 1479
      %v2349 = vld [vmem:[%s2348] ss:$2 sm:$0xff]
      %s2350 = scalar_lea.vmem [#allocation2], 1543
      %v2351 = vld [vmem:[%s2350] ss:$2 sm:$0xff]
      %s2352 = scalar_lea.vmem [#allocation2], 1607
      %v2353 = vld [vmem:[%s2352] ss:$2 sm:$0xff]
      %s2354 = scalar_lea.vmem [#allocation2], 1735
      %v2355 = vld [vmem:[%s2354] ss:$2 sm:$0xff]
      %s2356 = scalar_lea.vmem [#allocation2], 1799
      %v2357 = vld [vmem:[%s2356] ss:$2 sm:$0xff]
      %s2358 = scalar_lea.vmem [#allocation2], 1863
      %v2359 = vld [vmem:[%s2358] ss:$2 sm:$0xff]
      %s2360 = scalar_lea.vmem [#allocation2], 1927
      %v2361 = vld [vmem:[%s2360] ss:$2 sm:$0xff]
      %s2362 = scalar_lea.vmem [#allocation2], 1991
      %v2363 = vld [vmem:[%s2362] ss:$2 sm:$0xff]
      %s2364 = scalar_lea.vmem [#allocation2], 2055
      %v2365 = vld [vmem:[%s2364] ss:$2 sm:$0xff]
      %s2366 = scalar_lea.vmem [#allocation2], 2119
      %v2367 = vld [vmem:[%s2366] ss:$2 sm:$0xff]
      %s2368 = scalar_lea.vmem [#allocation2], 2183
      %v2369 = vld [vmem:[%s2368] ss:$2 sm:$0xff]
      %v2370 = vld [vmem:[%s1] sm:$0x1]
      %v2371 = vlaneseq
      %v2372 = vshrl.u32 %v2371, 7
      %v2373 = vsub.s32 0, %v2372
      %v2374 = vrot.slane %v2370, %v2373
      %v2375 = vmul.f32 %v2307, %v2374
      %v2376 = vmul.f32 %v2309, %v2374
      %v2377 = vmul.f32 %v2311, %v2374
      %v2378 = vmul.f32 %v2313, %v2374
      %v2379 = vmul.f32 %v2315, %v2374
      %v2380 = vmul.f32 %v2317, %v2374
      %v2381 = vmul.f32 %v2319, %v2374
      %v2382 = vmul.f32 %v2321, %v2374
      %v2383 = vmul.f32 %v2323, %v2374
      %v2384 = vmul.f32 %v2325, %v2374
      %v2385 = vmul.f32 %v2327, %v2374
      %v2386 = vmul.f32 %v2329, %v2374
      %v2387 = vmul.f32 %v2331, %v2374
      %v2388 = vmul.f32 %v2333, %v2374
      %v2389 = vmul.f32 %v2335, %v2374
      %v2390 = vmul.f32 %v2337, %v2374
      %v2391 = vmul.f32 %v2339, %v2374
      %v2392 = vmul.f32 %v2341, %v2374
      %v2393 = vmul.f32 %v2343, %v2374
      %v2394 = vmul.f32 %v2345, %v2374
      %v2395 = vmul.f32 %v2347, %v2374
      %v2396 = vmul.f32 %v2349, %v2374
      %v2397 = vmul.f32 %v2351, %v2374
      %v2398 = vmul.f32 %v2353, %v2374
      %v2399 = vmul.f32 %v2355, %v2374
      %v2400 = vmul.f32 %v2357, %v2374
      %v2401 = vmul.f32 %v2359, %v2374
      %v2402 = vmul.f32 %v2361, %v2374
      %v2403 = vmul.f32 %v2363, %v2374
      %v2404 = vmul.f32 %v2365, %v2374
      %v2405 = vmul.f32 %v2367, %v2374
      %v2406 = vmul.f32 %v2369, %v2374
      %s2407 = scalar_lea.vmem [#allocation2], 8
      %v2408 = vld [vmem:[%s2407] ss:$2 sm:$0xff]
      %s2409 = scalar_lea.vmem [#allocation2], 72
      %v2410 = vld [vmem:[%s2409] ss:$2 sm:$0xff]
      %s2411 = scalar_lea.vmem [#allocation2], 136
      %v2412 = vld [vmem:[%s2411] ss:$2 sm:$0xff]
      %s2413 = scalar_lea.vmem [#allocation2], 200
      %v2414 = vld [vmem:[%s2413] ss:$2 sm:$0xff]
      %s2415 = scalar_lea.vmem [#allocation2], 264
      %v2416 = vld [vmem:[%s2415] ss:$2 sm:$0xff]
      %s2417 = scalar_lea.vmem [#allocation2], 328
      %v2418 = vld [vmem:[%s2417] ss:$2 sm:$0xff]
      %s2419 = scalar_lea.vmem [#allocation2], 392
      %v2420 = vld [vmem:[%s2419] ss:$2 sm:$0xff]
      %s2421 = scalar_lea.vmem [#allocation2], 456
      %v2422 = vld [vmem:[%s2421] ss:$2 sm:$0xff]
      %s2423 = scalar_lea.vmem [#allocation2], 584
      %v2424 = vld [vmem:[%s2423] ss:$2 sm:$0xff]
      %s2425 = scalar_lea.vmem [#allocation2], 648
      %v2426 = vld [vmem:[%s2425] ss:$2 sm:$0xff]
      %s2427 = scalar_lea.vmem [#allocation2], 712
      %v2428 = vld [vmem:[%s2427] ss:$2 sm:$0xff]
      %s2429 = scalar_lea.vmem [#allocation2], 776
      %v2430 = vld [vmem:[%s2429] ss:$2 sm:$0xff]
      %s2431 = scalar_lea.vmem [#allocation2], 840
      %v2432 = vld [vmem:[%s2431] ss:$2 sm:$0xff]
      %s2433 = scalar_lea.vmem [#allocation2], 904
      %v2434 = vld [vmem:[%s2433] ss:$2 sm:$0xff]
      %s2435 = scalar_lea.vmem [#allocation2], 968
      %v2436 = vld [vmem:[%s2435] ss:$2 sm:$0xff]
      %s2437 = scalar_lea.vmem [#allocation2], 1032
      %v2438 = vld [vmem:[%s2437] ss:$2 sm:$0xff]
      %s2439 = scalar_lea.vmem [#allocation2], 1160
      %v2440 = vld [vmem:[%s2439] ss:$2 sm:$0xff]
      %s2441 = scalar_lea.vmem [#allocation2], 1224
      %v2442 = vld [vmem:[%s2441] ss:$2 sm:$0xff]
      %s2443 = scalar_lea.vmem [#allocation2], 1288
      %v2444 = vld [vmem:[%s2443] ss:$2 sm:$0xff]
      %s2445 = scalar_lea.vmem [#allocation2], 1352
      %v2446 = vld [vmem:[%s2445] ss:$2 sm:$0xff]
      %s2447 = scalar_lea.vmem [#allocation2], 1416
      %v2448 = vld [vmem:[%s2447] ss:$2 sm:$0xff]
      %s2449 = scalar_lea.vmem [#allocation2], 1480
      %v2450 = vld [vmem:[%s2449] ss:$2 sm:$0xff]
      %s2451 = scalar_lea.vmem [#allocation2], 1544
      %v2452 = vld [vmem:[%s2451] ss:$2 sm:$0xff]
      %s2453 = scalar_lea.vmem [#allocation2], 1608
      %v2454 = vld [vmem:[%s2453] ss:$2 sm:$0xff]
      %s2455 = scalar_lea.vmem [#allocation2], 1736
      %v2456 = vld [vmem:[%s2455] ss:$2 sm:$0xff]
      %s2457 = scalar_lea.vmem [#allocation2], 1800
      %v2458 = vld [vmem:[%s2457] ss:$2 sm:$0xff]
      %s2459 = scalar_lea.vmem [#allocation2], 1864
      %v2460 = vld [vmem:[%s2459] ss:$2 sm:$0xff]
      %s2461 = scalar_lea.vmem [#allocation2], 1928
      %v2462 = vld [vmem:[%s2461] ss:$2 sm:$0xff]
      %s2463 = scalar_lea.vmem [#allocation2], 1992
      %v2464 = vld [vmem:[%s2463] ss:$2 sm:$0xff]
      %s2465 = scalar_lea.vmem [#allocation2], 2056
      %v2466 = vld [vmem:[%s2465] ss:$2 sm:$0xff]
      %s2467 = scalar_lea.vmem [#allocation2], 2120
      %v2468 = vld [vmem:[%s2467] ss:$2 sm:$0xff]
      %s2469 = scalar_lea.vmem [#allocation2], 2184
      %v2470 = vld [vmem:[%s2469] ss:$2 sm:$0xff]
      %v2471 = vld [vmem:[%s1 + $0x1] sm:$0x1]
      %v2472 = vlaneseq
      %v2473 = vshrl.u32 %v2472, 7
      %v2474 = vsub.s32 0, %v2473
      %v2475 = vrot.slane %v2471, %v2474
      %v2476 = vmul.f32 %v2408, %v2475
      %v2477 = vmul.f32 %v2410, %v2475
      %v2478 = vmul.f32 %v2412, %v2475
      %v2479 = vmul.f32 %v2414, %v2475
      %v2480 = vmul.f32 %v2416, %v2475
      %v2481 = vmul.f32 %v2418, %v2475
      %v2482 = vmul.f32 %v2420, %v2475
      %v2483 = vmul.f32 %v2422, %v2475
      %v2484 = vmul.f32 %v2424, %v2475
      %v2485 = vmul.f32 %v2426, %v2475
      %v2486 = vmul.f32 %v2428, %v2475
      %v2487 = vmul.f32 %v2430, %v2475
      %v2488 = vmul.f32 %v2432, %v2475
      %v2489 = vmul.f32 %v2434, %v2475
      %v2490 = vmul.f32 %v2436, %v2475
      %v2491 = vmul.f32 %v2438, %v2475
      %v2492 = vmul.f32 %v2440, %v2475
      %v2493 = vmul.f32 %v2442, %v2475
      %v2494 = vmul.f32 %v2444, %v2475
      %v2495 = vmul.f32 %v2446, %v2475
      %v2496 = vmul.f32 %v2448, %v2475
      %v2497 = vmul.f32 %v2450, %v2475
      %v2498 = vmul.f32 %v2452, %v2475
      %v2499 = vmul.f32 %v2454, %v2475
      %v2500 = vmul.f32 %v2456, %v2475
      %v2501 = vmul.f32 %v2458, %v2475
      %v2502 = vmul.f32 %v2460, %v2475
      %v2503 = vmul.f32 %v2462, %v2475
      %v2504 = vmul.f32 %v2464, %v2475
      %v2505 = vmul.f32 %v2466, %v2475
      %v2506 = vmul.f32 %v2468, %v2475
      %v2507 = vmul.f32 %v2470, %v2475
      %v2508 = vadd.f32 %v2375, %v2476
      %v2509 = vadd.f32 %v2376, %v2477
      %v2510 = vadd.f32 %v2377, %v2478
      %v2511 = vadd.f32 %v2378, %v2479
      %v2512 = vadd.f32 %v2379, %v2480
      %v2513 = vadd.f32 %v2380, %v2481
      %v2514 = vadd.f32 %v2381, %v2482
      %v2515 = vadd.f32 %v2382, %v2483
      %v2516 = vadd.f32 %v2383, %v2484
      %v2517 = vadd.f32 %v2384, %v2485
      %v2518 = vadd.f32 %v2385, %v2486
      %v2519 = vadd.f32 %v2386, %v2487
      %v2520 = vadd.f32 %v2387, %v2488
      %v2521 = vadd.f32 %v2388, %v2489
      %v2522 = vadd.f32 %v2389, %v2490
      %v2523 = vadd.f32 %v2390, %v2491
      %v2524 = vadd.f32 %v2391, %v2492
      %v2525 = vadd.f32 %v2392, %v2493
      %v2526 = vadd.f32 %v2393, %v2494
      %v2527 = vadd.f32 %v2394, %v2495
      %v2528 = vadd.f32 %v2395, %v2496
      %v2529 = vadd.f32 %v2396, %v2497
      %v2530 = vadd.f32 %v2397, %v2498
      %v2531 = vadd.f32 %v2398, %v2499
      %v2532 = vadd.f32 %v2399, %v2500
      %v2533 = vadd.f32 %v2400, %v2501
      %v2534 = vadd.f32 %v2401, %v2502
      %v2535 = vadd.f32 %v2402, %v2503
      %v2536 = vadd.f32 %v2403, %v2504
      %v2537 = vadd.f32 %v2404, %v2505
      %v2538 = vadd.f32 %v2405, %v2506
      %v2539 = vadd.f32 %v2406, %v2507
      %s2540 = scalar_lea.vmem [#allocation2], 9
      %v2541 = vld [vmem:[%s2540] ss:$2 sm:$0xff]
      %s2542 = scalar_lea.vmem [#allocation2], 73
      %v2543 = vld [vmem:[%s2542] ss:$2 sm:$0xff]
      %s2544 = scalar_lea.vmem [#allocation2], 137
      %v2545 = vld [vmem:[%s2544] ss:$2 sm:$0xff]
      %s2546 = scalar_lea.vmem [#allocation2], 201
      %v2547 = vld [vmem:[%s2546] ss:$2 sm:$0xff]
      %s2548 = scalar_lea.vmem [#allocation2], 265
      %v2549 = vld [vmem:[%s2548] ss:$2 sm:$0xff]
      %s2550 = scalar_lea.vmem [#allocation2], 329
      %v2551 = vld [vmem:[%s2550] ss:$2 sm:$0xff]
      %s2552 = scalar_lea.vmem [#allocation2], 393
      %v2553 = vld [vmem:[%s2552] ss:$2 sm:$0xff]
      %s2554 = scalar_lea.vmem [#allocation2], 457
      %v2555 = vld [vmem:[%s2554] ss:$2 sm:$0xff]
      %s2556 = scalar_lea.vmem [#allocation2], 585
      %v2557 = vld [vmem:[%s2556] ss:$2 sm:$0xff]
      %s2558 = scalar_lea.vmem [#allocation2], 649
      %v2559 = vld [vmem:[%s2558] ss:$2 sm:$0xff]
      %s2560 = scalar_lea.vmem [#allocation2], 713
      %v2561 = vld [vmem:[%s2560] ss:$2 sm:$0xff]
      %s2562 = scalar_lea.vmem [#allocation2], 777
      %v2563 = vld [vmem:[%s2562] ss:$2 sm:$0xff]
      %s2564 = scalar_lea.vmem [#allocation2], 841
      %v2565 = vld [vmem:[%s2564] ss:$2 sm:$0xff]
      %s2566 = scalar_lea.vmem [#allocation2], 905
      %v2567 = vld [vmem:[%s2566] ss:$2 sm:$0xff]
      %s2568 = scalar_lea.vmem [#allocation2], 969
      %v2569 = vld [vmem:[%s2568] ss:$2 sm:$0xff]
      %s2570 = scalar_lea.vmem [#allocation2], 1033
      %v2571 = vld [vmem:[%s2570] ss:$2 sm:$0xff]
      %s2572 = scalar_lea.vmem [#allocation2], 1161
      %v2573 = vld [vmem:[%s2572] ss:$2 sm:$0xff]
      %s2574 = scalar_lea.vmem [#allocation2], 1225
      %v2575 = vld [vmem:[%s2574] ss:$2 sm:$0xff]
      %s2576 = scalar_lea.vmem [#allocation2], 1289
      %v2577 = vld [vmem:[%s2576] ss:$2 sm:$0xff]
      %s2578 = scalar_lea.vmem [#allocation2], 1353
      %v2579 = vld [vmem:[%s2578] ss:$2 sm:$0xff]
      %s2580 = scalar_lea.vmem [#allocation2], 1417
      %v2581 = vld [vmem:[%s2580] ss:$2 sm:$0xff]
      %s2582 = scalar_lea.vmem [#allocation2], 1481
      %v2583 = vld [vmem:[%s2582] ss:$2 sm:$0xff]
      %s2584 = scalar_lea.vmem [#allocation2], 1545
      %v2585 = vld [vmem:[%s2584] ss:$2 sm:$0xff]
      %s2586 = scalar_lea.vmem [#allocation2], 1609
      %v2587 = vld [vmem:[%s2586] ss:$2 sm:$0xff]
      %s2588 = scalar_lea.vmem [#allocation2], 1737
      %v2589 = vld [vmem:[%s2588] ss:$2 sm:$0xff]
      %s2590 = scalar_lea.vmem [#allocation2], 1801
      %v2591 = vld [vmem:[%s2590] ss:$2 sm:$0xff]
      %s2592 = scalar_lea.vmem [#allocation2], 1865
      %v2593 = vld [vmem:[%s2592] ss:$2 sm:$0xff]
      %s2594 = scalar_lea.vmem [#allocation2], 1929
      %v2595 = vld [vmem:[%s2594] ss:$2 sm:$0xff]
      %s2596 = scalar_lea.vmem [#allocation2], 1993
      %v2597 = vld [vmem:[%s2596] ss:$2 sm:$0xff]
      %s2598 = scalar_lea.vmem [#allocation2], 2057
      %v2599 = vld [vmem:[%s2598] ss:$2 sm:$0xff]
      %s2600 = scalar_lea.vmem [#allocation2], 2121
      %v2601 = vld [vmem:[%s2600] ss:$2 sm:$0xff]
      %s2602 = scalar_lea.vmem [#allocation2], 2185
      %v2603 = vld [vmem:[%s2602] ss:$2 sm:$0xff]
      %v2604 = vld [vmem:[%s1 + $0x2] sm:$0x1]
      %v2605 = vlaneseq
      %v2606 = vshrl.u32 %v2605, 7
      %v2607 = vsub.s32 0, %v2606
      %v2608 = vrot.slane %v2604, %v2607
      %v2609 = vmul.f32 %v2541, %v2608
      %v2610 = vmul.f32 %v2543, %v2608
      %v2611 = vmul.f32 %v2545, %v2608
      %v2612 = vmul.f32 %v2547, %v2608
      %v2613 = vmul.f32 %v2549, %v2608
      %v2614 = vmul.f32 %v2551, %v2608
      %v2615 = vmul.f32 %v2553, %v2608
      %v2616 = vmul.f32 %v2555, %v2608
      %v2617 = vmul.f32 %v2557, %v2608
      %v2618 = vmul.f32 %v2559, %v2608
      %v2619 = vmul.f32 %v2561, %v2608
      %v2620 = vmul.f32 %v2563, %v2608
      %v2621 = vmul.f32 %v2565, %v2608
      %v2622 = vmul.f32 %v2567, %v2608
      %v2623 = vmul.f32 %v2569, %v2608
      %v2624 = vmul.f32 %v2571, %v2608
      %v2625 = vmul.f32 %v2573, %v2608
      %v2626 = vmul.f32 %v2575, %v2608
      %v2627 = vmul.f32 %v2577, %v2608
      %v2628 = vmul.f32 %v2579, %v2608
      %v2629 = vmul.f32 %v2581, %v2608
      %v2630 = vmul.f32 %v2583, %v2608
      %v2631 = vmul.f32 %v2585, %v2608
      %v2632 = vmul.f32 %v2587, %v2608
      %v2633 = vmul.f32 %v2589, %v2608
      %v2634 = vmul.f32 %v2591, %v2608
      %v2635 = vmul.f32 %v2593, %v2608
      %v2636 = vmul.f32 %v2595, %v2608
      %v2637 = vmul.f32 %v2597, %v2608
      %v2638 = vmul.f32 %v2599, %v2608
      %v2639 = vmul.f32 %v2601, %v2608
      %v2640 = vmul.f32 %v2603, %v2608
      %v2641 = vadd.f32 %v2508, %v2609
      %v2642 = vadd.f32 %v2509, %v2610
      %v2643 = vadd.f32 %v2510, %v2611
      %v2644 = vadd.f32 %v2511, %v2612
      %v2645 = vadd.f32 %v2512, %v2613
      %v2646 = vadd.f32 %v2513, %v2614
      %v2647 = vadd.f32 %v2514, %v2615
      %v2648 = vadd.f32 %v2515, %v2616
      %v2649 = vadd.f32 %v2516, %v2617
      %v2650 = vadd.f32 %v2517, %v2618
      %v2651 = vadd.f32 %v2518, %v2619
      %v2652 = vadd.f32 %v2519, %v2620
      %v2653 = vadd.f32 %v2520, %v2621
      %v2654 = vadd.f32 %v2521, %v2622
      %v2655 = vadd.f32 %v2522, %v2623
      %v2656 = vadd.f32 %v2523, %v2624
      %v2657 = vadd.f32 %v2524, %v2625
      %v2658 = vadd.f32 %v2525, %v2626
      %v2659 = vadd.f32 %v2526, %v2627
      %v2660 = vadd.f32 %v2527, %v2628
      %v2661 = vadd.f32 %v2528, %v2629
      %v2662 = vadd.f32 %v2529, %v2630
      %v2663 = vadd.f32 %v2530, %v2631
      %v2664 = vadd.f32 %v2531, %v2632
      %v2665 = vadd.f32 %v2532, %v2633
      %v2666 = vadd.f32 %v2533, %v2634
      %v2667 = vadd.f32 %v2534, %v2635
      %v2668 = vadd.f32 %v2535, %v2636
      %v2669 = vadd.f32 %v2536, %v2637
      %v2670 = vadd.f32 %v2537, %v2638
      %v2671 = vadd.f32 %v2538, %v2639
      %v2672 = vadd.f32 %v2539, %v2640
      %s2673 = scalar_lea.vmem %s1759, 7 [#allocation2]
      %v2674 = vld [vmem:[%s2673] ss:$2 sm:$0xff]
      %s2675 = scalar_lea.vmem %s1759, 71 [#allocation2]
      %v2676 = vld [vmem:[%s2675] ss:$2 sm:$0xff]
      %s2677 = scalar_lea.vmem %s1759, 135 [#allocation2]
      %v2678 = vld [vmem:[%s2677] ss:$2 sm:$0xff]
      %s2679 = scalar_lea.vmem %s1759, 199 [#allocation2]
      %v2680 = vld [vmem:[%s2679] ss:$2 sm:$0xff]
      %s2681 = scalar_lea.vmem %s1759, 263 [#allocation2]
      %v2682 = vld [vmem:[%s2681] ss:$2 sm:$0xff]
      %s2683 = scalar_lea.vmem %s1759, 327 [#allocation2]
      %v2684 = vld [vmem:[%s2683] ss:$2 sm:$0xff]
      %s2685 = scalar_lea.vmem %s1759, 391 [#allocation2]
      %v2686 = vld [vmem:[%s2685] ss:$2 sm:$0xff]
      %s2687 = scalar_lea.vmem %s1759, 455 [#allocation2]
      %v2688 = vld [vmem:[%s2687] ss:$2 sm:$0xff]
      %s2689 = scalar_lea.vmem %s1759, 583 [#allocation2]
      %v2690 = vld [vmem:[%s2689] ss:$2 sm:$0xff]
      %s2691 = scalar_lea.vmem %s1759, 647 [#allocation2]
      %v2692 = vld [vmem:[%s2691] ss:$2 sm:$0xff]
      %s2693 = scalar_lea.vmem %s1759, 711 [#allocation2]
      %v2694 = vld [vmem:[%s2693] ss:$2 sm:$0xff]
      %s2695 = scalar_lea.vmem %s1759, 775 [#allocation2]
      %v2696 = vld [vmem:[%s2695] ss:$2 sm:$0xff]
      %s2697 = scalar_lea.vmem %s1759, 839 [#allocation2]
      %v2698 = vld [vmem:[%s2697] ss:$2 sm:$0xff]
      %s2699 = scalar_lea.vmem %s1759, 903 [#allocation2]
      %v2700 = vld [vmem:[%s2699] ss:$2 sm:$0xff]
      %s2701 = scalar_lea.vmem %s1759, 967 [#allocation2]
      %v2702 = vld [vmem:[%s2701] ss:$2 sm:$0xff]
      %s2703 = scalar_lea.vmem %s1759, 1031 [#allocation2]
      %v2704 = vld [vmem:[%s2703] ss:$2 sm:$0xff]
      %s2705 = scalar_lea.vmem %s1759, 1159 [#allocation2]
      %v2706 = vld [vmem:[%s2705] ss:$2 sm:$0xff]
      %s2707 = scalar_lea.vmem %s1759, 1223 [#allocation2]
      %v2708 = vld [vmem:[%s2707] ss:$2 sm:$0xff]
      %s2709 = scalar_lea.vmem %s1759, 1287 [#allocation2]
      %v2710 = vld [vmem:[%s2709] ss:$2 sm:$0xff]
      %s2711 = scalar_lea.vmem %s1759, 1351 [#allocation2]
      %v2712 = vld [vmem:[%s2711] ss:$2 sm:$0xff]
      %s2713 = scalar_lea.vmem %s1759, 1415 [#allocation2]
      %v2714 = vld [vmem:[%s2713] ss:$2 sm:$0xff]
      %s2715 = scalar_lea.vmem %s1759, 1479 [#allocation2]
      %v2716 = vld [vmem:[%s2715] ss:$2 sm:$0xff]
      %s2717 = scalar_lea.vmem %s1759, 1543 [#allocation2]
      %v2718 = vld [vmem:[%s2717] ss:$2 sm:$0xff]
      %s2719 = scalar_lea.vmem %s1759, 1607 [#allocation2]
      %v2720 = vld [vmem:[%s2719] ss:$2 sm:$0xff]
      %s2721 = scalar_lea.vmem %s1759, 1735 [#allocation2]
      %v2722 = vld [vmem:[%s2721] ss:$2 sm:$0xff]
      %s2723 = scalar_lea.vmem %s1759, 1799 [#allocation2]
      %v2724 = vld [vmem:[%s2723] ss:$2 sm:$0xff]
      %s2725 = scalar_lea.vmem %s1759, 1863 [#allocation2]
      %v2726 = vld [vmem:[%s2725] ss:$2 sm:$0xff]
      %s2727 = scalar_lea.vmem %s1759, 1927 [#allocation2]
      %v2728 = vld [vmem:[%s2727] ss:$2 sm:$0xff]
      %s2729 = scalar_lea.vmem %s1759, 1991 [#allocation2]
      %v2730 = vld [vmem:[%s2729] ss:$2 sm:$0xff]
      %s2731 = scalar_lea.vmem %s1759, 2055 [#allocation2]
      %v2732 = vld [vmem:[%s2731] ss:$2 sm:$0xff]
      %s2733 = scalar_lea.vmem %s1759, 2119 [#allocation2]
      %v2734 = vld [vmem:[%s2733] ss:$2 sm:$0xff]
      %s2735 = scalar_lea.vmem %s1759, 2183 [#allocation2]
      %v2736 = vld [vmem:[%s2735] ss:$2 sm:$0xff]
      %v2737 = vld [vmem:[%s1 + $0x3] sm:$0x1]
      %v2738 = vlaneseq
      %v2739 = vshrl.u32 %v2738, 7
      %v2740 = vsub.s32 0, %v2739
      %v2741 = vrot.slane %v2737, %v2740
      %v2742 = vmul.f32 %v2674, %v2741
      %v2743 = vmul.f32 %v2676, %v2741
      %v2744 = vmul.f32 %v2678, %v2741
      %v2745 = vmul.f32 %v2680, %v2741
      %v2746 = vmul.f32 %v2682, %v2741
      %v2747 = vmul.f32 %v2684, %v2741
      %v2748 = vmul.f32 %v2686, %v2741
      %v2749 = vmul.f32 %v2688, %v2741
      %v2750 = vmul.f32 %v2690, %v2741
      %v2751 = vmul.f32 %v2692, %v2741
      %v2752 = vmul.f32 %v2694, %v2741
      %v2753 = vmul.f32 %v2696, %v2741
      %v2754 = vmul.f32 %v2698, %v2741
      %v2755 = vmul.f32 %v2700, %v2741
      %v2756 = vmul.f32 %v2702, %v2741
      %v2757 = vmul.f32 %v2704, %v2741
      %v2758 = vmul.f32 %v2706, %v2741
      %v2759 = vmul.f32 %v2708, %v2741
      %v2760 = vmul.f32 %v2710, %v2741
      %v2761 = vmul.f32 %v2712, %v2741
      %v2762 = vmul.f32 %v2714, %v2741
      %v2763 = vmul.f32 %v2716, %v2741
      %v2764 = vmul.f32 %v2718, %v2741
      %v2765 = vmul.f32 %v2720, %v2741
      %v2766 = vmul.f32 %v2722, %v2741
      %v2767 = vmul.f32 %v2724, %v2741
      %v2768 = vmul.f32 %v2726, %v2741
      %v2769 = vmul.f32 %v2728, %v2741
      %v2770 = vmul.f32 %v2730, %v2741
      %v2771 = vmul.f32 %v2732, %v2741
      %v2772 = vmul.f32 %v2734, %v2741
      %v2773 = vmul.f32 %v2736, %v2741
      %v2774 = vadd.f32 %v2641, %v2742
      %v2775 = vadd.f32 %v2642, %v2743
      %v2776 = vadd.f32 %v2643, %v2744
      %v2777 = vadd.f32 %v2644, %v2745
      %v2778 = vadd.f32 %v2645, %v2746
      %v2779 = vadd.f32 %v2646, %v2747
      %v2780 = vadd.f32 %v2647, %v2748
      %v2781 = vadd.f32 %v2648, %v2749
      %v2782 = vadd.f32 %v2649, %v2750
      %v2783 = vadd.f32 %v2650, %v2751
      %v2784 = vadd.f32 %v2651, %v2752
      %v2785 = vadd.f32 %v2652, %v2753
      %v2786 = vadd.f32 %v2653, %v2754
      %v2787 = vadd.f32 %v2654, %v2755
      %v2788 = vadd.f32 %v2655, %v2756
      %v2789 = vadd.f32 %v2656, %v2757
      %v2790 = vadd.f32 %v2657, %v2758
      %v2791 = vadd.f32 %v2658, %v2759
      %v2792 = vadd.f32 %v2659, %v2760
      %v2793 = vadd.f32 %v2660, %v2761
      %v2794 = vadd.f32 %v2661, %v2762
      %v2795 = vadd.f32 %v2662, %v2763
      %v2796 = vadd.f32 %v2663, %v2764
      %v2797 = vadd.f32 %v2664, %v2765
      %v2798 = vadd.f32 %v2665, %v2766
      %v2799 = vadd.f32 %v2666, %v2767
      %v2800 = vadd.f32 %v2667, %v2768
      %v2801 = vadd.f32 %v2668, %v2769
      %v2802 = vadd.f32 %v2669, %v2770
      %v2803 = vadd.f32 %v2670, %v2771
      %v2804 = vadd.f32 %v2671, %v2772
      %v2805 = vadd.f32 %v2672, %v2773
      %s2806 = scalar_lea.vmem %s1759, 8 [#allocation2]
      %v2807 = vld [vmem:[%s2806] ss:$2 sm:$0xff]
      %s2808 = scalar_lea.vmem %s1759, 72 [#allocation2]
      %v2809 = vld [vmem:[%s2808] ss:$2 sm:$0xff]
      %s2810 = scalar_lea.vmem %s1759, 136 [#allocation2]
      %v2811 = vld [vmem:[%s2810] ss:$2 sm:$0xff]
      %s2812 = scalar_lea.vmem %s1759, 200 [#allocation2]
      %v2813 = vld [vmem:[%s2812] ss:$2 sm:$0xff]
      %s2814 = scalar_lea.vmem %s1759, 264 [#allocation2]
      %v2815 = vld [vmem:[%s2814] ss:$2 sm:$0xff]
      %s2816 = scalar_lea.vmem %s1759, 328 [#allocation2]
      %v2817 = vld [vmem:[%s2816] ss:$2 sm:$0xff]
      %s2818 = scalar_lea.vmem %s1759, 392 [#allocation2]
      %v2819 = vld [vmem:[%s2818] ss:$2 sm:$0xff]
      %s2820 = scalar_lea.vmem %s1759, 456 [#allocation2]
      %v2821 = vld [vmem:[%s2820] ss:$2 sm:$0xff]
      %s2822 = scalar_lea.vmem %s1759, 584 [#allocation2]
      %v2823 = vld [vmem:[%s2822] ss:$2 sm:$0xff]
      %s2824 = scalar_lea.vmem %s1759, 648 [#allocation2]
      %v2825 = vld [vmem:[%s2824] ss:$2 sm:$0xff]
      %s2826 = scalar_lea.vmem %s1759, 712 [#allocation2]
      %v2827 = vld [vmem:[%s2826] ss:$2 sm:$0xff]
      %s2828 = scalar_lea.vmem %s1759, 776 [#allocation2]
      %v2829 = vld [vmem:[%s2828] ss:$2 sm:$0xff]
      %s2830 = scalar_lea.vmem %s1759, 840 [#allocation2]
      %v2831 = vld [vmem:[%s2830] ss:$2 sm:$0xff]
      %s2832 = scalar_lea.vmem %s1759, 904 [#allocation2]
      %v2833 = vld [vmem:[%s2832] ss:$2 sm:$0xff]
      %s2834 = scalar_lea.vmem %s1759, 968 [#allocation2]
      %v2835 = vld [vmem:[%s2834] ss:$2 sm:$0xff]
      %s2836 = scalar_lea.vmem %s1759, 1032 [#allocation2]
      %v2837 = vld [vmem:[%s2836] ss:$2 sm:$0xff]
      %s2838 = scalar_lea.vmem %s1759, 1160 [#allocation2]
      %v2839 = vld [vmem:[%s2838] ss:$2 sm:$0xff]
      %s2840 = scalar_lea.vmem %s1759, 1224 [#allocation2]
      %v2841 = vld [vmem:[%s2840] ss:$2 sm:$0xff]
      %s2842 = scalar_lea.vmem %s1759, 1288 [#allocation2]
      %v2843 = vld [vmem:[%s2842] ss:$2 sm:$0xff]
      %s2844 = scalar_lea.vmem %s1759, 1352 [#allocation2]
      %v2845 = vld [vmem:[%s2844] ss:$2 sm:$0xff]
      %s2846 = scalar_lea.vmem %s1759, 1416 [#allocation2]
      %v2847 = vld [vmem:[%s2846] ss:$2 sm:$0xff]
      %s2848 = scalar_lea.vmem %s1759, 1480 [#allocation2]
      %v2849 = vld [vmem:[%s2848] ss:$2 sm:$0xff]
      %s2850 = scalar_lea.vmem %s1759, 1544 [#allocation2]
      %v2851 = vld [vmem:[%s2850] ss:$2 sm:$0xff]
      %s2852 = scalar_lea.vmem %s1759, 1608 [#allocation2]
      %v2853 = vld [vmem:[%s2852] ss:$2 sm:$0xff]
      %s2854 = scalar_lea.vmem %s1759, 1736 [#allocation2]
      %v2855 = vld [vmem:[%s2854] ss:$2 sm:$0xff]
      %s2856 = scalar_lea.vmem %s1759, 1800 [#allocation2]
      %v2857 = vld [vmem:[%s2856] ss:$2 sm:$0xff]
      %s2858 = scalar_lea.vmem %s1759, 1864 [#allocation2]
      %v2859 = vld [vmem:[%s2858] ss:$2 sm:$0xff]
      %s2860 = scalar_lea.vmem %s1759, 1928 [#allocation2]
      %v2861 = vld [vmem:[%s2860] ss:$2 sm:$0xff]
      %s2862 = scalar_lea.vmem %s1759, 1992 [#allocation2]
      %v2863 = vld [vmem:[%s2862] ss:$2 sm:$0xff]
      %s2864 = scalar_lea.vmem %s1759, 2056 [#allocation2]
      %v2865 = vld [vmem:[%s2864] ss:$2 sm:$0xff]
      %s2866 = scalar_lea.vmem %s1759, 2120 [#allocation2]
      %v2867 = vld [vmem:[%s2866] ss:$2 sm:$0xff]
      %s2868 = scalar_lea.vmem %s1759, 2184 [#allocation2]
      %v2869 = vld [vmem:[%s2868] ss:$2 sm:$0xff]
      %v2870 = vld [vmem:[%s1 + $0x4] sm:$0x1]
      %v2871 = vlaneseq
      %v2872 = vshrl.u32 %v2871, 7
      %v2873 = vsub.s32 0, %v2872
      %v2874 = vrot.slane %v2870, %v2873
      %v2875 = vmul.f32 %v2807, %v2874
      %v2876 = vmul.f32 %v2809, %v2874
      %v2877 = vmul.f32 %v2811, %v2874
      %v2878 = vmul.f32 %v2813, %v2874
      %v2879 = vmul.f32 %v2815, %v2874
      %v2880 = vmul.f32 %v2817, %v2874
      %v2881 = vmul.f32 %v2819, %v2874
      %v2882 = vmul.f32 %v2821, %v2874
      %v2883 = vmul.f32 %v2823, %v2874
      %v2884 = vmul.f32 %v2825, %v2874
      %v2885 = vmul.f32 %v2827, %v2874
      %v2886 = vmul.f32 %v2829, %v2874
      %v2887 = vmul.f32 %v2831, %v2874
      %v2888 = vmul.f32 %v2833, %v2874
      %v2889 = vmul.f32 %v2835, %v2874
      %v2890 = vmul.f32 %v2837, %v2874
      %v2891 = vmul.f32 %v2839, %v2874
      %v2892 = vmul.f32 %v2841, %v2874
      %v2893 = vmul.f32 %v2843, %v2874
      %v2894 = vmul.f32 %v2845, %v2874
      %v2895 = vmul.f32 %v2847, %v2874
      %v2896 = vmul.f32 %v2849, %v2874
      %v2897 = vmul.f32 %v2851, %v2874
      %v2898 = vmul.f32 %v2853, %v2874
      %v2899 = vmul.f32 %v2855, %v2874
      %v2900 = vmul.f32 %v2857, %v2874
      %v2901 = vmul.f32 %v2859, %v2874
      %v2902 = vmul.f32 %v2861, %v2874
      %v2903 = vmul.f32 %v2863, %v2874
      %v2904 = vmul.f32 %v2865, %v2874
      %v2905 = vmul.f32 %v2867, %v2874
      %v2906 = vmul.f32 %v2869, %v2874
      %v2907 = vadd.f32 %v2774, %v2875
      %v2908 = vadd.f32 %v2775, %v2876
      %v2909 = vadd.f32 %v2776, %v2877
      %v2910 = vadd.f32 %v2777, %v2878
      %v2911 = vadd.f32 %v2778, %v2879
      %v2912 = vadd.f32 %v2779, %v2880
      %v2913 = vadd.f32 %v2780, %v2881
      %v2914 = vadd.f32 %v2781, %v2882
      %v2915 = vadd.f32 %v2782, %v2883
      %v2916 = vadd.f32 %v2783, %v2884
      %v2917 = vadd.f32 %v2784, %v2885
      %v2918 = vadd.f32 %v2785, %v2886
      %v2919 = vadd.f32 %v2786, %v2887
      %v2920 = vadd.f32 %v2787, %v2888
      %v2921 = vadd.f32 %v2788, %v2889
      %v2922 = vadd.f32 %v2789, %v2890
      %v2923 = vadd.f32 %v2790, %v2891
      %v2924 = vadd.f32 %v2791, %v2892
      %v2925 = vadd.f32 %v2792, %v2893
      %v2926 = vadd.f32 %v2793, %v2894
      %v2927 = vadd.f32 %v2794, %v2895
      %v2928 = vadd.f32 %v2795, %v2896
      %v2929 = vadd.f32 %v2796, %v2897
      %v2930 = vadd.f32 %v2797, %v2898
      %v2931 = vadd.f32 %v2798, %v2899
      %v2932 = vadd.f32 %v2799, %v2900
      %v2933 = vadd.f32 %v2800, %v2901
      %v2934 = vadd.f32 %v2801, %v2902
      %v2935 = vadd.f32 %v2802, %v2903
      %v2936 = vadd.f32 %v2803, %v2904
      %v2937 = vadd.f32 %v2804, %v2905
      %v2938 = vadd.f32 %v2805, %v2906
      %s2939 = scalar_lea.vmem %s1759, 9 [#allocation2]
      %v2940 = vld [vmem:[%s2939] ss:$2 sm:$0xff]
      %s2941 = scalar_lea.vmem %s1759, 73 [#allocation2]
      %v2942 = vld [vmem:[%s2941] ss:$2 sm:$0xff]
      %s2943 = scalar_lea.vmem %s1759, 137 [#allocation2]
      %v2944 = vld [vmem:[%s2943] ss:$2 sm:$0xff]
      %s2945 = scalar_lea.vmem %s1759, 201 [#allocation2]
      %v2946 = vld [vmem:[%s2945] ss:$2 sm:$0xff]
      %s2947 = scalar_lea.vmem %s1759, 265 [#allocation2]
      %v2948 = vld [vmem:[%s2947] ss:$2 sm:$0xff]
      %s2949 = scalar_lea.vmem %s1759, 329 [#allocation2]
      %v2950 = vld [vmem:[%s2949] ss:$2 sm:$0xff]
      %s2951 = scalar_lea.vmem %s1759, 393 [#allocation2]
      %v2952 = vld [vmem:[%s2951] ss:$2 sm:$0xff]
      %s2953 = scalar_lea.vmem %s1759, 457 [#allocation2]
      %v2954 = vld [vmem:[%s2953] ss:$2 sm:$0xff]
      %s2955 = scalar_lea.vmem %s1759, 585 [#allocation2]
      %v2956 = vld [vmem:[%s2955] ss:$2 sm:$0xff]
      %s2957 = scalar_lea.vmem %s1759, 649 [#allocation2]
      %v2958 = vld [vmem:[%s2957] ss:$2 sm:$0xff]
      %s2959 = scalar_lea.vmem %s1759, 713 [#allocation2]
      %v2960 = vld [vmem:[%s2959] ss:$2 sm:$0xff]
      %s2961 = scalar_lea.vmem %s1759, 777 [#allocation2]
      %v2962 = vld [vmem:[%s2961] ss:$2 sm:$0xff]
      %s2963 = scalar_lea.vmem %s1759, 841 [#allocation2]
      %v2964 = vld [vmem:[%s2963] ss:$2 sm:$0xff]
      %s2965 = scalar_lea.vmem %s1759, 905 [#allocation2]
      %v2966 = vld [vmem:[%s2965] ss:$2 sm:$0xff]
      %s2967 = scalar_lea.vmem %s1759, 969 [#allocation2]
      %v2968 = vld [vmem:[%s2967] ss:$2 sm:$0xff]
      %s2969 = scalar_lea.vmem %s1759, 1033 [#allocation2]
      %v2970 = vld [vmem:[%s2969] ss:$2 sm:$0xff]
      %s2971 = scalar_lea.vmem %s1759, 1161 [#allocation2]
      %v2972 = vld [vmem:[%s2971] ss:$2 sm:$0xff]
      %s2973 = scalar_lea.vmem %s1759, 1225 [#allocation2]
      %v2974 = vld [vmem:[%s2973] ss:$2 sm:$0xff]
      %s2975 = scalar_lea.vmem %s1759, 1289 [#allocation2]
      %v2976 = vld [vmem:[%s2975] ss:$2 sm:$0xff]
      %s2977 = scalar_lea.vmem %s1759, 1353 [#allocation2]
      %v2978 = vld [vmem:[%s2977] ss:$2 sm:$0xff]
      %s2979 = scalar_lea.vmem %s1759, 1417 [#allocation2]
      %v2980 = vld [vmem:[%s2979] ss:$2 sm:$0xff]
      %s2981 = scalar_lea.vmem %s1759, 1481 [#allocation2]
      %v2982 = vld [vmem:[%s2981] ss:$2 sm:$0xff]
      %s2983 = scalar_lea.vmem %s1759, 1545 [#allocation2]
      %v2984 = vld [vmem:[%s2983] ss:$2 sm:$0xff]
      %s2985 = scalar_lea.vmem %s1759, 1609 [#allocation2]
      %v2986 = vld [vmem:[%s2985] ss:$2 sm:$0xff]
      %s2987 = scalar_lea.vmem %s1759, 1737 [#allocation2]
      %v2988 = vld [vmem:[%s2987] ss:$2 sm:$0xff]
      %s2989 = scalar_lea.vmem %s1759, 1801 [#allocation2]
      %v2990 = vld [vmem:[%s2989] ss:$2 sm:$0xff]
      %s2991 = scalar_lea.vmem %s1759, 1865 [#allocation2]
      %v2992 = vld [vmem:[%s2991] ss:$2 sm:$0xff]
      %s2993 = scalar_lea.vmem %s1759, 1929 [#allocation2]
      %v2994 = vld [vmem:[%s2993] ss:$2 sm:$0xff]
      %s2995 = scalar_lea.vmem %s1759, 1993 [#allocation2]
      %v2996 = vld [vmem:[%s2995] ss:$2 sm:$0xff]
      %s2997 = scalar_lea.vmem %s1759, 2057 [#allocation2]
      %v2998 = vld [vmem:[%s2997] ss:$2 sm:$0xff]
      %s2999 = scalar_lea.vmem %s1759, 2121 [#allocation2]
      %v3000 = vld [vmem:[%s2999] ss:$2 sm:$0xff]
      %s3001 = scalar_lea.vmem %s1759, 2185 [#allocation2]
      %v3002 = vld [vmem:[%s3001] ss:$2 sm:$0xff]
      %v3003 = vld [vmem:[%s1 + $0x5] sm:$0x1]
      %v3004 = vlaneseq
      %v3005 = vshrl.u32 %v3004, 7
      %v3006 = vsub.s32 0, %v3005
      %v3007 = vrot.slane %v3003, %v3006
      %v3008 = vmul.f32 %v2940, %v3007
      %v3009 = vmul.f32 %v2942, %v3007
      %v3010 = vmul.f32 %v2944, %v3007
      %v3011 = vmul.f32 %v2946, %v3007
      %v3012 = vmul.f32 %v2948, %v3007
      %v3013 = vmul.f32 %v2950, %v3007
      %v3014 = vmul.f32 %v2952, %v3007
      %v3015 = vmul.f32 %v2954, %v3007
      %v3016 = vmul.f32 %v2956, %v3007
      %v3017 = vmul.f32 %v2958, %v3007
      %v3018 = vmul.f32 %v2960, %v3007
      %v3019 = vmul.f32 %v2962, %v3007
      %v3020 = vmul.f32 %v2964, %v3007
      %v3021 = vmul.f32 %v2966, %v3007
      %v3022 = vmul.f32 %v2968, %v3007
      %v3023 = vmul.f32 %v2970, %v3007
      %v3024 = vmul.f32 %v2972, %v3007
      %v3025 = vmul.f32 %v2974, %v3007
      %v3026 = vmul.f32 %v2976, %v3007
      %v3027 = vmul.f32 %v2978, %v3007
      %v3028 = vmul.f32 %v2980, %v3007
      %v3029 = vmul.f32 %v2982, %v3007
      %v3030 = vmul.f32 %v2984, %v3007
      %v3031 = vmul.f32 %v2986, %v3007
      %v3032 = vmul.f32 %v2988, %v3007
      %v3033 = vmul.f32 %v2990, %v3007
      %v3034 = vmul.f32 %v2992, %v3007
      %v3035 = vmul.f32 %v2994, %v3007
      %v3036 = vmul.f32 %v2996, %v3007
      %v3037 = vmul.f32 %v2998, %v3007
      %v3038 = vmul.f32 %v3000, %v3007
      %v3039 = vmul.f32 %v3002, %v3007
      %v3040 = vadd.f32 %v2907, %v3008
      %v3041 = vadd.f32 %v2908, %v3009
      %v3042 = vadd.f32 %v2909, %v3010
      %v3043 = vadd.f32 %v2910, %v3011
      %v3044 = vadd.f32 %v2911, %v3012
      %v3045 = vadd.f32 %v2912, %v3013
      %v3046 = vadd.f32 %v2913, %v3014
      %v3047 = vadd.f32 %v2914, %v3015
      %v3048 = vadd.f32 %v2915, %v3016
      %v3049 = vadd.f32 %v2916, %v3017
      %v3050 = vadd.f32 %v2917, %v3018
      %v3051 = vadd.f32 %v2918, %v3019
      %v3052 = vadd.f32 %v2919, %v3020
      %v3053 = vadd.f32 %v2920, %v3021
      %v3054 = vadd.f32 %v2921, %v3022
      %v3055 = vadd.f32 %v2922, %v3023
      %v3056 = vadd.f32 %v2923, %v3024
      %v3057 = vadd.f32 %v2924, %v3025
      %v3058 = vadd.f32 %v2925, %v3026
      %v3059 = vadd.f32 %v2926, %v3027
      %v3060 = vadd.f32 %v2927, %v3028
      %v3061 = vadd.f32 %v2928, %v3029
      %v3062 = vadd.f32 %v2929, %v3030
      %v3063 = vadd.f32 %v2930, %v3031
      %v3064 = vadd.f32 %v2931, %v3032
      %v3065 = vadd.f32 %v2932, %v3033
      %v3066 = vadd.f32 %v2933, %v3034
      %v3067 = vadd.f32 %v2934, %v3035
      %v3068 = vadd.f32 %v2935, %v3036
      %v3069 = vadd.f32 %v2936, %v3037
      %v3070 = vadd.f32 %v2937, %v3038
      %v3071 = vadd.f32 %v2938, %v3039
      %s3072 = scalar_lea.vmem [#allocation2], 64
      %s3073 = scalar_lea.vmem %s3072, 7 [#allocation2]
      %v3074 = vld [vmem:[%s3073] ss:$2 sm:$0xff]
      %s3075 = scalar_lea.vmem %s3072, 71 [#allocation2]
      %v3076 = vld [vmem:[%s3075] ss:$2 sm:$0xff]
      %s3077 = scalar_lea.vmem %s3072, 135 [#allocation2]
      %v3078 = vld [vmem:[%s3077] ss:$2 sm:$0xff]
      %s3079 = scalar_lea.vmem %s3072, 199 [#allocation2]
      %v3080 = vld [vmem:[%s3079] ss:$2 sm:$0xff]
      %s3081 = scalar_lea.vmem %s3072, 263 [#allocation2]
      %v3082 = vld [vmem:[%s3081] ss:$2 sm:$0xff]
      %s3083 = scalar_lea.vmem %s3072, 327 [#allocation2]
      %v3084 = vld [vmem:[%s3083] ss:$2 sm:$0xff]
      %s3085 = scalar_lea.vmem %s3072, 391 [#allocation2]
      %v3086 = vld [vmem:[%s3085] ss:$2 sm:$0xff]
      %s3087 = scalar_lea.vmem %s3072, 455 [#allocation2]
      %v3088 = vld [vmem:[%s3087] ss:$2 sm:$0xff]
      %s3089 = scalar_lea.vmem %s3072, 583 [#allocation2]
      %v3090 = vld [vmem:[%s3089] ss:$2 sm:$0xff]
      %s3091 = scalar_lea.vmem %s3072, 647 [#allocation2]
      %v3092 = vld [vmem:[%s3091] ss:$2 sm:$0xff]
      %s3093 = scalar_lea.vmem %s3072, 711 [#allocation2]
      %v3094 = vld [vmem:[%s3093] ss:$2 sm:$0xff]
      %s3095 = scalar_lea.vmem %s3072, 775 [#allocation2]
      %v3096 = vld [vmem:[%s3095] ss:$2 sm:$0xff]
      %s3097 = scalar_lea.vmem %s3072, 839 [#allocation2]
      %v3098 = vld [vmem:[%s3097] ss:$2 sm:$0xff]
      %s3099 = scalar_lea.vmem %s3072, 903 [#allocation2]
      %v3100 = vld [vmem:[%s3099] ss:$2 sm:$0xff]
      %s3101 = scalar_lea.vmem %s3072, 967 [#allocation2]
      %v3102 = vld [vmem:[%s3101] ss:$2 sm:$0xff]
      %s3103 = scalar_lea.vmem %s3072, 1031 [#allocation2]
      %v3104 = vld [vmem:[%s3103] ss:$2 sm:$0xff]
      %s3105 = scalar_lea.vmem %s3072, 1159 [#allocation2]
      %v3106 = vld [vmem:[%s3105] ss:$2 sm:$0xff]
      %s3107 = scalar_lea.vmem %s3072, 1223 [#allocation2]
      %v3108 = vld [vmem:[%s3107] ss:$2 sm:$0xff]
      %s3109 = scalar_lea.vmem %s3072, 1287 [#allocation2]
      %v3110 = vld [vmem:[%s3109] ss:$2 sm:$0xff]
      %s3111 = scalar_lea.vmem %s3072, 1351 [#allocation2]
      %v3112 = vld [vmem:[%s3111] ss:$2 sm:$0xff]
      %s3113 = scalar_lea.vmem %s3072, 1415 [#allocation2]
      %v3114 = vld [vmem:[%s3113] ss:$2 sm:$0xff]
      %s3115 = scalar_lea.vmem %s3072, 1479 [#allocation2]
      %v3116 = vld [vmem:[%s3115] ss:$2 sm:$0xff]
      %s3117 = scalar_lea.vmem %s3072, 1543 [#allocation2]
      %v3118 = vld [vmem:[%s3117] ss:$2 sm:$0xff]
      %s3119 = scalar_lea.vmem %s3072, 1607 [#allocation2]
      %v3120 = vld [vmem:[%s3119] ss:$2 sm:$0xff]
      %s3121 = scalar_lea.vmem %s3072, 1735 [#allocation2]
      %v3122 = vld [vmem:[%s3121] ss:$2 sm:$0xff]
      %s3123 = scalar_lea.vmem %s3072, 1799 [#allocation2]
      %v3124 = vld [vmem:[%s3123] ss:$2 sm:$0xff]
      %s3125 = scalar_lea.vmem %s3072, 1863 [#allocation2]
      %v3126 = vld [vmem:[%s3125] ss:$2 sm:$0xff]
      %s3127 = scalar_lea.vmem %s3072, 1927 [#allocation2]
      %v3128 = vld [vmem:[%s3127] ss:$2 sm:$0xff]
      %s3129 = scalar_lea.vmem %s3072, 1991 [#allocation2]
      %v3130 = vld [vmem:[%s3129] ss:$2 sm:$0xff]
      %s3131 = scalar_lea.vmem %s3072, 2055 [#allocation2]
      %v3132 = vld [vmem:[%s3131] ss:$2 sm:$0xff]
      %s3133 = scalar_lea.vmem %s3072, 2119 [#allocation2]
      %v3134 = vld [vmem:[%s3133] ss:$2 sm:$0xff]
      %s3135 = scalar_lea.vmem %s3072, 2183 [#allocation2]
      %v3136 = vld [vmem:[%s3135] ss:$2 sm:$0xff]
      %v3137 = vld [vmem:[%s1 + $0x6] sm:$0x1]
      %v3138 = vlaneseq
      %v3139 = vshrl.u32 %v3138, 7
      %v3140 = vsub.s32 0, %v3139
      %v3141 = vrot.slane %v3137, %v3140
      %v3142 = vmul.f32 %v3074, %v3141
      %v3143 = vmul.f32 %v3076, %v3141
      %v3144 = vmul.f32 %v3078, %v3141
      %v3145 = vmul.f32 %v3080, %v3141
      %v3146 = vmul.f32 %v3082, %v3141
      %v3147 = vmul.f32 %v3084, %v3141
      %v3148 = vmul.f32 %v3086, %v3141
      %v3149 = vmul.f32 %v3088, %v3141
      %v3150 = vmul.f32 %v3090, %v3141
      %v3151 = vmul.f32 %v3092, %v3141
      %v3152 = vmul.f32 %v3094, %v3141
      %v3153 = vmul.f32 %v3096, %v3141
      %v3154 = vmul.f32 %v3098, %v3141
      %v3155 = vmul.f32 %v3100, %v3141
      %v3156 = vmul.f32 %v3102, %v3141
      %v3157 = vmul.f32 %v3104, %v3141
      %v3158 = vmul.f32 %v3106, %v3141
      %v3159 = vmul.f32 %v3108, %v3141
      %v3160 = vmul.f32 %v3110, %v3141
      %v3161 = vmul.f32 %v3112, %v3141
      %v3162 = vmul.f32 %v3114, %v3141
      %v3163 = vmul.f32 %v3116, %v3141
      %v3164 = vmul.f32 %v3118, %v3141
      %v3165 = vmul.f32 %v3120, %v3141
      %v3166 = vmul.f32 %v3122, %v3141
      %v3167 = vmul.f32 %v3124, %v3141
      %v3168 = vmul.f32 %v3126, %v3141
      %v3169 = vmul.f32 %v3128, %v3141
      %v3170 = vmul.f32 %v3130, %v3141
      %v3171 = vmul.f32 %v3132, %v3141
      %v3172 = vmul.f32 %v3134, %v3141
      %v3173 = vmul.f32 %v3136, %v3141
      %v3174 = vadd.f32 %v3040, %v3142
      %v3175 = vadd.f32 %v3041, %v3143
      %v3176 = vadd.f32 %v3042, %v3144
      %v3177 = vadd.f32 %v3043, %v3145
      %v3178 = vadd.f32 %v3044, %v3146
      %v3179 = vadd.f32 %v3045, %v3147
      %v3180 = vadd.f32 %v3046, %v3148
      %v3181 = vadd.f32 %v3047, %v3149
      %v3182 = vadd.f32 %v3048, %v3150
      %v3183 = vadd.f32 %v3049, %v3151
      %v3184 = vadd.f32 %v3050, %v3152
      %v3185 = vadd.f32 %v3051, %v3153
      %v3186 = vadd.f32 %v3052, %v3154
      %v3187 = vadd.f32 %v3053, %v3155
      %v3188 = vadd.f32 %v3054, %v3156
      %v3189 = vadd.f32 %v3055, %v3157
      %v3190 = vadd.f32 %v3056, %v3158
      %v3191 = vadd.f32 %v3057, %v3159
      %v3192 = vadd.f32 %v3058, %v3160
      %v3193 = vadd.f32 %v3059, %v3161
      %v3194 = vadd.f32 %v3060, %v3162
      %v3195 = vadd.f32 %v3061, %v3163
      %v3196 = vadd.f32 %v3062, %v3164
      %v3197 = vadd.f32 %v3063, %v3165
      %v3198 = vadd.f32 %v3064, %v3166
      %v3199 = vadd.f32 %v3065, %v3167
      %v3200 = vadd.f32 %v3066, %v3168
      %v3201 = vadd.f32 %v3067, %v3169
      %v3202 = vadd.f32 %v3068, %v3170
      %v3203 = vadd.f32 %v3069, %v3171
      %v3204 = vadd.f32 %v3070, %v3172
      %v3205 = vadd.f32 %v3071, %v3173
      %s3206 = scalar_lea.vmem %s3072, 8 [#allocation2]
      %v3207 = vld [vmem:[%s3206] ss:$2 sm:$0xff]
      %s3208 = scalar_lea.vmem %s3072, 72 [#allocation2]
      %v3209 = vld [vmem:[%s3208] ss:$2 sm:$0xff]
      %s3210 = scalar_lea.vmem %s3072, 136 [#allocation2]
      %v3211 = vld [vmem:[%s3210] ss:$2 sm:$0xff]
      %s3212 = scalar_lea.vmem %s3072, 200 [#allocation2]
      %v3213 = vld [vmem:[%s3212] ss:$2 sm:$0xff]
      %s3214 = scalar_lea.vmem %s3072, 264 [#allocation2]
      %v3215 = vld [vmem:[%s3214] ss:$2 sm:$0xff]
      %s3216 = scalar_lea.vmem %s3072, 328 [#allocation2]
      %v3217 = vld [vmem:[%s3216] ss:$2 sm:$0xff]
      %s3218 = scalar_lea.vmem %s3072, 392 [#allocation2]
      %v3219 = vld [vmem:[%s3218] ss:$2 sm:$0xff]
      %s3220 = scalar_lea.vmem %s3072, 456 [#allocation2]
      %v3221 = vld [vmem:[%s3220] ss:$2 sm:$0xff]
      %s3222 = scalar_lea.vmem %s3072, 584 [#allocation2]
      %v3223 = vld [vmem:[%s3222] ss:$2 sm:$0xff]
      %s3224 = scalar_lea.vmem %s3072, 648 [#allocation2]
      %v3225 = vld [vmem:[%s3224] ss:$2 sm:$0xff]
      %s3226 = scalar_lea.vmem %s3072, 712 [#allocation2]
      %v3227 = vld [vmem:[%s3226] ss:$2 sm:$0xff]
      %s3228 = scalar_lea.vmem %s3072, 776 [#allocation2]
      %v3229 = vld [vmem:[%s3228] ss:$2 sm:$0xff]
      %s3230 = scalar_lea.vmem %s3072, 840 [#allocation2]
      %v3231 = vld [vmem:[%s3230] ss:$2 sm:$0xff]
      %s3232 = scalar_lea.vmem %s3072, 904 [#allocation2]
      %v3233 = vld [vmem:[%s3232] ss:$2 sm:$0xff]
      %s3234 = scalar_lea.vmem %s3072, 968 [#allocation2]
      %v3235 = vld [vmem:[%s3234] ss:$2 sm:$0xff]
      %s3236 = scalar_lea.vmem %s3072, 1032 [#allocation2]
      %v3237 = vld [vmem:[%s3236] ss:$2 sm:$0xff]
      %s3238 = scalar_lea.vmem %s3072, 1160 [#allocation2]
      %v3239 = vld [vmem:[%s3238] ss:$2 sm:$0xff]
      %s3240 = scalar_lea.vmem %s3072, 1224 [#allocation2]
      %v3241 = vld [vmem:[%s3240] ss:$2 sm:$0xff]
      %s3242 = scalar_lea.vmem %s3072, 1288 [#allocation2]
      %v3243 = vld [vmem:[%s3242] ss:$2 sm:$0xff]
      %s3244 = scalar_lea.vmem %s3072, 1352 [#allocation2]
      %v3245 = vld [vmem:[%s3244] ss:$2 sm:$0xff]
      %s3246 = scalar_lea.vmem %s3072, 1416 [#allocation2]
      %v3247 = vld [vmem:[%s3246] ss:$2 sm:$0xff]
      %s3248 = scalar_lea.vmem %s3072, 1480 [#allocation2]
      %v3249 = vld [vmem:[%s3248] ss:$2 sm:$0xff]
      %s3250 = scalar_lea.vmem %s3072, 1544 [#allocation2]
      %v3251 = vld [vmem:[%s3250] ss:$2 sm:$0xff]
      %s3252 = scalar_lea.vmem %s3072, 1608 [#allocation2]
      %v3253 = vld [vmem:[%s3252] ss:$2 sm:$0xff]
      %s3254 = scalar_lea.vmem %s3072, 1736 [#allocation2]
      %v3255 = vld [vmem:[%s3254] ss:$2 sm:$0xff]
      %s3256 = scalar_lea.vmem %s3072, 1800 [#allocation2]
      %v3257 = vld [vmem:[%s3256] ss:$2 sm:$0xff]
      %s3258 = scalar_lea.vmem %s3072, 1864 [#allocation2]
      %v3259 = vld [vmem:[%s3258] ss:$2 sm:$0xff]
      %s3260 = scalar_lea.vmem %s3072, 1928 [#allocation2]
      %v3261 = vld [vmem:[%s3260] ss:$2 sm:$0xff]
      %s3262 = scalar_lea.vmem %s3072, 1992 [#allocation2]
      %v3263 = vld [vmem:[%s3262] ss:$2 sm:$0xff]
      %s3264 = scalar_lea.vmem %s3072, 2056 [#allocation2]
      %v3265 = vld [vmem:[%s3264] ss:$2 sm:$0xff]
      %s3266 = scalar_lea.vmem %s3072, 2120 [#allocation2]
      %v3267 = vld [vmem:[%s3266] ss:$2 sm:$0xff]
      %s3268 = scalar_lea.vmem %s3072, 2184 [#allocation2]
      %v3269 = vld [vmem:[%s3268] ss:$2 sm:$0xff]
      %v3270 = vld [vmem:[%s1 + $0x7] sm:$0x1]
      %v3271 = vlaneseq
      %v3272 = vshrl.u32 %v3271, 7
      %v3273 = vsub.s32 0, %v3272
      %v3274 = vrot.slane %v3270, %v3273
      %v3275 = vmul.f32 %v3207, %v3274
      %v3276 = vmul.f32 %v3209, %v3274
      %v3277 = vmul.f32 %v3211, %v3274
      %v3278 = vmul.f32 %v3213, %v3274
      %v3279 = vmul.f32 %v3215, %v3274
      %v3280 = vmul.f32 %v3217, %v3274
      %v3281 = vmul.f32 %v3219, %v3274
      %v3282 = vmul.f32 %v3221, %v3274
      %v3283 = vmul.f32 %v3223, %v3274
      %v3284 = vmul.f32 %v3225, %v3274
      %v3285 = vmul.f32 %v3227, %v3274
      %v3286 = vmul.f32 %v3229, %v3274
      %v3287 = vmul.f32 %v3231, %v3274
      %v3288 = vmul.f32 %v3233, %v3274
      %v3289 = vmul.f32 %v3235, %v3274
      %v3290 = vmul.f32 %v3237, %v3274
      %v3291 = vmul.f32 %v3239, %v3274
      %v3292 = vmul.f32 %v3241, %v3274
      %v3293 = vmul.f32 %v3243, %v3274
      %v3294 = vmul.f32 %v3245, %v3274
      %v3295 = vmul.f32 %v3247, %v3274
      %v3296 = vmul.f32 %v3249, %v3274
      %v3297 = vmul.f32 %v3251, %v3274
      %v3298 = vmul.f32 %v3253, %v3274
      %v3299 = vmul.f32 %v3255, %v3274
      %v3300 = vmul.f32 %v3257, %v3274
      %v3301 = vmul.f32 %v3259, %v3274
      %v3302 = vmul.f32 %v3261, %v3274
      %v3303 = vmul.f32 %v3263, %v3274
      %v3304 = vmul.f32 %v3265, %v3274
      %v3305 = vmul.f32 %v3267, %v3274
      %v3306 = vmul.f32 %v3269, %v3274
      %v3307 = vadd.f32 %v3174, %v3275
      %v3308 = vadd.f32 %v3175, %v3276
      %v3309 = vadd.f32 %v3176, %v3277
      %v3310 = vadd.f32 %v3177, %v3278
      %v3311 = vadd.f32 %v3178, %v3279
      %v3312 = vadd.f32 %v3179, %v3280
      %v3313 = vadd.f32 %v3180, %v3281
      %v3314 = vadd.f32 %v3181, %v3282
      %v3315 = vadd.f32 %v3182, %v3283
      %v3316 = vadd.f32 %v3183, %v3284
      %v3317 = vadd.f32 %v3184, %v3285
      %v3318 = vadd.f32 %v3185, %v3286
      %v3319 = vadd.f32 %v3186, %v3287
      %v3320 = vadd.f32 %v3187, %v3288
      %v3321 = vadd.f32 %v3188, %v3289
      %v3322 = vadd.f32 %v3189, %v3290
      %v3323 = vadd.f32 %v3190, %v3291
      %v3324 = vadd.f32 %v3191, %v3292
      %v3325 = vadd.f32 %v3192, %v3293
      %v3326 = vadd.f32 %v3193, %v3294
      %v3327 = vadd.f32 %v3194, %v3295
      %v3328 = vadd.f32 %v3195, %v3296
      %v3329 = vadd.f32 %v3196, %v3297
      %v3330 = vadd.f32 %v3197, %v3298
      %v3331 = vadd.f32 %v3198, %v3299
      %v3332 = vadd.f32 %v3199, %v3300
      %v3333 = vadd.f32 %v3200, %v3301
      %v3334 = vadd.f32 %v3201, %v3302
      %v3335 = vadd.f32 %v3202, %v3303
      %v3336 = vadd.f32 %v3203, %v3304
      %v3337 = vadd.f32 %v3204, %v3305
      %v3338 = vadd.f32 %v3205, %v3306
      %s3339 = scalar_lea.vmem %s3072, 9 [#allocation2]
      %v3340 = vld [vmem:[%s3339] ss:$2 sm:$0xff]
      %s3341 = scalar_lea.vmem %s3072, 73 [#allocation2]
      %v3342 = vld [vmem:[%s3341] ss:$2 sm:$0xff]
      %s3343 = scalar_lea.vmem %s3072, 137 [#allocation2]
      %v3344 = vld [vmem:[%s3343] ss:$2 sm:$0xff]
      %s3345 = scalar_lea.vmem %s3072, 201 [#allocation2]
      %v3346 = vld [vmem:[%s3345] ss:$2 sm:$0xff]
      %s3347 = scalar_lea.vmem %s3072, 265 [#allocation2]
      %v3348 = vld [vmem:[%s3347] ss:$2 sm:$0xff]
      %s3349 = scalar_lea.vmem %s3072, 329 [#allocation2]
      %v3350 = vld [vmem:[%s3349] ss:$2 sm:$0xff]
      %s3351 = scalar_lea.vmem %s3072, 393 [#allocation2]
      %v3352 = vld [vmem:[%s3351] ss:$2 sm:$0xff]
      %s3353 = scalar_lea.vmem %s3072, 457 [#allocation2]
      %v3354 = vld [vmem:[%s3353] ss:$2 sm:$0xff]
      %s3355 = scalar_lea.vmem %s3072, 585 [#allocation2]
      %v3356 = vld [vmem:[%s3355] ss:$2 sm:$0xff]
      %s3357 = scalar_lea.vmem %s3072, 649 [#allocation2]
      %v3358 = vld [vmem:[%s3357] ss:$2 sm:$0xff]
      %s3359 = scalar_lea.vmem %s3072, 713 [#allocation2]
      %v3360 = vld [vmem:[%s3359] ss:$2 sm:$0xff]
      %s3361 = scalar_lea.vmem %s3072, 777 [#allocation2]
      %v3362 = vld [vmem:[%s3361] ss:$2 sm:$0xff]
      %s3363 = scalar_lea.vmem %s3072, 841 [#allocation2]
      %v3364 = vld [vmem:[%s3363] ss:$2 sm:$0xff]
      %s3365 = scalar_lea.vmem %s3072, 905 [#allocation2]
      %v3366 = vld [vmem:[%s3365] ss:$2 sm:$0xff]
      %s3367 = scalar_lea.vmem %s3072, 969 [#allocation2]
      %v3368 = vld [vmem:[%s3367] ss:$2 sm:$0xff]
      %s3369 = scalar_lea.vmem %s3072, 1033 [#allocation2]
      %v3370 = vld [vmem:[%s3369] ss:$2 sm:$0xff]
      %s3371 = scalar_lea.vmem %s3072, 1161 [#allocation2]
      %v3372 = vld [vmem:[%s3371] ss:$2 sm:$0xff]
      %s3373 = scalar_lea.vmem %s3072, 1225 [#allocation2]
      %v3374 = vld [vmem:[%s3373] ss:$2 sm:$0xff]
      %s3375 = scalar_lea.vmem %s3072, 1289 [#allocation2]
      %v3376 = vld [vmem:[%s3375] ss:$2 sm:$0xff]
      %s3377 = scalar_lea.vmem %s3072, 1353 [#allocation2]
      %v3378 = vld [vmem:[%s3377] ss:$2 sm:$0xff]
      %s3379 = scalar_lea.vmem %s3072, 1417 [#allocation2]
      %v3380 = vld [vmem:[%s3379] ss:$2 sm:$0xff]
      %s3381 = scalar_lea.vmem %s3072, 1481 [#allocation2]
      %v3382 = vld [vmem:[%s3381] ss:$2 sm:$0xff]
      %s3383 = scalar_lea.vmem %s3072, 1545 [#allocation2]
      %v3384 = vld [vmem:[%s3383] ss:$2 sm:$0xff]
      %s3385 = scalar_lea.vmem %s3072, 1609 [#allocation2]
      %v3386 = vld [vmem:[%s3385] ss:$2 sm:$0xff]
      %s3387 = scalar_lea.vmem %s3072, 1737 [#allocation2]
      %v3388 = vld [vmem:[%s3387] ss:$2 sm:$0xff]
      %s3389 = scalar_lea.vmem %s3072, 1801 [#allocation2]
      %v3390 = vld [vmem:[%s3389] ss:$2 sm:$0xff]
      %s3391 = scalar_lea.vmem %s3072, 1865 [#allocation2]
      %v3392 = vld [vmem:[%s3391] ss:$2 sm:$0xff]
      %s3393 = scalar_lea.vmem %s3072, 1929 [#allocation2]
      %v3394 = vld [vmem:[%s3393] ss:$2 sm:$0xff]
      %s3395 = scalar_lea.vmem %s3072, 1993 [#allocation2]
      %v3396 = vld [vmem:[%s3395] ss:$2 sm:$0xff]
      %s3397 = scalar_lea.vmem %s3072, 2057 [#allocation2]
      %v3398 = vld [vmem:[%s3397] ss:$2 sm:$0xff]
      %s3399 = scalar_lea.vmem %s3072, 2121 [#allocation2]
      %v3400 = vld [vmem:[%s3399] ss:$2 sm:$0xff]
      %s3401 = scalar_lea.vmem %s3072, 2185 [#allocation2]
      %v3402 = vld [vmem:[%s3401] ss:$2 sm:$0xff]
      %v3403 = vld [vmem:[%s1 + $0x8] sm:$0x1]
      %v3404 = vlaneseq
      %v3405 = vshrl.u32 %v3404, 7
      %v3406 = vsub.s32 0, %v3405
      %v3407 = vrot.slane %v3403, %v3406
      %v3408 = vmul.f32 %v3340, %v3407
      %v3409 = vmul.f32 %v3342, %v3407
      %v3410 = vmul.f32 %v3344, %v3407
      %v3411 = vmul.f32 %v3346, %v3407
      %v3412 = vmul.f32 %v3348, %v3407
      %v3413 = vmul.f32 %v3350, %v3407
      %v3414 = vmul.f32 %v3352, %v3407
      %v3415 = vmul.f32 %v3354, %v3407
      %v3416 = vmul.f32 %v3356, %v3407
      %v3417 = vmul.f32 %v3358, %v3407
      %v3418 = vmul.f32 %v3360, %v3407
      %v3419 = vmul.f32 %v3362, %v3407
      %v3420 = vmul.f32 %v3364, %v3407
      %v3421 = vmul.f32 %v3366, %v3407
      %v3422 = vmul.f32 %v3368, %v3407
      %v3423 = vmul.f32 %v3370, %v3407
      %v3424 = vmul.f32 %v3372, %v3407
      %v3425 = vmul.f32 %v3374, %v3407
      %v3426 = vmul.f32 %v3376, %v3407
      %v3427 = vmul.f32 %v3378, %v3407
      %v3428 = vmul.f32 %v3380, %v3407
      %v3429 = vmul.f32 %v3382, %v3407
      %v3430 = vmul.f32 %v3384, %v3407
      %v3431 = vmul.f32 %v3386, %v3407
      %v3432 = vmul.f32 %v3388, %v3407
      %v3433 = vmul.f32 %v3390, %v3407
      %v3434 = vmul.f32 %v3392, %v3407
      %v3435 = vmul.f32 %v3394, %v3407
      %v3436 = vmul.f32 %v3396, %v3407
      %v3437 = vmul.f32 %v3398, %v3407
      %v3438 = vmul.f32 %v3400, %v3407
      %v3439 = vmul.f32 %v3402, %v3407
      %v3440 = vadd.f32 %v3307, %v3408
      %v3441 = vadd.f32 %v3308, %v3409
      %v3442 = vadd.f32 %v3309, %v3410
      %v3443 = vadd.f32 %v3310, %v3411
      %v3444 = vadd.f32 %v3311, %v3412
      %v3445 = vadd.f32 %v3312, %v3413
      %v3446 = vadd.f32 %v3313, %v3414
      %v3447 = vadd.f32 %v3314, %v3415
      %v3448 = vadd.f32 %v3315, %v3416
      %v3449 = vadd.f32 %v3316, %v3417
      %v3450 = vadd.f32 %v3317, %v3418
      %v3451 = vadd.f32 %v3318, %v3419
      %v3452 = vadd.f32 %v3319, %v3420
      %v3453 = vadd.f32 %v3320, %v3421
      %v3454 = vadd.f32 %v3321, %v3422
      %v3455 = vadd.f32 %v3322, %v3423
      %v3456 = vadd.f32 %v3323, %v3424
      %v3457 = vadd.f32 %v3324, %v3425
      %v3458 = vadd.f32 %v3325, %v3426
      %v3459 = vadd.f32 %v3326, %v3427
      %v3460 = vadd.f32 %v3327, %v3428
      %v3461 = vadd.f32 %v3328, %v3429
      %v3462 = vadd.f32 %v3329, %v3430
      %v3463 = vadd.f32 %v3330, %v3431
      %v3464 = vadd.f32 %v3331, %v3432
      %v3465 = vadd.f32 %v3332, %v3433
      %v3466 = vadd.f32 %v3333, %v3434
      %v3467 = vadd.f32 %v3334, %v3435
      %v3468 = vadd.f32 %v3335, %v3436
      %v3469 = vadd.f32 %v3336, %v3437
      %v3470 = vadd.f32 %v3337, %v3438
      %v3471 = vadd.f32 %v3338, %v3439
      %v3472 = vld [vmem:[%s2] sm:$0x1]
      %v3474 = vlaneseq
      %v3475 = vshrl.u32 %v3474, 7
      %v3476 = vsub.s32 0, %v3475
      %v3477 = vrot.slane %v3472, %v3476
      %v3479 = vadd.f32 %v3440, %v3477
      %v3480 = vadd.f32 %v3441, %v3477
      %v3481 = vadd.f32 %v3442, %v3477
      %v3482 = vadd.f32 %v3443, %v3477
      %v3483 = vadd.f32 %v3444, %v3477
      %v3484 = vadd.f32 %v3445, %v3477
      %v3485 = vadd.f32 %v3446, %v3477
      %v3486 = vadd.f32 %v3447, %v3477
      %v3487 = vadd.f32 %v3448, %v3477
      %v3488 = vadd.f32 %v3449, %v3477
      %v3489 = vadd.f32 %v3450, %v3477
      %v3490 = vadd.f32 %v3451, %v3477
      %v3491 = vadd.f32 %v3452, %v3477
      %v3492 = vadd.f32 %v3453, %v3477
      %v3493 = vadd.f32 %v3454, %v3477
      %v3494 = vadd.f32 %v3455, %v3477
      %v3495 = vadd.f32 %v3456, %v3477
      %v3496 = vadd.f32 %v3457, %v3477
      %v3497 = vadd.f32 %v3458, %v3477
      %v3498 = vadd.f32 %v3459, %v3477
      %v3499 = vadd.f32 %v3460, %v3477
      %v3500 = vadd.f32 %v3461, %v3477
      %v3501 = vadd.f32 %v3462, %v3477
      %v3502 = vadd.f32 %v3463, %v3477
      %v3503 = vadd.f32 %v3464, %v3477
      %v3504 = vadd.f32 %v3465, %v3477
      %v3505 = vadd.f32 %v3466, %v3477
      %v3506 = vadd.f32 %v3467, %v3477
      %v3507 = vadd.f32 %v3468, %v3477
      %v3508 = vadd.f32 %v3469, %v3477
      %v3509 = vadd.f32 %v3470, %v3477
      %v3510 = vadd.f32 %v3471, %v3477
      %s3511 = scalar_lea.vmem [#allocation3], 7
      %v3512 = vld [vmem:[%s3511] ss:$2 sm:$0xff]
      %s3513 = scalar_lea.vmem [#allocation3], 71
      %v3514 = vld [vmem:[%s3513] ss:$2 sm:$0xff]
      %s3515 = scalar_lea.vmem [#allocation3], 135
      %v3516 = vld [vmem:[%s3515] ss:$2 sm:$0xff]
      %s3517 = scalar_lea.vmem [#allocation3], 199
      %v3518 = vld [vmem:[%s3517] ss:$2 sm:$0xff]
      %s3519 = scalar_lea.vmem [#allocation3], 263
      %v3520 = vld [vmem:[%s3519] ss:$2 sm:$0xff]
      %s3521 = scalar_lea.vmem [#allocation3], 327
      %v3522 = vld [vmem:[%s3521] ss:$2 sm:$0xff]
      %s3523 = scalar_lea.vmem [#allocation3], 391
      %v3524 = vld [vmem:[%s3523] ss:$2 sm:$0xff]
      %s3525 = scalar_lea.vmem [#allocation3], 455
      %v3526 = vld [vmem:[%s3525] ss:$2 sm:$0xff]
      %s3527 = scalar_lea.vmem [#allocation3], 583
      %v3528 = vld [vmem:[%s3527] ss:$2 sm:$0xff]
      %s3529 = scalar_lea.vmem [#allocation3], 647
      %v3530 = vld [vmem:[%s3529] ss:$2 sm:$0xff]
      %s3531 = scalar_lea.vmem [#allocation3], 711
      %v3532 = vld [vmem:[%s3531] ss:$2 sm:$0xff]
      %s3533 = scalar_lea.vmem [#allocation3], 775
      %v3534 = vld [vmem:[%s3533] ss:$2 sm:$0xff]
      %s3535 = scalar_lea.vmem [#allocation3], 839
      %v3536 = vld [vmem:[%s3535] ss:$2 sm:$0xff]
      %s3537 = scalar_lea.vmem [#allocation3], 903
      %v3538 = vld [vmem:[%s3537] ss:$2 sm:$0xff]
      %s3539 = scalar_lea.vmem [#allocation3], 967
      %v3540 = vld [vmem:[%s3539] ss:$2 sm:$0xff]
      %s3541 = scalar_lea.vmem [#allocation3], 1031
      %v3542 = vld [vmem:[%s3541] ss:$2 sm:$0xff]
      %s3543 = scalar_lea.vmem [#allocation3], 1159
      %v3544 = vld [vmem:[%s3543] ss:$2 sm:$0xff]
      %s3545 = scalar_lea.vmem [#allocation3], 1223
      %v3546 = vld [vmem:[%s3545] ss:$2 sm:$0xff]
      %s3547 = scalar_lea.vmem [#allocation3], 1287
      %v3548 = vld [vmem:[%s3547] ss:$2 sm:$0xff]
      %s3549 = scalar_lea.vmem [#allocation3], 1351
      %v3550 = vld [vmem:[%s3549] ss:$2 sm:$0xff]
      %s3551 = scalar_lea.vmem [#allocation3], 1415
      %v3552 = vld [vmem:[%s3551] ss:$2 sm:$0xff]
      %s3553 = scalar_lea.vmem [#allocation3], 1479
      %v3554 = vld [vmem:[%s3553] ss:$2 sm:$0xff]
      %s3555 = scalar_lea.vmem [#allocation3], 1543
      %v3556 = vld [vmem:[%s3555] ss:$2 sm:$0xff]
      %s3557 = scalar_lea.vmem [#allocation3], 1607
      %v3558 = vld [vmem:[%s3557] ss:$2 sm:$0xff]
      %s3559 = scalar_lea.vmem [#allocation3], 1735
      %v3560 = vld [vmem:[%s3559] ss:$2 sm:$0xff]
      %s3561 = scalar_lea.vmem [#allocation3], 1799
      %v3562 = vld [vmem:[%s3561] ss:$2 sm:$0xff]
      %s3563 = scalar_lea.vmem [#allocation3], 1863
      %v3564 = vld [vmem:[%s3563] ss:$2 sm:$0xff]
      %s3565 = scalar_lea.vmem [#allocation3], 1927
      %v3566 = vld [vmem:[%s3565] ss:$2 sm:$0xff]
      %s3567 = scalar_lea.vmem [#allocation3], 1991
      %v3568 = vld [vmem:[%s3567] ss:$2 sm:$0xff]
      %s3569 = scalar_lea.vmem [#allocation3], 2055
      %v3570 = vld [vmem:[%s3569] ss:$2 sm:$0xff]
      %s3571 = scalar_lea.vmem [#allocation3], 2119
      %v3572 = vld [vmem:[%s3571] ss:$2 sm:$0xff]
      %s3573 = scalar_lea.vmem [#allocation3], 2183
      %v3574 = vld [vmem:[%s3573] ss:$2 sm:$0xff]
      %v3575 = vld [vmem:[%s5] sm:$0x1]
      %v3576 = vlaneseq
      %v3577 = vshrl.u32 %v3576, 7
      %v3578 = vsub.s32 0, %v3577
      %v3579 = vrot.slane %v3575, %v3578
      %v3580 = vmul.f32 %v3512, %v3579
      %v3581 = vmul.f32 %v3514, %v3579
      %v3582 = vmul.f32 %v3516, %v3579
      %v3583 = vmul.f32 %v3518, %v3579
      %v3584 = vmul.f32 %v3520, %v3579
      %v3585 = vmul.f32 %v3522, %v3579
      %v3586 = vmul.f32 %v3524, %v3579
      %v3587 = vmul.f32 %v3526, %v3579
      %v3588 = vmul.f32 %v3528, %v3579
      %v3589 = vmul.f32 %v3530, %v3579
      %v3590 = vmul.f32 %v3532, %v3579
      %v3591 = vmul.f32 %v3534, %v3579
      %v3592 = vmul.f32 %v3536, %v3579
      %v3593 = vmul.f32 %v3538, %v3579
      %v3594 = vmul.f32 %v3540, %v3579
      %v3595 = vmul.f32 %v3542, %v3579
      %v3596 = vmul.f32 %v3544, %v3579
      %v3597 = vmul.f32 %v3546, %v3579
      %v3598 = vmul.f32 %v3548, %v3579
      %v3599 = vmul.f32 %v3550, %v3579
      %v3600 = vmul.f32 %v3552, %v3579
      %v3601 = vmul.f32 %v3554, %v3579
      %v3602 = vmul.f32 %v3556, %v3579
      %v3603 = vmul.f32 %v3558, %v3579
      %v3604 = vmul.f32 %v3560, %v3579
      %v3605 = vmul.f32 %v3562, %v3579
      %v3606 = vmul.f32 %v3564, %v3579
      %v3607 = vmul.f32 %v3566, %v3579
      %v3608 = vmul.f32 %v3568, %v3579
      %v3609 = vmul.f32 %v3570, %v3579
      %v3610 = vmul.f32 %v3572, %v3579
      %v3611 = vmul.f32 %v3574, %v3579
      %s3612 = scalar_lea.vmem [#allocation3], 8
      %v3613 = vld [vmem:[%s3612] ss:$2 sm:$0xff]
      %s3614 = scalar_lea.vmem [#allocation3], 72
      %v3615 = vld [vmem:[%s3614] ss:$2 sm:$0xff]
      %s3616 = scalar_lea.vmem [#allocation3], 136
      %v3617 = vld [vmem:[%s3616] ss:$2 sm:$0xff]
      %s3618 = scalar_lea.vmem [#allocation3], 200
      %v3619 = vld [vmem:[%s3618] ss:$2 sm:$0xff]
      %s3620 = scalar_lea.vmem [#allocation3], 264
      %v3621 = vld [vmem:[%s3620] ss:$2 sm:$0xff]
      %s3622 = scalar_lea.vmem [#allocation3], 328
      %v3623 = vld [vmem:[%s3622] ss:$2 sm:$0xff]
      %s3624 = scalar_lea.vmem [#allocation3], 392
      %v3625 = vld [vmem:[%s3624] ss:$2 sm:$0xff]
      %s3626 = scalar_lea.vmem [#allocation3], 456
      %v3627 = vld [vmem:[%s3626] ss:$2 sm:$0xff]
      %s3628 = scalar_lea.vmem [#allocation3], 584
      %v3629 = vld [vmem:[%s3628] ss:$2 sm:$0xff]
      %s3630 = scalar_lea.vmem [#allocation3], 648
      %v3631 = vld [vmem:[%s3630] ss:$2 sm:$0xff]
      %s3632 = scalar_lea.vmem [#allocation3], 712
      %v3633 = vld [vmem:[%s3632] ss:$2 sm:$0xff]
      %s3634 = scalar_lea.vmem [#allocation3], 776
      %v3635 = vld [vmem:[%s3634] ss:$2 sm:$0xff]
      %s3636 = scalar_lea.vmem [#allocation3], 840
      %v3637 = vld [vmem:[%s3636] ss:$2 sm:$0xff]
      %s3638 = scalar_lea.vmem [#allocation3], 904
      %v3639 = vld [vmem:[%s3638] ss:$2 sm:$0xff]
      %s3640 = scalar_lea.vmem [#allocation3], 968
      %v3641 = vld [vmem:[%s3640] ss:$2 sm:$0xff]
      %s3642 = scalar_lea.vmem [#allocation3], 1032
      %v3643 = vld [vmem:[%s3642] ss:$2 sm:$0xff]
      %s3644 = scalar_lea.vmem [#allocation3], 1160
      %v3645 = vld [vmem:[%s3644] ss:$2 sm:$0xff]
      %s3646 = scalar_lea.vmem [#allocation3], 1224
      %v3647 = vld [vmem:[%s3646] ss:$2 sm:$0xff]
      %s3648 = scalar_lea.vmem [#allocation3], 1288
      %v3649 = vld [vmem:[%s3648] ss:$2 sm:$0xff]
      %s3650 = scalar_lea.vmem [#allocation3], 1352
      %v3651 = vld [vmem:[%s3650] ss:$2 sm:$0xff]
      %s3652 = scalar_lea.vmem [#allocation3], 1416
      %v3653 = vld [vmem:[%s3652] ss:$2 sm:$0xff]
      %s3654 = scalar_lea.vmem [#allocation3], 1480
      %v3655 = vld [vmem:[%s3654] ss:$2 sm:$0xff]
      %s3656 = scalar_lea.vmem [#allocation3], 1544
      %v3657 = vld [vmem:[%s3656] ss:$2 sm:$0xff]
      %s3658 = scalar_lea.vmem [#allocation3], 1608
      %v3659 = vld [vmem:[%s3658] ss:$2 sm:$0xff]
      %s3660 = scalar_lea.vmem [#allocation3], 1736
      %v3661 = vld [vmem:[%s3660] ss:$2 sm:$0xff]
      %s3662 = scalar_lea.vmem [#allocation3], 1800
      %v3663 = vld [vmem:[%s3662] ss:$2 sm:$0xff]
      %s3664 = scalar_lea.vmem [#allocation3], 1864
      %v3665 = vld [vmem:[%s3664] ss:$2 sm:$0xff]
      %s3666 = scalar_lea.vmem [#allocation3], 1928
      %v3667 = vld [vmem:[%s3666] ss:$2 sm:$0xff]
      %s3668 = scalar_lea.vmem [#allocation3], 1992
      %v3669 = vld [vmem:[%s3668] ss:$2 sm:$0xff]
      %s3670 = scalar_lea.vmem [#allocation3], 2056
      %v3671 = vld [vmem:[%s3670] ss:$2 sm:$0xff]
      %s3672 = scalar_lea.vmem [#allocation3], 2120
      %v3673 = vld [vmem:[%s3672] ss:$2 sm:$0xff]
      %s3674 = scalar_lea.vmem [#allocation3], 2184
      %v3675 = vld [vmem:[%s3674] ss:$2 sm:$0xff]
      %v3676 = vld [vmem:[%s5 + $0x1] sm:$0x1]
      %v3677 = vlaneseq
      %v3678 = vshrl.u32 %v3677, 7
      %v3679 = vsub.s32 0, %v3678
      %v3680 = vrot.slane %v3676, %v3679
      %v3681 = vmul.f32 %v3613, %v3680
      %v3682 = vmul.f32 %v3615, %v3680
      %v3683 = vmul.f32 %v3617, %v3680
      %v3684 = vmul.f32 %v3619, %v3680
      %v3685 = vmul.f32 %v3621, %v3680
      %v3686 = vmul.f32 %v3623, %v3680
      %v3687 = vmul.f32 %v3625, %v3680
      %v3688 = vmul.f32 %v3627, %v3680
      %v3689 = vmul.f32 %v3629, %v3680
      %v3690 = vmul.f32 %v3631, %v3680
      %v3691 = vmul.f32 %v3633, %v3680
      %v3692 = vmul.f32 %v3635, %v3680
      %v3693 = vmul.f32 %v3637, %v3680
      %v3694 = vmul.f32 %v3639, %v3680
      %v3695 = vmul.f32 %v3641, %v3680
      %v3696 = vmul.f32 %v3643, %v3680
      %v3697 = vmul.f32 %v3645, %v3680
      %v3698 = vmul.f32 %v3647, %v3680
      %v3699 = vmul.f32 %v3649, %v3680
      %v3700 = vmul.f32 %v3651, %v3680
      %v3701 = vmul.f32 %v3653, %v3680
      %v3702 = vmul.f32 %v3655, %v3680
      %v3703 = vmul.f32 %v3657, %v3680
      %v3704 = vmul.f32 %v3659, %v3680
      %v3705 = vmul.f32 %v3661, %v3680
      %v3706 = vmul.f32 %v3663, %v3680
      %v3707 = vmul.f32 %v3665, %v3680
      %v3708 = vmul.f32 %v3667, %v3680
      %v3709 = vmul.f32 %v3669, %v3680
      %v3710 = vmul.f32 %v3671, %v3680
      %v3711 = vmul.f32 %v3673, %v3680
      %v3712 = vmul.f32 %v3675, %v3680
      %v3713 = vadd.f32 %v3580, %v3681
      %v3714 = vadd.f32 %v3581, %v3682
      %v3715 = vadd.f32 %v3582, %v3683
      %v3716 = vadd.f32 %v3583, %v3684
      %v3717 = vadd.f32 %v3584, %v3685
      %v3718 = vadd.f32 %v3585, %v3686
      %v3719 = vadd.f32 %v3586, %v3687
      %v3720 = vadd.f32 %v3587, %v3688
      %v3721 = vadd.f32 %v3588, %v3689
      %v3722 = vadd.f32 %v3589, %v3690
      %v3723 = vadd.f32 %v3590, %v3691
      %v3724 = vadd.f32 %v3591, %v3692
      %v3725 = vadd.f32 %v3592, %v3693
      %v3726 = vadd.f32 %v3593, %v3694
      %v3727 = vadd.f32 %v3594, %v3695
      %v3728 = vadd.f32 %v3595, %v3696
      %v3729 = vadd.f32 %v3596, %v3697
      %v3730 = vadd.f32 %v3597, %v3698
      %v3731 = vadd.f32 %v3598, %v3699
      %v3732 = vadd.f32 %v3599, %v3700
      %v3733 = vadd.f32 %v3600, %v3701
      %v3734 = vadd.f32 %v3601, %v3702
      %v3735 = vadd.f32 %v3602, %v3703
      %v3736 = vadd.f32 %v3603, %v3704
      %v3737 = vadd.f32 %v3604, %v3705
      %v3738 = vadd.f32 %v3605, %v3706
      %v3739 = vadd.f32 %v3606, %v3707
      %v3740 = vadd.f32 %v3607, %v3708
      %v3741 = vadd.f32 %v3608, %v3709
      %v3742 = vadd.f32 %v3609, %v3710
      %v3743 = vadd.f32 %v3610, %v3711
      %v3744 = vadd.f32 %v3611, %v3712
      %s3745 = scalar_lea.vmem [#allocation3], 9
      %v3746 = vld [vmem:[%s3745] ss:$2 sm:$0xff]
      %s3747 = scalar_lea.vmem [#allocation3], 73
      %v3748 = vld [vmem:[%s3747] ss:$2 sm:$0xff]
      %s3749 = scalar_lea.vmem [#allocation3], 137
      %v3750 = vld [vmem:[%s3749] ss:$2 sm:$0xff]
      %s3751 = scalar_lea.vmem [#allocation3], 201
      %v3752 = vld [vmem:[%s3751] ss:$2 sm:$0xff]
      %s3753 = scalar_lea.vmem [#allocation3], 265
      %v3754 = vld [vmem:[%s3753] ss:$2 sm:$0xff]
      %s3755 = scalar_lea.vmem [#allocation3], 329
      %v3756 = vld [vmem:[%s3755] ss:$2 sm:$0xff]
      %s3757 = scalar_lea.vmem [#allocation3], 393
      %v3758 = vld [vmem:[%s3757] ss:$2 sm:$0xff]
      %s3759 = scalar_lea.vmem [#allocation3], 457
      %v3760 = vld [vmem:[%s3759] ss:$2 sm:$0xff]
      %s3761 = scalar_lea.vmem [#allocation3], 585
      %v3762 = vld [vmem:[%s3761] ss:$2 sm:$0xff]
      %s3763 = scalar_lea.vmem [#allocation3], 649
      %v3764 = vld [vmem:[%s3763] ss:$2 sm:$0xff]
      %s3765 = scalar_lea.vmem [#allocation3], 713
      %v3766 = vld [vmem:[%s3765] ss:$2 sm:$0xff]
      %s3767 = scalar_lea.vmem [#allocation3], 777
      %v3768 = vld [vmem:[%s3767] ss:$2 sm:$0xff]
      %s3769 = scalar_lea.vmem [#allocation3], 841
      %v3770 = vld [vmem:[%s3769] ss:$2 sm:$0xff]
      %s3771 = scalar_lea.vmem [#allocation3], 905
      %v3772 = vld [vmem:[%s3771] ss:$2 sm:$0xff]
      %s3773 = scalar_lea.vmem [#allocation3], 969
      %v3774 = vld [vmem:[%s3773] ss:$2 sm:$0xff]
      %s3775 = scalar_lea.vmem [#allocation3], 1033
      %v3776 = vld [vmem:[%s3775] ss:$2 sm:$0xff]
      %s3777 = scalar_lea.vmem [#allocation3], 1161
      %v3778 = vld [vmem:[%s3777] ss:$2 sm:$0xff]
      %s3779 = scalar_lea.vmem [#allocation3], 1225
      %v3780 = vld [vmem:[%s3779] ss:$2 sm:$0xff]
      %s3781 = scalar_lea.vmem [#allocation3], 1289
      %v3782 = vld [vmem:[%s3781] ss:$2 sm:$0xff]
      %s3783 = scalar_lea.vmem [#allocation3], 1353
      %v3784 = vld [vmem:[%s3783] ss:$2 sm:$0xff]
      %s3785 = scalar_lea.vmem [#allocation3], 1417
      %v3786 = vld [vmem:[%s3785] ss:$2 sm:$0xff]
      %s3787 = scalar_lea.vmem [#allocation3], 1481
      %v3788 = vld [vmem:[%s3787] ss:$2 sm:$0xff]
      %s3789 = scalar_lea.vmem [#allocation3], 1545
      %v3790 = vld [vmem:[%s3789] ss:$2 sm:$0xff]
      %s3791 = scalar_lea.vmem [#allocation3], 1609
      %v3792 = vld [vmem:[%s3791] ss:$2 sm:$0xff]
      %s3793 = scalar_lea.vmem [#allocation3], 1737
      %v3794 = vld [vmem:[%s3793] ss:$2 sm:$0xff]
      %s3795 = scalar_lea.vmem [#allocation3], 1801
      %v3796 = vld [vmem:[%s3795] ss:$2 sm:$0xff]
      %s3797 = scalar_lea.vmem [#allocation3], 1865
      %v3798 = vld [vmem:[%s3797] ss:$2 sm:$0xff]
      %s3799 = scalar_lea.vmem [#allocation3], 1929
      %v3800 = vld [vmem:[%s3799] ss:$2 sm:$0xff]
      %s3801 = scalar_lea.vmem [#allocation3], 1993
      %v3802 = vld [vmem:[%s3801] ss:$2 sm:$0xff]
      %s3803 = scalar_lea.vmem [#allocation3], 2057
      %v3804 = vld [vmem:[%s3803] ss:$2 sm:$0xff]
      %s3805 = scalar_lea.vmem [#allocation3], 2121
      %v3806 = vld [vmem:[%s3805] ss:$2 sm:$0xff]
      %s3807 = scalar_lea.vmem [#allocation3], 2185
      %v3808 = vld [vmem:[%s3807] ss:$2 sm:$0xff]
      %v3809 = vld [vmem:[%s5 + $0x2] sm:$0x1]
      %v3810 = vlaneseq
      %v3811 = vshrl.u32 %v3810, 7
      %v3812 = vsub.s32 0, %v3811
      %v3813 = vrot.slane %v3809, %v3812
      %v3814 = vmul.f32 %v3746, %v3813
      %v3815 = vmul.f32 %v3748, %v3813
      %v3816 = vmul.f32 %v3750, %v3813
      %v3817 = vmul.f32 %v3752, %v3813
      %v3818 = vmul.f32 %v3754, %v3813
      %v3819 = vmul.f32 %v3756, %v3813
      %v3820 = vmul.f32 %v3758, %v3813
      %v3821 = vmul.f32 %v3760, %v3813
      %v3822 = vmul.f32 %v3762, %v3813
      %v3823 = vmul.f32 %v3764, %v3813
      %v3824 = vmul.f32 %v3766, %v3813
      %v3825 = vmul.f32 %v3768, %v3813
      %v3826 = vmul.f32 %v3770, %v3813
      %v3827 = vmul.f32 %v3772, %v3813
      %v3828 = vmul.f32 %v3774, %v3813
      %v3829 = vmul.f32 %v3776, %v3813
      %v3830 = vmul.f32 %v3778, %v3813
      %v3831 = vmul.f32 %v3780, %v3813
      %v3832 = vmul.f32 %v3782, %v3813
      %v3833 = vmul.f32 %v3784, %v3813
      %v3834 = vmul.f32 %v3786, %v3813
      %v3835 = vmul.f32 %v3788, %v3813
      %v3836 = vmul.f32 %v3790, %v3813
      %v3837 = vmul.f32 %v3792, %v3813
      %v3838 = vmul.f32 %v3794, %v3813
      %v3839 = vmul.f32 %v3796, %v3813
      %v3840 = vmul.f32 %v3798, %v3813
      %v3841 = vmul.f32 %v3800, %v3813
      %v3842 = vmul.f32 %v3802, %v3813
      %v3843 = vmul.f32 %v3804, %v3813
      %v3844 = vmul.f32 %v3806, %v3813
      %v3845 = vmul.f32 %v3808, %v3813
      %v3846 = vadd.f32 %v3713, %v3814
      %v3847 = vadd.f32 %v3714, %v3815
      %v3848 = vadd.f32 %v3715, %v3816
      %v3849 = vadd.f32 %v3716, %v3817
      %v3850 = vadd.f32 %v3717, %v3818
      %v3851 = vadd.f32 %v3718, %v3819
      %v3852 = vadd.f32 %v3719, %v3820
      %v3853 = vadd.f32 %v3720, %v3821
      %v3854 = vadd.f32 %v3721, %v3822
      %v3855 = vadd.f32 %v3722, %v3823
      %v3856 = vadd.f32 %v3723, %v3824
      %v3857 = vadd.f32 %v3724, %v3825
      %v3858 = vadd.f32 %v3725, %v3826
      %v3859 = vadd.f32 %v3726, %v3827
      %v3860 = vadd.f32 %v3727, %v3828
      %v3861 = vadd.f32 %v3728, %v3829
      %v3862 = vadd.f32 %v3729, %v3830
      %v3863 = vadd.f32 %v3730, %v3831
      %v3864 = vadd.f32 %v3731, %v3832
      %v3865 = vadd.f32 %v3732, %v3833
      %v3866 = vadd.f32 %v3733, %v3834
      %v3867 = vadd.f32 %v3734, %v3835
      %v3868 = vadd.f32 %v3735, %v3836
      %v3869 = vadd.f32 %v3736, %v3837
      %v3870 = vadd.f32 %v3737, %v3838
      %v3871 = vadd.f32 %v3738, %v3839
      %v3872 = vadd.f32 %v3739, %v3840
      %v3873 = vadd.f32 %v3740, %v3841
      %v3874 = vadd.f32 %v3741, %v3842
      %v3875 = vadd.f32 %v3742, %v3843
      %v3876 = vadd.f32 %v3743, %v3844
      %v3877 = vadd.f32 %v3744, %v3845
      %s3878 = scalar_lea.vmem %s2049, 7 [#allocation3]
      %v3879 = vld [vmem:[%s3878] ss:$2 sm:$0xff]
      %s3880 = scalar_lea.vmem %s2049, 71 [#allocation3]
      %v3881 = vld [vmem:[%s3880] ss:$2 sm:$0xff]
      %s3882 = scalar_lea.vmem %s2049, 135 [#allocation3]
      %v3883 = vld [vmem:[%s3882] ss:$2 sm:$0xff]
      %s3884 = scalar_lea.vmem %s2049, 199 [#allocation3]
      %v3885 = vld [vmem:[%s3884] ss:$2 sm:$0xff]
      %s3886 = scalar_lea.vmem %s2049, 263 [#allocation3]
      %v3887 = vld [vmem:[%s3886] ss:$2 sm:$0xff]
      %s3888 = scalar_lea.vmem %s2049, 327 [#allocation3]
      %v3889 = vld [vmem:[%s3888] ss:$2 sm:$0xff]
      %s3890 = scalar_lea.vmem %s2049, 391 [#allocation3]
      %v3891 = vld [vmem:[%s3890] ss:$2 sm:$0xff]
      %s3892 = scalar_lea.vmem %s2049, 455 [#allocation3]
      %v3893 = vld [vmem:[%s3892] ss:$2 sm:$0xff]
      %s3894 = scalar_lea.vmem %s2049, 583 [#allocation3]
      %v3895 = vld [vmem:[%s3894] ss:$2 sm:$0xff]
      %s3896 = scalar_lea.vmem %s2049, 647 [#allocation3]
      %v3897 = vld [vmem:[%s3896] ss:$2 sm:$0xff]
      %s3898 = scalar_lea.vmem %s2049, 711 [#allocation3]
      %v3899 = vld [vmem:[%s3898] ss:$2 sm:$0xff]
      %s3900 = scalar_lea.vmem %s2049, 775 [#allocation3]
      %v3901 = vld [vmem:[%s3900] ss:$2 sm:$0xff]
      %s3902 = scalar_lea.vmem %s2049, 839 [#allocation3]
      %v3903 = vld [vmem:[%s3902] ss:$2 sm:$0xff]
      %s3904 = scalar_lea.vmem %s2049, 903 [#allocation3]
      %v3905 = vld [vmem:[%s3904] ss:$2 sm:$0xff]
      %s3906 = scalar_lea.vmem %s2049, 967 [#allocation3]
      %v3907 = vld [vmem:[%s3906] ss:$2 sm:$0xff]
      %s3908 = scalar_lea.vmem %s2049, 1031 [#allocation3]
      %v3909 = vld [vmem:[%s3908] ss:$2 sm:$0xff]
      %s3910 = scalar_lea.vmem %s2049, 1159 [#allocation3]
      %v3911 = vld [vmem:[%s3910] ss:$2 sm:$0xff]
      %s3912 = scalar_lea.vmem %s2049, 1223 [#allocation3]
      %v3913 = vld [vmem:[%s3912] ss:$2 sm:$0xff]
      %s3914 = scalar_lea.vmem %s2049, 1287 [#allocation3]
      %v3915 = vld [vmem:[%s3914] ss:$2 sm:$0xff]
      %s3916 = scalar_lea.vmem %s2049, 1351 [#allocation3]
      %v3917 = vld [vmem:[%s3916] ss:$2 sm:$0xff]
      %s3918 = scalar_lea.vmem %s2049, 1415 [#allocation3]
      %v3919 = vld [vmem:[%s3918] ss:$2 sm:$0xff]
      %s3920 = scalar_lea.vmem %s2049, 1479 [#allocation3]
      %v3921 = vld [vmem:[%s3920] ss:$2 sm:$0xff]
      %s3922 = scalar_lea.vmem %s2049, 1543 [#allocation3]
      %v3923 = vld [vmem:[%s3922] ss:$2 sm:$0xff]
      %s3924 = scalar_lea.vmem %s2049, 1607 [#allocation3]
      %v3925 = vld [vmem:[%s3924] ss:$2 sm:$0xff]
      %s3926 = scalar_lea.vmem %s2049, 1735 [#allocation3]
      %v3927 = vld [vmem:[%s3926] ss:$2 sm:$0xff]
      %s3928 = scalar_lea.vmem %s2049, 1799 [#allocation3]
      %v3929 = vld [vmem:[%s3928] ss:$2 sm:$0xff]
      %s3930 = scalar_lea.vmem %s2049, 1863 [#allocation3]
      %v3931 = vld [vmem:[%s3930] ss:$2 sm:$0xff]
      %s3932 = scalar_lea.vmem %s2049, 1927 [#allocation3]
      %v3933 = vld [vmem:[%s3932] ss:$2 sm:$0xff]
      %s3934 = scalar_lea.vmem %s2049, 1991 [#allocation3]
      %v3935 = vld [vmem:[%s3934] ss:$2 sm:$0xff]
      %s3936 = scalar_lea.vmem %s2049, 2055 [#allocation3]
      %v3937 = vld [vmem:[%s3936] ss:$2 sm:$0xff]
      %s3938 = scalar_lea.vmem %s2049, 2119 [#allocation3]
      %v3939 = vld [vmem:[%s3938] ss:$2 sm:$0xff]
      %s3940 = scalar_lea.vmem %s2049, 2183 [#allocation3]
      %v3941 = vld [vmem:[%s3940] ss:$2 sm:$0xff]
      %v3942 = vld [vmem:[%s5 + $0x3] sm:$0x1]
      %v3943 = vlaneseq
      %v3944 = vshrl.u32 %v3943, 7
      %v3945 = vsub.s32 0, %v3944
      %v3946 = vrot.slane %v3942, %v3945
      %v3947 = vmul.f32 %v3879, %v3946
      %v3948 = vmul.f32 %v3881, %v3946
      %v3949 = vmul.f32 %v3883, %v3946
      %v3950 = vmul.f32 %v3885, %v3946
      %v3951 = vmul.f32 %v3887, %v3946
      %v3952 = vmul.f32 %v3889, %v3946
      %v3953 = vmul.f32 %v3891, %v3946
      %v3954 = vmul.f32 %v3893, %v3946
      %v3955 = vmul.f32 %v3895, %v3946
      %v3956 = vmul.f32 %v3897, %v3946
      %v3957 = vmul.f32 %v3899, %v3946
      %v3958 = vmul.f32 %v3901, %v3946
      %v3959 = vmul.f32 %v3903, %v3946
      %v3960 = vmul.f32 %v3905, %v3946
      %v3961 = vmul.f32 %v3907, %v3946
      %v3962 = vmul.f32 %v3909, %v3946
      %v3963 = vmul.f32 %v3911, %v3946
      %v3964 = vmul.f32 %v3913, %v3946
      %v3965 = vmul.f32 %v3915, %v3946
      %v3966 = vmul.f32 %v3917, %v3946
      %v3967 = vmul.f32 %v3919, %v3946
      %v3968 = vmul.f32 %v3921, %v3946
      %v3969 = vmul.f32 %v3923, %v3946
      %v3970 = vmul.f32 %v3925, %v3946
      %v3971 = vmul.f32 %v3927, %v3946
      %v3972 = vmul.f32 %v3929, %v3946
      %v3973 = vmul.f32 %v3931, %v3946
      %v3974 = vmul.f32 %v3933, %v3946
      %v3975 = vmul.f32 %v3935, %v3946
      %v3976 = vmul.f32 %v3937, %v3946
      %v3977 = vmul.f32 %v3939, %v3946
      %v3978 = vmul.f32 %v3941, %v3946
      %v3979 = vadd.f32 %v3846, %v3947
      %v3980 = vadd.f32 %v3847, %v3948
      %v3981 = vadd.f32 %v3848, %v3949
      %v3982 = vadd.f32 %v3849, %v3950
      %v3983 = vadd.f32 %v3850, %v3951
      %v3984 = vadd.f32 %v3851, %v3952
      %v3985 = vadd.f32 %v3852, %v3953
      %v3986 = vadd.f32 %v3853, %v3954
      %v3987 = vadd.f32 %v3854, %v3955
      %v3988 = vadd.f32 %v3855, %v3956
      %v3989 = vadd.f32 %v3856, %v3957
      %v3990 = vadd.f32 %v3857, %v3958
      %v3991 = vadd.f32 %v3858, %v3959
      %v3992 = vadd.f32 %v3859, %v3960
      %v3993 = vadd.f32 %v3860, %v3961
      %v3994 = vadd.f32 %v3861, %v3962
      %v3995 = vadd.f32 %v3862, %v3963
      %v3996 = vadd.f32 %v3863, %v3964
      %v3997 = vadd.f32 %v3864, %v3965
      %v3998 = vadd.f32 %v3865, %v3966
      %v3999 = vadd.f32 %v3866, %v3967
      %v4000 = vadd.f32 %v3867, %v3968
      %v4001 = vadd.f32 %v3868, %v3969
      %v4002 = vadd.f32 %v3869, %v3970
      %v4003 = vadd.f32 %v3870, %v3971
      %v4004 = vadd.f32 %v3871, %v3972
      %v4005 = vadd.f32 %v3872, %v3973
      %v4006 = vadd.f32 %v3873, %v3974
      %v4007 = vadd.f32 %v3874, %v3975
      %v4008 = vadd.f32 %v3875, %v3976
      %v4009 = vadd.f32 %v3876, %v3977
      %v4010 = vadd.f32 %v3877, %v3978
      %s4011 = scalar_lea.vmem %s2049, 8 [#allocation3]
      %v4012 = vld [vmem:[%s4011] ss:$2 sm:$0xff]
      %s4013 = scalar_lea.vmem %s2049, 72 [#allocation3]
      %v4014 = vld [vmem:[%s4013] ss:$2 sm:$0xff]
      %s4015 = scalar_lea.vmem %s2049, 136 [#allocation3]
      %v4016 = vld [vmem:[%s4015] ss:$2 sm:$0xff]
      %s4017 = scalar_lea.vmem %s2049, 200 [#allocation3]
      %v4018 = vld [vmem:[%s4017] ss:$2 sm:$0xff]
      %s4019 = scalar_lea.vmem %s2049, 264 [#allocation3]
      %v4020 = vld [vmem:[%s4019] ss:$2 sm:$0xff]
      %s4021 = scalar_lea.vmem %s2049, 328 [#allocation3]
      %v4022 = vld [vmem:[%s4021] ss:$2 sm:$0xff]
      %s4023 = scalar_lea.vmem %s2049, 392 [#allocation3]
      %v4024 = vld [vmem:[%s4023] ss:$2 sm:$0xff]
      %s4025 = scalar_lea.vmem %s2049, 456 [#allocation3]
      %v4026 = vld [vmem:[%s4025] ss:$2 sm:$0xff]
      %s4027 = scalar_lea.vmem %s2049, 584 [#allocation3]
      %v4028 = vld [vmem:[%s4027] ss:$2 sm:$0xff]
      %s4029 = scalar_lea.vmem %s2049, 648 [#allocation3]
      %v4030 = vld [vmem:[%s4029] ss:$2 sm:$0xff]
      %s4031 = scalar_lea.vmem %s2049, 712 [#allocation3]
      %v4032 = vld [vmem:[%s4031] ss:$2 sm:$0xff]
      %s4033 = scalar_lea.vmem %s2049, 776 [#allocation3]
      %v4034 = vld [vmem:[%s4033] ss:$2 sm:$0xff]
      %s4035 = scalar_lea.vmem %s2049, 840 [#allocation3]
      %v4036 = vld [vmem:[%s4035] ss:$2 sm:$0xff]
      %s4037 = scalar_lea.vmem %s2049, 904 [#allocation3]
      %v4038 = vld [vmem:[%s4037] ss:$2 sm:$0xff]
      %s4039 = scalar_lea.vmem %s2049, 968 [#allocation3]
      %v4040 = vld [vmem:[%s4039] ss:$2 sm:$0xff]
      %s4041 = scalar_lea.vmem %s2049, 1032 [#allocation3]
      %v4042 = vld [vmem:[%s4041] ss:$2 sm:$0xff]
      %s4043 = scalar_lea.vmem %s2049, 1160 [#allocation3]
      %v4044 = vld [vmem:[%s4043] ss:$2 sm:$0xff]
      %s4045 = scalar_lea.vmem %s2049, 1224 [#allocation3]
      %v4046 = vld [vmem:[%s4045] ss:$2 sm:$0xff]
      %s4047 = scalar_lea.vmem %s2049, 1288 [#allocation3]
      %v4048 = vld [vmem:[%s4047] ss:$2 sm:$0xff]
      %s4049 = scalar_lea.vmem %s2049, 1352 [#allocation3]
      %v4050 = vld [vmem:[%s4049] ss:$2 sm:$0xff]
      %s4051 = scalar_lea.vmem %s2049, 1416 [#allocation3]
      %v4052 = vld [vmem:[%s4051] ss:$2 sm:$0xff]
      %s4053 = scalar_lea.vmem %s2049, 1480 [#allocation3]
      %v4054 = vld [vmem:[%s4053] ss:$2 sm:$0xff]
      %s4055 = scalar_lea.vmem %s2049, 1544 [#allocation3]
      %v4056 = vld [vmem:[%s4055] ss:$2 sm:$0xff]
      %s4057 = scalar_lea.vmem %s2049, 1608 [#allocation3]
      %v4058 = vld [vmem:[%s4057] ss:$2 sm:$0xff]
      %s4059 = scalar_lea.vmem %s2049, 1736 [#allocation3]
      %v4060 = vld [vmem:[%s4059] ss:$2 sm:$0xff]
      %s4061 = scalar_lea.vmem %s2049, 1800 [#allocation3]
      %v4062 = vld [vmem:[%s4061] ss:$2 sm:$0xff]
      %s4063 = scalar_lea.vmem %s2049, 1864 [#allocation3]
      %v4064 = vld [vmem:[%s4063] ss:$2 sm:$0xff]
      %s4065 = scalar_lea.vmem %s2049, 1928 [#allocation3]
      %v4066 = vld [vmem:[%s4065] ss:$2 sm:$0xff]
      %s4067 = scalar_lea.vmem %s2049, 1992 [#allocation3]
      %v4068 = vld [vmem:[%s4067] ss:$2 sm:$0xff]
      %s4069 = scalar_lea.vmem %s2049, 2056 [#allocation3]
      %v4070 = vld [vmem:[%s4069] ss:$2 sm:$0xff]
      %s4071 = scalar_lea.vmem %s2049, 2120 [#allocation3]
      %v4072 = vld [vmem:[%s4071] ss:$2 sm:$0xff]
      %s4073 = scalar_lea.vmem %s2049, 2184 [#allocation3]
      %v4074 = vld [vmem:[%s4073] ss:$2 sm:$0xff]
      %v4075 = vld [vmem:[%s5 + $0x4] sm:$0x1]
      %v4076 = vlaneseq
      %v4077 = vshrl.u32 %v4076, 7
      %v4078 = vsub.s32 0, %v4077
      %v4079 = vrot.slane %v4075, %v4078
      %v4080 = vmul.f32 %v4012, %v4079
      %v4081 = vmul.f32 %v4014, %v4079
      %v4082 = vmul.f32 %v4016, %v4079
      %v4083 = vmul.f32 %v4018, %v4079
      %v4084 = vmul.f32 %v4020, %v4079
      %v4085 = vmul.f32 %v4022, %v4079
      %v4086 = vmul.f32 %v4024, %v4079
      %v4087 = vmul.f32 %v4026, %v4079
      %v4088 = vmul.f32 %v4028, %v4079
      %v4089 = vmul.f32 %v4030, %v4079
      %v4090 = vmul.f32 %v4032, %v4079
      %v4091 = vmul.f32 %v4034, %v4079
      %v4092 = vmul.f32 %v4036, %v4079
      %v4093 = vmul.f32 %v4038, %v4079
      %v4094 = vmul.f32 %v4040, %v4079
      %v4095 = vmul.f32 %v4042, %v4079
      %v4096 = vmul.f32 %v4044, %v4079
      %v4097 = vmul.f32 %v4046, %v4079
      %v4098 = vmul.f32 %v4048, %v4079
      %v4099 = vmul.f32 %v4050, %v4079
      %v4100 = vmul.f32 %v4052, %v4079
      %v4101 = vmul.f32 %v4054, %v4079
      %v4102 = vmul.f32 %v4056, %v4079
      %v4103 = vmul.f32 %v4058, %v4079
      %v4104 = vmul.f32 %v4060, %v4079
      %v4105 = vmul.f32 %v4062, %v4079
      %v4106 = vmul.f32 %v4064, %v4079
      %v4107 = vmul.f32 %v4066, %v4079
      %v4108 = vmul.f32 %v4068, %v4079
      %v4109 = vmul.f32 %v4070, %v4079
      %v4110 = vmul.f32 %v4072, %v4079
      %v4111 = vmul.f32 %v4074, %v4079
      %v4112 = vadd.f32 %v3979, %v4080
      %v4113 = vadd.f32 %v3980, %v4081
      %v4114 = vadd.f32 %v3981, %v4082
      %v4115 = vadd.f32 %v3982, %v4083
      %v4116 = vadd.f32 %v3983, %v4084
      %v4117 = vadd.f32 %v3984, %v4085
      %v4118 = vadd.f32 %v3985, %v4086
      %v4119 = vadd.f32 %v3986, %v4087
      %v4120 = vadd.f32 %v3987, %v4088
      %v4121 = vadd.f32 %v3988, %v4089
      %v4122 = vadd.f32 %v3989, %v4090
      %v4123 = vadd.f32 %v3990, %v4091
      %v4124 = vadd.f32 %v3991, %v4092
      %v4125 = vadd.f32 %v3992, %v4093
      %v4126 = vadd.f32 %v3993, %v4094
      %v4127 = vadd.f32 %v3994, %v4095
      %v4128 = vadd.f32 %v3995, %v4096
      %v4129 = vadd.f32 %v3996, %v4097
      %v4130 = vadd.f32 %v3997, %v4098
      %v4131 = vadd.f32 %v3998, %v4099
      %v4132 = vadd.f32 %v3999, %v4100
      %v4133 = vadd.f32 %v4000, %v4101
      %v4134 = vadd.f32 %v4001, %v4102
      %v4135 = vadd.f32 %v4002, %v4103
      %v4136 = vadd.f32 %v4003, %v4104
      %v4137 = vadd.f32 %v4004, %v4105
      %v4138 = vadd.f32 %v4005, %v4106
      %v4139 = vadd.f32 %v4006, %v4107
      %v4140 = vadd.f32 %v4007, %v4108
      %v4141 = vadd.f32 %v4008, %v4109
      %v4142 = vadd.f32 %v4009, %v4110
      %v4143 = vadd.f32 %v4010, %v4111
      %s4144 = scalar_lea.vmem %s2049, 9 [#allocation3]
      %v4145 = vld [vmem:[%s4144] ss:$2 sm:$0xff]
      %s4146 = scalar_lea.vmem %s2049, 73 [#allocation3]
      %v4147 = vld [vmem:[%s4146] ss:$2 sm:$0xff]
      %s4148 = scalar_lea.vmem %s2049, 137 [#allocation3]
      %v4149 = vld [vmem:[%s4148] ss:$2 sm:$0xff]
      %s4150 = scalar_lea.vmem %s2049, 201 [#allocation3]
      %v4151 = vld [vmem:[%s4150] ss:$2 sm:$0xff]
      %s4152 = scalar_lea.vmem %s2049, 265 [#allocation3]
      %v4153 = vld [vmem:[%s4152] ss:$2 sm:$0xff]
      %s4154 = scalar_lea.vmem %s2049, 329 [#allocation3]
      %v4155 = vld [vmem:[%s4154] ss:$2 sm:$0xff]
      %s4156 = scalar_lea.vmem %s2049, 393 [#allocation3]
      %v4157 = vld [vmem:[%s4156] ss:$2 sm:$0xff]
      %s4158 = scalar_lea.vmem %s2049, 457 [#allocation3]
      %v4159 = vld [vmem:[%s4158] ss:$2 sm:$0xff]
      %s4160 = scalar_lea.vmem %s2049, 585 [#allocation3]
      %v4161 = vld [vmem:[%s4160] ss:$2 sm:$0xff]
      %s4162 = scalar_lea.vmem %s2049, 649 [#allocation3]
      %v4163 = vld [vmem:[%s4162] ss:$2 sm:$0xff]
      %s4164 = scalar_lea.vmem %s2049, 713 [#allocation3]
      %v4165 = vld [vmem:[%s4164] ss:$2 sm:$0xff]
      %s4166 = scalar_lea.vmem %s2049, 777 [#allocation3]
      %v4167 = vld [vmem:[%s4166] ss:$2 sm:$0xff]
      %s4168 = scalar_lea.vmem %s2049, 841 [#allocation3]
      %v4169 = vld [vmem:[%s4168] ss:$2 sm:$0xff]
      %s4170 = scalar_lea.vmem %s2049, 905 [#allocation3]
      %v4171 = vld [vmem:[%s4170] ss:$2 sm:$0xff]
      %s4172 = scalar_lea.vmem %s2049, 969 [#allocation3]
      %v4173 = vld [vmem:[%s4172] ss:$2 sm:$0xff]
      %s4174 = scalar_lea.vmem %s2049, 1033 [#allocation3]
      %v4175 = vld [vmem:[%s4174] ss:$2 sm:$0xff]
      %s4176 = scalar_lea.vmem %s2049, 1161 [#allocation3]
      %v4177 = vld [vmem:[%s4176] ss:$2 sm:$0xff]
      %s4178 = scalar_lea.vmem %s2049, 1225 [#allocation3]
      %v4179 = vld [vmem:[%s4178] ss:$2 sm:$0xff]
      %s4180 = scalar_lea.vmem %s2049, 1289 [#allocation3]
      %v4181 = vld [vmem:[%s4180] ss:$2 sm:$0xff]
      %s4182 = scalar_lea.vmem %s2049, 1353 [#allocation3]
      %v4183 = vld [vmem:[%s4182] ss:$2 sm:$0xff]
      %s4184 = scalar_lea.vmem %s2049, 1417 [#allocation3]
      %v4185 = vld [vmem:[%s4184] ss:$2 sm:$0xff]
      %s4186 = scalar_lea.vmem %s2049, 1481 [#allocation3]
      %v4187 = vld [vmem:[%s4186] ss:$2 sm:$0xff]
      %s4188 = scalar_lea.vmem %s2049, 1545 [#allocation3]
      %v4189 = vld [vmem:[%s4188] ss:$2 sm:$0xff]
      %s4190 = scalar_lea.vmem %s2049, 1609 [#allocation3]
      %v4191 = vld [vmem:[%s4190] ss:$2 sm:$0xff]
      %s4192 = scalar_lea.vmem %s2049, 1737 [#allocation3]
      %v4193 = vld [vmem:[%s4192] ss:$2 sm:$0xff]
      %s4194 = scalar_lea.vmem %s2049, 1801 [#allocation3]
      %v4195 = vld [vmem:[%s4194] ss:$2 sm:$0xff]
      %s4196 = scalar_lea.vmem %s2049, 1865 [#allocation3]
      %v4197 = vld [vmem:[%s4196] ss:$2 sm:$0xff]
      %s4198 = scalar_lea.vmem %s2049, 1929 [#allocation3]
      %v4199 = vld [vmem:[%s4198] ss:$2 sm:$0xff]
      %s4200 = scalar_lea.vmem %s2049, 1993 [#allocation3]
      %v4201 = vld [vmem:[%s4200] ss:$2 sm:$0xff]
      %s4202 = scalar_lea.vmem %s2049, 2057 [#allocation3]
      %v4203 = vld [vmem:[%s4202] ss:$2 sm:$0xff]
      %s4204 = scalar_lea.vmem %s2049, 2121 [#allocation3]
      %v4205 = vld [vmem:[%s4204] ss:$2 sm:$0xff]
      %s4206 = scalar_lea.vmem %s2049, 2185 [#allocation3]
      %v4207 = vld [vmem:[%s4206] ss:$2 sm:$0xff]
      %v4208 = vld [vmem:[%s5 + $0x5] sm:$0x1]
      %v4209 = vlaneseq
      %v4210 = vshrl.u32 %v4209, 7
      %v4211 = vsub.s32 0, %v4210
      %v4212 = vrot.slane %v4208, %v4211
      %v4213 = vmul.f32 %v4145, %v4212
      %v4214 = vmul.f32 %v4147, %v4212
      %v4215 = vmul.f32 %v4149, %v4212
      %v4216 = vmul.f32 %v4151, %v4212
      %v4217 = vmul.f32 %v4153, %v4212
      %v4218 = vmul.f32 %v4155, %v4212
      %v4219 = vmul.f32 %v4157, %v4212
      %v4220 = vmul.f32 %v4159, %v4212
      %v4221 = vmul.f32 %v4161, %v4212
      %v4222 = vmul.f32 %v4163, %v4212
      %v4223 = vmul.f32 %v4165, %v4212
      %v4224 = vmul.f32 %v4167, %v4212
      %v4225 = vmul.f32 %v4169, %v4212
      %v4226 = vmul.f32 %v4171, %v4212
      %v4227 = vmul.f32 %v4173, %v4212
      %v4228 = vmul.f32 %v4175, %v4212
      %v4229 = vmul.f32 %v4177, %v4212
      %v4230 = vmul.f32 %v4179, %v4212
      %v4231 = vmul.f32 %v4181, %v4212
      %v4232 = vmul.f32 %v4183, %v4212
      %v4233 = vmul.f32 %v4185, %v4212
      %v4234 = vmul.f32 %v4187, %v4212
      %v4235 = vmul.f32 %v4189, %v4212
      %v4236 = vmul.f32 %v4191, %v4212
      %v4237 = vmul.f32 %v4193, %v4212
      %v4238 = vmul.f32 %v4195, %v4212
      %v4239 = vmul.f32 %v4197, %v4212
      %v4240 = vmul.f32 %v4199, %v4212
      %v4241 = vmul.f32 %v4201, %v4212
      %v4242 = vmul.f32 %v4203, %v4212
      %v4243 = vmul.f32 %v4205, %v4212
      %v4244 = vmul.f32 %v4207, %v4212
      %v4245 = vadd.f32 %v4112, %v4213
      %v4246 = vadd.f32 %v4113, %v4214
      %v4247 = vadd.f32 %v4114, %v4215
      %v4248 = vadd.f32 %v4115, %v4216
      %v4249 = vadd.f32 %v4116, %v4217
      %v4250 = vadd.f32 %v4117, %v4218
      %v4251 = vadd.f32 %v4118, %v4219
      %v4252 = vadd.f32 %v4119, %v4220
      %v4253 = vadd.f32 %v4120, %v4221
      %v4254 = vadd.f32 %v4121, %v4222
      %v4255 = vadd.f32 %v4122, %v4223
      %v4256 = vadd.f32 %v4123, %v4224
      %v4257 = vadd.f32 %v4124, %v4225
      %v4258 = vadd.f32 %v4125, %v4226
      %v4259 = vadd.f32 %v4126, %v4227
      %v4260 = vadd.f32 %v4127, %v4228
      %v4261 = vadd.f32 %v4128, %v4229
      %v4262 = vadd.f32 %v4129, %v4230
      %v4263 = vadd.f32 %v4130, %v4231
      %v4264 = vadd.f32 %v4131, %v4232
      %v4265 = vadd.f32 %v4132, %v4233
      %v4266 = vadd.f32 %v4133, %v4234
      %v4267 = vadd.f32 %v4134, %v4235
      %v4268 = vadd.f32 %v4135, %v4236
      %v4269 = vadd.f32 %v4136, %v4237
      %v4270 = vadd.f32 %v4137, %v4238
      %v4271 = vadd.f32 %v4138, %v4239
      %v4272 = vadd.f32 %v4139, %v4240
      %v4273 = vadd.f32 %v4140, %v4241
      %v4274 = vadd.f32 %v4141, %v4242
      %v4275 = vadd.f32 %v4142, %v4243
      %v4276 = vadd.f32 %v4143, %v4244
      %s4277 = scalar_lea.vmem [#allocation3], 64
      %s4278 = scalar_lea.vmem %s4277, 7 [#allocation3]
      %v4279 = vld [vmem:[%s4278] ss:$2 sm:$0xff]
      %s4280 = scalar_lea.vmem %s4277, 71 [#allocation3]
      %v4281 = vld [vmem:[%s4280] ss:$2 sm:$0xff]
      %s4282 = scalar_lea.vmem %s4277, 135 [#allocation3]
      %v4283 = vld [vmem:[%s4282] ss:$2 sm:$0xff]
      %s4284 = scalar_lea.vmem %s4277, 199 [#allocation3]
      %v4285 = vld [vmem:[%s4284] ss:$2 sm:$0xff]
      %s4286 = scalar_lea.vmem %s4277, 263 [#allocation3]
      %v4287 = vld [vmem:[%s4286] ss:$2 sm:$0xff]
      %s4288 = scalar_lea.vmem %s4277, 327 [#allocation3]
      %v4289 = vld [vmem:[%s4288] ss:$2 sm:$0xff]
      %s4290 = scalar_lea.vmem %s4277, 391 [#allocation3]
      %v4291 = vld [vmem:[%s4290] ss:$2 sm:$0xff]
      %s4292 = scalar_lea.vmem %s4277, 455 [#allocation3]
      %v4293 = vld [vmem:[%s4292] ss:$2 sm:$0xff]
      %s4294 = scalar_lea.vmem %s4277, 583 [#allocation3]
      %v4295 = vld [vmem:[%s4294] ss:$2 sm:$0xff]
      %s4296 = scalar_lea.vmem %s4277, 647 [#allocation3]
      %v4297 = vld [vmem:[%s4296] ss:$2 sm:$0xff]
      %s4298 = scalar_lea.vmem %s4277, 711 [#allocation3]
      %v4299 = vld [vmem:[%s4298] ss:$2 sm:$0xff]
      %s4300 = scalar_lea.vmem %s4277, 775 [#allocation3]
      %v4301 = vld [vmem:[%s4300] ss:$2 sm:$0xff]
      %s4302 = scalar_lea.vmem %s4277, 839 [#allocation3]
      %v4303 = vld [vmem:[%s4302] ss:$2 sm:$0xff]
      %s4304 = scalar_lea.vmem %s4277, 903 [#allocation3]
      %v4305 = vld [vmem:[%s4304] ss:$2 sm:$0xff]
      %s4306 = scalar_lea.vmem %s4277, 967 [#allocation3]
      %v4307 = vld [vmem:[%s4306] ss:$2 sm:$0xff]
      %s4308 = scalar_lea.vmem %s4277, 1031 [#allocation3]
      %v4309 = vld [vmem:[%s4308] ss:$2 sm:$0xff]
      %s4310 = scalar_lea.vmem %s4277, 1159 [#allocation3]
      %v4311 = vld [vmem:[%s4310] ss:$2 sm:$0xff]
      %s4312 = scalar_lea.vmem %s4277, 1223 [#allocation3]
      %v4313 = vld [vmem:[%s4312] ss:$2 sm:$0xff]
      %s4314 = scalar_lea.vmem %s4277, 1287 [#allocation3]
      %v4315 = vld [vmem:[%s4314] ss:$2 sm:$0xff]
      %s4316 = scalar_lea.vmem %s4277, 1351 [#allocation3]
      %v4317 = vld [vmem:[%s4316] ss:$2 sm:$0xff]
      %s4318 = scalar_lea.vmem %s4277, 1415 [#allocation3]
      %v4319 = vld [vmem:[%s4318] ss:$2 sm:$0xff]
      %s4320 = scalar_lea.vmem %s4277, 1479 [#allocation3]
      %v4321 = vld [vmem:[%s4320] ss:$2 sm:$0xff]
      %s4322 = scalar_lea.vmem %s4277, 1543 [#allocation3]
      %v4323 = vld [vmem:[%s4322] ss:$2 sm:$0xff]
      %s4324 = scalar_lea.vmem %s4277, 1607 [#allocation3]
      %v4325 = vld [vmem:[%s4324] ss:$2 sm:$0xff]
      %s4326 = scalar_lea.vmem %s4277, 1735 [#allocation3]
      %v4327 = vld [vmem:[%s4326] ss:$2 sm:$0xff]
      %s4328 = scalar_lea.vmem %s4277, 1799 [#allocation3]
      %v4329 = vld [vmem:[%s4328] ss:$2 sm:$0xff]
      %s4330 = scalar_lea.vmem %s4277, 1863 [#allocation3]
      %v4331 = vld [vmem:[%s4330] ss:$2 sm:$0xff]
      %s4332 = scalar_lea.vmem %s4277, 1927 [#allocation3]
      %v4333 = vld [vmem:[%s4332] ss:$2 sm:$0xff]
      %s4334 = scalar_lea.vmem %s4277, 1991 [#allocation3]
      %v4335 = vld [vmem:[%s4334] ss:$2 sm:$0xff]
      %s4336 = scalar_lea.vmem %s4277, 2055 [#allocation3]
      %v4337 = vld [vmem:[%s4336] ss:$2 sm:$0xff]
      %s4338 = scalar_lea.vmem %s4277, 2119 [#allocation3]
      %v4339 = vld [vmem:[%s4338] ss:$2 sm:$0xff]
      %s4340 = scalar_lea.vmem %s4277, 2183 [#allocation3]
      %v4341 = vld [vmem:[%s4340] ss:$2 sm:$0xff]
      %v4342 = vld [vmem:[%s5 + $0x6] sm:$0x1]
      %v4343 = vlaneseq
      %v4344 = vshrl.u32 %v4343, 7
      %v4345 = vsub.s32 0, %v4344
      %v4346 = vrot.slane %v4342, %v4345
      %v4347 = vmul.f32 %v4279, %v4346
      %v4348 = vmul.f32 %v4281, %v4346
      %v4349 = vmul.f32 %v4283, %v4346
      %v4350 = vmul.f32 %v4285, %v4346
      %v4351 = vmul.f32 %v4287, %v4346
      %v4352 = vmul.f32 %v4289, %v4346
      %v4353 = vmul.f32 %v4291, %v4346
      %v4354 = vmul.f32 %v4293, %v4346
      %v4355 = vmul.f32 %v4295, %v4346
      %v4356 = vmul.f32 %v4297, %v4346
      %v4357 = vmul.f32 %v4299, %v4346
      %v4358 = vmul.f32 %v4301, %v4346
      %v4359 = vmul.f32 %v4303, %v4346
      %v4360 = vmul.f32 %v4305, %v4346
      %v4361 = vmul.f32 %v4307, %v4346
      %v4362 = vmul.f32 %v4309, %v4346
      %v4363 = vmul.f32 %v4311, %v4346
      %v4364 = vmul.f32 %v4313, %v4346
      %v4365 = vmul.f32 %v4315, %v4346
      %v4366 = vmul.f32 %v4317, %v4346
      %v4367 = vmul.f32 %v4319, %v4346
      %v4368 = vmul.f32 %v4321, %v4346
      %v4369 = vmul.f32 %v4323, %v4346
      %v4370 = vmul.f32 %v4325, %v4346
      %v4371 = vmul.f32 %v4327, %v4346
      %v4372 = vmul.f32 %v4329, %v4346
      %v4373 = vmul.f32 %v4331, %v4346
      %v4374 = vmul.f32 %v4333, %v4346
      %v4375 = vmul.f32 %v4335, %v4346
      %v4376 = vmul.f32 %v4337, %v4346
      %v4377 = vmul.f32 %v4339, %v4346
      %v4378 = vmul.f32 %v4341, %v4346
      %v4379 = vadd.f32 %v4245, %v4347
      %v4380 = vadd.f32 %v4246, %v4348
      %v4381 = vadd.f32 %v4247, %v4349
      %v4382 = vadd.f32 %v4248, %v4350
      %v4383 = vadd.f32 %v4249, %v4351
      %v4384 = vadd.f32 %v4250, %v4352
      %v4385 = vadd.f32 %v4251, %v4353
      %v4386 = vadd.f32 %v4252, %v4354
      %v4387 = vadd.f32 %v4253, %v4355
      %v4388 = vadd.f32 %v4254, %v4356
      %v4389 = vadd.f32 %v4255, %v4357
      %v4390 = vadd.f32 %v4256, %v4358
      %v4391 = vadd.f32 %v4257, %v4359
      %v4392 = vadd.f32 %v4258, %v4360
      %v4393 = vadd.f32 %v4259, %v4361
      %v4394 = vadd.f32 %v4260, %v4362
      %v4395 = vadd.f32 %v4261, %v4363
      %v4396 = vadd.f32 %v4262, %v4364
      %v4397 = vadd.f32 %v4263, %v4365
      %v4398 = vadd.f32 %v4264, %v4366
      %v4399 = vadd.f32 %v4265, %v4367
      %v4400 = vadd.f32 %v4266, %v4368
      %v4401 = vadd.f32 %v4267, %v4369
      %v4402 = vadd.f32 %v4268, %v4370
      %v4403 = vadd.f32 %v4269, %v4371
      %v4404 = vadd.f32 %v4270, %v4372
      %v4405 = vadd.f32 %v4271, %v4373
      %v4406 = vadd.f32 %v4272, %v4374
      %v4407 = vadd.f32 %v4273, %v4375
      %v4408 = vadd.f32 %v4274, %v4376
      %v4409 = vadd.f32 %v4275, %v4377
      %v4410 = vadd.f32 %v4276, %v4378
      %s4411 = scalar_lea.vmem %s4277, 8 [#allocation3]
      %v4412 = vld [vmem:[%s4411] ss:$2 sm:$0xff]
      %s4413 = scalar_lea.vmem %s4277, 72 [#allocation3]
      %v4414 = vld [vmem:[%s4413] ss:$2 sm:$0xff]
      %s4415 = scalar_lea.vmem %s4277, 136 [#allocation3]
      %v4416 = vld [vmem:[%s4415] ss:$2 sm:$0xff]
      %s4417 = scalar_lea.vmem %s4277, 200 [#allocation3]
      %v4418 = vld [vmem:[%s4417] ss:$2 sm:$0xff]
      %s4419 = scalar_lea.vmem %s4277, 264 [#allocation3]
      %v4420 = vld [vmem:[%s4419] ss:$2 sm:$0xff]
      %s4421 = scalar_lea.vmem %s4277, 328 [#allocation3]
      %v4422 = vld [vmem:[%s4421] ss:$2 sm:$0xff]
      %s4423 = scalar_lea.vmem %s4277, 392 [#allocation3]
      %v4424 = vld [vmem:[%s4423] ss:$2 sm:$0xff]
      %s4425 = scalar_lea.vmem %s4277, 456 [#allocation3]
      %v4426 = vld [vmem:[%s4425] ss:$2 sm:$0xff]
      %s4427 = scalar_lea.vmem %s4277, 584 [#allocation3]
      %v4428 = vld [vmem:[%s4427] ss:$2 sm:$0xff]
      %s4429 = scalar_lea.vmem %s4277, 648 [#allocation3]
      %v4430 = vld [vmem:[%s4429] ss:$2 sm:$0xff]
      %s4431 = scalar_lea.vmem %s4277, 712 [#allocation3]
      %v4432 = vld [vmem:[%s4431] ss:$2 sm:$0xff]
      %s4433 = scalar_lea.vmem %s4277, 776 [#allocation3]
      %v4434 = vld [vmem:[%s4433] ss:$2 sm:$0xff]
      %s4435 = scalar_lea.vmem %s4277, 840 [#allocation3]
      %v4436 = vld [vmem:[%s4435] ss:$2 sm:$0xff]
      %s4437 = scalar_lea.vmem %s4277, 904 [#allocation3]
      %v4438 = vld [vmem:[%s4437] ss:$2 sm:$0xff]
      %s4439 = scalar_lea.vmem %s4277, 968 [#allocation3]
      %v4440 = vld [vmem:[%s4439] ss:$2 sm:$0xff]
      %s4441 = scalar_lea.vmem %s4277, 1032 [#allocation3]
      %v4442 = vld [vmem:[%s4441] ss:$2 sm:$0xff]
      %s4443 = scalar_lea.vmem %s4277, 1160 [#allocation3]
      %v4444 = vld [vmem:[%s4443] ss:$2 sm:$0xff]
      %s4445 = scalar_lea.vmem %s4277, 1224 [#allocation3]
      %v4446 = vld [vmem:[%s4445] ss:$2 sm:$0xff]
      %s4447 = scalar_lea.vmem %s4277, 1288 [#allocation3]
      %v4448 = vld [vmem:[%s4447] ss:$2 sm:$0xff]
      %s4449 = scalar_lea.vmem %s4277, 1352 [#allocation3]
      %v4450 = vld [vmem:[%s4449] ss:$2 sm:$0xff]
      %s4451 = scalar_lea.vmem %s4277, 1416 [#allocation3]
      %v4452 = vld [vmem:[%s4451] ss:$2 sm:$0xff]
      %s4453 = scalar_lea.vmem %s4277, 1480 [#allocation3]
      %v4454 = vld [vmem:[%s4453] ss:$2 sm:$0xff]
      %s4455 = scalar_lea.vmem %s4277, 1544 [#allocation3]
      %v4456 = vld [vmem:[%s4455] ss:$2 sm:$0xff]
      %s4457 = scalar_lea.vmem %s4277, 1608 [#allocation3]
      %v4458 = vld [vmem:[%s4457] ss:$2 sm:$0xff]
      %s4459 = scalar_lea.vmem %s4277, 1736 [#allocation3]
      %v4460 = vld [vmem:[%s4459] ss:$2 sm:$0xff]
      %s4461 = scalar_lea.vmem %s4277, 1800 [#allocation3]
      %v4462 = vld [vmem:[%s4461] ss:$2 sm:$0xff]
      %s4463 = scalar_lea.vmem %s4277, 1864 [#allocation3]
      %v4464 = vld [vmem:[%s4463] ss:$2 sm:$0xff]
      %s4465 = scalar_lea.vmem %s4277, 1928 [#allocation3]
      %v4466 = vld [vmem:[%s4465] ss:$2 sm:$0xff]
      %s4467 = scalar_lea.vmem %s4277, 1992 [#allocation3]
      %v4468 = vld [vmem:[%s4467] ss:$2 sm:$0xff]
      %s4469 = scalar_lea.vmem %s4277, 2056 [#allocation3]
      %v4470 = vld [vmem:[%s4469] ss:$2 sm:$0xff]
      %s4471 = scalar_lea.vmem %s4277, 2120 [#allocation3]
      %v4472 = vld [vmem:[%s4471] ss:$2 sm:$0xff]
      %s4473 = scalar_lea.vmem %s4277, 2184 [#allocation3]
      %v4474 = vld [vmem:[%s4473] ss:$2 sm:$0xff]
      %v4475 = vld [vmem:[%s5 + $0x7] sm:$0x1]
      %v4476 = vlaneseq
      %v4477 = vshrl.u32 %v4476, 7
      %v4478 = vsub.s32 0, %v4477
      %v4479 = vrot.slane %v4475, %v4478
      %v4480 = vmul.f32 %v4412, %v4479
      %v4481 = vmul.f32 %v4414, %v4479
      %v4482 = vmul.f32 %v4416, %v4479
      %v4483 = vmul.f32 %v4418, %v4479
      %v4484 = vmul.f32 %v4420, %v4479
      %v4485 = vmul.f32 %v4422, %v4479
      %v4486 = vmul.f32 %v4424, %v4479
      %v4487 = vmul.f32 %v4426, %v4479
      %v4488 = vmul.f32 %v4428, %v4479
      %v4489 = vmul.f32 %v4430, %v4479
      %v4490 = vmul.f32 %v4432, %v4479
      %v4491 = vmul.f32 %v4434, %v4479
      %v4492 = vmul.f32 %v4436, %v4479
      %v4493 = vmul.f32 %v4438, %v4479
      %v4494 = vmul.f32 %v4440, %v4479
      %v4495 = vmul.f32 %v4442, %v4479
      %v4496 = vmul.f32 %v4444, %v4479
      %v4497 = vmul.f32 %v4446, %v4479
      %v4498 = vmul.f32 %v4448, %v4479
      %v4499 = vmul.f32 %v4450, %v4479
      %v4500 = vmul.f32 %v4452, %v4479
      %v4501 = vmul.f32 %v4454, %v4479
      %v4502 = vmul.f32 %v4456, %v4479
      %v4503 = vmul.f32 %v4458, %v4479
      %v4504 = vmul.f32 %v4460, %v4479
      %v4505 = vmul.f32 %v4462, %v4479
      %v4506 = vmul.f32 %v4464, %v4479
      %v4507 = vmul.f32 %v4466, %v4479
      %v4508 = vmul.f32 %v4468, %v4479
      %v4509 = vmul.f32 %v4470, %v4479
      %v4510 = vmul.f32 %v4472, %v4479
      %v4511 = vmul.f32 %v4474, %v4479
      %v4512 = vadd.f32 %v4379, %v4480
      %v4513 = vadd.f32 %v4380, %v4481
      %v4514 = vadd.f32 %v4381, %v4482
      %v4515 = vadd.f32 %v4382, %v4483
      %v4516 = vadd.f32 %v4383, %v4484
      %v4517 = vadd.f32 %v4384, %v4485
      %v4518 = vadd.f32 %v4385, %v4486
      %v4519 = vadd.f32 %v4386, %v4487
      %v4520 = vadd.f32 %v4387, %v4488
      %v4521 = vadd.f32 %v4388, %v4489
      %v4522 = vadd.f32 %v4389, %v4490
      %v4523 = vadd.f32 %v4390, %v4491
      %v4524 = vadd.f32 %v4391, %v4492
      %v4525 = vadd.f32 %v4392, %v4493
      %v4526 = vadd.f32 %v4393, %v4494
      %v4527 = vadd.f32 %v4394, %v4495
      %v4528 = vadd.f32 %v4395, %v4496
      %v4529 = vadd.f32 %v4396, %v4497
      %v4530 = vadd.f32 %v4397, %v4498
      %v4531 = vadd.f32 %v4398, %v4499
      %v4532 = vadd.f32 %v4399, %v4500
      %v4533 = vadd.f32 %v4400, %v4501
      %v4534 = vadd.f32 %v4401, %v4502
      %v4535 = vadd.f32 %v4402, %v4503
      %v4536 = vadd.f32 %v4403, %v4504
      %v4537 = vadd.f32 %v4404, %v4505
      %v4538 = vadd.f32 %v4405, %v4506
      %v4539 = vadd.f32 %v4406, %v4507
      %v4540 = vadd.f32 %v4407, %v4508
      %v4541 = vadd.f32 %v4408, %v4509
      %v4542 = vadd.f32 %v4409, %v4510
      %v4543 = vadd.f32 %v4410, %v4511
      %s4544 = scalar_lea.vmem %s4277, 9 [#allocation3]
      %v4545 = vld [vmem:[%s4544] ss:$2 sm:$0xff]
      %s4546 = scalar_lea.vmem %s4277, 73 [#allocation3]
      %v4547 = vld [vmem:[%s4546] ss:$2 sm:$0xff]
      %s4548 = scalar_lea.vmem %s4277, 137 [#allocation3]
      %v4549 = vld [vmem:[%s4548] ss:$2 sm:$0xff]
      %s4550 = scalar_lea.vmem %s4277, 201 [#allocation3]
      %v4551 = vld [vmem:[%s4550] ss:$2 sm:$0xff]
      %s4552 = scalar_lea.vmem %s4277, 265 [#allocation3]
      %v4553 = vld [vmem:[%s4552] ss:$2 sm:$0xff]
      %s4554 = scalar_lea.vmem %s4277, 329 [#allocation3]
      %v4555 = vld [vmem:[%s4554] ss:$2 sm:$0xff]
      %s4556 = scalar_lea.vmem %s4277, 393 [#allocation3]
      %v4557 = vld [vmem:[%s4556] ss:$2 sm:$0xff]
      %s4558 = scalar_lea.vmem %s4277, 457 [#allocation3]
      %v4559 = vld [vmem:[%s4558] ss:$2 sm:$0xff]
      %s4560 = scalar_lea.vmem %s4277, 585 [#allocation3]
      %v4561 = vld [vmem:[%s4560] ss:$2 sm:$0xff]
      %s4562 = scalar_lea.vmem %s4277, 649 [#allocation3]
      %v4563 = vld [vmem:[%s4562] ss:$2 sm:$0xff]
      %s4564 = scalar_lea.vmem %s4277, 713 [#allocation3]
      %v4565 = vld [vmem:[%s4564] ss:$2 sm:$0xff]
      %s4566 = scalar_lea.vmem %s4277, 777 [#allocation3]
      %v4567 = vld [vmem:[%s4566] ss:$2 sm:$0xff]
      %s4568 = scalar_lea.vmem %s4277, 841 [#allocation3]
      %v4569 = vld [vmem:[%s4568] ss:$2 sm:$0xff]
      %s4570 = scalar_lea.vmem %s4277, 905 [#allocation3]
      %v4571 = vld [vmem:[%s4570] ss:$2 sm:$0xff]
      %s4572 = scalar_lea.vmem %s4277, 969 [#allocation3]
      %v4573 = vld [vmem:[%s4572] ss:$2 sm:$0xff]
      %s4574 = scalar_lea.vmem %s4277, 1033 [#allocation3]
      %v4575 = vld [vmem:[%s4574] ss:$2 sm:$0xff]
      %s4576 = scalar_lea.vmem %s4277, 1161 [#allocation3]
      %v4577 = vld [vmem:[%s4576] ss:$2 sm:$0xff]
      %s4578 = scalar_lea.vmem %s4277, 1225 [#allocation3]
      %v4579 = vld [vmem:[%s4578] ss:$2 sm:$0xff]
      %s4580 = scalar_lea.vmem %s4277, 1289 [#allocation3]
      %v4581 = vld [vmem:[%s4580] ss:$2 sm:$0xff]
      %s4582 = scalar_lea.vmem %s4277, 1353 [#allocation3]
      %v4583 = vld [vmem:[%s4582] ss:$2 sm:$0xff]
      %s4584 = scalar_lea.vmem %s4277, 1417 [#allocation3]
      %v4585 = vld [vmem:[%s4584] ss:$2 sm:$0xff]
      %s4586 = scalar_lea.vmem %s4277, 1481 [#allocation3]
      %v4587 = vld [vmem:[%s4586] ss:$2 sm:$0xff]
      %s4588 = scalar_lea.vmem %s4277, 1545 [#allocation3]
      %v4589 = vld [vmem:[%s4588] ss:$2 sm:$0xff]
      %s4590 = scalar_lea.vmem %s4277, 1609 [#allocation3]
      %v4591 = vld [vmem:[%s4590] ss:$2 sm:$0xff]
      %s4592 = scalar_lea.vmem %s4277, 1737 [#allocation3]
      %v4593 = vld [vmem:[%s4592] ss:$2 sm:$0xff]
      %s4594 = scalar_lea.vmem %s4277, 1801 [#allocation3]
      %v4595 = vld [vmem:[%s4594] ss:$2 sm:$0xff]
      %s4596 = scalar_lea.vmem %s4277, 1865 [#allocation3]
      %v4597 = vld [vmem:[%s4596] ss:$2 sm:$0xff]
      %s4598 = scalar_lea.vmem %s4277, 1929 [#allocation3]
      %v4599 = vld [vmem:[%s4598] ss:$2 sm:$0xff]
      %s4600 = scalar_lea.vmem %s4277, 1993 [#allocation3]
      %v4601 = vld [vmem:[%s4600] ss:$2 sm:$0xff]
      %s4602 = scalar_lea.vmem %s4277, 2057 [#allocation3]
      %v4603 = vld [vmem:[%s4602] ss:$2 sm:$0xff]
      %s4604 = scalar_lea.vmem %s4277, 2121 [#allocation3]
      %v4605 = vld [vmem:[%s4604] ss:$2 sm:$0xff]
      %s4606 = scalar_lea.vmem %s4277, 2185 [#allocation3]
      %v4607 = vld [vmem:[%s4606] ss:$2 sm:$0xff]
      %v4608 = vld [vmem:[%s5 + $0x8] sm:$0x1]
      %v4609 = vlaneseq
      %v4610 = vshrl.u32 %v4609, 7
      %v4611 = vsub.s32 0, %v4610
      %v4612 = vrot.slane %v4608, %v4611
      %v4613 = vmul.f32 %v4545, %v4612
      %v4614 = vmul.f32 %v4547, %v4612
      %v4615 = vmul.f32 %v4549, %v4612
      %v4616 = vmul.f32 %v4551, %v4612
      %v4617 = vmul.f32 %v4553, %v4612
      %v4618 = vmul.f32 %v4555, %v4612
      %v4619 = vmul.f32 %v4557, %v4612
      %v4620 = vmul.f32 %v4559, %v4612
      %v4621 = vmul.f32 %v4561, %v4612
      %v4622 = vmul.f32 %v4563, %v4612
      %v4623 = vmul.f32 %v4565, %v4612
      %v4624 = vmul.f32 %v4567, %v4612
      %v4625 = vmul.f32 %v4569, %v4612
      %v4626 = vmul.f32 %v4571, %v4612
      %v4627 = vmul.f32 %v4573, %v4612
      %v4628 = vmul.f32 %v4575, %v4612
      %v4629 = vmul.f32 %v4577, %v4612
      %v4630 = vmul.f32 %v4579, %v4612
      %v4631 = vmul.f32 %v4581, %v4612
      %v4632 = vmul.f32 %v4583, %v4612
      %v4633 = vmul.f32 %v4585, %v4612
      %v4634 = vmul.f32 %v4587, %v4612
      %v4635 = vmul.f32 %v4589, %v4612
      %v4636 = vmul.f32 %v4591, %v4612
      %v4637 = vmul.f32 %v4593, %v4612
      %v4638 = vmul.f32 %v4595, %v4612
      %v4639 = vmul.f32 %v4597, %v4612
      %v4640 = vmul.f32 %v4599, %v4612
      %v4641 = vmul.f32 %v4601, %v4612
      %v4642 = vmul.f32 %v4603, %v4612
      %v4643 = vmul.f32 %v4605, %v4612
      %v4644 = vmul.f32 %v4607, %v4612
      %v4645 = vadd.f32 %v4512, %v4613
      %v4646 = vadd.f32 %v4513, %v4614
      %v4647 = vadd.f32 %v4514, %v4615
      %v4648 = vadd.f32 %v4515, %v4616
      %v4649 = vadd.f32 %v4516, %v4617
      %v4650 = vadd.f32 %v4517, %v4618
      %v4651 = vadd.f32 %v4518, %v4619
      %v4652 = vadd.f32 %v4519, %v4620
      %v4653 = vadd.f32 %v4520, %v4621
      %v4654 = vadd.f32 %v4521, %v4622
      %v4655 = vadd.f32 %v4522, %v4623
      %v4656 = vadd.f32 %v4523, %v4624
      %v4657 = vadd.f32 %v4524, %v4625
      %v4658 = vadd.f32 %v4525, %v4626
      %v4659 = vadd.f32 %v4526, %v4627
      %v4660 = vadd.f32 %v4527, %v4628
      %v4661 = vadd.f32 %v4528, %v4629
      %v4662 = vadd.f32 %v4529, %v4630
      %v4663 = vadd.f32 %v4530, %v4631
      %v4664 = vadd.f32 %v4531, %v4632
      %v4665 = vadd.f32 %v4532, %v4633
      %v4666 = vadd.f32 %v4533, %v4634
      %v4667 = vadd.f32 %v4534, %v4635
      %v4668 = vadd.f32 %v4535, %v4636
      %v4669 = vadd.f32 %v4536, %v4637
      %v4670 = vadd.f32 %v4537, %v4638
      %v4671 = vadd.f32 %v4538, %v4639
      %v4672 = vadd.f32 %v4539, %v4640
      %v4673 = vadd.f32 %v4540, %v4641
      %v4674 = vadd.f32 %v4541, %v4642
      %v4675 = vadd.f32 %v4542, %v4643
      %v4676 = vadd.f32 %v4543, %v4644
      %v4677 = vld [vmem:[%s6] sm:$0x1]
      %v4679 = vlaneseq
      %v4680 = vshrl.u32 %v4679, 7
      %v4681 = vsub.s32 0, %v4680
      %v4682 = vrot.slane %v4677, %v4681
      %v4684 = vadd.f32 %v4645, %v4682
      %v4685 = vadd.f32 %v4646, %v4682
      %v4686 = vadd.f32 %v4647, %v4682
      %v4687 = vadd.f32 %v4648, %v4682
      %v4688 = vadd.f32 %v4649, %v4682
      %v4689 = vadd.f32 %v4650, %v4682
      %v4690 = vadd.f32 %v4651, %v4682
      %v4691 = vadd.f32 %v4652, %v4682
      %v4692 = vadd.f32 %v4653, %v4682
      %v4693 = vadd.f32 %v4654, %v4682
      %v4694 = vadd.f32 %v4655, %v4682
      %v4695 = vadd.f32 %v4656, %v4682
      %v4696 = vadd.f32 %v4657, %v4682
      %v4697 = vadd.f32 %v4658, %v4682
      %v4698 = vadd.f32 %v4659, %v4682
      %v4699 = vadd.f32 %v4660, %v4682
      %v4700 = vadd.f32 %v4661, %v4682
      %v4701 = vadd.f32 %v4662, %v4682
      %v4702 = vadd.f32 %v4663, %v4682
      %v4703 = vadd.f32 %v4664, %v4682
      %v4704 = vadd.f32 %v4665, %v4682
      %v4705 = vadd.f32 %v4666, %v4682
      %v4706 = vadd.f32 %v4667, %v4682
      %v4707 = vadd.f32 %v4668, %v4682
      %v4708 = vadd.f32 %v4669, %v4682
      %v4709 = vadd.f32 %v4670, %v4682
      %v4710 = vadd.f32 %v4671, %v4682
      %v4711 = vadd.f32 %v4672, %v4682
      %v4712 = vadd.f32 %v4673, %v4682
      %v4713 = vadd.f32 %v4674, %v4682
      %v4714 = vadd.f32 %v4675, %v4682
      %v4715 = vadd.f32 %v4676, %v4682
      %v4716 = vpack.c.bf16 %v3480, %v3479
      %v4717 = vpack.c.bf16 %v3482, %v3481
      %v4718 = vpack.c.bf16 %v3484, %v3483
      %v4719 = vpack.c.bf16 %v3486, %v3485
      %v4720 = vpack.c.bf16 %v3488, %v3487
      %v4721 = vpack.c.bf16 %v3490, %v3489
      %v4722 = vpack.c.bf16 %v3492, %v3491
      %v4723 = vpack.c.bf16 %v3494, %v3493
      %v4724 = vpack.c.bf16 %v3496, %v3495
      %v4725 = vpack.c.bf16 %v3498, %v3497
      %v4726 = vpack.c.bf16 %v3500, %v3499
      %v4727 = vpack.c.bf16 %v3502, %v3501
      %v4728 = vpack.c.bf16 %v3504, %v3503
      %v4729 = vpack.c.bf16 %v3506, %v3505
      %v4730 = vpack.c.bf16 %v3508, %v3507
      %v4731 = vpack.c.bf16 %v3510, %v3509
      %v4732 = vpack.c.bf16 %v4685, %v4684
      %v4733 = vpack.c.bf16 %v4687, %v4686
      %v4734 = vpack.c.bf16 %v4689, %v4688
      %v4735 = vpack.c.bf16 %v4691, %v4690
      %v4736 = vpack.c.bf16 %v4693, %v4692
      %v4737 = vpack.c.bf16 %v4695, %v4694
      %v4738 = vpack.c.bf16 %v4697, %v4696
      %v4739 = vpack.c.bf16 %v4699, %v4698
      %v4740 = vpack.c.bf16 %v4701, %v4700
      %v4741 = vpack.c.bf16 %v4703, %v4702
      %v4742 = vpack.c.bf16 %v4705, %v4704
      %v4743 = vpack.c.bf16 %v4707, %v4706
      %v4744 = vpack.c.bf16 %v4709, %v4708
      %v4745 = vpack.c.bf16 %v4711, %v4710
      %v4746 = vpack.c.bf16 %v4713, %v4712
      %v4747 = vpack.c.bf16 %v4715, %v4714
      %v4748 = vld [vmem:[%s7] sm:$0xff]
      %v4749 = vld [vmem:[%s7 + $0x8] sm:$0xff]
      %v4750 = vld [vmem:[%s7 + $0x10] sm:$0xff]
      %v4751 = vld [vmem:[%s7 + $0x18] sm:$0xff]
      %v4752 = vld [vmem:[%s7 + $0x20] sm:$0xff]
      %v4753 = vld [vmem:[%s7 + $0x28] sm:$0xff]
      %v4754 = vld [vmem:[%s7 + $0x30] sm:$0xff]
      %v4755 = vld [vmem:[%s7 + $0x38] sm:$0xff]
      %v4756 = vld [vmem:[%s7 + $0x40] sm:$0xff]
      %v4757 = vld [vmem:[%s7 + $0x48] sm:$0xff]
      %v4758 = vld [vmem:[%s7 + $0x50] sm:$0xff]
      %v4759 = vld [vmem:[%s7 + $0x58] sm:$0xff]
      %v4760 = vld [vmem:[%s7 + $0x60] sm:$0xff]
      %v4761 = vld [vmem:[%s7 + $0x68] sm:$0xff]
      %v4762 = vld [vmem:[%s7 + $0x70] sm:$0xff]
      %v4763 = vld [vmem:[%s7 + $0x78] sm:$0xff]
      %v4764 = vld [vmem:[%s7 + $0x80] sm:$0xff]
      %v4765 = vld [vmem:[%s7 + $0x88] sm:$0xff]
      %v4766 = vld [vmem:[%s7 + $0x90] sm:$0xff]
      %v4767 = vld [vmem:[%s7 + $0x98] sm:$0xff]
      %v4768 = vld [vmem:[%s7 + $0xa0] sm:$0xff]
      %v4769 = vld [vmem:[%s7 + $0xa8] sm:$0xff]
      %v4770 = vld [vmem:[%s7 + $0xb0] sm:$0xff]
      %v4771 = vld [vmem:[%s7 + $0xb8] sm:$0xff]
      %v4772 = vld [vmem:[%s7 + $0xc0] sm:$0xff]
      %v4773 = vld [vmem:[%s7 + $0xc8] sm:$0xff]
      %v4774 = vld [vmem:[%s7 + $0xd0] sm:$0xff]
      %v4775 = vld [vmem:[%s7 + $0xd8] sm:$0xff]
      %v4776 = vld [vmem:[%s7 + $0xe0] sm:$0xff]
      %v4777 = vld [vmem:[%s7 + $0xe8] sm:$0xff]
      %v4778 = vld [vmem:[%s7 + $0xf0] sm:$0xff]
      %v4779 = vld [vmem:[%s7 + $0xf8] sm:$0xff]
      %v4780 = vld [vmem:[%s8] sm:$0x3]
      %v4782 = vlaneseq
      %v4783 = vshrl.u32 %v4782, 7
      %v4784 = vsub.s32 0, %v4783
      %v4785 = vrot.slane %v4780, %v4784
      %v4786 = vlaneseq
      %v4787 = vshrl.u32 %v4786, 7
      %v4788 = vsub.s32 1, %v4787
      %v4789 = vrot.slane %v4780, %v4788
      %v4824 = vunpack.c.l.b16 %v4748
      %v4825 = vunpack.c.h.b16 %v4748
      %v4826 = vunpack.c.l.b16 %v4749
      %v4827 = vunpack.c.h.b16 %v4749
      %v4828 = vunpack.c.l.b16 %v4750
      %v4829 = vunpack.c.h.b16 %v4750
      %v4830 = vunpack.c.l.b16 %v4751
      %v4831 = vunpack.c.h.b16 %v4751
      %v4832 = vunpack.c.l.b16 %v4752
      %v4833 = vunpack.c.h.b16 %v4752
      %v4834 = vunpack.c.l.b16 %v4753
      %v4835 = vunpack.c.h.b16 %v4753
      %v4836 = vunpack.c.l.b16 %v4754
      %v4837 = vunpack.c.h.b16 %v4754
      %v4838 = vunpack.c.l.b16 %v4755
      %v4839 = vunpack.c.h.b16 %v4755
      %v4840 = vunpack.c.l.b16 %v4756
      %v4841 = vunpack.c.h.b16 %v4756
      %v4842 = vunpack.c.l.b16 %v4757
      %v4843 = vunpack.c.h.b16 %v4757
      %v4844 = vunpack.c.l.b16 %v4758
      %v4845 = vunpack.c.h.b16 %v4758
      %v4846 = vunpack.c.l.b16 %v4759
      %v4847 = vunpack.c.h.b16 %v4759
      %v4848 = vunpack.c.l.b16 %v4760
      %v4849 = vunpack.c.h.b16 %v4760
      %v4850 = vunpack.c.l.b16 %v4761
      %v4851 = vunpack.c.h.b16 %v4761
      %v4852 = vunpack.c.l.b16 %v4762
      %v4853 = vunpack.c.h.b16 %v4762
      %v4854 = vunpack.c.l.b16 %v4763
      %v4855 = vunpack.c.h.b16 %v4763
      %v4856 = vunpack.c.l.b16 %v4764
      %v4857 = vunpack.c.h.b16 %v4764
      %v4858 = vunpack.c.l.b16 %v4765
      %v4859 = vunpack.c.h.b16 %v4765
      %v4860 = vunpack.c.l.b16 %v4766
      %v4861 = vunpack.c.h.b16 %v4766
      %v4862 = vunpack.c.l.b16 %v4767
      %v4863 = vunpack.c.h.b16 %v4767
      %v4864 = vunpack.c.l.b16 %v4768
      %v4865 = vunpack.c.h.b16 %v4768
      %v4866 = vunpack.c.l.b16 %v4769
      %v4867 = vunpack.c.h.b16 %v4769
      %v4868 = vunpack.c.l.b16 %v4770
      %v4869 = vunpack.c.h.b16 %v4770
      %v4870 = vunpack.c.l.b16 %v4771
      %v4871 = vunpack.c.h.b16 %v4771
      %v4872 = vunpack.c.l.b16 %v4772
      %v4873 = vunpack.c.h.b16 %v4772
      %v4874 = vunpack.c.l.b16 %v4773
      %v4875 = vunpack.c.h.b16 %v4773
      %v4876 = vunpack.c.l.b16 %v4774
      %v4877 = vunpack.c.h.b16 %v4774
      %v4878 = vunpack.c.l.b16 %v4775
      %v4879 = vunpack.c.h.b16 %v4775
      %v4880 = vunpack.c.l.b16 %v4776
      %v4881 = vunpack.c.h.b16 %v4776
      %v4882 = vunpack.c.l.b16 %v4777
      %v4883 = vunpack.c.h.b16 %v4777
      %v4884 = vunpack.c.l.b16 %v4778
      %v4885 = vunpack.c.h.b16 %v4778
      %v4886 = vunpack.c.l.b16 %v4779
      %v4887 = vunpack.c.h.b16 %v4779
      %v4888 = vpack.c.b16 %v4826, %v4824
      %v4889 = vpack.c.b16 %v4827, %v4825
      %v4890 = vpack.c.b16 %v4830, %v4828
      %v4891 = vpack.c.b16 %v4831, %v4829
      %v4892 = vpack.c.b16 %v4834, %v4832
      %v4893 = vpack.c.b16 %v4835, %v4833
      %v4894 = vpack.c.b16 %v4838, %v4836
      %v4895 = vpack.c.b16 %v4839, %v4837
      %v4896 = vpack.c.b16 %v4842, %v4840
      %v4897 = vpack.c.b16 %v4843, %v4841
      %v4898 = vpack.c.b16 %v4846, %v4844
      %v4899 = vpack.c.b16 %v4847, %v4845
      %v4900 = vpack.c.b16 %v4850, %v4848
      %v4901 = vpack.c.b16 %v4851, %v4849
      %v4902 = vpack.c.b16 %v4854, %v4852
      %v4903 = vpack.c.b16 %v4855, %v4853
      %v4904 = vpack.c.b16 %v4858, %v4856
      %v4905 = vpack.c.b16 %v4859, %v4857
      %v4906 = vpack.c.b16 %v4862, %v4860
      %v4907 = vpack.c.b16 %v4863, %v4861
      %v4908 = vpack.c.b16 %v4866, %v4864
      %v4909 = vpack.c.b16 %v4867, %v4865
      %v4910 = vpack.c.b16 %v4870, %v4868
      %v4911 = vpack.c.b16 %v4871, %v4869
      %v4912 = vpack.c.b16 %v4874, %v4872
      %v4913 = vpack.c.b16 %v4875, %v4873
      %v4914 = vpack.c.b16 %v4878, %v4876
      %v4915 = vpack.c.b16 %v4879, %v4877
      %v4916 = vpack.c.b16 %v4882, %v4880
      %v4917 = vpack.c.b16 %v4883, %v4881
      %v4918 = vpack.c.b16 %v4886, %v4884
      %v4919 = vpack.c.b16 %v4887, %v4885
      %4952 = vmatprep.subr.bf16.mxu0 %v4889
      %4953 = vmatpush1.bf16.msra.mxu0 %v4888
      %4954 = vmatprep.subr.bf16.mxu0 %v4891
      %4955 = vmatpush1.bf16.msra.mxu0 %v4890
      %4956 = vmatprep.subr.bf16.mxu0 %v4893
      %4957 = vmatpush1.bf16.msra.mxu0 %v4892
      %4958 = vmatprep.subr.bf16.mxu0 %v4895
      %4959 = vmatpush1.bf16.msra.mxu0 %v4894
      %4960 = vmatprep.subr.bf16.mxu0 %v4897
      %4961 = vmatpush1.bf16.msra.mxu0 %v4896
      %4962 = vmatprep.subr.bf16.mxu0 %v4899
      %4963 = vmatpush1.bf16.msra.mxu0 %v4898
      %4964 = vmatprep.subr.bf16.mxu0 %v4901
      %4965 = vmatpush1.bf16.msra.mxu0 %v4900
      %4966 = vmatprep.subr.bf16.mxu0 %v4903
      %4967 = vmatpush1.bf16.msra.mxu0 %v4902
      %4968 = vmatprep.subr.bf16.mxu0 %v4905
      %4969 = vmatpush1.bf16.msra.mxu0 %v4904
      %4970 = vmatprep.subr.bf16.mxu0 %v4907
      %4971 = vmatpush1.bf16.msra.mxu0 %v4906
      %4972 = vmatprep.subr.bf16.mxu0 %v4909
      %4973 = vmatpush1.bf16.msra.mxu0 %v4908
      %4974 = vmatprep.subr.bf16.mxu0 %v4911
      %4975 = vmatpush1.bf16.msra.mxu0 %v4910
      %4976 = vmatprep.subr.bf16.mxu0 %v4913
      %4977 = vmatpush1.bf16.msra.mxu0 %v4912
      %4978 = vmatprep.subr.bf16.mxu0 %v4915
      %4979 = vmatpush1.bf16.msra.mxu0 %v4914
      %4980 = vmatprep.subr.bf16.mxu0 %v4917
      %4981 = vmatpush1.bf16.msra.mxu0 %v4916
      %4982 = vmatprep.subr.bf16.mxu0 %v4919
      %4983 = vmatpush1.bf16.msra.mxu0 %v4918
      %4984 = vmatprep.mubr.bf16.mxu0 %v4732
      %4985 = vmatmul.mubr.bf16.gmra.mrb[0].mxu0 %v4716
      %v4986 = vpop.f32.mrb[0].mxu0
      %v4987 = vadd.f32 %v4785, %v4986
      %v4988 = vpop.f32.mrb[0].mxu0
      %v4989 = vadd.f32 %v4789, %v4988
      %v4990 = vpop.f32.mrb[0].mxu0
      %v4991 = vadd.f32 %v4785, %v4990
      %v4992 = vpop.f32.mrb[0].mxu0
      %v4993 = vadd.f32 %v4789, %v4992
      %4994 = vmatprep.mubr.bf16.mxu0 %v4733
      %4995 = vmatmul.mubr.bf16.gmra.mrb[0].mxu0 %v4717
      %v4996 = vpop.f32.mrb[0].mxu0
      %v4997 = vadd.f32 %v4785, %v4996
      %v4998 = vpop.f32.mrb[0].mxu0
      %v4999 = vadd.f32 %v4789, %v4998
      %v5000 = vpop.f32.mrb[0].mxu0
      %v5001 = vadd.f32 %v4785, %v5000
      %v5002 = vpop.f32.mrb[0].mxu0
      %v5003 = vadd.f32 %v4789, %v5002
      %5004 = vmatprep.mubr.bf16.mxu0 %v4734
      %5005 = vmatmul.mubr.bf16.gmra.mrb[0].mxu0 %v4718
      %v5006 = vpop.f32.mrb[0].mxu0
      %v5007 = vadd.f32 %v4785, %v5006
      %v5008 = vpop.f32.mrb[0].mxu0
      %v5009 = vadd.f32 %v4789, %v5008
      %v5010 = vpop.f32.mrb[0].mxu0
      %v5011 = vadd.f32 %v4785, %v5010
      %v5012 = vpop.f32.mrb[0].mxu0
      %v5013 = vadd.f32 %v4789, %v5012
      %5014 = vmatprep.mubr.bf16.mxu0 %v4735
      %5015 = vmatmul.mubr.bf16.gmra.mrb[0].mxu0 %v4719
      %v5016 = vpop.f32.mrb[0].mxu0
      %v5017 = vadd.f32 %v4785, %v5016
      %v5018 = vpop.f32.mrb[0].mxu0
      %v5019 = vadd.f32 %v4789, %v5018
      %v5020 = vpop.f32.mrb[0].mxu0
      %v5021 = vadd.f32 %v4785, %v5020
      %v5022 = vpop.f32.mrb[0].mxu0
      %v5023 = vadd.f32 %v4789, %v5022
      %5024 = vmatprep.mubr.bf16.mxu0 %v4736
      %5025 = vmatmul.mubr.bf16.gmra.mrb[0].mxu0 %v4720
      %v5026 = vpop.f32.mrb[0].mxu0
      %v5027 = vadd.f32 %v4785, %v5026
      %v5028 = vpop.f32.mrb[0].mxu0
      %v5029 = vadd.f32 %v4789, %v5028
      %v5030 = vpop.f32.mrb[0].mxu0
      %v5031 = vadd.f32 %v4785, %v5030
      %v5032 = vpop.f32.mrb[0].mxu0
      %v5033 = vadd.f32 %v4789, %v5032
      %5034 = vmatprep.mubr.bf16.mxu0 %v4737
      %5035 = vmatmul.mubr.bf16.gmra.mrb[0].mxu0 %v4721
      %v5036 = vpop.f32.mrb[0].mxu0
      %v5037 = vadd.f32 %v4785, %v5036
      %v5038 = vpop.f32.mrb[0].mxu0
      %v5039 = vadd.f32 %v4789, %v5038
      %v5040 = vpop.f32.mrb[0].mxu0
      %v5041 = vadd.f32 %v4785, %v5040
      %v5042 = vpop.f32.mrb[0].mxu0
      %v5043 = vadd.f32 %v4789, %v5042
      %5044 = vmatprep.mubr.bf16.mxu0 %v4738
      %5045 = vmatmul.mubr.bf16.gmra.mrb[0].mxu0 %v4722
      %v5046 = vpop.f32.mrb[0].mxu0
      %v5047 = vadd.f32 %v4785, %v5046
      %v5048 = vpop.f32.mrb[0].mxu0
      %v5049 = vadd.f32 %v4789, %v5048
      %v5050 = vpop.f32.mrb[0].mxu0
      %v5051 = vadd.f32 %v4785, %v5050
      %v5052 = vpop.f32.mrb[0].mxu0
      %v5053 = vadd.f32 %v4789, %v5052
      %5054 = vmatprep.mubr.bf16.mxu0 %v4739
      %5055 = vmatmul.mubr.bf16.gmra.mrb[0].mxu0 %v4723
      %v5056 = vpop.f32.mrb[0].mxu0
      %v5057 = vadd.f32 %v4785, %v5056
      %v5058 = vpop.f32.mrb[0].mxu0
      %v5059 = vadd.f32 %v4789, %v5058
      %v5060 = vpop.f32.mrb[0].mxu0
      %v5061 = vadd.f32 %v4785, %v5060
      %v5062 = vpop.f32.mrb[0].mxu0
      %v5063 = vadd.f32 %v4789, %v5062
      %5064 = vmatprep.mubr.bf16.mxu0 %v4740
      %5065 = vmatmul.mubr.bf16.gmra.mrb[0].mxu0 %v4724
      %v5066 = vpop.f32.mrb[0].mxu0
      %v5067 = vadd.f32 %v4785, %v5066
      %v5068 = vpop.f32.mrb[0].mxu0
      %v5069 = vadd.f32 %v4789, %v5068
      %v5070 = vpop.f32.mrb[0].mxu0
      %v5071 = vadd.f32 %v4785, %v5070
      %v5072 = vpop.f32.mrb[0].mxu0
      %v5073 = vadd.f32 %v4789, %v5072
      %5074 = vmatprep.mubr.bf16.mxu0 %v4741
      %5075 = vmatmul.mubr.bf16.gmra.mrb[0].mxu0 %v4725
      %v5076 = vpop.f32.mrb[0].mxu0
      %v5077 = vadd.f32 %v4785, %v5076
      %v5078 = vpop.f32.mrb[0].mxu0
      %v5079 = vadd.f32 %v4789, %v5078
      %v5080 = vpop.f32.mrb[0].mxu0
      %v5081 = vadd.f32 %v4785, %v5080
      %v5082 = vpop.f32.mrb[0].mxu0
      %v5083 = vadd.f32 %v4789, %v5082
      %5084 = vmatprep.mubr.bf16.mxu0 %v4742
      %5085 = vmatmul.mubr.bf16.gmra.mrb[0].mxu0 %v4726
      %v5086 = vpop.f32.mrb[0].mxu0
      %v5087 = vadd.f32 %v4785, %v5086
      %v5088 = vpop.f32.mrb[0].mxu0
      %v5089 = vadd.f32 %v4789, %v5088
      %v5090 = vpop.f32.mrb[0].mxu0
      %v5091 = vadd.f32 %v4785, %v5090
      %v5092 = vpop.f32.mrb[0].mxu0
      %v5093 = vadd.f32 %v4789, %v5092
      %5094 = vmatprep.mubr.bf16.mxu0 %v4743
      %5095 = vmatmul.mubr.bf16.gmra.mrb[0].mxu0 %v4727
      %v5096 = vpop.f32.mrb[0].mxu0
      %v5097 = vadd.f32 %v4785, %v5096
      %v5098 = vpop.f32.mrb[0].mxu0
      %v5099 = vadd.f32 %v4789, %v5098
      %v5100 = vpop.f32.mrb[0].mxu0
      %v5101 = vadd.f32 %v4785, %v5100
      %v5102 = vpop.f32.mrb[0].mxu0
      %v5103 = vadd.f32 %v4789, %v5102
      %5104 = vmatprep.mubr.bf16.mxu0 %v4744
      %5105 = vmatmul.mubr.bf16.gmra.mrb[0].mxu0 %v4728
      %v5106 = vpop.f32.mrb[0].mxu0
      %v5107 = vadd.f32 %v4785, %v5106
      %v5108 = vpop.f32.mrb[0].mxu0
      %v5109 = vadd.f32 %v4789, %v5108
      %v5110 = vpop.f32.mrb[0].mxu0
      %v5111 = vadd.f32 %v4785, %v5110
      %v5112 = vpop.f32.mrb[0].mxu0
      %v5113 = vadd.f32 %v4789, %v5112
      %5114 = vmatprep.mubr.bf16.mxu0 %v4745
      %5115 = vmatmul.mubr.bf16.gmra.mrb[0].mxu0 %v4729
      %v5116 = vpop.f32.mrb[0].mxu0
      %v5117 = vadd.f32 %v4785, %v5116
      %v5118 = vpop.f32.mrb[0].mxu0
      %v5119 = vadd.f32 %v4789, %v5118
      %v5120 = vpop.f32.mrb[0].mxu0
      %v5121 = vadd.f32 %v4785, %v5120
      %v5122 = vpop.f32.mrb[0].mxu0
      %v5123 = vadd.f32 %v4789, %v5122
      %5124 = vmatprep.mubr.bf16.mxu0 %v4746
      %5125 = vmatmul.mubr.bf16.gmra.mrb[0].mxu0 %v4730
      %v5126 = vpop.f32.mrb[0].mxu0
      %v5127 = vadd.f32 %v4785, %v5126
      %v5128 = vpop.f32.mrb[0].mxu0
      %v5129 = vadd.f32 %v4789, %v5128
      %v5130 = vpop.f32.mrb[0].mxu0
      %v5131 = vadd.f32 %v4785, %v5130
      %v5132 = vpop.f32.mrb[0].mxu0
      %v5133 = vadd.f32 %v4789, %v5132
      %5134 = vmatprep.mubr.bf16.mxu0 %v4747
      %5135 = vmatmul.mubr.bf16.gmra.mrb[0].mxu0 %v4731
      %v5136 = vpop.f32.mrb[0].mxu0
      %v5137 = vadd.f32 %v4785, %v5136
      %v5138 = vpop.f32.mrb[0].mxu0
      %v5139 = vadd.f32 %v4789, %v5138
      %v5140 = vpop.f32.mrb[0].mxu0
      %v5141 = vadd.f32 %v4785, %v5140
      %v5142 = vpop.f32.mrb[0].mxu0
      %v5143 = vadd.f32 %v4789, %v5142
      %5144 = vdwg.mxu0
      %v5145 = vmax.f32 %v4987, 0.0
      %v5146 = vmax.f32 %v4989, 0.0
      %v5147 = vmax.f32 %v4991, 0.0
      %v5148 = vmax.f32 %v4993, 0.0
      %v5149 = vmax.f32 %v4997, 0.0
      %v5150 = vmax.f32 %v4999, 0.0
      %v5151 = vmax.f32 %v5001, 0.0
      %v5152 = vmax.f32 %v5003, 0.0
      %v5153 = vmax.f32 %v5007, 0.0
      %v5154 = vmax.f32 %v5009, 0.0
      %v5155 = vmax.f32 %v5011, 0.0
      %v5156 = vmax.f32 %v5013, 0.0
      %v5157 = vmax.f32 %v5017, 0.0
      %v5158 = vmax.f32 %v5019, 0.0
      %v5159 = vmax.f32 %v5021, 0.0
      %v5160 = vmax.f32 %v5023, 0.0
      %v5161 = vmax.f32 %v5027, 0.0
      %v5162 = vmax.f32 %v5029, 0.0
      %v5163 = vmax.f32 %v5031, 0.0
      %v5164 = vmax.f32 %v5033, 0.0
      %v5165 = vmax.f32 %v5037, 0.0
      %v5166 = vmax.f32 %v5039, 0.0
      %v5167 = vmax.f32 %v5041, 0.0
      %v5168 = vmax.f32 %v5043, 0.0
      %v5169 = vmax.f32 %v5047, 0.0
      %v5170 = vmax.f32 %v5049, 0.0
      %v5171 = vmax.f32 %v5051, 0.0
      %v5172 = vmax.f32 %v5053, 0.0
      %v5173 = vmax.f32 %v5057, 0.0
      %v5174 = vmax.f32 %v5059, 0.0
      %v5175 = vmax.f32 %v5061, 0.0
      %v5176 = vmax.f32 %v5063, 0.0
      %v5177 = vmax.f32 %v5067, 0.0
      %v5178 = vmax.f32 %v5069, 0.0
      %v5179 = vmax.f32 %v5071, 0.0
      %v5180 = vmax.f32 %v5073, 0.0
      %v5181 = vmax.f32 %v5077, 0.0
      %v5182 = vmax.f32 %v5079, 0.0
      %v5183 = vmax.f32 %v5081, 0.0
      %v5184 = vmax.f32 %v5083, 0.0
      %v5185 = vmax.f32 %v5087, 0.0
      %v5186 = vmax.f32 %v5089, 0.0
      %v5187 = vmax.f32 %v5091, 0.0
      %v5188 = vmax.f32 %v5093, 0.0
      %v5189 = vmax.f32 %v5097, 0.0
      %v5190 = vmax.f32 %v5099, 0.0
      %v5191 = vmax.f32 %v5101, 0.0
      %v5192 = vmax.f32 %v5103, 0.0
      %v5193 = vmax.f32 %v5107, 0.0
      %v5194 = vmax.f32 %v5109, 0.0
      %v5195 = vmax.f32 %v5111, 0.0
      %v5196 = vmax.f32 %v5113, 0.0
      %v5197 = vmax.f32 %v5117, 0.0
      %v5198 = vmax.f32 %v5119, 0.0
      %v5199 = vmax.f32 %v5121, 0.0
      %v5200 = vmax.f32 %v5123, 0.0
      %v5201 = vmax.f32 %v5127, 0.0
      %v5202 = vmax.f32 %v5129, 0.0
      %v5203 = vmax.f32 %v5131, 0.0
      %v5204 = vmax.f32 %v5133, 0.0
      %v5205 = vmax.f32 %v5137, 0.0
      %v5206 = vmax.f32 %v5139, 0.0
      %v5207 = vmax.f32 %v5141, 0.0
      %v5208 = vmax.f32 %v5143, 0.0
      %v5209 = vpack.c.bf16 %v5145, %v5145
      %v5210 = vpack.c.bf16 %v5146, %v5146
      %v5211 = vpack.c.bf16 %v5147, %v5147
      %v5212 = vpack.c.bf16 %v5148, %v5148
      %v5213 = vpack.c.bf16 %v5149, %v5149
      %v5214 = vpack.c.bf16 %v5150, %v5150
      %v5215 = vpack.c.bf16 %v5151, %v5151
      %v5216 = vpack.c.bf16 %v5152, %v5152
      %v5217 = vpack.c.bf16 %v5153, %v5153
      %v5218 = vpack.c.bf16 %v5154, %v5154
      %v5219 = vpack.c.bf16 %v5155, %v5155
      %v5220 = vpack.c.bf16 %v5156, %v5156
      %v5221 = vpack.c.bf16 %v5157, %v5157
      %v5222 = vpack.c.bf16 %v5158, %v5158
      %v5223 = vpack.c.bf16 %v5159, %v5159
      %v5224 = vpack.c.bf16 %v5160, %v5160
      %v5225 = vpack.c.bf16 %v5161, %v5161
      %v5226 = vpack.c.bf16 %v5162, %v5162
      %v5227 = vpack.c.bf16 %v5163, %v5163
      %v5228 = vpack.c.bf16 %v5164, %v5164
      %v5229 = vpack.c.bf16 %v5165, %v5165
      %v5230 = vpack.c.bf16 %v5166, %v5166
      %v5231 = vpack.c.bf16 %v5167, %v5167
      %v5232 = vpack.c.bf16 %v5168, %v5168
      %v5233 = vpack.c.bf16 %v5169, %v5169
      %v5234 = vpack.c.bf16 %v5170, %v5170
      %v5235 = vpack.c.bf16 %v5171, %v5171
      %v5236 = vpack.c.bf16 %v5172, %v5172
      %v5237 = vpack.c.bf16 %v5173, %v5173
      %v5238 = vpack.c.bf16 %v5174, %v5174
      %v5239 = vpack.c.bf16 %v5175, %v5175
      %v5240 = vpack.c.bf16 %v5176, %v5176
      %v5241 = vpack.c.bf16 %v5177, %v5177
      %v5242 = vpack.c.bf16 %v5178, %v5178
      %v5243 = vpack.c.bf16 %v5179, %v5179
      %v5244 = vpack.c.bf16 %v5180, %v5180
      %v5245 = vpack.c.bf16 %v5181, %v5181
      %v5246 = vpack.c.bf16 %v5182, %v5182
      %v5247 = vpack.c.bf16 %v5183, %v5183
      %v5248 = vpack.c.bf16 %v5184, %v5184
      %v5249 = vpack.c.bf16 %v5185, %v5185
      %v5250 = vpack.c.bf16 %v5186, %v5186
      %v5251 = vpack.c.bf16 %v5187, %v5187
      %v5252 = vpack.c.bf16 %v5188, %v5188
      %v5253 = vpack.c.bf16 %v5189, %v5189
      %v5254 = vpack.c.bf16 %v5190, %v5190
      %v5255 = vpack.c.bf16 %v5191, %v5191
      %v5256 = vpack.c.bf16 %v5192, %v5192
      %v5257 = vpack.c.bf16 %v5193, %v5193
      %v5258 = vpack.c.bf16 %v5194, %v5194
      %v5259 = vpack.c.bf16 %v5195, %v5195
      %v5260 = vpack.c.bf16 %v5196, %v5196
      %v5261 = vpack.c.bf16 %v5197, %v5197
      %v5262 = vpack.c.bf16 %v5198, %v5198
      %v5263 = vpack.c.bf16 %v5199, %v5199
      %v5264 = vpack.c.bf16 %v5200, %v5200
      %v5265 = vpack.c.bf16 %v5201, %v5201
      %v5266 = vpack.c.bf16 %v5202, %v5202
      %v5267 = vpack.c.bf16 %v5203, %v5203
      %v5268 = vpack.c.bf16 %v5204, %v5204
      %v5269 = vpack.c.bf16 %v5205, %v5205
      %v5270 = vpack.c.bf16 %v5206, %v5206
      %v5271 = vpack.c.bf16 %v5207, %v5207
      %v5272 = vpack.c.bf16 %v5208, %v5208
      %v5337 = vunpack.c.l.b16 %v5209
      %v5338 = vunpack.c.l.b16 %v5210
      %v5339 = vunpack.c.l.b16 %v5211
      %v5340 = vunpack.c.l.b16 %v5212
      %v5341 = vunpack.c.l.b16 %v5213
      %v5342 = vunpack.c.l.b16 %v5214
      %v5343 = vunpack.c.l.b16 %v5215
      %v5344 = vunpack.c.l.b16 %v5216
      %v5345 = vunpack.c.l.b16 %v5217
      %v5346 = vunpack.c.l.b16 %v5218
      %v5347 = vunpack.c.l.b16 %v5219
      %v5348 = vunpack.c.l.b16 %v5220
      %v5349 = vunpack.c.l.b16 %v5221
      %v5350 = vunpack.c.l.b16 %v5222
      %v5351 = vunpack.c.l.b16 %v5223
      %v5352 = vunpack.c.l.b16 %v5224
      %v5353 = vunpack.c.l.b16 %v5225
      %v5354 = vunpack.c.l.b16 %v5226
      %v5355 = vunpack.c.l.b16 %v5227
      %v5356 = vunpack.c.l.b16 %v5228
      %v5357 = vunpack.c.l.b16 %v5229
      %v5358 = vunpack.c.l.b16 %v5230
      %v5359 = vunpack.c.l.b16 %v5231
      %v5360 = vunpack.c.l.b16 %v5232
      %v5361 = vunpack.c.l.b16 %v5233
      %v5362 = vunpack.c.l.b16 %v5234
      %v5363 = vunpack.c.l.b16 %v5235
      %v5364 = vunpack.c.l.b16 %v5236
      %v5365 = vunpack.c.l.b16 %v5237
      %v5366 = vunpack.c.l.b16 %v5238
      %v5367 = vunpack.c.l.b16 %v5239
      %v5368 = vunpack.c.l.b16 %v5240
      %v5369 = vunpack.c.l.b16 %v5241
      %v5370 = vunpack.c.l.b16 %v5242
      %v5371 = vunpack.c.l.b16 %v5243
      %v5372 = vunpack.c.l.b16 %v5244
      %v5373 = vunpack.c.l.b16 %v5245
      %v5374 = vunpack.c.l.b16 %v5246
      %v5375 = vunpack.c.l.b16 %v5247
      %v5376 = vunpack.c.l.b16 %v5248
      %v5377 = vunpack.c.l.b16 %v5249
      %v5378 = vunpack.c.l.b16 %v5250
      %v5379 = vunpack.c.l.b16 %v5251
      %v5380 = vunpack.c.l.b16 %v5252
      %v5381 = vunpack.c.l.b16 %v5253
      %v5382 = vunpack.c.l.b16 %v5254
      %v5383 = vunpack.c.l.b16 %v5255
      %v5384 = vunpack.c.l.b16 %v5256
      %v5385 = vunpack.c.l.b16 %v5257
      %v5386 = vunpack.c.l.b16 %v5258
      %v5387 = vunpack.c.l.b16 %v5259
      %v5388 = vunpack.c.l.b16 %v5260
      %v5389 = vunpack.c.l.b16 %v5261
      %v5390 = vunpack.c.l.b16 %v5262
      %v5391 = vunpack.c.l.b16 %v5263
      %v5392 = vunpack.c.l.b16 %v5264
      %v5393 = vunpack.c.l.b16 %v5265
      %v5394 = vunpack.c.l.b16 %v5266
      %v5395 = vunpack.c.l.b16 %v5267
      %v5396 = vunpack.c.l.b16 %v5268
      %v5397 = vunpack.c.l.b16 %v5269
      %v5398 = vunpack.c.l.b16 %v5270
      %v5399 = vunpack.c.l.b16 %v5271
      %v5400 = vunpack.c.l.b16 %v5272
      %v5401 = vpack.c.b16 %v5338, %v5337
      %v5402 = vpack.c.b16 %v5340, %v5339
      %v5403 = vpack.c.b16 %v5342, %v5341
      %v5404 = vpack.c.b16 %v5344, %v5343
      %v5405 = vpack.c.b16 %v5346, %v5345
      %v5406 = vpack.c.b16 %v5348, %v5347
      %v5407 = vpack.c.b16 %v5350, %v5349
      %v5408 = vpack.c.b16 %v5352, %v5351
      %v5409 = vpack.c.b16 %v5354, %v5353
      %v5410 = vpack.c.b16 %v5356, %v5355
      %v5411 = vpack.c.b16 %v5358, %v5357
      %v5412 = vpack.c.b16 %v5360, %v5359
      %v5413 = vpack.c.b16 %v5362, %v5361
      %v5414 = vpack.c.b16 %v5364, %v5363
      %v5415 = vpack.c.b16 %v5366, %v5365
      %v5416 = vpack.c.b16 %v5368, %v5367
      %v5417 = vpack.c.b16 %v5370, %v5369
      %v5418 = vpack.c.b16 %v5372, %v5371
      %v5419 = vpack.c.b16 %v5374, %v5373
      %v5420 = vpack.c.b16 %v5376, %v5375
      %v5421 = vpack.c.b16 %v5378, %v5377
      %v5422 = vpack.c.b16 %v5380, %v5379
      %v5423 = vpack.c.b16 %v5382, %v5381
      %v5424 = vpack.c.b16 %v5384, %v5383
      %v5425 = vpack.c.b16 %v5386, %v5385
      %v5426 = vpack.c.b16 %v5388, %v5387
      %v5427 = vpack.c.b16 %v5390, %v5389
      %v5428 = vpack.c.b16 %v5392, %v5391
      %v5429 = vpack.c.b16 %v5394, %v5393
      %v5430 = vpack.c.b16 %v5396, %v5395
      %v5431 = vpack.c.b16 %v5398, %v5397
      %v5432 = vpack.c.b16 %v5400, %v5399
      %5465 = vst [vmem:[%s339] sm:$0xff] %v5401
      %5466 = vst [vmem:[%s339 + $0x8] sm:$0xff] %v5402
      %5467 = vst [vmem:[%s339 + $0x10] sm:$0xff] %v5403
      %5468 = vst [vmem:[%s339 + $0x18] sm:$0xff] %v5404
      %5469 = vst [vmem:[%s339 + $0x20] sm:$0xff] %v5405
      %5470 = vst [vmem:[%s339 + $0x28] sm:$0xff] %v5406
      %5471 = vst [vmem:[%s339 + $0x30] sm:$0xff] %v5407
      %5472 = vst [vmem:[%s339 + $0x38] sm:$0xff] %v5408
      %5473 = vst [vmem:[%s339 + $0x40] sm:$0xff] %v5409
      %5474 = vst [vmem:[%s339 + $0x48] sm:$0xff] %v5410
      %5475 = vst [vmem:[%s339 + $0x50] sm:$0xff] %v5411
      %5476 = vst [vmem:[%s339 + $0x58] sm:$0xff] %v5412
      %5477 = vst [vmem:[%s339 + $0x60] sm:$0xff] %v5413
      %5478 = vst [vmem:[%s339 + $0x68] sm:$0xff] %v5414
      %5479 = vst [vmem:[%s339 + $0x70] sm:$0xff] %v5415
      %5480 = vst [vmem:[%s339 + $0x78] sm:$0xff] %v5416
      %5481 = vst [vmem:[%s339 + $0x80] sm:$0xff] %v5417
      %5482 = vst [vmem:[%s339 + $0x88] sm:$0xff] %v5418
      %5483 = vst [vmem:[%s339 + $0x90] sm:$0xff] %v5419
      %5484 = vst [vmem:[%s339 + $0x98] sm:$0xff] %v5420
      %5485 = vst [vmem:[%s339 + $0xa0] sm:$0xff] %v5421
      %5486 = vst [vmem:[%s339 + $0xa8] sm:$0xff] %v5422
      %5487 = vst [vmem:[%s339 + $0xb0] sm:$0xff] %v5423
      %5488 = vst [vmem:[%s339 + $0xb8] sm:$0xff] %v5424
      %5489 = vst [vmem:[%s339 + $0xc0] sm:$0xff] %v5425
      %5490 = vst [vmem:[%s339 + $0xc8] sm:$0xff] %v5426
      %5491 = vst [vmem:[%s339 + $0xd0] sm:$0xff] %v5427
      %5492 = vst [vmem:[%s339 + $0xd8] sm:$0xff] %v5428
      %5493 = vst [vmem:[%s339 + $0xe0] sm:$0xff] %v5429
      %5494 = vst [vmem:[%s339 + $0xe8] sm:$0xff] %v5430
      %5495 = vst [vmem:[%s339 + $0xf0] sm:$0xff] %v5431
      %5496 = vst [vmem:[%s339 + $0xf8] sm:$0xff] %v5432
      %s5497 = smul.u32 4, %s20
      %p5498 = scmp.lt.s32.totalorder %s5497, 15
      %s5499 = scalar_select %p5498, %s5497, 15
      %s5500 = smul.addr %s5499, 16
      %s5501 = smul.addr %s5500, 4
      %s5502 = scalar_lea.vmem %s9, %s5501
      // Predicated region
      $region57: #{forward.2} parent=55 // pred_check
        %p5503 = pneg %p232
      $region58: #{forward.2} parent=55 // pred_check_branch
        %5505 = sbr.rel (%p5503) target = $region60
      $region59: #{forward.2} parent=55 // pred_region
        %s5506 = smul.u32 4, %s20
      $region60: #{forward.2} parent=55 // pred_fallthru
        _
    $region56: #{forward.2} parent=5 // pred_fallthru
      _
    %p5507 = scmp.le.s32.totalorder 2, %s15
    // Predicated region
    $region61: #{forward.2} parent=5 // pred_check
      %p5508 = pneg %p5507
    $region62: #{forward.2} parent=5 // pred_check_branch
      %5510 = sbr.rel (%p5508) target = $region64
    $region63: #{forward.2} parent=5 // pred_region
      %s5511 = ssub.s32 %s15, 2
      // Predicated region
      $region65: #{forward.2} parent=63 // pred_check
        %p5512 = pneg %p238
      $region66: #{forward.2} parent=63 // pred_check_branch
        %5514 = sbr.rel (%p5512) target = $region68
      $region67: #{forward.2} parent=63 // pred_region
        %s5515 = smul.u32 4, %s21
        %p5516 = scmp.lt.s32.totalorder %s5515, 15
        %s5517 = scalar_select %p5516, %s5515, 15
        %s5518 = smul.addr %s5517, 16
        %s5519 = smul.addr %s5518, 4
        %s5520 = scalar_lea.vmem %s9, %s5519
      $region68: #{forward.2} parent=63 // pred_fallthru
        _
    $region64: #{forward.2} parent=5 // pred_fallthru
      _
  $region6: #{forward.2} parent=0 // loop_footer
    %s19 = sadd.s32 1, %s15
  $region7: #{forward.2} parent=0 // loop_footer_branch
    %14 = sbr.rel target = $region3
  $region8: #{forward.2} parent=0 // loop_exit
    _

</llo_original>
